<compile_context>
chip_gen: v6e
topology: v6e:2x2x1
jax: 0.10.0
libtpu: 0.0.40
codegen_flags: <defaults>
</compile_context>

<pallas_src>
import jax
import jax.numpy as jnp
import numpy as np
from jax.experimental import pallas as pl
from jax.experimental.pallas import tpu as pltpu

# ---- module hyper-parameters (small but consistent with the nn.Module) -----
Z_DIM = 10
IM_CHAN = 1
HIDDEN = 8          # hidden_dim kept small for a quick synthetic run
N_BATCH = 2
KSIZE = 4
BN_EPS = 1e-5
OUT_PAD = 128       # final-layer column padding -> lane-dense output stores

# (cin, cout, stride) for the 5 make_gen_block calls.
_BLOCKS = [
    (Z_DIM, HIDDEN * 8, 1),
    (HIDDEN * 8, HIDDEN * 4, 2),
    (HIDDEN * 4, HIDDEN * 2, 2),
    (HIDDEN * 2, HIDDEN, 1),
    (HIDDEN, IM_CHAN, 2),
]


def _layer_dims():
    dims, h = [], 1
    for cin, cout, stride in _BLOCKS:
        h_out = (h - 1) * stride + KSIZE
        dims.append((cin, cout, stride, h, h_out))
        h = h_out
    return dims


LAYER_DIMS = _layer_dims()          # 1 -> 4 -> 10 -> 22 -> 25 -> 52 (square maps)
N_LAYERS = len(LAYER_DIMS)
H_FINAL = LAYER_DIMS[-1][4]         # 52


def _round8(x):
    return ((x + 7) // 8) * 8


def _round_up(x, m):
    return ((x + m - 1) // m) * m


def _out_cols(li):
    _, cout, _, _, h_out = LAYER_DIMS[li]
    return OUT_PAD if li == N_LAYERS - 1 else h_out * cout


# scratch sizes (rows of the 4 stacked A@T_r blocks / widest (w,c) slab)
_MSCR_ROWS = max(KSIZE * _round8(N_BATCH * d[3]) for d in LAYER_DIMS)        # 224
_MSCR_COLS = _round_up(max(_out_cols(li) for li in range(N_LAYERS)), 128)    # 384


# ------------------------------ Pallas kernel --------------------------------
def _generator_kernel(*refs):
    """refs = (noise, [per layer: T, E_cat, (gb, S, S^T) | (b_last)], out, m_scr, st_scr)."""
    out_ref = refs[-3]
    m_scr = refs[-2]      # (224, 384) f32: four A@T_r blocks stacked along rows
    st_scr = refs[-1]     # (8, 384)   f32: stacked BN stats / scale-shift rows
    it = iter(refs[:-3])

    # canonical activation layout: rows = (n, h), cols = (w, c)
    x = next(it)[...]                                     # noise: (N, z) == (N*1, 1*z)
    # pad rows of m_scr may never be written for some layers; zero once so the
    # matching zero columns of E_cat always multiply a finite value.
    m_scr[...] = jnp.zeros_like(m_scr)

    for li, (cin, cout, stride, h_in, h_out) in enumerate(LAYER_DIMS):
        w_out = h_out                                      # square feature maps
        wc = _out_cols(li)
        nh_in = N_BATCH * h_in
        p = _round8(nh_in)

        t_ref = next(it)                                   # (4, W_in*C_in, wc)  bf16
        e_ref = next(it)                                   # (N*H_out, 4*p)      bf16 0/1

        # ConvTranspose2d: 4 width-Toeplitz matmuls staged into m_scr, then one
        # fused row-scatter matmul against E_cat.
        xb = x.astype(jnp.bfloat16)
        for r in range(KSIZE):
            m = jnp.dot(xb, t_ref[r], preferred_element_type=jnp.float32)
            m_scr[r * p:r * p + nh_in, 0:wc] = m
        m_cat = m_scr[0:KSIZE * p, 0:wc].astype(jnp.bfloat16)
        y = jnp.dot(e_ref[...], m_cat,
                    preferred_element_type=jnp.float32)    # (N*H_out, wc) f32

        if li < N_LAYERS - 1:
            # BatchNorm2d (training-mode batch stats) + ReLU.  The ConvTranspose
            # bias is dropped: it is exactly cancelled by the mean subtraction.
            gb_ref = next(it)                              # (2, C) f32: gamma, beta
            s_ref = next(it)                               # (wc, C) bf16: pool (w,c)->c
            stT_ref = next(it)                             # (C, wc) bf16: tile c->(w,c)
            cnt = float(N_BATCH * h_out * w_out)

            # per-channel mean / E[y^2] with ONE pool matmul over the (w,c) layout
            st_scr[0:1, 0:wc] = jnp.sum(y, axis=0, keepdims=True)
            st_scr[1:2, 0:wc] = jnp.sum(y * y, axis=0, keepdims=True)
            pooled = jnp.dot(st_scr[0:2, 0:wc], s_ref[...],
                             preferred_element_type=jnp.float32) * (1.0 / cnt)  # (2, C)
            mean = pooled[0:1, :]
            var = pooled[1:2, :] - mean * mean
            scale = gb_ref[0:1, :] * jax.lax.rsqrt(var + BN_EPS)                # (1, C)
            shift = gb_ref[1:2, :] - mean * scale                               # (1, C)

            # broadcast scale & shift across w with ONE matmul, then VPU affine+ReLU
            st_scr[0:1, 0:cout] = scale
            st_scr[1:2, 0:cout] = shift
            bcast = jnp.dot(st_scr[0:2, 0:cout], stT_ref[...],
                            preferred_element_type=jnp.float32)                 # (2, wc)
            x = jnp.maximum(y * bcast[0:1, :] + bcast[1:2, :], 0.0)
        else:
            b_ref = next(it)                               # (1, 1) f32 final conv bias
            out_ref[...] = jnp.tanh(y + b_ref[...])        # (N*52, 128), cropped outside


# ------------------------- host-side weight packing ---------------------------
def _pack_toeplitz(w_torch_layout, stride, w_in, pad_cols=None):
    """T[r, iw*Cin+ci, ow*Cout+co] = W[ci, co, r, ow - iw*stride] (0 outside kernel)."""
    w_np = np.asarray(w_torch_layout, dtype=np.float32)   # (Cin, Cout, k, k)
    cin, cout, k, _ = w_np.shape
    w_out = (w_in - 1) * stride + k
    iw = np.arange(w_in)[:, None]
    ow = np.arange(w_out)[None, :]
    q = ow - iw * stride                                   # (w_in, w_out) kernel col idx
    valid = (q >= 0) & (q < k)
    qc = np.clip(q, 0, k - 1)
    g = w_np[:, :, :, qc]                                   # (Cin, Cout, k, w_in, w_out)
    g = g * valid[None, None, None, :, :]
    g = np.transpose(g, (2, 3, 0, 4, 1)).reshape(k, w_in * cin, w_out * cout)
    if pad_cols is not None and pad_cols > w_out * cout:
        g = np.pad(g, ((0, 0), (0, 0), (0, pad_cols - w_out * cout)))
    return g


def _pack_scatter_cat(h_in, stride, n):
    """E_cat = [E_0 | E_1 | E_2 | E_3], E_r = blockdiag_n([oh == ih*stride + r]).

    Each E_r block is padded to an 8-row-aligned column width `p` with zero
    columns so the kernel-side stacking of A@T_r blocks can use aligned offsets."""
    h_out = (h_in - 1) * stride + KSIZE
    nh_in, nh_out = n * h_in, n * h_out
    p = _round8(nh_in)
    oh = np.arange(h_out)[:, None]
    ih = np.arange(h_in)[None, :]
    e_cat = np.zeros((nh_out, KSIZE * p), np.float32)
    for r in range(KSIZE):
        e = (oh == ih * stride + r).astype(np.float32)
        e_cat[:, r * p:r * p + nh_in] = np.kron(np.eye(n, dtype=np.float32), e)
    return e_cat


def pack_params(params):
    """Convert torch-layout params into the kernel's flat argument list (done once)."""
    packed = []
    for li, ((cin, cout, stride, h_in, h_out), p) in enumerate(zip(LAYER_DIMS, params)):
        final = li == N_LAYERS - 1
        t = _pack_toeplitz(p["w"], stride, h_in, pad_cols=OUT_PAD if final else None)
        packed.append(jnp.asarray(t, dtype=jnp.bfloat16))                 # T_r, bf16
        packed.append(jnp.asarray(_pack_scatter_cat(h_in, stride, N_BATCH),
                                  dtype=jnp.bfloat16))                    # E_cat (0/1)
        if not final:
            # NOTE: the ConvTranspose bias is intentionally NOT packed here — with
            # training-mode BatchNorm it is exactly cancelled by mean subtraction.
            gb = np.stack([np.asarray(p["gamma"], np.float32),
                           np.asarray(p["beta"], np.float32)])            # (2, C)
            s = np.tile(np.eye(cout, dtype=np.float32), (h_out, 1))       # (W*C, C)
            packed.append(jnp.asarray(gb, dtype=jnp.float32))
            packed.append(jnp.asarray(s, dtype=jnp.bfloat16))
            packed.append(jnp.asarray(np.ascontiguousarray(s.T), dtype=jnp.bfloat16))
        else:
            packed.append(jnp.asarray(np.asarray(p["b"], np.float32).reshape(1, 1)))
    return packed


# ------------------------------ parameters ------------------------------------
def init_params(key):
    params = []
    for li, (cin, cout, stride, h_in, h_out) in enumerate(LAYER_DIMS):
        key, k1, k2, k3, k4 = jax.random.split(key, 5)
        scale = 1.0 / float(np.sqrt(cin * KSIZE * KSIZE))
        w = jax.random.uniform(k1, (cin, cout, KSIZE, KSIZE), jnp.float32, -scale, scale)
        b = jax.random.uniform(k2, (cout,), jnp.float32, -scale, scale)
        if li < N_LAYERS - 1:
            gamma = 1.0 + 0.1 * jax.random.normal(k3, (cout,), jnp.float32)
            beta = 0.1 * jax.random.normal(k4, (cout,), jnp.float32)
        else:
            gamma = beta = None
        params.append(dict(w=w, b=b, gamma=gamma, beta=beta, stride=stride))
    return params


# -------------------------------- forward -------------------------------------
def follower_generator_forward(noise, packed):
    args = [noise.astype(jnp.float32)] + list(packed)
    vmem_spec = pl.BlockSpec(memory_space=pltpu.MemorySpace.VMEM)
    out = pl.pallas_call(
        _generator_kernel,
        # no grid -> single invocation, single (not double-buffered) VMEM copy of
        # every weight; whole problem stays resident (< 3 MB incl. bf16 weights).
        in_specs=[vmem_spec] * len(args),
        out_specs=vmem_spec,
        out_shape=jax.ShapeDtypeStruct((N_BATCH * H_FINAL, OUT_PAD), jnp.float32),
        scratch_shapes=[
            pltpu.VMEM((_MSCR_ROWS, _MSCR_COLS), jnp.float32),   # stacked A@T_r blocks
            pltpu.VMEM((8, _MSCR_COLS), jnp.float32),            # BN stats / scale-shift
        ],
    )(*args)
    # (N*H, 128) -> crop the lane padding -> (N, 1, H, W).
    # row-major (N*H, W) IS NCHW here because im_chan == 1.
    return out[:, :H_FINAL].reshape(N_BATCH, IM_CHAN, H_FINAL, H_FINAL)
    # NOTE: for many-noise-batch throughput, add a leading "parallel" grid axis over
    # (n,h) row chunks with constant weight index_maps (weights stay VMEM-resident
    # across steps, both v7x TensorCores used) and restructure BN as two passes.


if __name__ == "__main__":
    key = jax.random.PRNGKey(0)
    key, pkey, nkey = jax.random.split(key, 3)
    params = init_params(pkey)
    packed = pack_params(params)                    # one-time weight layout packing
    noise = jax.random.normal(nkey, (N_BATCH, Z_DIM), jnp.float32)

    fwd = jax.jit(follower_generator_forward)
    out = fwd(noise, packed)
    jax.block_until_ready(out)

    assert out.shape == (N_BATCH, IM_CHAN, H_FINAL, H_FINAL), out.shape
    assert bool(jnp.all(jnp.isfinite(out)))
    print("KERNEL_OK")
</pallas_src>

<mosaic_0001>
module attributes {stable_mosaic.version = 11 : i64} {
  func.func @_generator_kernel(%arg0: memref<2x10xf32, #tpu.memory_space<vmem>>, %arg1: memref<4x10x256xbf16, #tpu.memory_space<vmem>>, %arg2: memref<8x32xbf16, #tpu.memory_space<vmem>>, %arg3: memref<2x64xf32, #tpu.memory_space<vmem>>, %arg4: memref<256x64xbf16, #tpu.memory_space<vmem>>, %arg5: memref<64x256xbf16, #tpu.memory_space<vmem>>, %arg6: memref<4x256x320xbf16, #tpu.memory_space<vmem>>, %arg7: memref<20x32xbf16, #tpu.memory_space<vmem>>, %arg8: memref<2x32xf32, #tpu.memory_space<vmem>>, %arg9: memref<320x32xbf16, #tpu.memory_space<vmem>>, %arg10: memref<32x320xbf16, #tpu.memory_space<vmem>>, %arg11: memref<4x320x352xbf16, #tpu.memory_space<vmem>>, %arg12: memref<44x96xbf16, #tpu.memory_space<vmem>>, %arg13: memref<2x16xf32, #tpu.memory_space<vmem>>, %arg14: memref<352x16xbf16, #tpu.memory_space<vmem>>, %arg15: memref<16x352xbf16, #tpu.memory_space<vmem>>, %arg16: memref<4x352x200xbf16, #tpu.memory_space<vmem>>, %arg17: memref<50x192xbf16, #tpu.memory_space<vmem>>, %arg18: memref<2x8xf32, #tpu.memory_space<vmem>>, %arg19: memref<200x8xbf16, #tpu.memory_space<vmem>>, %arg20: memref<8x200xbf16, #tpu.memory_space<vmem>>, %arg21: memref<4x200x128xbf16, #tpu.memory_space<vmem>>, %arg22: memref<104x224xbf16, #tpu.memory_space<vmem>>, %arg23: memref<1x1xf32, #tpu.memory_space<vmem>>, %arg24: memref<104x128xf32, #tpu.memory_space<vmem>>, %arg25: memref<224x384xf32, #tpu.memory_space<vmem>>, %arg26: memref<8x384xf32, #tpu.memory_space<vmem>>) attributes {dimension_semantics = [], scalar_prefetch = 0 : i64, scratch_operands = 2 : i64, tpu.core_type = #tpu.core_type<tc>} {
    %c0 = arith.constant 0 : index
    %c0_0 = arith.constant 0 : index
    %0 = vector.load %arg0[%c0, %c0_0] : memref<2x10xf32, #tpu.memory_space<vmem>>, vector<2x10xf32>
    %cst = arith.constant 0.000000e+00 : f32
    %1 = vector.broadcast %cst : f32 to vector<224x384xf32>
    %c0_1 = arith.constant 0 : index
    %c0_2 = arith.constant 0 : index
    %2 = vector.load %arg25[%c0_1, %c0_2] : memref<224x384xf32, #tpu.memory_space<vmem>>, vector<224x384xf32>
    tpu.vector_store %arg25[%c0_1, %c0_2], %1 {strides = array<i32>} : memref<224x384xf32, #tpu.memory_space<vmem>>, vector<224x384xf32>,
    %3 = arith.truncf %0 : vector<2x10xf32> to vector<2x10xbf16>
    %c0_3 = arith.constant 0 : index
    %c0_4 = arith.constant 0 : index
    %c0_5 = arith.constant 0 : index
    %4 = vector.load %arg1[%c0_3, %c0_4, %c0_5] : memref<4x10x256xbf16, #tpu.memory_space<vmem>>, vector<1x10x256xbf16>
    %5 = vector.shape_cast %4 : vector<1x10x256xbf16> to vector<10x256xbf16>
    %cst_6 = arith.constant dense<0.000000e+00> : vector<2x256xf32>
    %6 = tpu.matmul %3, %5, %cst_6 {dimension_numbers = #tpu.dot_dimension_numbers<[1], [0], [0], [1], [0, 0, 1, 1], [], []>} : vector<2x10xbf16>, vector<10x256xbf16>, vector<2x256xf32> -> vector<2x256xf32>
    %c0_7 = arith.constant 0 : index
    %c0_8 = arith.constant 0 : index
    %7 = vector.load %arg25[%c0_7, %c0_8] : memref<224x384xf32, #tpu.memory_space<vmem>>, vector<2x256xf32>
    tpu.vector_store %arg25[%c0_7, %c0_8], %6 {strides = array<i32>} : memref<224x384xf32, #tpu.memory_space<vmem>>, vector<2x256xf32>,
    %c1 = arith.constant 1 : index
    %c0_9 = arith.constant 0 : index
    %c0_10 = arith.constant 0 : index
    %8 = vector.load %arg1[%c1, %c0_9, %c0_10] : memref<4x10x256xbf16, #tpu.memory_space<vmem>>, vector<1x10x256xbf16>
    %9 = vector.shape_cast %8 : vector<1x10x256xbf16> to vector<10x256xbf16>
    %cst_11 = arith.constant dense<0.000000e+00> : vector<2x256xf32>
    %10 = tpu.matmul %3, %9, %cst_11 {dimension_numbers = #tpu.dot_dimension_numbers<[1], [0], [0], [1], [0, 0, 1, 1], [], []>} : vector<2x10xbf16>, vector<10x256xbf16>, vector<2x256xf32> -> vector<2x256xf32>
    %c8 = arith.constant 8 : index
    %c0_12 = arith.constant 0 : index
    %11 = vector.load %arg25[%c8, %c0_12] : memref<224x384xf32, #tpu.memory_space<vmem>>, vector<2x256xf32>
    tpu.vector_store %arg25[%c8, %c0_12], %10 {strides = array<i32>} : memref<224x384xf32, #tpu.memory_space<vmem>>, vector<2x256xf32>,
    %c2 = arith.constant 2 : index
    %c0_13 = arith.constant 0 : index
    %c0_14 = arith.constant 0 : index
    %12 = vector.load %arg1[%c2, %c0_13, %c0_14] : memref<4x10x256xbf16, #tpu.memory_space<vmem>>, vector<1x10x256xbf16>
    %13 = vector.shape_cast %12 : vector<1x10x256xbf16> to vector<10x256xbf16>
    %cst_15 = arith.constant dense<0.000000e+00> : vector<2x256xf32>
    %14 = tpu.matmul %3, %13, %cst_15 {dimension_numbers = #tpu.dot_dimension_numbers<[1], [0], [0], [1], [0, 0, 1, 1], [], []>} : vector<2x10xbf16>, vector<10x256xbf16>, vector<2x256xf32> -> vector<2x256xf32>
    %c16 = arith.constant 16 : index
    %c0_16 = arith.constant 0 : index
    %15 = vector.load %arg25[%c16, %c0_16] : memref<224x384xf32, #tpu.memory_space<vmem>>, vector<2x256xf32>
    tpu.vector_store %arg25[%c16, %c0_16], %14 {strides = array<i32>} : memref<224x384xf32, #tpu.memory_space<vmem>>, vector<2x256xf32>,
    %c3 = arith.constant 3 : index
    %c0_17 = arith.constant 0 : index
    %c0_18 = arith.constant 0 : index
    %16 = vector.load %arg1[%c3, %c0_17, %c0_18] : memref<4x10x256xbf16, #tpu.memory_space<vmem>>, vector<1x10x256xbf16>
    %17 = vector.shape_cast %16 : vector<1x10x256xbf16> to vector<10x256xbf16>
    %cst_19 = arith.constant dense<0.000000e+00> : vector<2x256xf32>
    %18 = tpu.matmul %3, %17, %cst_19 {dimension_numbers = #tpu.dot_dimension_numbers<[1], [0], [0], [1], [0, 0, 1, 1], [], []>} : vector<2x10xbf16>, vector<10x256xbf16>, vector<2x256xf32> -> vector<2x256xf32>
    %c24 = arith.constant 24 : index
    %c0_20 = arith.constant 0 : index
    %19 = vector.load %arg25[%c24, %c0_20] : memref<224x384xf32, #tpu.memory_space<vmem>>, vector<2x256xf32>
    tpu.vector_store %arg25[%c24, %c0_20], %18 {strides = array<i32>} : memref<224x384xf32, #tpu.memory_space<vmem>>, vector<2x256xf32>,
    %c0_21 = arith.constant 0 : index
    %c0_22 = arith.constant 0 : index
    %20 = vector.load %arg25[%c0_21, %c0_22] : memref<224x384xf32, #tpu.memory_space<vmem>>, vector<32x256xf32>
    %21 = arith.truncf %20 : vector<32x256xf32> to vector<32x256xbf16>
    %c0_23 = arith.constant 0 : index
    %c0_24 = arith.constant 0 : index
    %22 = vector.load %arg2[%c0_23, %c0_24] : memref<8x32xbf16, #tpu.memory_space<vmem>>, vector<8x32xbf16>
    %cst_25 = arith.constant dense<0.000000e+00> : vector<8x256xf32>
    %23 = tpu.matmul %22, %21, %cst_25 {dimension_numbers = #tpu.dot_dimension_numbers<[1], [0], [0], [1], [0, 0, 1, 1], [], []>} : vector<8x32xbf16>, vector<32x256xbf16>, vector<8x256xf32> -> vector<8x256xf32>
    %cst_26 = arith.constant dense<0.000000e+00> : vector<256xf32>
    %24 = vector.multi_reduction <add>, %23, %cst_26 [0] : vector<8x256xf32> to vector<256xf32>
    %25 = vector.shape_cast %24 : vector<256xf32> to vector<1x256xf32>
    %c0_27 = arith.constant 0 : index
    %c0_28 = arith.constant 0 : index
    %26 = vector.load %arg26[%c0_27, %c0_28] : memref<8x384xf32, #tpu.memory_space<vmem>>, vector<1x256xf32>
    tpu.vector_store %arg26[%c0_27, %c0_28], %25 {strides = array<i32>} : memref<8x384xf32, #tpu.memory_space<vmem>>, vector<1x256xf32>,
    %27 = arith.mulf %23, %23 : vector<8x256xf32>
    %cst_29 = arith.constant dense<0.000000e+00> : vector<256xf32>
    %28 = vector.multi_reduction <add>, %27, %cst_29 [0] : vector<8x256xf32> to vector<256xf32>
    %29 = vector.shape_cast %28 : vector<256xf32> to vector<1x256xf32>
    %c1_30 = arith.constant 1 : index
    %c0_31 = arith.constant 0 : index
    %30 = vector.load %arg26[%c1_30, %c0_31] : memref<8x384xf32, #tpu.memory_space<vmem>>, vector<1x256xf32>
    tpu.vector_store %arg26[%c1_30, %c0_31], %29 {strides = array<i32>} : memref<8x384xf32, #tpu.memory_space<vmem>>, vector<1x256xf32>,
    %c0_32 = arith.constant 0 : index
    %c0_33 = arith.constant 0 : index
    %31 = vector.load %arg26[%c0_32, %c0_33] : memref<8x384xf32, #tpu.memory_space<vmem>>, vector<2x256xf32>
    %c0_34 = arith.constant 0 : index
    %c0_35 = arith.constant 0 : index
    %32 = vector.load %arg4[%c0_34, %c0_35] : memref<256x64xbf16, #tpu.memory_space<vmem>>, vector<256x64xbf16>
    %cst_36 = arith.constant dense<0.000000e+00> : vector<2x64xf32>
    %33 = tpu.matmul %31, %32, %cst_36 {dimension_numbers = #tpu.dot_dimension_numbers<[1], [0], [0], [1], [0, 0, 1, 1], [], []>} : vector<2x256xf32>, vector<256x64xbf16>, vector<2x64xf32> -> vector<2x64xf32>
    %cst_37 = arith.constant 3.125000e-02 : f32
    %34 = vector.broadcast %cst_37 : f32 to vector<2x64xf32>
    %35 = arith.mulf %33, %34 : vector<2x64xf32>
    %36 = vector.extract_strided_slice %35 {offsets = [0, 0], sizes = [1, 64], strides = [1, 1]} : vector<2x64xf32> to vector<1x64xf32>
    %37 = vector.extract_strided_slice %35 {offsets = [1, 0], sizes = [1, 64], strides = [1, 1]} : vector<2x64xf32> to vector<1x64xf32>
    %38 = arith.mulf %36, %36 : vector<1x64xf32>
    %39 = arith.subf %37, %38 : vector<1x64xf32>
    %c0_38 = arith.constant 0 : index
    %c0_39 = arith.constant 0 : index
    %40 = vector.load %arg3[%c0_38, %c0_39] : memref<2x64xf32, #tpu.memory_space<vmem>>, vector<1x64xf32>
    %cst_40 = arith.constant 9.99999974E-6 : f32
    %41 = vector.broadcast %cst_40 : f32 to vector<1x64xf32>
    %42 = arith.addf %39, %41 : vector<1x64xf32>
    %43 = math.rsqrt %42 : vector<1x64xf32>
    %44 = arith.mulf %40, %43 : vector<1x64xf32>
    %c1_41 = arith.constant 1 : index
    %c0_42 = arith.constant 0 : index
    %45 = vector.load %arg3[%c1_41, %c0_42] : memref<2x64xf32, #tpu.memory_space<vmem>>, vector<1x64xf32>
    %46 = arith.mulf %36, %44 : vector<1x64xf32>
    %47 = arith.subf %45, %46 : vector<1x64xf32>
    %c0_43 = arith.constant 0 : index
    %c0_44 = arith.constant 0 : index
    %48 = vector.load %arg26[%c0_43, %c0_44] : memref<8x384xf32, #tpu.memory_space<vmem>>, vector<1x64xf32>
    tpu.vector_store %arg26[%c0_43, %c0_44], %44 {strides = array<i32>} : memref<8x384xf32, #tpu.memory_space<vmem>>, vector<1x64xf32>,
    %c1_45 = arith.constant 1 : index
    %c0_46 = arith.constant 0 : index
    %49 = vector.load %arg26[%c1_45, %c0_46] : memref<8x384xf32, #tpu.memory_space<vmem>>, vector<1x64xf32>
    tpu.vector_store %arg26[%c1_45, %c0_46], %47 {strides = array<i32>} : memref<8x384xf32, #tpu.memory_space<vmem>>, vector<1x64xf32>,
    %c0_47 = arith.constant 0 : index
    %c0_48 = arith.constant 0 : index
    %50 = vector.load %arg26[%c0_47, %c0_48] : memref<8x384xf32, #tpu.memory_space<vmem>>, vector<2x64xf32>
    %c0_49 = arith.constant 0 : index
    %c0_50 = arith.constant 0 : index
    %51 = vector.load %arg5[%c0_49, %c0_50] : memref<64x256xbf16, #tpu.memory_space<vmem>>, vector<64x256xbf16>
    %cst_51 = arith.constant dense<0.000000e+00> : vector<2x256xf32>
    %52 = tpu.matmul %50, %51, %cst_51 {dimension_numbers = #tpu.dot_dimension_numbers<[1], [0], [0], [1], [0, 0, 1, 1], [], []>} : vector<2x64xf32>, vector<64x256xbf16>, vector<2x256xf32> -> vector<2x256xf32>
    %53 = vector.extract_strided_slice %52 {offsets = [0, 0], sizes = [1, 256], strides = [1, 1]} : vector<2x256xf32> to vector<1x256xf32>
    %54 = vector.broadcast %53 : vector<1x256xf32> to vector<8x256xf32>
    %55 = arith.mulf %23, %54 : vector<8x256xf32>
    %56 = vector.extract_strided_slice %52 {offsets = [1, 0], sizes = [1, 256], strides = [1, 1]} : vector<2x256xf32> to vector<1x256xf32>
    %57 = vector.broadcast %56 : vector<1x256xf32> to vector<8x256xf32>
    %58 = arith.addf %55, %57 : vector<8x256xf32>
    %cst_52 = arith.constant 0.000000e+00 : f32
    %59 = vector.broadcast %cst_52 : f32 to vector<8x256xf32>
    %60 = arith.maximumf %58, %59 : vector<8x256xf32>
    %61 = arith.truncf %60 : vector<8x256xf32> to vector<8x256xbf16>
    %c0_53 = arith.constant 0 : index
    %c0_54 = arith.constant 0 : index
    %c0_55 = arith.constant 0 : index
    %62 = vector.load %arg6[%c0_53, %c0_54, %c0_55] : memref<4x256x320xbf16, #tpu.memory_space<vmem>>, vector<1x256x320xbf16>
    %63 = vector.shape_cast %62 : vector<1x256x320xbf16> to vector<256x320xbf16>
    %cst_56 = arith.constant dense<0.000000e+00> : vector<8x320xf32>
    %64 = tpu.matmul %61, %63, %cst_56 {dimension_numbers = #tpu.dot_dimension_numbers<[1], [0], [0], [1], [0, 0, 1, 1], [], []>} : vector<8x256xbf16>, vector<256x320xbf16>, vector<8x320xf32> -> vector<8x320xf32>
    %c0_57 = arith.constant 0 : index
    %c0_58 = arith.constant 0 : index
    %65 = vector.load %arg25[%c0_57, %c0_58] : memref<224x384xf32, #tpu.memory_space<vmem>>, vector<8x320xf32>
    tpu.vector_store %arg25[%c0_57, %c0_58], %64 {strides = array<i32>} : memref<224x384xf32, #tpu.memory_space<vmem>>, vector<8x320xf32>,
    %c1_59 = arith.constant 1 : index
    %c0_60 = arith.constant 0 : index
    %c0_61 = arith.constant 0 : index
    %66 = vector.load %arg6[%c1_59, %c0_60, %c0_61] : memref<4x256x320xbf16, #tpu.memory_space<vmem>>, vector<1x256x320xbf16>
    %67 = vector.shape_cast %66 : vector<1x256x320xbf16> to vector<256x320xbf16>
    %cst_62 = arith.constant dense<0.000000e+00> : vector<8x320xf32>
    %68 = tpu.matmul %61, %67, %cst_62 {dimension_numbers = #tpu.dot_dimension_numbers<[1], [0], [0], [1], [0, 0, 1, 1], [], []>} : vector<8x256xbf16>, vector<256x320xbf16>, vector<8x320xf32> -> vector<8x320xf32>
    %c8_63 = arith.constant 8 : index
    %c0_64 = arith.constant 0 : index
    %69 = vector.load %arg25[%c8_63, %c0_64] : memref<224x384xf32, #tpu.memory_space<vmem>>, vector<8x320xf32>
    tpu.vector_store %arg25[%c8_63, %c0_64], %68 {strides = array<i32>} : memref<224x384xf32, #tpu.memory_space<vmem>>, vector<8x320xf32>,
    %c2_65 = arith.constant 2 : index
    %c0_66 = arith.constant 0 : index
    %c0_67 = arith.constant 0 : index
    %70 = vector.load %arg6[%c2_65, %c0_66, %c0_67] : memref<4x256x320xbf16, #tpu.memory_space<vmem>>, vector<1x256x320xbf16>
    %71 = vector.shape_cast %70 : vector<1x256x320xbf16> to vector<256x320xbf16>
    %cst_68 = arith.constant dense<0.000000e+00> : vector<8x320xf32>
    %72 = tpu.matmul %61, %71, %cst_68 {dimension_numbers = #tpu.dot_dimension_numbers<[1], [0], [0], [1], [0, 0, 1, 1], [], []>} : vector<8x256xbf16>, vector<256x320xbf16>, vector<8x320xf32> -> vector<8x320xf32>
    %c16_69 = arith.constant 16 : index
    %c0_70 = arith.constant 0 : index
    %73 = vector.load %arg25[%c16_69, %c0_70] : memref<224x384xf32, #tpu.memory_space<vmem>>, vector<8x320xf32>
    tpu.vector_store %arg25[%c16_69, %c0_70], %72 {strides = array<i32>} : memref<224x384xf32, #tpu.memory_space<vmem>>, vector<8x320xf32>,
    %c3_71 = arith.constant 3 : index
    %c0_72 = arith.constant 0 : index
    %c0_73 = arith.constant 0 : index
    %74 = vector.load %arg6[%c3_71, %c0_72, %c0_73] : memref<4x256x320xbf16, #tpu.memory_space<vmem>>, vector<1x256x320xbf16>
    %75 = vector.shape_cast %74 : vector<1x256x320xbf16> to vector<256x320xbf16>
    %cst_74 = arith.constant dense<0.000000e+00> : vector<8x320xf32>
    %76 = tpu.matmul %61, %75, %cst_74 {dimension_numbers = #tpu.dot_dimension_numbers<[1], [0], [0], [1], [0, 0, 1, 1], [], []>} : vector<8x256xbf16>, vector<256x320xbf16>, vector<8x320xf32> -> vector<8x320xf32>
    %c24_75 = arith.constant 24 : index
    %c0_76 = arith.constant 0 : index
    %77 = vector.load %arg25[%c24_75, %c0_76] : memref<224x384xf32, #tpu.memory_space<vmem>>, vector<8x320xf32>
    tpu.vector_store %arg25[%c24_75, %c0_76], %76 {strides = array<i32>} : memref<224x384xf32, #tpu.memory_space<vmem>>, vector<8x320xf32>,
    %c0_77 = arith.constant 0 : index
    %c0_78 = arith.constant 0 : index
    %78 = vector.load %arg25[%c0_77, %c0_78] : memref<224x384xf32, #tpu.memory_space<vmem>>, vector<32x320xf32>
    %79 = arith.truncf %78 : vector<32x320xf32> to vector<32x320xbf16>
    %c0_79 = arith.constant 0 : index
    %c0_80 = arith.constant 0 : index
    %80 = vector.load %arg7[%c0_79, %c0_80] : memref<20x32xbf16, #tpu.memory_space<vmem>>, vector<20x32xbf16>
    %cst_81 = arith.constant dense<0.000000e+00> : vector<20x320xf32>
    %81 = tpu.matmul %80, %79, %cst_81 {dimension_numbers = #tpu.dot_dimension_numbers<[1], [0], [0], [1], [0, 0, 1, 1], [], []>} : vector<20x32xbf16>, vector<32x320xbf16>, vector<20x320xf32> -> vector<20x320xf32>
    %cst_82 = arith.constant dense<0.000000e+00> : vector<320xf32>
    %82 = vector.multi_reduction <add>, %81, %cst_82 [0] : vector<20x320xf32> to vector<320xf32>
    %83 = vector.shape_cast %82 : vector<320xf32> to vector<1x320xf32>
    %c0_83 = arith.constant 0 : index
    %c0_84 = arith.constant 0 : index
    %84 = vector.load %arg26[%c0_83, %c0_84] : memref<8x384xf32, #tpu.memory_space<vmem>>, vector<1x320xf32>
    tpu.vector_store %arg26[%c0_83, %c0_84], %83 {strides = array<i32>} : memref<8x384xf32, #tpu.memory_space<vmem>>, vector<1x320xf32>,
    %85 = arith.mulf %81, %81 : vector<20x320xf32>
    %cst_85 = arith.constant dense<0.000000e+00> : vector<320xf32>
    %86 = vector.multi_reduction <add>, %85, %cst_85 [0] : vector<20x320xf32> to vector<320xf32>
    %87 = vector.shape_cast %86 : vector<320xf32> to vector<1x320xf32>
    %c1_86 = arith.constant 1 : index
    %c0_87 = arith.constant 0 : index
    %88 = vector.load %arg26[%c1_86, %c0_87] : memref<8x384xf32, #tpu.memory_space<vmem>>, vector<1x320xf32>
    tpu.vector_store %arg26[%c1_86, %c0_87], %87 {strides = array<i32>} : memref<8x384xf32, #tpu.memory_space<vmem>>, vector<1x320xf32>,
    %c0_88 = arith.constant 0 : index
    %c0_89 = arith.constant 0 : index
    %89 = vector.load %arg26[%c0_88, %c0_89] : memref<8x384xf32, #tpu.memory_space<vmem>>, vector<2x320xf32>
    %c0_90 = arith.constant 0 : index
    %c0_91 = arith.constant 0 : index
    %90 = vector.load %arg9[%c0_90, %c0_91] : memref<320x32xbf16, #tpu.memory_space<vmem>>, vector<320x32xbf16>
    %cst_92 = arith.constant dense<0.000000e+00> : vector<2x32xf32>
    %91 = tpu.matmul %89, %90, %cst_92 {dimension_numbers = #tpu.dot_dimension_numbers<[1], [0], [0], [1], [0, 0, 1, 1], [], []>} : vector<2x320xf32>, vector<320x32xbf16>, vector<2x32xf32> -> vector<2x32xf32>
    %cst_93 = arith.constant 5.000000e-03 : f32
    %92 = vector.broadcast %cst_93 : f32 to vector<2x32xf32>
    %93 = arith.mulf %91, %92 : vector<2x32xf32>
    %94 = vector.extract_strided_slice %93 {offsets = [0, 0], sizes = [1, 32], strides = [1, 1]} : vector<2x32xf32> to vector<1x32xf32>
    %95 = vector.extract_strided_slice %93 {offsets = [1, 0], sizes = [1, 32], strides = [1, 1]} : vector<2x32xf32> to vector<1x32xf32>
    %96 = arith.mulf %94, %94 : vector<1x32xf32>
    %97 = arith.subf %95, %96 : vector<1x32xf32>
    %c0_94 = arith.constant 0 : index
    %c0_95 = arith.constant 0 : index
    %98 = vector.load %arg8[%c0_94, %c0_95] : memref<2x32xf32, #tpu.memory_space<vmem>>, vector<1x32xf32>
    %cst_96 = arith.constant 9.99999974E-6 : f32
    %99 = vector.broadcast %cst_96 : f32 to vector<1x32xf32>
    %100 = arith.addf %97, %99 : vector<1x32xf32>
    %101 = math.rsqrt %100 : vector<1x32xf32>
    %102 = arith.mulf %98, %101 : vector<1x32xf32>
    %c1_97 = arith.constant 1 : index
    %c0_98 = arith.constant 0 : index
    %103 = vector.load %arg8[%c1_97, %c0_98] : memref<2x32xf32, #tpu.memory_space<vmem>>, vector<1x32xf32>
    %104 = arith.mulf %94, %102 : vector<1x32xf32>
    %105 = arith.subf %103, %104 : vector<1x32xf32>
    %c0_99 = arith.constant 0 : index
    %c0_100 = arith.constant 0 : index
    %106 = vector.load %arg26[%c0_99, %c0_100] : memref<8x384xf32, #tpu.memory_space<vmem>>, vector<1x32xf32>
    tpu.vector_store %arg26[%c0_99, %c0_100], %102 {strides = array<i32>} : memref<8x384xf32, #tpu.memory_space<vmem>>, vector<1x32xf32>,
    %c1_101 = arith.constant 1 : index
    %c0_102 = arith.constant 0 : index
    %107 = vector.load %arg26[%c1_101, %c0_102] : memref<8x384xf32, #tpu.memory_space<vmem>>, vector<1x32xf32>
    tpu.vector_store %arg26[%c1_101, %c0_102], %105 {strides = array<i32>} : memref<8x384xf32, #tpu.memory_space<vmem>>, vector<1x32xf32>,
    %c0_103 = arith.constant 0 : index
    %c0_104 = arith.constant 0 : index
    %108 = vector.load %arg26[%c0_103, %c0_104] : memref<8x384xf32, #tpu.memory_space<vmem>>, vector<2x32xf32>
    %c0_105 = arith.constant 0 : index
    %c0_106 = arith.constant 0 : index
    %109 = vector.load %arg10[%c0_105, %c0_106] : memref<32x320xbf16, #tpu.memory_space<vmem>>, vector<32x320xbf16>
    %cst_107 = arith.constant dense<0.000000e+00> : vector<2x320xf32>
    %110 = tpu.matmul %108, %109, %cst_107 {dimension_numbers = #tpu.dot_dimension_numbers<[1], [0], [0], [1], [0, 0, 1, 1], [], []>} : vector<2x32xf32>, vector<32x320xbf16>, vector<2x320xf32> -> vector<2x320xf32>
    %111 = vector.extract_strided_slice %110 {offsets = [0, 0], sizes = [1, 320], strides = [1, 1]} : vector<2x320xf32> to vector<1x320xf32>
    %112 = vector.broadcast %111 : vector<1x320xf32> to vector<20x320xf32>
    %113 = arith.mulf %81, %112 : vector<20x320xf32>
    %114 = vector.extract_strided_slice %110 {offsets = [1, 0], sizes = [1, 320], strides = [1, 1]} : vector<2x320xf32> to vector<1x320xf32>
    %115 = vector.broadcast %114 : vector<1x320xf32> to vector<20x320xf32>
    %116 = arith.addf %113, %115 : vector<20x320xf32>
    %cst_108 = arith.constant 0.000000e+00 : f32
    %117 = vector.broadcast %cst_108 : f32 to vector<20x320xf32>
    %118 = arith.maximumf %116, %117 : vector<20x320xf32>
    %119 = arith.truncf %118 : vector<20x320xf32> to vector<20x320xbf16>
    %c0_109 = arith.constant 0 : index
    %c0_110 = arith.constant 0 : index
    %c0_111 = arith.constant 0 : index
    %120 = vector.load %arg11[%c0_109, %c0_110, %c0_111] : memref<4x320x352xbf16, #tpu.memory_space<vmem>>, vector<1x320x352xbf16>
    %121 = vector.shape_cast %120 : vector<1x320x352xbf16> to vector<320x352xbf16>
    %cst_112 = arith.constant dense<0.000000e+00> : vector<20x352xf32>
    %122 = tpu.matmul %119, %121, %cst_112 {dimension_numbers = #tpu.dot_dimension_numbers<[1], [0], [0], [1], [0, 0, 1, 1], [], []>} : vector<20x320xbf16>, vector<320x352xbf16>, vector<20x352xf32> -> vector<20x352xf32>
    %c0_113 = arith.constant 0 : index
    %c0_114 = arith.constant 0 : index
    %123 = vector.load %arg25[%c0_113, %c0_114] : memref<224x384xf32, #tpu.memory_space<vmem>>, vector<20x352xf32>
    tpu.vector_store %arg25[%c0_113, %c0_114], %122 {strides = array<i32>} : memref<224x384xf32, #tpu.memory_space<vmem>>, vector<20x352xf32>,
    %c1_115 = arith.constant 1 : index
    %c0_116 = arith.constant 0 : index
    %c0_117 = arith.constant 0 : index
    %124 = vector.load %arg11[%c1_115, %c0_116, %c0_117] : memref<4x320x352xbf16, #tpu.memory_space<vmem>>, vector<1x320x352xbf16>
    %125 = vector.shape_cast %124 : vector<1x320x352xbf16> to vector<320x352xbf16>
    %cst_118 = arith.constant dense<0.000000e+00> : vector<20x352xf32>
    %126 = tpu.matmul %119, %125, %cst_118 {dimension_numbers = #tpu.dot_dimension_numbers<[1], [0], [0], [1], [0, 0, 1, 1], [], []>} : vector<20x320xbf16>, vector<320x352xbf16>, vector<20x352xf32> -> vector<20x352xf32>
    %c24_119 = arith.constant 24 : index
    %c0_120 = arith.constant 0 : index
    %127 = vector.load %arg25[%c24_119, %c0_120] : memref<224x384xf32, #tpu.memory_space<vmem>>, vector<20x352xf32>
    tpu.vector_store %arg25[%c24_119, %c0_120], %126 {strides = array<i32>} : memref<224x384xf32, #tpu.memory_space<vmem>>, vector<20x352xf32>,
    %c2_121 = arith.constant 2 : index
    %c0_122 = arith.constant 0 : index
    %c0_123 = arith.constant 0 : index
    %128 = vector.load %arg11[%c2_121, %c0_122, %c0_123] : memref<4x320x352xbf16, #tpu.memory_space<vmem>>, vector<1x320x352xbf16>
    %129 = vector.shape_cast %128 : vector<1x320x352xbf16> to vector<320x352xbf16>
    %cst_124 = arith.constant dense<0.000000e+00> : vector<20x352xf32>
    %130 = tpu.matmul %119, %129, %cst_124 {dimension_numbers = #tpu.dot_dimension_numbers<[1], [0], [0], [1], [0, 0, 1, 1], [], []>} : vector<20x320xbf16>, vector<320x352xbf16>, vector<20x352xf32> -> vector<20x352xf32>
    %c48 = arith.constant 48 : index
    %c0_125 = arith.constant 0 : index
    %131 = vector.load %arg25[%c48, %c0_125] : memref<224x384xf32, #tpu.memory_space<vmem>>, vector<20x352xf32>
    tpu.vector_store %arg25[%c48, %c0_125], %130 {strides = array<i32>} : memref<224x384xf32, #tpu.memory_space<vmem>>, vector<20x352xf32>,
    %c3_126 = arith.constant 3 : index
    %c0_127 = arith.constant 0 : index
    %c0_128 = arith.constant 0 : index
    %132 = vector.load %arg11[%c3_126, %c0_127, %c0_128] : memref<4x320x352xbf16, #tpu.memory_space<vmem>>, vector<1x320x352xbf16>
    %133 = vector.shape_cast %132 : vector<1x320x352xbf16> to vector<320x352xbf16>
    %cst_129 = arith.constant dense<0.000000e+00> : vector<20x352xf32>
    %134 = tpu.matmul %119, %133, %cst_129 {dimension_numbers = #tpu.dot_dimension_numbers<[1], [0], [0], [1], [0, 0, 1, 1], [], []>} : vector<20x320xbf16>, vector<320x352xbf16>, vector<20x352xf32> -> vector<20x352xf32>
    %c72 = arith.constant 72 : index
    %c0_130 = arith.constant 0 : index
    %135 = vector.load %arg25[%c72, %c0_130] : memref<224x384xf32, #tpu.memory_space<vmem>>, vector<20x352xf32>
    tpu.vector_store %arg25[%c72, %c0_130], %134 {strides = array<i32>} : memref<224x384xf32, #tpu.memory_space<vmem>>, vector<20x352xf32>,
    %c0_131 = arith.constant 0 : index
    %c0_132 = arith.constant 0 : index
    %136 = vector.load %arg25[%c0_131, %c0_132] : memref<224x384xf32, #tpu.memory_space<vmem>>, vector<96x352xf32>
    %137 = arith.truncf %136 : vector<96x352xf32> to vector<96x352xbf16>
    %c0_133 = arith.constant 0 : index
    %c0_134 = arith.constant 0 : index
    %138 = vector.load %arg12[%c0_133, %c0_134] : memref<44x96xbf16, #tpu.memory_space<vmem>>, vector<44x96xbf16>
    %cst_135 = arith.constant dense<0.000000e+00> : vector<44x352xf32>
    %139 = tpu.matmul %138, %137, %cst_135 {dimension_numbers = #tpu.dot_dimension_numbers<[1], [0], [0], [1], [0, 0, 1, 1], [], []>} : vector<44x96xbf16>, vector<96x352xbf16>, vector<44x352xf32> -> vector<44x352xf32>
    %cst_136 = arith.constant dense<0.000000e+00> : vector<352xf32>
    %140 = vector.multi_reduction <add>, %139, %cst_136 [0] : vector<44x352xf32> to vector<352xf32>
    %141 = vector.shape_cast %140 : vector<352xf32> to vector<1x352xf32>
    %c0_137 = arith.constant 0 : index
    %c0_138 = arith.constant 0 : index
    %142 = vector.load %arg26[%c0_137, %c0_138] : memref<8x384xf32, #tpu.memory_space<vmem>>, vector<1x352xf32>
    tpu.vector_store %arg26[%c0_137, %c0_138], %141 {strides = array<i32>} : memref<8x384xf32, #tpu.memory_space<vmem>>, vector<1x352xf32>,
    %143 = arith.mulf %139, %139 : vector<44x352xf32>
    %cst_139 = arith.constant dense<0.000000e+00> : vector<352xf32>
    %144 = vector.multi_reduction <add>, %143, %cst_139 [0] : vector<44x352xf32> to vector<352xf32>
    %145 = vector.shape_cast %144 : vector<352xf32> to vector<1x352xf32>
    %c1_140 = arith.constant 1 : index
    %c0_141 = arith.constant 0 : index
    %146 = vector.load %arg26[%c1_140, %c0_141] : memref<8x384xf32, #tpu.memory_space<vmem>>, vector<1x352xf32>
    tpu.vector_store %arg26[%c1_140, %c0_141], %145 {strides = array<i32>} : memref<8x384xf32, #tpu.memory_space<vmem>>, vector<1x352xf32>,
    %c0_142 = arith.constant 0 : index
    %c0_143 = arith.constant 0 : index
    %147 = vector.load %arg26[%c0_142, %c0_143] : memref<8x384xf32, #tpu.memory_space<vmem>>, vector<2x352xf32>
    %c0_144 = arith.constant 0 : index
    %c0_145 = arith.constant 0 : index
    %148 = vector.load %arg14[%c0_144, %c0_145] : memref<352x16xbf16, #tpu.memory_space<vmem>>, vector<352x16xbf16>
    %cst_146 = arith.constant dense<0.000000e+00> : vector<2x16xf32>
    %149 = tpu.matmul %147, %148, %cst_146 {dimension_numbers = #tpu.dot_dimension_numbers<[1], [0], [0], [1], [0, 0, 1, 1], [], []>} : vector<2x352xf32>, vector<352x16xbf16>, vector<2x16xf32> -> vector<2x16xf32>
    %cst_147 = arith.constant 0.00103305781 : f32
    %150 = vector.broadcast %cst_147 : f32 to vector<2x16xf32>
    %151 = arith.mulf %149, %150 : vector<2x16xf32>
    %152 = vector.extract_strided_slice %151 {offsets = [0, 0], sizes = [1, 16], strides = [1, 1]} : vector<2x16xf32> to vector<1x16xf32>
    %153 = vector.extract_strided_slice %151 {offsets = [1, 0], sizes = [1, 16], strides = [1, 1]} : vector<2x16xf32> to vector<1x16xf32>
    %154 = arith.mulf %152, %152 : vector<1x16xf32>
    %155 = arith.subf %153, %154 : vector<1x16xf32>
    %c0_148 = arith.constant 0 : index
    %c0_149 = arith.constant 0 : index
    %156 = vector.load %arg13[%c0_148, %c0_149] : memref<2x16xf32, #tpu.memory_space<vmem>>, vector<1x16xf32>
    %cst_150 = arith.constant 9.99999974E-6 : f32
    %157 = vector.broadcast %cst_150 : f32 to vector<1x16xf32>
    %158 = arith.addf %155, %157 : vector<1x16xf32>
    %159 = math.rsqrt %158 : vector<1x16xf32>
    %160 = arith.mulf %156, %159 : vector<1x16xf32>
    %c1_151 = arith.constant 1 : index
    %c0_152 = arith.constant 0 : index
    %161 = vector.load %arg13[%c1_151, %c0_152] : memref<2x16xf32, #tpu.memory_space<vmem>>, vector<1x16xf32>
    %162 = arith.mulf %152, %160 : vector<1x16xf32>
    %163 = arith.subf %161, %162 : vector<1x16xf32>
    %c0_153 = arith.constant 0 : index
    %c0_154 = arith.constant 0 : index
    %164 = vector.load %arg26[%c0_153, %c0_154] : memref<8x384xf32, #tpu.memory_space<vmem>>, vector<1x16xf32>
    tpu.vector_store %arg26[%c0_153, %c0_154], %160 {strides = array<i32>} : memref<8x384xf32, #tpu.memory_space<vmem>>, vector<1x16xf32>,
    %c1_155 = arith.constant 1 : index
    %c0_156 = arith.constant 0 : index
    %165 = vector.load %arg26[%c1_155, %c0_156] : memref<8x384xf32, #tpu.memory_space<vmem>>, vector<1x16xf32>
    tpu.vector_store %arg26[%c1_155, %c0_156], %163 {strides = array<i32>} : memref<8x384xf32, #tpu.memory_space<vmem>>, vector<1x16xf32>,
    %c0_157 = arith.constant 0 : index
    %c0_158 = arith.constant 0 : index
    %166 = vector.load %arg26[%c0_157, %c0_158] : memref<8x384xf32, #tpu.memory_space<vmem>>, vector<2x16xf32>
    %c0_159 = arith.constant 0 : index
    %c0_160 = arith.constant 0 : index
    %167 = vector.load %arg15[%c0_159, %c0_160] : memref<16x352xbf16, #tpu.memory_space<vmem>>, vector<16x352xbf16>
    %cst_161 = arith.constant dense<0.000000e+00> : vector<2x352xf32>
    %168 = tpu.matmul %166, %167, %cst_161 {dimension_numbers = #tpu.dot_dimension_numbers<[1], [0], [0], [1], [0, 0, 1, 1], [], []>} : vector<2x16xf32>, vector<16x352xbf16>, vector<2x352xf32> -> vector<2x352xf32>
    %169 = vector.extract_strided_slice %168 {offsets = [0, 0], sizes = [1, 352], strides = [1, 1]} : vector<2x352xf32> to vector<1x352xf32>
    %170 = vector.broadcast %169 : vector<1x352xf32> to vector<44x352xf32>
    %171 = arith.mulf %139, %170 : vector<44x352xf32>
    %172 = vector.extract_strided_slice %168 {offsets = [1, 0], sizes = [1, 352], strides = [1, 1]} : vector<2x352xf32> to vector<1x352xf32>
    %173 = vector.broadcast %172 : vector<1x352xf32> to vector<44x352xf32>
    %174 = arith.addf %171, %173 : vector<44x352xf32>
    %cst_162 = arith.constant 0.000000e+00 : f32
    %175 = vector.broadcast %cst_162 : f32 to vector<44x352xf32>
    %176 = arith.maximumf %174, %175 : vector<44x352xf32>
    %177 = arith.truncf %176 : vector<44x352xf32> to vector<44x352xbf16>
    %c0_163 = arith.constant 0 : index
    %c0_164 = arith.constant 0 : index
    %c0_165 = arith.constant 0 : index
    %178 = vector.load %arg16[%c0_163, %c0_164, %c0_165] : memref<4x352x200xbf16, #tpu.memory_space<vmem>>, vector<1x352x200xbf16>
    %179 = vector.shape_cast %178 : vector<1x352x200xbf16> to vector<352x200xbf16>
    %cst_166 = arith.constant dense<0.000000e+00> : vector<44x200xf32>
    %180 = tpu.matmul %177, %179, %cst_166 {dimension_numbers = #tpu.dot_dimension_numbers<[1], [0], [0], [1], [0, 0, 1, 1], [], []>} : vector<44x352xbf16>, vector<352x200xbf16>, vector<44x200xf32> -> vector<44x200xf32>
    %c0_167 = arith.constant 0 : index
    %c0_168 = arith.constant 0 : index
    %181 = vector.load %arg25[%c0_167, %c0_168] : memref<224x384xf32, #tpu.memory_space<vmem>>, vector<44x200xf32>
    tpu.vector_store %arg25[%c0_167, %c0_168], %180 {strides = array<i32>} : memref<224x384xf32, #tpu.memory_space<vmem>>, vector<44x200xf32>,
    %c1_169 = arith.constant 1 : index
    %c0_170 = arith.constant 0 : index
    %c0_171 = arith.constant 0 : index
    %182 = vector.load %arg16[%c1_169, %c0_170, %c0_171] : memref<4x352x200xbf16, #tpu.memory_space<vmem>>, vector<1x352x200xbf16>
    %183 = vector.shape_cast %182 : vector<1x352x200xbf16> to vector<352x200xbf16>
    %cst_172 = arith.constant dense<0.000000e+00> : vector<44x200xf32>
    %184 = tpu.matmul %177, %183, %cst_172 {dimension_numbers = #tpu.dot_dimension_numbers<[1], [0], [0], [1], [0, 0, 1, 1], [], []>} : vector<44x352xbf16>, vector<352x200xbf16>, vector<44x200xf32> -> vector<44x200xf32>
    %c48_173 = arith.constant 48 : index
    %c0_174 = arith.constant 0 : index
    %185 = vector.load %arg25[%c48_173, %c0_174] : memref<224x384xf32, #tpu.memory_space<vmem>>, vector<44x200xf32>
    tpu.vector_store %arg25[%c48_173, %c0_174], %184 {strides = array<i32>} : memref<224x384xf32, #tpu.memory_space<vmem>>, vector<44x200xf32>,
    %c2_175 = arith.constant 2 : index
    %c0_176 = arith.constant 0 : index
    %c0_177 = arith.constant 0 : index
    %186 = vector.load %arg16[%c2_175, %c0_176, %c0_177] : memref<4x352x200xbf16, #tpu.memory_space<vmem>>, vector<1x352x200xbf16>
    %187 = vector.shape_cast %186 : vector<1x352x200xbf16> to vector<352x200xbf16>
    %cst_178 = arith.constant dense<0.000000e+00> : vector<44x200xf32>
    %188 = tpu.matmul %177, %187, %cst_178 {dimension_numbers = #tpu.dot_dimension_numbers<[1], [0], [0], [1], [0, 0, 1, 1], [], []>} : vector<44x352xbf16>, vector<352x200xbf16>, vector<44x200xf32> -> vector<44x200xf32>
    %c96 = arith.constant 96 : index
    %c0_179 = arith.constant 0 : index
    %189 = vector.load %arg25[%c96, %c0_179] : memref<224x384xf32, #tpu.memory_space<vmem>>, vector<44x200xf32>
    tpu.vector_store %arg25[%c96, %c0_179], %188 {strides = array<i32>} : memref<224x384xf32, #tpu.memory_space<vmem>>, vector<44x200xf32>,
    %c3_180 = arith.constant 3 : index
    %c0_181 = arith.constant 0 : index
    %c0_182 = arith.constant 0 : index
    %190 = vector.load %arg16[%c3_180, %c0_181, %c0_182] : memref<4x352x200xbf16, #tpu.memory_space<vmem>>, vector<1x352x200xbf16>
    %191 = vector.shape_cast %190 : vector<1x352x200xbf16> to vector<352x200xbf16>
    %cst_183 = arith.constant dense<0.000000e+00> : vector<44x200xf32>
    %192 = tpu.matmul %177, %191, %cst_183 {dimension_numbers = #tpu.dot_dimension_numbers<[1], [0], [0], [1], [0, 0, 1, 1], [], []>} : vector<44x352xbf16>, vector<352x200xbf16>, vector<44x200xf32> -> vector<44x200xf32>
    %c144 = arith.constant 144 : index
    %c0_184 = arith.constant 0 : index
    %193 = vector.load %arg25[%c144, %c0_184] : memref<224x384xf32, #tpu.memory_space<vmem>>, vector<44x200xf32>
    tpu.vector_store %arg25[%c144, %c0_184], %192 {strides = array<i32>} : memref<224x384xf32, #tpu.memory_space<vmem>>, vector<44x200xf32>,
    %c0_185 = arith.constant 0 : index
    %c0_186 = arith.constant 0 : index
    %194 = vector.load %arg25[%c0_185, %c0_186] : memref<224x384xf32, #tpu.memory_space<vmem>>, vector<192x200xf32>
    %195 = arith.truncf %194 : vector<192x200xf32> to vector<192x200xbf16>
    %c0_187 = arith.constant 0 : index
    %c0_188 = arith.constant 0 : index
    %196 = vector.load %arg17[%c0_187, %c0_188] : memref<50x192xbf16, #tpu.memory_space<vmem>>, vector<50x192xbf16>
    %cst_189 = arith.constant dense<0.000000e+00> : vector<50x200xf32>
    %197 = tpu.matmul %196, %195, %cst_189 {dimension_numbers = #tpu.dot_dimension_numbers<[1], [0], [0], [1], [0, 0, 1, 1], [], []>} : vector<50x192xbf16>, vector<192x200xbf16>, vector<50x200xf32> -> vector<50x200xf32>
    %cst_190 = arith.constant dense<0.000000e+00> : vector<200xf32>
    %198 = vector.multi_reduction <add>, %197, %cst_190 [0] : vector<50x200xf32> to vector<200xf32>
    %199 = vector.shape_cast %198 : vector<200xf32> to vector<1x200xf32>
    %c0_191 = arith.constant 0 : index
    %c0_192 = arith.constant 0 : index
    %200 = vector.load %arg26[%c0_191, %c0_192] : memref<8x384xf32, #tpu.memory_space<vmem>>, vector<1x200xf32>
    tpu.vector_store %arg26[%c0_191, %c0_192], %199 {strides = array<i32>} : memref<8x384xf32, #tpu.memory_space<vmem>>, vector<1x200xf32>,
    %201 = arith.mulf %197, %197 : vector<50x200xf32>
    %cst_193 = arith.constant dense<0.000000e+00> : vector<200xf32>
    %202 = vector.multi_reduction <add>, %201, %cst_193 [0] : vector<50x200xf32> to vector<200xf32>
    %203 = vector.shape_cast %202 : vector<200xf32> to vector<1x200xf32>
    %c1_194 = arith.constant 1 : index
    %c0_195 = arith.constant 0 : index
    %204 = vector.load %arg26[%c1_194, %c0_195] : memref<8x384xf32, #tpu.memory_space<vmem>>, vector<1x200xf32>
    tpu.vector_store %arg26[%c1_194, %c0_195], %203 {strides = array<i32>} : memref<8x384xf32, #tpu.memory_space<vmem>>, vector<1x200xf32>,
    %c0_196 = arith.constant 0 : index
    %c0_197 = arith.constant 0 : index
    %205 = vector.load %arg26[%c0_196, %c0_197] : memref<8x384xf32, #tpu.memory_space<vmem>>, vector<2x200xf32>
    %c0_198 = arith.constant 0 : index
    %c0_199 = arith.constant 0 : index
    %206 = vector.load %arg19[%c0_198, %c0_199] : memref<200x8xbf16, #tpu.memory_space<vmem>>, vector<200x8xbf16>
    %cst_200 = arith.constant dense<0.000000e+00> : vector<2x8xf32>
    %207 = tpu.matmul %205, %206, %cst_200 {dimension_numbers = #tpu.dot_dimension_numbers<[1], [0], [0], [1], [0, 0, 1, 1], [], []>} : vector<2x200xf32>, vector<200x8xbf16>, vector<2x8xf32> -> vector<2x8xf32>
    %cst_201 = arith.constant 8.000000e-04 : f32
    %208 = vector.broadcast %cst_201 : f32 to vector<2x8xf32>
    %209 = arith.mulf %207, %208 : vector<2x8xf32>
    %210 = vector.extract_strided_slice %209 {offsets = [0, 0], sizes = [1, 8], strides = [1, 1]} : vector<2x8xf32> to vector<1x8xf32>
    %211 = vector.extract_strided_slice %209 {offsets = [1, 0], sizes = [1, 8], strides = [1, 1]} : vector<2x8xf32> to vector<1x8xf32>
    %212 = arith.mulf %210, %210 : vector<1x8xf32>
    %213 = arith.subf %211, %212 : vector<1x8xf32>
    %c0_202 = arith.constant 0 : index
    %c0_203 = arith.constant 0 : index
    %214 = vector.load %arg18[%c0_202, %c0_203] : memref<2x8xf32, #tpu.memory_space<vmem>>, vector<1x8xf32>
    %cst_204 = arith.constant 9.99999974E-6 : f32
    %215 = vector.broadcast %cst_204 : f32 to vector<1x8xf32>
    %216 = arith.addf %213, %215 : vector<1x8xf32>
    %217 = math.rsqrt %216 : vector<1x8xf32>
    %218 = arith.mulf %214, %217 : vector<1x8xf32>
    %c1_205 = arith.constant 1 : index
    %c0_206 = arith.constant 0 : index
    %219 = vector.load %arg18[%c1_205, %c0_206] : memref<2x8xf32, #tpu.memory_space<vmem>>, vector<1x8xf32>
    %220 = arith.mulf %210, %218 : vector<1x8xf32>
    %221 = arith.subf %219, %220 : vector<1x8xf32>
    %c0_207 = arith.constant 0 : index
    %c0_208 = arith.constant 0 : index
    %222 = vector.load %arg26[%c0_207, %c0_208] : memref<8x384xf32, #tpu.memory_space<vmem>>, vector<1x8xf32>
    tpu.vector_store %arg26[%c0_207, %c0_208], %218 {strides = array<i32>} : memref<8x384xf32, #tpu.memory_space<vmem>>, vector<1x8xf32>,
    %c1_209 = arith.constant 1 : index
    %c0_210 = arith.constant 0 : index
    %223 = vector.load %arg26[%c1_209, %c0_210] : memref<8x384xf32, #tpu.memory_space<vmem>>, vector<1x8xf32>
    tpu.vector_store %arg26[%c1_209, %c0_210], %221 {strides = array<i32>} : memref<8x384xf32, #tpu.memory_space<vmem>>, vector<1x8xf32>,
    %c0_211 = arith.constant 0 : index
    %c0_212 = arith.constant 0 : index
    %224 = vector.load %arg26[%c0_211, %c0_212] : memref<8x384xf32, #tpu.memory_space<vmem>>, vector<2x8xf32>
    %c0_213 = arith.constant 0 : index
    %c0_214 = arith.constant 0 : index
    %225 = vector.load %arg20[%c0_213, %c0_214] : memref<8x200xbf16, #tpu.memory_space<vmem>>, vector<8x200xbf16>
    %cst_215 = arith.constant dense<0.000000e+00> : vector<2x200xf32>
    %226 = tpu.matmul %224, %225, %cst_215 {dimension_numbers = #tpu.dot_dimension_numbers<[1], [0], [0], [1], [0, 0, 1, 1], [], []>} : vector<2x8xf32>, vector<8x200xbf16>, vector<2x200xf32> -> vector<2x200xf32>
    %227 = vector.extract_strided_slice %226 {offsets = [0, 0], sizes = [1, 200], strides = [1, 1]} : vector<2x200xf32> to vector<1x200xf32>
    %228 = vector.broadcast %227 : vector<1x200xf32> to vector<50x200xf32>
    %229 = arith.mulf %197, %228 : vector<50x200xf32>
    %230 = vector.extract_strided_slice %226 {offsets = [1, 0], sizes = [1, 200], strides = [1, 1]} : vector<2x200xf32> to vector<1x200xf32>
    %231 = vector.broadcast %230 : vector<1x200xf32> to vector<50x200xf32>
    %232 = arith.addf %229, %231 : vector<50x200xf32>
    %cst_216 = arith.constant 0.000000e+00 : f32
    %233 = vector.broadcast %cst_216 : f32 to vector<50x200xf32>
    %234 = arith.maximumf %232, %233 : vector<50x200xf32>
    %235 = arith.truncf %234 : vector<50x200xf32> to vector<50x200xbf16>
    %c0_217 = arith.constant 0 : index
    %c0_218 = arith.constant 0 : index
    %c0_219 = arith.constant 0 : index
    %236 = vector.load %arg21[%c0_217, %c0_218, %c0_219] : memref<4x200x128xbf16, #tpu.memory_space<vmem>>, vector<1x200x128xbf16>
    %237 = vector.shape_cast %236 : vector<1x200x128xbf16> to vector<200x128xbf16>
    %cst_220 = arith.constant dense<0.000000e+00> : vector<50x128xf32>
    %238 = tpu.matmul %235, %237, %cst_220 {dimension_numbers = #tpu.dot_dimension_numbers<[1], [0], [0], [1], [0, 0, 1, 1], [], []>} : vector<50x200xbf16>, vector<200x128xbf16>, vector<50x128xf32> -> vector<50x128xf32>
    %c0_221 = arith.constant 0 : index
    %c0_222 = arith.constant 0 : index
    %239 = vector.load %arg25[%c0_221, %c0_222] : memref<224x384xf32, #tpu.memory_space<vmem>>, vector<50x128xf32>
    tpu.vector_store %arg25[%c0_221, %c0_222], %238 {strides = array<i32>} : memref<224x384xf32, #tpu.memory_space<vmem>>, vector<50x128xf32>,
    %c1_223 = arith.constant 1 : index
    %c0_224 = arith.constant 0 : index
    %c0_225 = arith.constant 0 : index
    %240 = vector.load %arg21[%c1_223, %c0_224, %c0_225] : memref<4x200x128xbf16, #tpu.memory_space<vmem>>, vector<1x200x128xbf16>
    %241 = vector.shape_cast %240 : vector<1x200x128xbf16> to vector<200x128xbf16>
    %cst_226 = arith.constant dense<0.000000e+00> : vector<50x128xf32>
    %242 = tpu.matmul %235, %241, %cst_226 {dimension_numbers = #tpu.dot_dimension_numbers<[1], [0], [0], [1], [0, 0, 1, 1], [], []>} : vector<50x200xbf16>, vector<200x128xbf16>, vector<50x128xf32> -> vector<50x128xf32>
    %c56 = arith.constant 56 : index
    %c0_227 = arith.constant 0 : index
    %243 = vector.load %arg25[%c56, %c0_227] : memref<224x384xf32, #tpu.memory_space<vmem>>, vector<50x128xf32>
    tpu.vector_store %arg25[%c56, %c0_227], %242 {strides = array<i32>} : memref<224x384xf32, #tpu.memory_space<vmem>>, vector<50x128xf32>,
    %c2_228 = arith.constant 2 : index
    %c0_229 = arith.constant 0 : index
    %c0_230 = arith.constant 0 : index
    %244 = vector.load %arg21[%c2_228, %c0_229, %c0_230] : memref<4x200x128xbf16, #tpu.memory_space<vmem>>, vector<1x200x128xbf16>
    %245 = vector.shape_cast %244 : vector<1x200x128xbf16> to vector<200x128xbf16>
    %cst_231 = arith.constant dense<0.000000e+00> : vector<50x128xf32>
    %246 = tpu.matmul %235, %245, %cst_231 {dimension_numbers = #tpu.dot_dimension_numbers<[1], [0], [0], [1], [0, 0, 1, 1], [], []>} : vector<50x200xbf16>, vector<200x128xbf16>, vector<50x128xf32> -> vector<50x128xf32>
    %c112 = arith.constant 112 : index
    %c0_232 = arith.constant 0 : index
    %247 = vector.load %arg25[%c112, %c0_232] : memref<224x384xf32, #tpu.memory_space<vmem>>, vector<50x128xf32>
    tpu.vector_store %arg25[%c112, %c0_232], %246 {strides = array<i32>} : memref<224x384xf32, #tpu.memory_space<vmem>>, vector<50x128xf32>,
    %c3_233 = arith.constant 3 : index
    %c0_234 = arith.constant 0 : index
    %c0_235 = arith.constant 0 : index
    %248 = vector.load %arg21[%c3_233, %c0_234, %c0_235] : memref<4x200x128xbf16, #tpu.memory_space<vmem>>, vector<1x200x128xbf16>
    %249 = vector.shape_cast %248 : vector<1x200x128xbf16> to vector<200x128xbf16>
    %cst_236 = arith.constant dense<0.000000e+00> : vector<50x128xf32>
    %250 = tpu.matmul %235, %249, %cst_236 {dimension_numbers = #tpu.dot_dimension_numbers<[1], [0], [0], [1], [0, 0, 1, 1], [], []>} : vector<50x200xbf16>, vector<200x128xbf16>, vector<50x128xf32> -> vector<50x128xf32>
    %c168 = arith.constant 168 : index
    %c0_237 = arith.constant 0 : index
    %251 = vector.load %arg25[%c168, %c0_237] : memref<224x384xf32, #tpu.memory_space<vmem>>, vector<50x128xf32>
    tpu.vector_store %arg25[%c168, %c0_237], %250 {strides = array<i32>} : memref<224x384xf32, #tpu.memory_space<vmem>>, vector<50x128xf32>,
    %c0_238 = arith.constant 0 : index
    %c0_239 = arith.constant 0 : index
    %252 = vector.load %arg25[%c0_238, %c0_239] : memref<224x384xf32, #tpu.memory_space<vmem>>, vector<224x128xf32>
    %253 = arith.truncf %252 : vector<224x128xf32> to vector<224x128xbf16>
    %c0_240 = arith.constant 0 : index
    %c0_241 = arith.constant 0 : index
    %254 = vector.load %arg22[%c0_240, %c0_241] : memref<104x224xbf16, #tpu.memory_space<vmem>>, vector<104x224xbf16>
    %cst_242 = arith.constant dense<0.000000e+00> : vector<104x128xf32>
    %255 = tpu.matmul %254, %253, %cst_242 {dimension_numbers = #tpu.dot_dimension_numbers<[1], [0], [0], [1], [0, 0, 1, 1], [], []>} : vector<104x224xbf16>, vector<224x128xbf16>, vector<104x128xf32> -> vector<104x128xf32>
    %c0_243 = arith.constant 0 : index
    %c0_244 = arith.constant 0 : index
    %256 = vector.load %arg23[%c0_243, %c0_244] : memref<1x1xf32, #tpu.memory_space<vmem>>, vector<1x1xf32>
    %257 = vector.broadcast %256 : vector<1x1xf32> to vector<104x128xf32>
    %258 = arith.addf %255, %257 : vector<104x128xf32>
    %259 = math.tanh %258 : vector<104x128xf32>
    %c0_245 = arith.constant 0 : index
    %c0_246 = arith.constant 0 : index
    %260 = vector.load %arg24[%c0_245, %c0_246] : memref<104x128xf32, #tpu.memory_space<vmem>>, vector<104x128xf32>
    tpu.vector_store %arg24[%c0_245, %c0_246], %259 {strides = array<i32>} : memref<104x128xf32, #tpu.memory_space<vmem>>, vector<104x128xf32>,
    return
  }
}

</mosaic_0001>

<llo_original>
// kernel: follower_generator_forward.1
$region0: #{follower_generator_forward.1}
  #allocation0 [shape = 'u32[]', space=smem, size = 0x4, offset = 0x4, fixed_abs, tag = 'smem constant byte address 0x4 - core index']
  #allocation1 [shape = 'u32[144,128]{1,0:T(1,128)}', space=vmem, size = 0x12000, scoped, tag = 'internal scratch']
  #allocation2 [shape = 'f32[224,384]{1,0:T(8,128)}', space=vmem, size = 0x54000, scoped, tag = 'scratch operand']
  #allocation3 [shape = 'f32[8,384]{1,0:T(8,128)}', space=vmem, size = 0x3000, scoped, tag = 'scratch operand']
  #allocation4 [shape = 'f32[1,1]{1,0:T(1,128)S(1)}', space=vmem, size = 0x200, scoped, tag = 'scoped memory for follower_generator_forward.1']
  %s0 = inlined_call_operand.vmem [shape: f32[2,10], index: 0, kind: input, shape index: {}]
  %s1 = inlined_call_operand.vmem [shape: bf16[4,10,256], index: 1, kind: input, shape index: {}]
  %s2 = inlined_call_operand.vmem [shape: bf16[8,32], index: 2, kind: input, shape index: {}]
  %s3 = inlined_call_operand.vmem [shape: f32[2,64], index: 3, kind: input, shape index: {}]
  %s4 = inlined_call_operand.vmem [shape: bf16[256,64], index: 4, kind: input, shape index: {}]
  %s5 = inlined_call_operand.vmem [shape: bf16[64,256], index: 5, kind: input, shape index: {}]
  %s6 = inlined_call_operand.vmem [shape: bf16[4,256,320], index: 6, kind: input, shape index: {}]
  %s7 = inlined_call_operand.vmem [shape: bf16[20,32], index: 7, kind: input, shape index: {}]
  %s8 = inlined_call_operand.vmem [shape: f32[2,32], index: 8, kind: input, shape index: {}]
  %s9 = inlined_call_operand.vmem [shape: bf16[320,32], index: 9, kind: input, shape index: {}]
  %s10 = inlined_call_operand.vmem [shape: bf16[32,320], index: 10, kind: input, shape index: {}]
  %s11 = inlined_call_operand.vmem [shape: bf16[4,320,352], index: 11, kind: input, shape index: {}]
  %s12 = inlined_call_operand.vmem [shape: bf16[44,96], index: 12, kind: input, shape index: {}]
  %s13 = inlined_call_operand.vmem [shape: f32[2,16], index: 13, kind: input, shape index: {}]
  %s14 = inlined_call_operand.vmem [shape: bf16[352,16], index: 14, kind: input, shape index: {}]
  %s15 = inlined_call_operand.vmem [shape: bf16[16,352], index: 15, kind: input, shape index: {}]
  %s16 = inlined_call_operand.vmem [shape: bf16[4,352,200], index: 16, kind: input, shape index: {}]
  %s17 = inlined_call_operand.vmem [shape: bf16[50,192], index: 17, kind: input, shape index: {}]
  %s18 = inlined_call_operand.vmem [shape: f32[2,8], index: 18, kind: input, shape index: {}]
  %s19 = inlined_call_operand.vmem [shape: bf16[200,8], index: 19, kind: input, shape index: {}]
  %s20 = inlined_call_operand.vmem [shape: bf16[8,200], index: 20, kind: input, shape index: {}]
  %s21 = inlined_call_operand.vmem [shape: bf16[4,200,128], index: 21, kind: input, shape index: {}]
  %s22 = inlined_call_operand.vmem [shape: bf16[104,224], index: 22, kind: input, shape index: {}]
  %s23 = inlined_call_operand.<no memory space> [shape: f32[1,1], index: 23, kind: input, shape index: {}]
  %s24 = inlined_call_operand.hbm [shape: f32[104,128], index: 24, kind: output, shape index: {}]
  %s25 = sld [smem:[#allocation0]]
  $region106: #{follower_generator_forward.1} parent=0
    _
  %s27 = ssub.s32 1, %s25
  %s28 = scalar_select 0, %s27, %s25
  %v29 = vstv %s23
  %30 = vst [vmem:[#allocation4] sm:$0x1] %v29
  $region1: #{follower_generator_forward.1} parent=0
    #allocation5 [shape = 'u8[53248]{0}', space=vmem, size = 0xd000, scoped, tag = 'output window, operand 0, single buffered']
    #allocation6 [shape = 's32[1]{0}', space=sflag, size = 0x4, scoped, tag = 'scoped memory for follower_generator_forward.1']
    %31 = vsyncpa [#allocation6], 0
    // Predicated region
    $region2: #{follower_generator_forward.1} parent=1 // pred_check
      _
    $region3: #{follower_generator_forward.1} parent=1 // pred_check_branch
      %33 = sbr.rel (0) target = $region5
    $region4: #{follower_generator_forward.1} parent=1 // pred_region
      _
    $region5: #{follower_generator_forward.1} parent=1 // pred_fallthru
      _
    // Predicated region
    $region6: #{follower_generator_forward.1} parent=1 // pred_check
      _
    $region7: #{follower_generator_forward.1} parent=1 // pred_check_branch
      %35 = sbr.rel (0) target = $region9
    $region8: #{follower_generator_forward.1} parent=1 // pred_region
      _
    $region9: #{follower_generator_forward.1} parent=1 // pred_fallthru
      _
    // Predicated region
    $region10: #{follower_generator_forward.1} parent=1 // pred_check
      _
    $region11: #{follower_generator_forward.1} parent=1 // pred_check_branch
      %37 = sbr.rel (0) target = $region13
    $region12: #{follower_generator_forward.1} parent=1 // pred_region
      _
    $region13: #{follower_generator_forward.1} parent=1 // pred_fallthru
      _
    // Predicated region
    $region14: #{follower_generator_forward.1} parent=1 // pred_check
      _
    $region15: #{follower_generator_forward.1} parent=1 // pred_check_branch
      %39 = sbr.rel (0) target = $region17
    $region16: #{follower_generator_forward.1} parent=1 // pred_region
      _
    $region17: #{follower_generator_forward.1} parent=1 // pred_fallthru
      _
    // Predicated region
    $region18: #{follower_generator_forward.1} parent=1 // pred_check
      _
    $region19: #{follower_generator_forward.1} parent=1 // pred_check_branch
      %41 = sbr.rel (0) target = $region21
    $region20: #{follower_generator_forward.1} parent=1 // pred_region
      _
    $region21: #{follower_generator_forward.1} parent=1 // pred_fallthru
      _
    // Predicated region
    $region22: #{follower_generator_forward.1} parent=1 // pred_check
      _
    $region23: #{follower_generator_forward.1} parent=1 // pred_check_branch
      %43 = sbr.rel (0) target = $region25
    $region24: #{follower_generator_forward.1} parent=1 // pred_region
      _
    $region25: #{follower_generator_forward.1} parent=1 // pred_fallthru
      _
    // Predicated region
    $region26: #{follower_generator_forward.1} parent=1 // pred_check
      _
    $region27: #{follower_generator_forward.1} parent=1 // pred_check_branch
      %45 = sbr.rel (0) target = $region29
    $region28: #{follower_generator_forward.1} parent=1 // pred_region
      _
    $region29: #{follower_generator_forward.1} parent=1 // pred_fallthru
      _
    // Predicated region
    $region30: #{follower_generator_forward.1} parent=1 // pred_check
      _
    $region31: #{follower_generator_forward.1} parent=1 // pred_check_branch
      %47 = sbr.rel (0) target = $region33
    $region32: #{follower_generator_forward.1} parent=1 // pred_region
      _
    $region33: #{follower_generator_forward.1} parent=1 // pred_fallthru
      _
    // Predicated region
    $region34: #{follower_generator_forward.1} parent=1 // pred_check
      _
    $region35: #{follower_generator_forward.1} parent=1 // pred_check_branch
      %49 = sbr.rel (0) target = $region37
    $region36: #{follower_generator_forward.1} parent=1 // pred_region
      _
    $region37: #{follower_generator_forward.1} parent=1 // pred_fallthru
      _
    // Predicated region
    $region38: #{follower_generator_forward.1} parent=1 // pred_check
      _
    $region39: #{follower_generator_forward.1} parent=1 // pred_check_branch
      %51 = sbr.rel (0) target = $region41
    $region40: #{follower_generator_forward.1} parent=1 // pred_region
      _
    $region41: #{follower_generator_forward.1} parent=1 // pred_fallthru
      _
    // Predicated region
    $region42: #{follower_generator_forward.1} parent=1 // pred_check
      _
    $region43: #{follower_generator_forward.1} parent=1 // pred_check_branch
      %53 = sbr.rel (0) target = $region45
    $region44: #{follower_generator_forward.1} parent=1 // pred_region
      _
    $region45: #{follower_generator_forward.1} parent=1 // pred_fallthru
      _
    // Predicated region
    $region46: #{follower_generator_forward.1} parent=1 // pred_check
      _
    $region47: #{follower_generator_forward.1} parent=1 // pred_check_branch
      %55 = sbr.rel (0) target = $region49
    $region48: #{follower_generator_forward.1} parent=1 // pred_region
      _
    $region49: #{follower_generator_forward.1} parent=1 // pred_fallthru
      _
    // Predicated region
    $region50: #{follower_generator_forward.1} parent=1 // pred_check
      _
    $region51: #{follower_generator_forward.1} parent=1 // pred_check_branch
      %57 = sbr.rel (0) target = $region53
    $region52: #{follower_generator_forward.1} parent=1 // pred_region
      _
    $region53: #{follower_generator_forward.1} parent=1 // pred_fallthru
      _
    // Predicated region
    $region54: #{follower_generator_forward.1} parent=1 // pred_check
      _
    $region55: #{follower_generator_forward.1} parent=1 // pred_check_branch
      %59 = sbr.rel (0) target = $region57
    $region56: #{follower_generator_forward.1} parent=1 // pred_region
      _
    $region57: #{follower_generator_forward.1} parent=1 // pred_fallthru
      _
    // Predicated region
    $region58: #{follower_generator_forward.1} parent=1 // pred_check
      _
    $region59: #{follower_generator_forward.1} parent=1 // pred_check_branch
      %61 = sbr.rel (0) target = $region61
    $region60: #{follower_generator_forward.1} parent=1 // pred_region
      _
    $region61: #{follower_generator_forward.1} parent=1 // pred_fallthru
      _
    // Predicated region
    $region62: #{follower_generator_forward.1} parent=1 // pred_check
      _
    $region63: #{follower_generator_forward.1} parent=1 // pred_check_branch
      %63 = sbr.rel (0) target = $region65
    $region64: #{follower_generator_forward.1} parent=1 // pred_region
      _
    $region65: #{follower_generator_forward.1} parent=1 // pred_fallthru
      _
    // Predicated region
    $region66: #{follower_generator_forward.1} parent=1 // pred_check
      _
    $region67: #{follower_generator_forward.1} parent=1 // pred_check_branch
      %65 = sbr.rel (0) target = $region69
    $region68: #{follower_generator_forward.1} parent=1 // pred_region
      _
    $region69: #{follower_generator_forward.1} parent=1 // pred_fallthru
      _
    // Predicated region
    $region70: #{follower_generator_forward.1} parent=1 // pred_check
      _
    $region71: #{follower_generator_forward.1} parent=1 // pred_check_branch
      %67 = sbr.rel (0) target = $region73
    $region72: #{follower_generator_forward.1} parent=1 // pred_region
      _
    $region73: #{follower_generator_forward.1} parent=1 // pred_fallthru
      _
    // Predicated region
    $region74: #{follower_generator_forward.1} parent=1 // pred_check
      _
    $region75: #{follower_generator_forward.1} parent=1 // pred_check_branch
      %69 = sbr.rel (0) target = $region77
    $region76: #{follower_generator_forward.1} parent=1 // pred_region
      _
    $region77: #{follower_generator_forward.1} parent=1 // pred_fallthru
      _
    // Predicated region
    $region78: #{follower_generator_forward.1} parent=1 // pred_check
      _
    $region79: #{follower_generator_forward.1} parent=1 // pred_check_branch
      %71 = sbr.rel (0) target = $region81
    $region80: #{follower_generator_forward.1} parent=1 // pred_region
      _
    $region81: #{follower_generator_forward.1} parent=1 // pred_fallthru
      _
    // Predicated region
    $region82: #{follower_generator_forward.1} parent=1 // pred_check
      _
    $region83: #{follower_generator_forward.1} parent=1 // pred_check_branch
      %73 = sbr.rel (0) target = $region85
    $region84: #{follower_generator_forward.1} parent=1 // pred_region
      _
    $region85: #{follower_generator_forward.1} parent=1 // pred_fallthru
      _
    // Predicated region
    $region86: #{follower_generator_forward.1} parent=1 // pred_check
      _
    $region87: #{follower_generator_forward.1} parent=1 // pred_check_branch
      %75 = sbr.rel (0) target = $region89
    $region88: #{follower_generator_forward.1} parent=1 // pred_region
      _
    $region89: #{follower_generator_forward.1} parent=1 // pred_fallthru
      _
    // Predicated region
    $region90: #{follower_generator_forward.1} parent=1 // pred_check
      _
    $region91: #{follower_generator_forward.1} parent=1 // pred_check_branch
      %77 = sbr.rel (0) target = $region93
    $region92: #{follower_generator_forward.1} parent=1 // pred_region
      _
    $region93: #{follower_generator_forward.1} parent=1 // pred_fallthru
      _
    // Predicated region
    $region94: #{follower_generator_forward.1} parent=1 // pred_check
      _
    $region95: #{follower_generator_forward.1} parent=1 // pred_check_branch
      %79 = sbr.rel (0) target = $region97
    $region96: #{follower_generator_forward.1} parent=1 // pred_region
      _
    $region97: #{follower_generator_forward.1} parent=1 // pred_fallthru
      _
    %v81 = vld [vmem:[%s0] sm:$0x3]
    %82 = vst [vmem:[#allocation2] sm:$0xff] 0.0
    %83 = vst [vmem:[#allocation2 + $0x8] sm:$0xff] 0.0
    %84 = vst [vmem:[#allocation2 + $0x10] sm:$0xff] 0.0
    %85 = vst [vmem:[#allocation2 + $0x18] sm:$0xff] 0.0
    %86 = vst [vmem:[#allocation2 + $0x20] sm:$0xff] 0.0
    %87 = vst [vmem:[#allocation2 + $0x28] sm:$0xff] 0.0
    %88 = vst [vmem:[#allocation2 + $0x30] sm:$0xff] 0.0
    %89 = vst [vmem:[#allocation2 + $0x38] sm:$0xff] 0.0
    %90 = vst [vmem:[#allocation2 + $0x40] sm:$0xff] 0.0
    %91 = vst [vmem:[#allocation2 + $0x48] sm:$0xff] 0.0
    %92 = vst [vmem:[#allocation2 + $0x50] sm:$0xff] 0.0
    %93 = vst [vmem:[#allocation2 + $0x58] sm:$0xff] 0.0
    %94 = vst [vmem:[#allocation2 + $0x60] sm:$0xff] 0.0
    %95 = vst [vmem:[#allocation2 + $0x68] sm:$0xff] 0.0
    %96 = vst [vmem:[#allocation2 + $0x70] sm:$0xff] 0.0
    %97 = vst [vmem:[#allocation2 + $0x78] sm:$0xff] 0.0
    %98 = vst [vmem:[#allocation2 + $0x80] sm:$0xff] 0.0
    %99 = vst [vmem:[#allocation2 + $0x88] sm:$0xff] 0.0
    %100 = vst [vmem:[#allocation2 + $0x90] sm:$0xff] 0.0
    %101 = vst [vmem:[#allocation2 + $0x98] sm:$0xff] 0.0
    %102 = vst [vmem:[#allocation2 + $0xa0] sm:$0xff] 0.0
    %103 = vst [vmem:[#allocation2 + $0xa8] sm:$0xff] 0.0
    %104 = vst [vmem:[#allocation2 + $0xb0] sm:$0xff] 0.0
    %105 = vst [vmem:[#allocation2 + $0xb8] sm:$0xff] 0.0
    %106 = vst [vmem:[#allocation2 + $0xc0] sm:$0xff] 0.0
    %107 = vst [vmem:[#allocation2 + $0xc8] sm:$0xff] 0.0
    %108 = vst [vmem:[#allocation2 + $0xd0] sm:$0xff] 0.0
    %109 = vst [vmem:[#allocation2 + $0xd8] sm:$0xff] 0.0
    %110 = vst [vmem:[#allocation2 + $0xe0] sm:$0xff] 0.0
    %111 = vst [vmem:[#allocation2 + $0xe8] sm:$0xff] 0.0
    %112 = vst [vmem:[#allocation2 + $0xf0] sm:$0xff] 0.0
    %113 = vst [vmem:[#allocation2 + $0xf8] sm:$0xff] 0.0
    %114 = vst [vmem:[#allocation2 + $0x100] sm:$0xff] 0.0
    %115 = vst [vmem:[#allocation2 + $0x108] sm:$0xff] 0.0
    %116 = vst [vmem:[#allocation2 + $0x110] sm:$0xff] 0.0
    %117 = vst [vmem:[#allocation2 + $0x118] sm:$0xff] 0.0
    %118 = vst [vmem:[#allocation2 + $0x120] sm:$0xff] 0.0
    %119 = vst [vmem:[#allocation2 + $0x128] sm:$0xff] 0.0
    %120 = vst [vmem:[#allocation2 + $0x130] sm:$0xff] 0.0
    %121 = vst [vmem:[#allocation2 + $0x138] sm:$0xff] 0.0
    %122 = vst [vmem:[#allocation2 + $0x140] sm:$0xff] 0.0
    %123 = vst [vmem:[#allocation2 + $0x148] sm:$0xff] 0.0
    %124 = vst [vmem:[#allocation2 + $0x150] sm:$0xff] 0.0
    %125 = vst [vmem:[#allocation2 + $0x158] sm:$0xff] 0.0
    %126 = vst [vmem:[#allocation2 + $0x160] sm:$0xff] 0.0
    %127 = vst [vmem:[#allocation2 + $0x168] sm:$0xff] 0.0
    %128 = vst [vmem:[#allocation2 + $0x170] sm:$0xff] 0.0
    %129 = vst [vmem:[#allocation2 + $0x178] sm:$0xff] 0.0
    %130 = vst [vmem:[#allocation2 + $0x180] sm:$0xff] 0.0
    %131 = vst [vmem:[#allocation2 + $0x188] sm:$0xff] 0.0
    %132 = vst [vmem:[#allocation2 + $0x190] sm:$0xff] 0.0
    %133 = vst [vmem:[#allocation2 + $0x198] sm:$0xff] 0.0
    %134 = vst [vmem:[#allocation2 + $0x1a0] sm:$0xff] 0.0
    %135 = vst [vmem:[#allocation2 + $0x1a8] sm:$0xff] 0.0
    %136 = vst [vmem:[#allocation2 + $0x1b0] sm:$0xff] 0.0
    %137 = vst [vmem:[#allocation2 + $0x1b8] sm:$0xff] 0.0
    %138 = vst [vmem:[#allocation2 + $0x1c0] sm:$0xff] 0.0
    %139 = vst [vmem:[#allocation2 + $0x1c8] sm:$0xff] 0.0
    %140 = vst [vmem:[#allocation2 + $0x1d0] sm:$0xff] 0.0
    %141 = vst [vmem:[#allocation2 + $0x1d8] sm:$0xff] 0.0
    %142 = vst [vmem:[#allocation2 + $0x1e0] sm:$0xff] 0.0
    %143 = vst [vmem:[#allocation2 + $0x1e8] sm:$0xff] 0.0
    %144 = vst [vmem:[#allocation2 + $0x1f0] sm:$0xff] 0.0
    %145 = vst [vmem:[#allocation2 + $0x1f8] sm:$0xff] 0.0
    %146 = vst [vmem:[#allocation2 + $0x200] sm:$0xff] 0.0
    %147 = vst [vmem:[#allocation2 + $0x208] sm:$0xff] 0.0
    %148 = vst [vmem:[#allocation2 + $0x210] sm:$0xff] 0.0
    %149 = vst [vmem:[#allocation2 + $0x218] sm:$0xff] 0.0
    %150 = vst [vmem:[#allocation2 + $0x220] sm:$0xff] 0.0
    %151 = vst [vmem:[#allocation2 + $0x228] sm:$0xff] 0.0
    %152 = vst [vmem:[#allocation2 + $0x230] sm:$0xff] 0.0
    %153 = vst [vmem:[#allocation2 + $0x238] sm:$0xff] 0.0
    %154 = vst [vmem:[#allocation2 + $0x240] sm:$0xff] 0.0
    %155 = vst [vmem:[#allocation2 + $0x248] sm:$0xff] 0.0
    %156 = vst [vmem:[#allocation2 + $0x250] sm:$0xff] 0.0
    %157 = vst [vmem:[#allocation2 + $0x258] sm:$0xff] 0.0
    %158 = vst [vmem:[#allocation2 + $0x260] sm:$0xff] 0.0
    %159 = vst [vmem:[#allocation2 + $0x268] sm:$0xff] 0.0
    %160 = vst [vmem:[#allocation2 + $0x270] sm:$0xff] 0.0
    %161 = vst [vmem:[#allocation2 + $0x278] sm:$0xff] 0.0
    %162 = vst [vmem:[#allocation2 + $0x280] sm:$0xff] 0.0
    %163 = vst [vmem:[#allocation2 + $0x288] sm:$0xff] 0.0
    %164 = vst [vmem:[#allocation2 + $0x290] sm:$0xff] 0.0
    %165 = vst [vmem:[#allocation2 + $0x298] sm:$0xff] 0.0
    %v166 = vpack.c.bf16 %v81, %v81
    %v167 = vld [vmem:[%s1] sm:$0xff]
    %v168 = vld [vmem:[%s1 + $0x8] sm:$0x11]
    %v171 = vunpack.c.l.b16 %v167
    %v172 = vunpack.c.h.b16 %v167
    %v173 = vunpack.c.l.b16 %v168
    %v174 = vunpack.c.h.b16 %v168
    %v175 = vpack.c.b16 %v173, %v171
    %v176 = vpack.c.b16 %v174, %v172
    %vm177 = vcmask 80896
    %v179 = vsel %vm177, %v166, 0
    %vm181 = vcmask 1044480
    %v183 = vsel %vm181, %v175, 0
    %v186 = vsel %vm181, %v176, 0
    %188 = vmatprep.subr.bf16.mxu0 0
    %189 = vmatpush1.bf16.msra.mxu0 0
    %190 = vmatprep.subr.bf16.mxu0 0
    %191 = vmatpush1.bf16.msra.mxu0 0
    %192 = vmatprep.subr.bf16.mxu0 0
    %193 = vmatpush1.bf16.msra.mxu0 0
    %194 = vmatprep.subr.bf16.mxu0 0
    %195 = vmatpush1.bf16.msra.mxu0 0
    %196 = vmatprep.subr.bf16.mxu0 0
    %197 = vmatpush1.bf16.msra.mxu0 0
    %198 = vmatprep.subr.bf16.mxu0 0
    %199 = vmatpush1.bf16.msra.mxu0 0
    %200 = vmatprep.subr.bf16.mxu0 0
    %201 = vmatpush1.bf16.msra.mxu0 0
    %202 = vmatprep.subr.bf16.mxu0 %v186
    %203 = vmatpush1.bf16.msra.mxu0 %v183
    %204 = vmatprep.subr.bf16.mxu0 0
    %205 = vmatpush2.bf16.msra.mxu0 0
    %206 = vmatprep.subr.bf16.mxu0 0
    %207 = vmatpush2.bf16.msra.mxu0 0
    %208 = vmatprep.subr.bf16.mxu0 0
    %209 = vmatpush2.bf16.msra.mxu0 0
    %210 = vmatprep.subr.bf16.mxu0 0
    %211 = vmatpush2.bf16.msra.mxu0 0
    %212 = vmatprep.subr.bf16.mxu0 0
    %213 = vmatpush2.bf16.msra.mxu0 0
    %214 = vmatprep.subr.bf16.mxu0 0
    %215 = vmatpush2.bf16.msra.mxu0 0
    %216 = vmatprep.subr.bf16.mxu0 0
    %217 = vmatpush2.bf16.msra.mxu0 0
    %218 = vmatprep.subr.bf16.mxu0 0
    %219 = vmatpush2.bf16.msra.mxu0 0
    %220 = vmatprep.mubr.bf16.mxu0 0
    %221 = vmatmul.mubr.bf16.gmra.mxu0 %v179
    %v222 = vpop.f32.mrf.mxu0
    %v223 = vadd.f32 0.0, %v222
    %v224 = vpop.f32.mrf.mxu0
    %v225 = vadd.f32 0.0, %v224
    %v226 = vpop.f32.mrf.mxu0
    %v227 = vpop.f32.mrf.mxu0
    %228 = vdwg.mxu0
    %229 = vst [vmem:[#allocation2] sm:$0x3] %v223
    %230 = vst [vmem:[#allocation2 + $0x8] sm:$0x3] %v225
    %s231 = scalar_lea.vmem %s1, 16
    %v232 = vld [vmem:[%s231] sm:$0xff]
    %v233 = vld [vmem:[%s231 + $0x8] sm:$0x11]
    %v236 = vunpack.c.l.b16 %v232
    %v237 = vunpack.c.h.b16 %v232
    %v238 = vunpack.c.l.b16 %v233
    %v239 = vunpack.c.h.b16 %v233
    %v240 = vpack.c.b16 %v238, %v236
    %v241 = vpack.c.b16 %v239, %v237
    %v243 = vsel %vm181, %v240, 0
    %v246 = vsel %vm181, %v241, 0
    %248 = vmatprep.subr.bf16.mxu0 0
    %249 = vmatpush1.bf16.msra.mxu0 0
    %250 = vmatprep.subr.bf16.mxu0 0
    %251 = vmatpush1.bf16.msra.mxu0 0
    %252 = vmatprep.subr.bf16.mxu0 0
    %253 = vmatpush1.bf16.msra.mxu0 0
    %254 = vmatprep.subr.bf16.mxu0 0
    %255 = vmatpush1.bf16.msra.mxu0 0
    %256 = vmatprep.subr.bf16.mxu0 0
    %257 = vmatpush1.bf16.msra.mxu0 0
    %258 = vmatprep.subr.bf16.mxu0 0
    %259 = vmatpush1.bf16.msra.mxu0 0
    %260 = vmatprep.subr.bf16.mxu0 0
    %261 = vmatpush1.bf16.msra.mxu0 0
    %262 = vmatprep.subr.bf16.mxu0 %v246
    %263 = vmatpush1.bf16.msra.mxu0 %v243
    %264 = vmatprep.subr.bf16.mxu0 0
    %265 = vmatpush2.bf16.msra.mxu0 0
    %266 = vmatprep.subr.bf16.mxu0 0
    %267 = vmatpush2.bf16.msra.mxu0 0
    %268 = vmatprep.subr.bf16.mxu0 0
    %269 = vmatpush2.bf16.msra.mxu0 0
    %270 = vmatprep.subr.bf16.mxu0 0
    %271 = vmatpush2.bf16.msra.mxu0 0
    %272 = vmatprep.subr.bf16.mxu0 0
    %273 = vmatpush2.bf16.msra.mxu0 0
    %274 = vmatprep.subr.bf16.mxu0 0
    %275 = vmatpush2.bf16.msra.mxu0 0
    %276 = vmatprep.subr.bf16.mxu0 0
    %277 = vmatpush2.bf16.msra.mxu0 0
    %278 = vmatprep.subr.bf16.mxu0 0
    %279 = vmatpush2.bf16.msra.mxu0 0
    %280 = vmatprep.mubr.bf16.mxu0 0
    %281 = vmatmul.mubr.bf16.gmra.mxu0 %v179
    %v282 = vpop.f32.mrf.mxu0
    %v283 = vadd.f32 0.0, %v282
    %v284 = vpop.f32.mrf.mxu0
    %v285 = vadd.f32 0.0, %v284
    %v286 = vpop.f32.mrf.mxu0
    %v287 = vpop.f32.mrf.mxu0
    %288 = vdwg.mxu0
    %289 = vst [vmem:[#allocation2 + $0x18] sm:$0x3] %v283
    %290 = vst [vmem:[#allocation2 + $0x20] sm:$0x3] %v285
    %s291 = scalar_lea.vmem %s1, 32
    %v292 = vld [vmem:[%s291] sm:$0xff]
    %v293 = vld [vmem:[%s291 + $0x8] sm:$0x11]
    %v296 = vunpack.c.l.b16 %v292
    %v297 = vunpack.c.h.b16 %v292
    %v298 = vunpack.c.l.b16 %v293
    %v299 = vunpack.c.h.b16 %v293
    %v300 = vpack.c.b16 %v298, %v296
    %v301 = vpack.c.b16 %v299, %v297
    %v303 = vsel %vm181, %v300, 0
    %v306 = vsel %vm181, %v301, 0
    %308 = vmatprep.subr.bf16.mxu0 0
    %309 = vmatpush1.bf16.msra.mxu0 0
    %310 = vmatprep.subr.bf16.mxu0 0
    %311 = vmatpush1.bf16.msra.mxu0 0
    %312 = vmatprep.subr.bf16.mxu0 0
    %313 = vmatpush1.bf16.msra.mxu0 0
    %314 = vmatprep.subr.bf16.mxu0 0
    %315 = vmatpush1.bf16.msra.mxu0 0
    %316 = vmatprep.subr.bf16.mxu0 0
    %317 = vmatpush1.bf16.msra.mxu0 0
    %318 = vmatprep.subr.bf16.mxu0 0
    %319 = vmatpush1.bf16.msra.mxu0 0
    %320 = vmatprep.subr.bf16.mxu0 0
    %321 = vmatpush1.bf16.msra.mxu0 0
    %322 = vmatprep.subr.bf16.mxu0 %v306
    %323 = vmatpush1.bf16.msra.mxu0 %v303
    %324 = vmatprep.subr.bf16.mxu0 0
    %325 = vmatpush2.bf16.msra.mxu0 0
    %326 = vmatprep.subr.bf16.mxu0 0
    %327 = vmatpush2.bf16.msra.mxu0 0
    %328 = vmatprep.subr.bf16.mxu0 0
    %329 = vmatpush2.bf16.msra.mxu0 0
    %330 = vmatprep.subr.bf16.mxu0 0
    %331 = vmatpush2.bf16.msra.mxu0 0
    %332 = vmatprep.subr.bf16.mxu0 0
    %333 = vmatpush2.bf16.msra.mxu0 0
    %334 = vmatprep.subr.bf16.mxu0 0
    %335 = vmatpush2.bf16.msra.mxu0 0
    %336 = vmatprep.subr.bf16.mxu0 0
    %337 = vmatpush2.bf16.msra.mxu0 0
    %338 = vmatprep.subr.bf16.mxu0 0
    %339 = vmatpush2.bf16.msra.mxu0 0
    %340 = vmatprep.mubr.bf16.mxu0 0
    %341 = vmatmul.mubr.bf16.gmra.mxu0 %v179
    %v342 = vpop.f32.mrf.mxu0
    %v343 = vadd.f32 0.0, %v342
    %v344 = vpop.f32.mrf.mxu0
    %v345 = vadd.f32 0.0, %v344
    %v346 = vpop.f32.mrf.mxu0
    %v347 = vpop.f32.mrf.mxu0
    %348 = vdwg.mxu0
    %349 = vst [vmem:[#allocation2 + $0x30] sm:$0x3] %v343
    %350 = vst [vmem:[#allocation2 + $0x38] sm:$0x3] %v345
    %s351 = scalar_lea.vmem %s1, 48
    %v352 = vld [vmem:[%s351] sm:$0xff]
    %v353 = vld [vmem:[%s351 + $0x8] sm:$0x11]
    %v356 = vunpack.c.l.b16 %v352
    %v357 = vunpack.c.h.b16 %v352
    %v358 = vunpack.c.l.b16 %v353
    %v359 = vunpack.c.h.b16 %v353
    %v360 = vpack.c.b16 %v358, %v356
    %v361 = vpack.c.b16 %v359, %v357
    %v363 = vsel %vm181, %v360, 0
    %v366 = vsel %vm181, %v361, 0
    %368 = vmatprep.subr.bf16.mxu0 0
    %369 = vmatpush1.bf16.msra.mxu0 0
    %370 = vmatprep.subr.bf16.mxu0 0
    %371 = vmatpush1.bf16.msra.mxu0 0
    %372 = vmatprep.subr.bf16.mxu0 0
    %373 = vmatpush1.bf16.msra.mxu0 0
    %374 = vmatprep.subr.bf16.mxu0 0
    %375 = vmatpush1.bf16.msra.mxu0 0
    %376 = vmatprep.subr.bf16.mxu0 0
    %377 = vmatpush1.bf16.msra.mxu0 0
    %378 = vmatprep.subr.bf16.mxu0 0
    %379 = vmatpush1.bf16.msra.mxu0 0
    %380 = vmatprep.subr.bf16.mxu0 0
    %381 = vmatpush1.bf16.msra.mxu0 0
    %382 = vmatprep.subr.bf16.mxu0 %v366
    %383 = vmatpush1.bf16.msra.mxu0 %v363
    %384 = vmatprep.subr.bf16.mxu0 0
    %385 = vmatpush2.bf16.msra.mxu0 0
    %386 = vmatprep.subr.bf16.mxu0 0
    %387 = vmatpush2.bf16.msra.mxu0 0
    %388 = vmatprep.subr.bf16.mxu0 0
    %389 = vmatpush2.bf16.msra.mxu0 0
    %390 = vmatprep.subr.bf16.mxu0 0
    %391 = vmatpush2.bf16.msra.mxu0 0
    %392 = vmatprep.subr.bf16.mxu0 0
    %393 = vmatpush2.bf16.msra.mxu0 0
    %394 = vmatprep.subr.bf16.mxu0 0
    %395 = vmatpush2.bf16.msra.mxu0 0
    %396 = vmatprep.subr.bf16.mxu0 0
    %397 = vmatpush2.bf16.msra.mxu0 0
    %398 = vmatprep.subr.bf16.mxu0 0
    %399 = vmatpush2.bf16.msra.mxu0 0
    %400 = vmatprep.mubr.bf16.mxu0 0
    %401 = vmatmul.mubr.bf16.gmra.mxu0 %v179
    %v402 = vpop.f32.mrf.mxu0
    %v403 = vadd.f32 0.0, %v402
    %v404 = vpop.f32.mrf.mxu0
    %v405 = vadd.f32 0.0, %v404
    %v406 = vpop.f32.mrf.mxu0
    %v407 = vpop.f32.mrf.mxu0
    %408 = vdwg.mxu0
    %409 = vst [vmem:[#allocation2 + $0x48] sm:$0x3] %v403
    %410 = vst [vmem:[#allocation2 + $0x50] sm:$0x3] %v405
    %v411 = vld [vmem:[#allocation2] sm:$0xff]
    %v412 = vld [vmem:[#allocation2 + $0x8] sm:$0xff]
    %v413 = vld [vmem:[#allocation2 + $0x18] sm:$0xff]
    %v414 = vld [vmem:[#allocation2 + $0x20] sm:$0xff]
    %v415 = vld [vmem:[#allocation2 + $0x30] sm:$0xff]
    %v416 = vld [vmem:[#allocation2 + $0x38] sm:$0xff]
    %v417 = vld [vmem:[#allocation2 + $0x48] sm:$0xff]
    %v418 = vld [vmem:[#allocation2 + $0x50] sm:$0xff]
    %v419 = vpack.c.bf16 %v413, %v411
    %v420 = vpack.c.bf16 %v414, %v412
    %v421 = vpack.c.bf16 %v417, %v415
    %v422 = vpack.c.bf16 %v418, %v416
    %v423 = vld [vmem:[%s2] sm:$0xf]
    %vm424 = vcmask 261120
    %v426 = vsel %vm424, %v423, 0
    %428 = vmatprep.subr.bf16.mxu0 0
    %429 = vmatpush1.bf16.msra.mxu0 0
    %430 = vmatprep.subr.bf16.mxu0 0
    %431 = vmatpush1.bf16.msra.mxu0 0
    %432 = vmatprep.subr.bf16.mxu0 0
    %433 = vmatpush1.bf16.msra.mxu0 0
    %434 = vmatprep.subr.bf16.mxu0 0
    %435 = vmatpush1.bf16.msra.mxu0 0
    %436 = vmatprep.subr.bf16.mxu0 0
    %437 = vmatpush1.bf16.msra.mxu0 0
    %438 = vmatprep.subr.bf16.mxu0 0
    %439 = vmatpush1.bf16.msra.mxu0 0
    %440 = vmatprep.subr.bf16.mxu0 %v422
    %441 = vmatpush1.bf16.msra.mxu0 %v421
    %442 = vmatprep.subr.bf16.mxu0 %v420
    %443 = vmatpush1.bf16.msra.mxu0 %v419
    %444 = vmatprep.subr.bf16.mxu0 0
    %445 = vmatpush2.bf16.msra.mxu0 0
    %446 = vmatprep.subr.bf16.mxu0 0
    %447 = vmatpush2.bf16.msra.mxu0 0
    %448 = vmatprep.subr.bf16.mxu0 0
    %449 = vmatpush2.bf16.msra.mxu0 0
    %450 = vmatprep.subr.bf16.mxu0 0
    %451 = vmatpush2.bf16.msra.mxu0 0
    %452 = vmatprep.subr.bf16.mxu0 0
    %453 = vmatpush2.bf16.msra.mxu0 0
    %454 = vmatprep.subr.bf16.mxu0 0
    %455 = vmatpush2.bf16.msra.mxu0 0
    %456 = vmatprep.subr.bf16.mxu0 0
    %457 = vmatpush2.bf16.msra.mxu0 0
    %458 = vmatprep.subr.bf16.mxu0 0
    %459 = vmatpush2.bf16.msra.mxu0 0
    %460 = vmatprep.mubr.bf16.mxu0 0
    %461 = vmatmul.mubr.bf16.gmra.mxu0 %v426
    %v462 = vpop.f32.mrf.mxu0
    %v463 = vadd.f32 0.0, %v462
    %v464 = vpop.f32.mrf.mxu0
    %v465 = vadd.f32 0.0, %v464
    %v466 = vpop.f32.mrf.mxu0
    %v467 = vpop.f32.mrf.mxu0
    %468 = vdwg.mxu0
    %v469 = vrot.slane %v463, 4
    %v470 = vadd.f32 %v463, %v469
    %v471 = vrot.slane %v470, 2
    %v472 = vadd.f32 %v470, %v471
    %v473 = vrot.slane %v472, 1
    %v474 = vadd.f32 %v472, %v473
    %v475 = vrot.slane %v465, 4
    %v476 = vadd.f32 %v465, %v475
    %v477 = vrot.slane %v476, 2
    %v478 = vadd.f32 %v476, %v477
    %v479 = vrot.slane %v478, 1
    %v480 = vadd.f32 %v478, %v479
    %v483 = vcombine.low %v474, %v480
    %v485 = vunpack.c.l.s4 1966171168
    %v486 = vunpack.c.0.s8 %v485
    %v487 = vlaneseq
    %v488 = vshrl.u32 %v487, 7
    %v489 = vsub.s32 %v486, %v488
    %v490 = vrot.slane %v483, %v489
    %v492 = vunpack.c.l.s4 1966171168
    %v493 = vunpack.c.0.s8 %v492
    %v494 = vlaneseq
    %v495 = vshrl.u32 %v494, 7
    %v496 = vsub.s32 %v493, %v495
    %v497 = vrot.slane %v490, %v496
    %v499 = vlaneseq
    %vm500 = vcmp.ge.s32.totalorder %v499, 0
    %vm501 = vcmp.lt.s32.totalorder %v499, 256
    %vm502 = vmand %vm500, %vm501
    %503 = vst.msk [vmem:[#allocation3] ss:$8 sm:$0x3] %vm502, %v497
    %504 = vst.msk [vmem:[#allocation3] ss:$8 sm:$0x0] %vm502, %v497
    %v505 = vmul.f32 %v463, %v463
    %v506 = vmul.f32 %v465, %v465
    %v507 = vrot.slane %v505, 4
    %v508 = vadd.f32 %v505, %v507
    %v509 = vrot.slane %v508, 2
    %v510 = vadd.f32 %v508, %v509
    %v511 = vrot.slane %v510, 1
    %v512 = vadd.f32 %v510, %v511
    %v513 = vrot.slane %v506, 4
    %v514 = vadd.f32 %v506, %v513
    %v515 = vrot.slane %v514, 2
    %v516 = vadd.f32 %v514, %v515
    %v517 = vrot.slane %v516, 1
    %v518 = vadd.f32 %v516, %v517
    %v521 = vcombine.low %v512, %v518
    %v523 = vunpack.c.l.s4 1966171168
    %v524 = vunpack.c.0.s8 %v523
    %v525 = vlaneseq
    %v526 = vshrl.u32 %v525, 7
    %v527 = vsub.s32 %v524, %v526
    %v528 = vrot.slane %v521, %v527
    %v530 = vunpack.c.l.s4 1966171168
    %v531 = vunpack.c.0.s8 %v530
    %v532 = vlaneseq
    %v533 = vshrl.u32 %v532, 7
    %v534 = vsub.s32 %v531, %v533
    %v535 = vrot.slane %v528, %v534
    %s537 = scalar_lea.vmem [#allocation3], 1
    %538 = vst.msk [vmem:[%s537] ss:$8 sm:$0x3] %vm502, %v535
    %539 = vst.msk [vmem:[%s537] ss:$8 sm:$0x0] %vm502, %v535
    %v540 = vld [vmem:[#allocation3] sm:$0x3]
    %v541 = vld [vmem:[#allocation3 + $0x8] sm:$0x3]
    %v542 = vld [vmem:[%s4] sm:$0xf]
    %v543 = vld [vmem:[%s4 + $0x4] sm:$0xf]
    %v544 = vld [vmem:[%s4 + $0x8] sm:$0xf]
    %v545 = vld [vmem:[%s4 + $0xc] sm:$0xf]
    %v546 = vld [vmem:[%s4 + $0x10] sm:$0xf]
    %v547 = vld [vmem:[%s4 + $0x14] sm:$0xf]
    %v548 = vld [vmem:[%s4 + $0x18] sm:$0xf]
    %v549 = vld [vmem:[%s4 + $0x1c] sm:$0xf]
    %v550 = vld [vmem:[%s4 + $0x20] sm:$0xf]
    %v551 = vld [vmem:[%s4 + $0x24] sm:$0xf]
    %v552 = vld [vmem:[%s4 + $0x28] sm:$0xf]
    %v553 = vld [vmem:[%s4 + $0x2c] sm:$0xf]
    %v554 = vld [vmem:[%s4 + $0x30] sm:$0xf]
    %v555 = vld [vmem:[%s4 + $0x34] sm:$0xf]
    %v556 = vld [vmem:[%s4 + $0x38] sm:$0xf]
    %v557 = vld [vmem:[%s4 + $0x3c] sm:$0xf]
    %v558 = vld [vmem:[%s4 + $0x40] sm:$0xf]
    %v559 = vld [vmem:[%s4 + $0x44] sm:$0xf]
    %v560 = vld [vmem:[%s4 + $0x48] sm:$0xf]
    %v561 = vld [vmem:[%s4 + $0x4c] sm:$0xf]
    %v562 = vld [vmem:[%s4 + $0x50] sm:$0xf]
    %v563 = vld [vmem:[%s4 + $0x54] sm:$0xf]
    %v564 = vld [vmem:[%s4 + $0x58] sm:$0xf]
    %v565 = vld [vmem:[%s4 + $0x5c] sm:$0xf]
    %v566 = vld [vmem:[%s4 + $0x60] sm:$0xf]
    %v567 = vld [vmem:[%s4 + $0x64] sm:$0xf]
    %v568 = vld [vmem:[%s4 + $0x68] sm:$0xf]
    %v569 = vld [vmem:[%s4 + $0x6c] sm:$0xf]
    %v570 = vld [vmem:[%s4 + $0x70] sm:$0xf]
    %v571 = vld [vmem:[%s4 + $0x74] sm:$0xf]
    %v572 = vld [vmem:[%s4 + $0x78] sm:$0xf]
    %v573 = vld [vmem:[%s4 + $0x7c] sm:$0xf]
    %v606 = vunpack.c.l.b16 %v542
    %v607 = vunpack.c.l.b16 %v543
    %v608 = vunpack.c.l.b16 %v544
    %v609 = vunpack.c.l.b16 %v545
    %v610 = vunpack.c.l.b16 %v546
    %v611 = vunpack.c.l.b16 %v547
    %v612 = vunpack.c.l.b16 %v548
    %v613 = vunpack.c.l.b16 %v549
    %v614 = vunpack.c.l.b16 %v550
    %v615 = vunpack.c.l.b16 %v551
    %v616 = vunpack.c.l.b16 %v552
    %v617 = vunpack.c.l.b16 %v553
    %v618 = vunpack.c.l.b16 %v554
    %v619 = vunpack.c.l.b16 %v555
    %v620 = vunpack.c.l.b16 %v556
    %v621 = vunpack.c.l.b16 %v557
    %v622 = vunpack.c.l.b16 %v558
    %v623 = vunpack.c.l.b16 %v559
    %v624 = vunpack.c.l.b16 %v560
    %v625 = vunpack.c.l.b16 %v561
    %v626 = vunpack.c.l.b16 %v562
    %v627 = vunpack.c.l.b16 %v563
    %v628 = vunpack.c.l.b16 %v564
    %v629 = vunpack.c.l.b16 %v565
    %v630 = vunpack.c.l.b16 %v566
    %v631 = vunpack.c.l.b16 %v567
    %v632 = vunpack.c.l.b16 %v568
    %v633 = vunpack.c.l.b16 %v569
    %v634 = vunpack.c.l.b16 %v570
    %v635 = vunpack.c.l.b16 %v571
    %v636 = vunpack.c.l.b16 %v572
    %v637 = vunpack.c.l.b16 %v573
    %v638 = vpack.c.b16 %v607, %v606
    %v639 = vpack.c.b16 %v609, %v608
    %v640 = vpack.c.b16 %v611, %v610
    %v641 = vpack.c.b16 %v613, %v612
    %v642 = vpack.c.b16 %v615, %v614
    %v643 = vpack.c.b16 %v617, %v616
    %v644 = vpack.c.b16 %v619, %v618
    %v645 = vpack.c.b16 %v621, %v620
    %v646 = vpack.c.b16 %v623, %v622
    %v647 = vpack.c.b16 %v625, %v624
    %v648 = vpack.c.b16 %v627, %v626
    %v649 = vpack.c.b16 %v629, %v628
    %v650 = vpack.c.b16 %v631, %v630
    %v651 = vpack.c.b16 %v633, %v632
    %v652 = vpack.c.b16 %v635, %v634
    %v653 = vpack.c.b16 %v637, %v636
    %670 = vmatprep.subr.bf16.mxu0 0
    %671 = vmatpush1.bf16.msra.mxu0 %v645
    %672 = vmatprep.subr.bf16.mxu0 0
    %673 = vmatpush1.bf16.msra.mxu0 %v644
    %674 = vmatprep.subr.bf16.mxu0 0
    %675 = vmatpush1.bf16.msra.mxu0 %v643
    %676 = vmatprep.subr.bf16.mxu0 0
    %677 = vmatpush1.bf16.msra.mxu0 %v642
    %678 = vmatprep.subr.bf16.mxu0 0
    %679 = vmatpush1.bf16.msra.mxu0 %v641
    %680 = vmatprep.subr.bf16.mxu0 0
    %681 = vmatpush1.bf16.msra.mxu0 %v640
    %682 = vmatprep.subr.bf16.mxu0 0
    %683 = vmatpush1.bf16.msra.mxu0 %v639
    %684 = vmatprep.subr.bf16.mxu0 0
    %685 = vmatpush1.bf16.msra.mxu0 %v638
    %686 = vmatprep.subr.bf16.mxu0 0
    %687 = vmatpush2.bf16.msra.mxu0 %v653
    %688 = vmatprep.subr.bf16.mxu0 0
    %689 = vmatpush2.bf16.msra.mxu0 %v652
    %690 = vmatprep.subr.bf16.mxu0 0
    %691 = vmatpush2.bf16.msra.mxu0 %v651
    %692 = vmatprep.subr.bf16.mxu0 0
    %693 = vmatpush2.bf16.msra.mxu0 %v650
    %694 = vmatprep.subr.bf16.mxu0 0
    %695 = vmatpush2.bf16.msra.mxu0 %v649
    %696 = vmatprep.subr.bf16.mxu0 0
    %697 = vmatpush2.bf16.msra.mxu0 %v648
    %698 = vmatprep.subr.bf16.mxu0 0
    %699 = vmatpush2.bf16.msra.mxu0 %v647
    %700 = vmatprep.subr.bf16.mxu0 0
    %701 = vmatpush2.bf16.msra.mxu0 %v646
    %702 = vmatprep.mubr.f32.mxu0 %v541
    %703 = vmatmul.mubr.f32.gmra.mxu0 %v540
    %v704 = vpop.f32.mrf.mxu0
    %v705 = vadd.f32 0.0, %v704
    %v706 = vpop.f32.mrf.mxu0
    %707 = vdwg.mxu0
    %v708 = vmul.f32 %v705, 0.03125
    %v709 = vmul.f32 %v708, %v708
    %v711 = vrot.slane %v709, 7
    %v713 = vsub.f32 %v708, %v711
    %v714 = vld [vmem:[%s3] sm:$0x1]
    %v715 = vadd.f32 %v713, 1e-05
    %v716 = vrsqrt.pop %v715
    %v718 = vrot.slane %v716, 1
    %v720 = vmul.f32 %v714, %v718
    %v721 = vld [vmem:[%s3 + $0x1] sm:$0x1]
    %v722 = vmul.f32 %v708, %v720
    %v723 = vsub.f32 %v721, %v722
    %vm724 = vcmask 516096
    %725 = vst.msk [vmem:[#allocation3] sm:$0x1] %vm724, %v720
    %726 = vst.msk [vmem:[#allocation3 + $0x1] sm:$0x1] %vm724, %v723
    %v727 = vld [vmem:[#allocation3] sm:$0x3]
    %v728 = vld [vmem:[%s5] sm:$0xff]
    %v729 = vld [vmem:[%s5 + $0x8] sm:$0xff]
    %v730 = vld [vmem:[%s5 + $0x10] sm:$0xff]
    %v731 = vld [vmem:[%s5 + $0x18] sm:$0xff]
    %v732 = vld [vmem:[%s5 + $0x20] sm:$0xff]
    %v733 = vld [vmem:[%s5 + $0x28] sm:$0xff]
    %v734 = vld [vmem:[%s5 + $0x30] sm:$0xff]
    %v735 = vld [vmem:[%s5 + $0x38] sm:$0xff]
    %v744 = vunpack.c.l.b16 %v728
    %v745 = vunpack.c.h.b16 %v728
    %v746 = vunpack.c.l.b16 %v729
    %v747 = vunpack.c.h.b16 %v729
    %v748 = vunpack.c.l.b16 %v730
    %v749 = vunpack.c.h.b16 %v730
    %v750 = vunpack.c.l.b16 %v731
    %v751 = vunpack.c.h.b16 %v731
    %v752 = vunpack.c.l.b16 %v732
    %v753 = vunpack.c.h.b16 %v732
    %v754 = vunpack.c.l.b16 %v733
    %v755 = vunpack.c.h.b16 %v733
    %v756 = vunpack.c.l.b16 %v734
    %v757 = vunpack.c.h.b16 %v734
    %v758 = vunpack.c.l.b16 %v735
    %v759 = vunpack.c.h.b16 %v735
    %v760 = vpack.c.b16 %v746, %v744
    %v761 = vpack.c.b16 %v747, %v745
    %v762 = vpack.c.b16 %v750, %v748
    %v763 = vpack.c.b16 %v751, %v749
    %v764 = vpack.c.b16 %v754, %v752
    %v765 = vpack.c.b16 %v755, %v753
    %v766 = vpack.c.b16 %v758, %v756
    %v767 = vpack.c.b16 %v759, %v757
    %vm776 = vcmask 523264
    %v778 = vsel %vm776, %v727, 0
    %780 = vmatprep.subr.bf16.mxu0 0
    %781 = vmatpush1.bf16.msra.mxu0 0
    %782 = vmatprep.subr.bf16.mxu0 0
    %783 = vmatpush1.bf16.msra.mxu0 0
    %784 = vmatprep.subr.bf16.mxu0 0
    %785 = vmatpush1.bf16.msra.mxu0 0
    %786 = vmatprep.subr.bf16.mxu0 0
    %787 = vmatpush1.bf16.msra.mxu0 0
    %788 = vmatprep.subr.bf16.mxu0 %v767
    %789 = vmatpush1.bf16.msra.mxu0 %v766
    %790 = vmatprep.subr.bf16.mxu0 %v765
    %791 = vmatpush1.bf16.msra.mxu0 %v764
    %792 = vmatprep.subr.bf16.mxu0 %v763
    %793 = vmatpush1.bf16.msra.mxu0 %v762
    %794 = vmatprep.subr.bf16.mxu0 %v761
    %795 = vmatpush1.bf16.msra.mxu0 %v760
    %796 = vmatprep.subr.bf16.mxu0 0
    %797 = vmatpush2.bf16.msra.mxu0 0
    %798 = vmatprep.subr.bf16.mxu0 0
    %799 = vmatpush2.bf16.msra.mxu0 0
    %800 = vmatprep.subr.bf16.mxu0 0
    %801 = vmatpush2.bf16.msra.mxu0 0
    %802 = vmatprep.subr.bf16.mxu0 0
    %803 = vmatpush2.bf16.msra.mxu0 0
    %804 = vmatprep.subr.bf16.mxu0 0
    %805 = vmatpush2.bf16.msra.mxu0 0
    %806 = vmatprep.subr.bf16.mxu0 0
    %807 = vmatpush2.bf16.msra.mxu0 0
    %808 = vmatprep.subr.bf16.mxu0 0
    %809 = vmatpush2.bf16.msra.mxu0 0
    %810 = vmatprep.subr.bf16.mxu0 0
    %811 = vmatpush2.bf16.msra.mxu0 0
    %812 = vmatprep.mubr.f32.mxu0 0.0
    %813 = vmatmul.mubr.f32.gmra.mxu0 %v778
    %v814 = vpop.f32.mrf.mxu0
    %v815 = vadd.f32 0.0, %v814
    %v816 = vpop.f32.mrf.mxu0
    %v817 = vadd.f32 0.0, %v816
    %818 = vdwg.mxu0
    %v819 = vlaneseq
    %v820 = vshrl.u32 %v819, 7
    %v821 = vsub.s32 0, %v820
    %v822 = vrot.slane %v815, %v821
    %v823 = vlaneseq
    %v824 = vshrl.u32 %v823, 7
    %v825 = vsub.s32 0, %v824
    %v826 = vrot.slane %v817, %v825
    %v827 = vmul.f32 %v463, %v822
    %v828 = vmul.f32 %v465, %v826
    %v829 = vlaneseq
    %v830 = vshrl.u32 %v829, 7
    %v831 = vsub.s32 1, %v830
    %v832 = vrot.slane %v815, %v831
    %v833 = vlaneseq
    %v834 = vshrl.u32 %v833, 7
    %v835 = vsub.s32 1, %v834
    %v836 = vrot.slane %v817, %v835
    %v837 = vadd.f32 %v827, %v832
    %v838 = vadd.f32 %v828, %v836
    %v839 = vmax.f32 %v837, 0.0
    %v840 = vmax.f32 %v838, 0.0
    %v841 = vpack.c.bf16 %v839, %v839
    %v842 = vpack.c.bf16 %v840, %v840
    %v843 = vld [vmem:[%s6] sm:$0xff]
    %v844 = vld [vmem:[%s6 + $0x8] sm:$0xf]
    %v845 = vld [vmem:[%s6 + $0xc] sm:$0xff]
    %v846 = vld [vmem:[%s6 + $0x14] sm:$0xf]
    %v847 = vld [vmem:[%s6 + $0x18] sm:$0xff]
    %v848 = vld [vmem:[%s6 + $0x20] sm:$0xf]
    %v849 = vld [vmem:[%s6 + $0x24] sm:$0xff]
    %v850 = vld [vmem:[%s6 + $0x2c] sm:$0xf]
    %v851 = vld [vmem:[%s6 + $0x30] sm:$0xff]
    %v852 = vld [vmem:[%s6 + $0x38] sm:$0xf]
    %v853 = vld [vmem:[%s6 + $0x3c] sm:$0xff]
    %v854 = vld [vmem:[%s6 + $0x44] sm:$0xf]
    %v855 = vld [vmem:[%s6 + $0x48] sm:$0xff]
    %v856 = vld [vmem:[%s6 + $0x50] sm:$0xf]
    %v857 = vld [vmem:[%s6 + $0x54] sm:$0xff]
    %v858 = vld [vmem:[%s6 + $0x5c] sm:$0xf]
    %v859 = vld [vmem:[%s6 + $0x60] sm:$0xff]
    %v860 = vld [vmem:[%s6 + $0x68] sm:$0xf]
    %v861 = vld [vmem:[%s6 + $0x6c] sm:$0xff]
    %v862 = vld [vmem:[%s6 + $0x74] sm:$0xf]
    %v863 = vld [vmem:[%s6 + $0x78] sm:$0xff]
    %v864 = vld [vmem:[%s6 + $0x80] sm:$0xf]
    %v865 = vld [vmem:[%s6 + $0x84] sm:$0xff]
    %v866 = vld [vmem:[%s6 + $0x8c] sm:$0xf]
    %v867 = vld [vmem:[%s6 + $0x90] sm:$0xff]
    %v868 = vld [vmem:[%s6 + $0x98] sm:$0xf]
    %v869 = vld [vmem:[%s6 + $0x9c] sm:$0xff]
    %v870 = vld [vmem:[%s6 + $0xa4] sm:$0xf]
    %v871 = vld [vmem:[%s6 + $0xa8] sm:$0xff]
    %v872 = vld [vmem:[%s6 + $0xb0] sm:$0xf]
    %v873 = vld [vmem:[%s6 + $0xb4] sm:$0xff]
    %v874 = vld [vmem:[%s6 + $0xbc] sm:$0xf]
    %v875 = vld [vmem:[%s6 + $0xc0] sm:$0xff]
    %v876 = vld [vmem:[%s6 + $0xc8] sm:$0xf]
    %v877 = vld [vmem:[%s6 + $0xcc] sm:$0xff]
    %v878 = vld [vmem:[%s6 + $0xd4] sm:$0xf]
    %v879 = vld [vmem:[%s6 + $0xd8] sm:$0xff]
    %v880 = vld [vmem:[%s6 + $0xe0] sm:$0xf]
    %v881 = vld [vmem:[%s6 + $0xe4] sm:$0xff]
    %v882 = vld [vmem:[%s6 + $0xec] sm:$0xf]
    %v883 = vld [vmem:[%s6 + $0xf0] sm:$0xff]
    %v884 = vld [vmem:[%s6 + $0xf8] sm:$0xf]
    %v885 = vld [vmem:[%s6 + $0xfc] sm:$0xff]
    %v886 = vld [vmem:[%s6 + $0x104] sm:$0xf]
    %v887 = vld [vmem:[%s6 + $0x108] sm:$0xff]
    %v888 = vld [vmem:[%s6 + $0x110] sm:$0xf]
    %v889 = vld [vmem:[%s6 + $0x114] sm:$0xff]
    %v890 = vld [vmem:[%s6 + $0x11c] sm:$0xf]
    %v891 = vld [vmem:[%s6 + $0x120] sm:$0xff]
    %v892 = vld [vmem:[%s6 + $0x128] sm:$0xf]
    %v893 = vld [vmem:[%s6 + $0x12c] sm:$0xff]
    %v894 = vld [vmem:[%s6 + $0x134] sm:$0xf]
    %v895 = vld [vmem:[%s6 + $0x138] sm:$0xff]
    %v896 = vld [vmem:[%s6 + $0x140] sm:$0xf]
    %v897 = vld [vmem:[%s6 + $0x144] sm:$0xff]
    %v898 = vld [vmem:[%s6 + $0x14c] sm:$0xf]
    %v899 = vld [vmem:[%s6 + $0x150] sm:$0xff]
    %v900 = vld [vmem:[%s6 + $0x158] sm:$0xf]
    %v901 = vld [vmem:[%s6 + $0x15c] sm:$0xff]
    %v902 = vld [vmem:[%s6 + $0x164] sm:$0xf]
    %v903 = vld [vmem:[%s6 + $0x168] sm:$0xff]
    %v904 = vld [vmem:[%s6 + $0x170] sm:$0xf]
    %v905 = vld [vmem:[%s6 + $0x174] sm:$0xff]
    %v906 = vld [vmem:[%s6 + $0x17c] sm:$0xf]
    %v971 = vunpack.c.l.b16 %v843
    %v972 = vunpack.c.h.b16 %v843
    %v973 = vunpack.c.l.b16 %v844
    %v974 = vunpack.c.l.b16 %v845
    %v975 = vunpack.c.h.b16 %v845
    %v976 = vunpack.c.l.b16 %v846
    %v977 = vunpack.c.l.b16 %v847
    %v978 = vunpack.c.h.b16 %v847
    %v979 = vunpack.c.l.b16 %v848
    %v980 = vunpack.c.l.b16 %v849
    %v981 = vunpack.c.h.b16 %v849
    %v982 = vunpack.c.l.b16 %v850
    %v983 = vunpack.c.l.b16 %v851
    %v984 = vunpack.c.h.b16 %v851
    %v985 = vunpack.c.l.b16 %v852
    %v986 = vunpack.c.l.b16 %v853
    %v987 = vunpack.c.h.b16 %v853
    %v988 = vunpack.c.l.b16 %v854
    %v989 = vunpack.c.l.b16 %v855
    %v990 = vunpack.c.h.b16 %v855
    %v991 = vunpack.c.l.b16 %v856
    %v992 = vunpack.c.l.b16 %v857
    %v993 = vunpack.c.h.b16 %v857
    %v994 = vunpack.c.l.b16 %v858
    %v995 = vunpack.c.l.b16 %v859
    %v996 = vunpack.c.h.b16 %v859
    %v997 = vunpack.c.l.b16 %v860
    %v998 = vunpack.c.l.b16 %v861
    %v999 = vunpack.c.h.b16 %v861
    %v1000 = vunpack.c.l.b16 %v862
    %v1001 = vunpack.c.l.b16 %v863
    %v1002 = vunpack.c.h.b16 %v863
    %v1003 = vunpack.c.l.b16 %v864
    %v1004 = vunpack.c.l.b16 %v865
    %v1005 = vunpack.c.h.b16 %v865
    %v1006 = vunpack.c.l.b16 %v866
    %v1007 = vunpack.c.l.b16 %v867
    %v1008 = vunpack.c.h.b16 %v867
    %v1009 = vunpack.c.l.b16 %v868
    %v1010 = vunpack.c.l.b16 %v869
    %v1011 = vunpack.c.h.b16 %v869
    %v1012 = vunpack.c.l.b16 %v870
    %v1013 = vunpack.c.l.b16 %v871
    %v1014 = vunpack.c.h.b16 %v871
    %v1015 = vunpack.c.l.b16 %v872
    %v1016 = vunpack.c.l.b16 %v873
    %v1017 = vunpack.c.h.b16 %v873
    %v1018 = vunpack.c.l.b16 %v874
    %v1019 = vunpack.c.l.b16 %v875
    %v1020 = vunpack.c.h.b16 %v875
    %v1021 = vunpack.c.l.b16 %v876
    %v1022 = vunpack.c.l.b16 %v877
    %v1023 = vunpack.c.h.b16 %v877
    %v1024 = vunpack.c.l.b16 %v878
    %v1025 = vunpack.c.l.b16 %v879
    %v1026 = vunpack.c.h.b16 %v879
    %v1027 = vunpack.c.l.b16 %v880
    %v1028 = vunpack.c.l.b16 %v881
    %v1029 = vunpack.c.h.b16 %v881
    %v1030 = vunpack.c.l.b16 %v882
    %v1031 = vunpack.c.l.b16 %v883
    %v1032 = vunpack.c.h.b16 %v883
    %v1033 = vunpack.c.l.b16 %v884
    %v1034 = vunpack.c.l.b16 %v885
    %v1035 = vunpack.c.h.b16 %v885
    %v1036 = vunpack.c.l.b16 %v886
    %v1037 = vunpack.c.l.b16 %v887
    %v1038 = vunpack.c.h.b16 %v887
    %v1039 = vunpack.c.l.b16 %v888
    %v1040 = vunpack.c.l.b16 %v889
    %v1041 = vunpack.c.h.b16 %v889
    %v1042 = vunpack.c.l.b16 %v890
    %v1043 = vunpack.c.l.b16 %v891
    %v1044 = vunpack.c.h.b16 %v891
    %v1045 = vunpack.c.l.b16 %v892
    %v1046 = vunpack.c.l.b16 %v893
    %v1047 = vunpack.c.h.b16 %v893
    %v1048 = vunpack.c.l.b16 %v894
    %v1049 = vunpack.c.l.b16 %v895
    %v1050 = vunpack.c.h.b16 %v895
    %v1051 = vunpack.c.l.b16 %v896
    %v1052 = vunpack.c.l.b16 %v897
    %v1053 = vunpack.c.h.b16 %v897
    %v1054 = vunpack.c.l.b16 %v898
    %v1055 = vunpack.c.l.b16 %v899
    %v1056 = vunpack.c.h.b16 %v899
    %v1057 = vunpack.c.l.b16 %v900
    %v1058 = vunpack.c.l.b16 %v901
    %v1059 = vunpack.c.h.b16 %v901
    %v1060 = vunpack.c.l.b16 %v902
    %v1061 = vunpack.c.l.b16 %v903
    %v1062 = vunpack.c.h.b16 %v903
    %v1063 = vunpack.c.l.b16 %v904
    %v1064 = vunpack.c.l.b16 %v905
    %v1065 = vunpack.c.h.b16 %v905
    %v1066 = vunpack.c.l.b16 %v906
    %v1067 = vpack.c.b16 %v974, %v971
    %v1068 = vpack.c.b16 %v975, %v972
    %v1069 = vpack.c.b16 %v976, %v973
    %v1070 = vpack.c.b16 %v980, %v977
    %v1071 = vpack.c.b16 %v981, %v978
    %v1072 = vpack.c.b16 %v982, %v979
    %v1073 = vpack.c.b16 %v986, %v983
    %v1074 = vpack.c.b16 %v987, %v984
    %v1075 = vpack.c.b16 %v988, %v985
    %v1076 = vpack.c.b16 %v992, %v989
    %v1077 = vpack.c.b16 %v993, %v990
    %v1078 = vpack.c.b16 %v994, %v991
    %v1079 = vpack.c.b16 %v998, %v995
    %v1080 = vpack.c.b16 %v999, %v996
    %v1081 = vpack.c.b16 %v1000, %v997
    %v1082 = vpack.c.b16 %v1004, %v1001
    %v1083 = vpack.c.b16 %v1005, %v1002
    %v1084 = vpack.c.b16 %v1006, %v1003
    %v1085 = vpack.c.b16 %v1010, %v1007
    %v1086 = vpack.c.b16 %v1011, %v1008
    %v1087 = vpack.c.b16 %v1012, %v1009
    %v1088 = vpack.c.b16 %v1016, %v1013
    %v1089 = vpack.c.b16 %v1017, %v1014
    %v1090 = vpack.c.b16 %v1018, %v1015
    %v1091 = vpack.c.b16 %v1022, %v1019
    %v1092 = vpack.c.b16 %v1023, %v1020
    %v1093 = vpack.c.b16 %v1024, %v1021
    %v1094 = vpack.c.b16 %v1028, %v1025
    %v1095 = vpack.c.b16 %v1029, %v1026
    %v1096 = vpack.c.b16 %v1030, %v1027
    %v1097 = vpack.c.b16 %v1034, %v1031
    %v1098 = vpack.c.b16 %v1035, %v1032
    %v1099 = vpack.c.b16 %v1036, %v1033
    %v1100 = vpack.c.b16 %v1040, %v1037
    %v1101 = vpack.c.b16 %v1041, %v1038
    %v1102 = vpack.c.b16 %v1042, %v1039
    %v1103 = vpack.c.b16 %v1046, %v1043
    %v1104 = vpack.c.b16 %v1047, %v1044
    %v1105 = vpack.c.b16 %v1048, %v1045
    %v1106 = vpack.c.b16 %v1052, %v1049
    %v1107 = vpack.c.b16 %v1053, %v1050
    %v1108 = vpack.c.b16 %v1054, %v1051
    %v1109 = vpack.c.b16 %v1058, %v1055
    %v1110 = vpack.c.b16 %v1059, %v1056
    %v1111 = vpack.c.b16 %v1060, %v1057
    %v1112 = vpack.c.b16 %v1064, %v1061
    %v1113 = vpack.c.b16 %v1065, %v1062
    %v1114 = vpack.c.b16 %v1066, %v1063
    %1163 = vmatprep.subr.bf16.mxu0 %v1089
    %1164 = vmatpush1.bf16.msra.mxu0 %v1088
    %1165 = vmatprep.subr.bf16.mxu0 %v1086
    %1166 = vmatpush1.bf16.msra.mxu0 %v1085
    %1167 = vmatprep.subr.bf16.mxu0 %v1083
    %1168 = vmatpush1.bf16.msra.mxu0 %v1082
    %1169 = vmatprep.subr.bf16.mxu0 %v1080
    %1170 = vmatpush1.bf16.msra.mxu0 %v1079
    %1171 = vmatprep.subr.bf16.mxu0 %v1077
    %1172 = vmatpush1.bf16.msra.mxu0 %v1076
    %1173 = vmatprep.subr.bf16.mxu0 %v1074
    %1174 = vmatpush1.bf16.msra.mxu0 %v1073
    %1175 = vmatprep.subr.bf16.mxu0 %v1071
    %1176 = vmatpush1.bf16.msra.mxu0 %v1070
    %1177 = vmatprep.subr.bf16.mxu0 %v1068
    %1178 = vmatpush1.bf16.msra.mxu0 %v1067
    %1179 = vmatprep.subr.bf16.mxu0 %v1113
    %1180 = vmatpush2.bf16.msra.mxu0 %v1112
    %1181 = vmatprep.subr.bf16.mxu0 %v1110
    %1182 = vmatpush2.bf16.msra.mxu0 %v1109
    %1183 = vmatprep.subr.bf16.mxu0 %v1107
    %1184 = vmatpush2.bf16.msra.mxu0 %v1106
    %1185 = vmatprep.subr.bf16.mxu0 %v1104
    %1186 = vmatpush2.bf16.msra.mxu0 %v1103
    %1187 = vmatprep.subr.bf16.mxu0 %v1101
    %1188 = vmatpush2.bf16.msra.mxu0 %v1100
    %1189 = vmatprep.subr.bf16.mxu0 %v1098
    %1190 = vmatpush2.bf16.msra.mxu0 %v1097
    %1191 = vmatprep.subr.bf16.mxu0 %v1095
    %1192 = vmatpush2.bf16.msra.mxu0 %v1094
    %1193 = vmatprep.subr.bf16.mxu0 %v1092
    %1194 = vmatpush2.bf16.msra.mxu0 %v1091
    %1195 = vmatprep.mubr.bf16.mxu0 %v842
    %1196 = vmatmul.mubr.bf16.gmra.mxu0 %v841
    %v1197 = vpop.f32.mrf.mxu0
    %v1198 = vadd.f32 0.0, %v1197
    %v1199 = vpop.f32.mrf.mxu0
    %v1200 = vadd.f32 0.0, %v1199
    %v1201 = vpop.f32.mrf.mxu0
    %v1202 = vpop.f32.mrf.mxu0
    %1203 = vdwg.mxu0
    %1204 = vmatprep.subr.bf16.mxu0 0
    %1205 = vmatpush1.bf16.msra.mxu0 %v1090
    %1206 = vmatprep.subr.bf16.mxu0 0
    %1207 = vmatpush1.bf16.msra.mxu0 %v1087
    %1208 = vmatprep.subr.bf16.mxu0 0
    %1209 = vmatpush1.bf16.msra.mxu0 %v1084
    %1210 = vmatprep.subr.bf16.mxu0 0
    %1211 = vmatpush1.bf16.msra.mxu0 %v1081
    %1212 = vmatprep.subr.bf16.mxu0 0
    %1213 = vmatpush1.bf16.msra.mxu0 %v1078
    %1214 = vmatprep.subr.bf16.mxu0 0
    %1215 = vmatpush1.bf16.msra.mxu0 %v1075
    %1216 = vmatprep.subr.bf16.mxu0 0
    %1217 = vmatpush1.bf16.msra.mxu0 %v1072
    %1218 = vmatprep.subr.bf16.mxu0 0
    %1219 = vmatpush1.bf16.msra.mxu0 %v1069
    %1220 = vmatprep.subr.bf16.mxu0 0
    %1221 = vmatpush2.bf16.msra.mxu0 %v1114
    %1222 = vmatprep.subr.bf16.mxu0 0
    %1223 = vmatpush2.bf16.msra.mxu0 %v1111
    %1224 = vmatprep.subr.bf16.mxu0 0
    %1225 = vmatpush2.bf16.msra.mxu0 %v1108
    %1226 = vmatprep.subr.bf16.mxu0 0
    %1227 = vmatpush2.bf16.msra.mxu0 %v1105
    %1228 = vmatprep.subr.bf16.mxu0 0
    %1229 = vmatpush2.bf16.msra.mxu0 %v1102
    %1230 = vmatprep.subr.bf16.mxu0 0
    %1231 = vmatpush2.bf16.msra.mxu0 %v1099
    %1232 = vmatprep.subr.bf16.mxu0 0
    %1233 = vmatpush2.bf16.msra.mxu0 %v1096
    %1234 = vmatprep.subr.bf16.mxu0 0
    %1235 = vmatpush2.bf16.msra.mxu0 %v1093
    %1236 = vmatprep.mubr.bf16.mxu0 %v842
    %1237 = vmatmul.mubr.bf16.gmra.mxu0 %v841
    %v1238 = vpop.f32.mrf.mxu0
    %v1239 = vadd.f32 0.0, %v1238
    %v1240 = vpop.f32.mrf.mxu0
    %v1241 = vpop.f32.mrf.mxu0
    %v1242 = vpop.f32.mrf.mxu0
    %1243 = vdwg.mxu0
    %1244 = vst [vmem:[#allocation2] sm:$0xff] %v1198
    %1245 = vst [vmem:[#allocation2 + $0x8] sm:$0xff] %v1200
    %1246 = vst.msk [vmem:[#allocation2 + $0x10] sm:$0xff] %vm776, %v1239
    %s1247 = scalar_lea.vmem %s6, 384
    %v1248 = vld [vmem:[%s1247] sm:$0xff]
    %v1249 = vld [vmem:[%s1247 + $0x8] sm:$0xf]
    %v1250 = vld [vmem:[%s1247 + $0xc] sm:$0xff]
    %v1251 = vld [vmem:[%s1247 + $0x14] sm:$0xf]
    %v1252 = vld [vmem:[%s1247 + $0x18] sm:$0xff]
    %v1253 = vld [vmem:[%s1247 + $0x20] sm:$0xf]
    %v1254 = vld [vmem:[%s1247 + $0x24] sm:$0xff]
    %v1255 = vld [vmem:[%s1247 + $0x2c] sm:$0xf]
    %v1256 = vld [vmem:[%s1247 + $0x30] sm:$0xff]
    %v1257 = vld [vmem:[%s1247 + $0x38] sm:$0xf]
    %v1258 = vld [vmem:[%s1247 + $0x3c] sm:$0xff]
    %v1259 = vld [vmem:[%s1247 + $0x44] sm:$0xf]
    %v1260 = vld [vmem:[%s1247 + $0x48] sm:$0xff]
    %v1261 = vld [vmem:[%s1247 + $0x50] sm:$0xf]
    %v1262 = vld [vmem:[%s1247 + $0x54] sm:$0xff]
    %v1263 = vld [vmem:[%s1247 + $0x5c] sm:$0xf]
    %v1264 = vld [vmem:[%s1247 + $0x60] sm:$0xff]
    %v1265 = vld [vmem:[%s1247 + $0x68] sm:$0xf]
    %v1266 = vld [vmem:[%s1247 + $0x6c] sm:$0xff]
    %v1267 = vld [vmem:[%s1247 + $0x74] sm:$0xf]
    %v1268 = vld [vmem:[%s1247 + $0x78] sm:$0xff]
    %v1269 = vld [vmem:[%s1247 + $0x80] sm:$0xf]
    %v1270 = vld [vmem:[%s1247 + $0x84] sm:$0xff]
    %v1271 = vld [vmem:[%s1247 + $0x8c] sm:$0xf]
    %v1272 = vld [vmem:[%s1247 + $0x90] sm:$0xff]
    %v1273 = vld [vmem:[%s1247 + $0x98] sm:$0xf]
    %v1274 = vld [vmem:[%s1247 + $0x9c] sm:$0xff]
    %v1275 = vld [vmem:[%s1247 + $0xa4] sm:$0xf]
    %v1276 = vld [vmem:[%s1247 + $0xa8] sm:$0xff]
    %v1277 = vld [vmem:[%s1247 + $0xb0] sm:$0xf]
    %v1278 = vld [vmem:[%s1247 + $0xb4] sm:$0xff]
    %v1279 = vld [vmem:[%s1247 + $0xbc] sm:$0xf]
    %v1280 = vld [vmem:[%s1247 + $0xc0] sm:$0xff]
    %v1281 = vld [vmem:[%s1247 + $0xc8] sm:$0xf]
    %v1282 = vld [vmem:[%s1247 + $0xcc] sm:$0xff]
    %v1283 = vld [vmem:[%s1247 + $0xd4] sm:$0xf]
    %v1284 = vld [vmem:[%s1247 + $0xd8] sm:$0xff]
    %v1285 = vld [vmem:[%s1247 + $0xe0] sm:$0xf]
    %v1286 = vld [vmem:[%s1247 + $0xe4] sm:$0xff]
    %v1287 = vld [vmem:[%s1247 + $0xec] sm:$0xf]
    %v1288 = vld [vmem:[%s1247 + $0xf0] sm:$0xff]
    %v1289 = vld [vmem:[%s1247 + $0xf8] sm:$0xf]
    %v1290 = vld [vmem:[%s1247 + $0xfc] sm:$0xff]
    %v1291 = vld [vmem:[%s1247 + $0x104] sm:$0xf]
    %v1292 = vld [vmem:[%s1247 + $0x108] sm:$0xff]
    %v1293 = vld [vmem:[%s1247 + $0x110] sm:$0xf]
    %v1294 = vld [vmem:[%s1247 + $0x114] sm:$0xff]
    %v1295 = vld [vmem:[%s1247 + $0x11c] sm:$0xf]
    %v1296 = vld [vmem:[%s1247 + $0x120] sm:$0xff]
    %v1297 = vld [vmem:[%s1247 + $0x128] sm:$0xf]
    %v1298 = vld [vmem:[%s1247 + $0x12c] sm:$0xff]
    %v1299 = vld [vmem:[%s1247 + $0x134] sm:$0xf]
    %v1300 = vld [vmem:[%s1247 + $0x138] sm:$0xff]
    %v1301 = vld [vmem:[%s1247 + $0x140] sm:$0xf]
    %v1302 = vld [vmem:[%s1247 + $0x144] sm:$0xff]
    %v1303 = vld [vmem:[%s1247 + $0x14c] sm:$0xf]
    %v1304 = vld [vmem:[%s1247 + $0x150] sm:$0xff]
    %v1305 = vld [vmem:[%s1247 + $0x158] sm:$0xf]
    %v1306 = vld [vmem:[%s1247 + $0x15c] sm:$0xff]
    %v1307 = vld [vmem:[%s1247 + $0x164] sm:$0xf]
    %v1308 = vld [vmem:[%s1247 + $0x168] sm:$0xff]
    %v1309 = vld [vmem:[%s1247 + $0x170] sm:$0xf]
    %v1310 = vld [vmem:[%s1247 + $0x174] sm:$0xff]
    %v1311 = vld [vmem:[%s1247 + $0x17c] sm:$0xf]
    %v1376 = vunpack.c.l.b16 %v1248
    %v1377 = vunpack.c.h.b16 %v1248
    %v1378 = vunpack.c.l.b16 %v1249
    %v1379 = vunpack.c.l.b16 %v1250
    %v1380 = vunpack.c.h.b16 %v1250
    %v1381 = vunpack.c.l.b16 %v1251
    %v1382 = vunpack.c.l.b16 %v1252
    %v1383 = vunpack.c.h.b16 %v1252
    %v1384 = vunpack.c.l.b16 %v1253
    %v1385 = vunpack.c.l.b16 %v1254
    %v1386 = vunpack.c.h.b16 %v1254
    %v1387 = vunpack.c.l.b16 %v1255
    %v1388 = vunpack.c.l.b16 %v1256
    %v1389 = vunpack.c.h.b16 %v1256
    %v1390 = vunpack.c.l.b16 %v1257
    %v1391 = vunpack.c.l.b16 %v1258
    %v1392 = vunpack.c.h.b16 %v1258
    %v1393 = vunpack.c.l.b16 %v1259
    %v1394 = vunpack.c.l.b16 %v1260
    %v1395 = vunpack.c.h.b16 %v1260
    %v1396 = vunpack.c.l.b16 %v1261
    %v1397 = vunpack.c.l.b16 %v1262
    %v1398 = vunpack.c.h.b16 %v1262
    %v1399 = vunpack.c.l.b16 %v1263
    %v1400 = vunpack.c.l.b16 %v1264
    %v1401 = vunpack.c.h.b16 %v1264
    %v1402 = vunpack.c.l.b16 %v1265
    %v1403 = vunpack.c.l.b16 %v1266
    %v1404 = vunpack.c.h.b16 %v1266
    %v1405 = vunpack.c.l.b16 %v1267
    %v1406 = vunpack.c.l.b16 %v1268
    %v1407 = vunpack.c.h.b16 %v1268
    %v1408 = vunpack.c.l.b16 %v1269
    %v1409 = vunpack.c.l.b16 %v1270
    %v1410 = vunpack.c.h.b16 %v1270
    %v1411 = vunpack.c.l.b16 %v1271
    %v1412 = vunpack.c.l.b16 %v1272
    %v1413 = vunpack.c.h.b16 %v1272
    %v1414 = vunpack.c.l.b16 %v1273
    %v1415 = vunpack.c.l.b16 %v1274
    %v1416 = vunpack.c.h.b16 %v1274
    %v1417 = vunpack.c.l.b16 %v1275
    %v1418 = vunpack.c.l.b16 %v1276
    %v1419 = vunpack.c.h.b16 %v1276
    %v1420 = vunpack.c.l.b16 %v1277
    %v1421 = vunpack.c.l.b16 %v1278
    %v1422 = vunpack.c.h.b16 %v1278
    %v1423 = vunpack.c.l.b16 %v1279
    %v1424 = vunpack.c.l.b16 %v1280
    %v1425 = vunpack.c.h.b16 %v1280
    %v1426 = vunpack.c.l.b16 %v1281
    %v1427 = vunpack.c.l.b16 %v1282
    %v1428 = vunpack.c.h.b16 %v1282
    %v1429 = vunpack.c.l.b16 %v1283
    %v1430 = vunpack.c.l.b16 %v1284
    %v1431 = vunpack.c.h.b16 %v1284
    %v1432 = vunpack.c.l.b16 %v1285
    %v1433 = vunpack.c.l.b16 %v1286
    %v1434 = vunpack.c.h.b16 %v1286
    %v1435 = vunpack.c.l.b16 %v1287
    %v1436 = vunpack.c.l.b16 %v1288
    %v1437 = vunpack.c.h.b16 %v1288
    %v1438 = vunpack.c.l.b16 %v1289
    %v1439 = vunpack.c.l.b16 %v1290
    %v1440 = vunpack.c.h.b16 %v1290
    %v1441 = vunpack.c.l.b16 %v1291
    %v1442 = vunpack.c.l.b16 %v1292
    %v1443 = vunpack.c.h.b16 %v1292
    %v1444 = vunpack.c.l.b16 %v1293
    %v1445 = vunpack.c.l.b16 %v1294
    %v1446 = vunpack.c.h.b16 %v1294
    %v1447 = vunpack.c.l.b16 %v1295
    %v1448 = vunpack.c.l.b16 %v1296
    %v1449 = vunpack.c.h.b16 %v1296
    %v1450 = vunpack.c.l.b16 %v1297
    %v1451 = vunpack.c.l.b16 %v1298
    %v1452 = vunpack.c.h.b16 %v1298
    %v1453 = vunpack.c.l.b16 %v1299
    %v1454 = vunpack.c.l.b16 %v1300
    %v1455 = vunpack.c.h.b16 %v1300
    %v1456 = vunpack.c.l.b16 %v1301
    %v1457 = vunpack.c.l.b16 %v1302
    %v1458 = vunpack.c.h.b16 %v1302
    %v1459 = vunpack.c.l.b16 %v1303
    %v1460 = vunpack.c.l.b16 %v1304
    %v1461 = vunpack.c.h.b16 %v1304
    %v1462 = vunpack.c.l.b16 %v1305
    %v1463 = vunpack.c.l.b16 %v1306
    %v1464 = vunpack.c.h.b16 %v1306
    %v1465 = vunpack.c.l.b16 %v1307
    %v1466 = vunpack.c.l.b16 %v1308
    %v1467 = vunpack.c.h.b16 %v1308
    %v1468 = vunpack.c.l.b16 %v1309
    %v1469 = vunpack.c.l.b16 %v1310
    %v1470 = vunpack.c.h.b16 %v1310
    %v1471 = vunpack.c.l.b16 %v1311
    %v1472 = vpack.c.b16 %v1379, %v1376
    %v1473 = vpack.c.b16 %v1380, %v1377
    %v1474 = vpack.c.b16 %v1381, %v1378
    %v1475 = vpack.c.b16 %v1385, %v1382
    %v1476 = vpack.c.b16 %v1386, %v1383
    %v1477 = vpack.c.b16 %v1387, %v1384
    %v1478 = vpack.c.b16 %v1391, %v1388
    %v1479 = vpack.c.b16 %v1392, %v1389
    %v1480 = vpack.c.b16 %v1393, %v1390
    %v1481 = vpack.c.b16 %v1397, %v1394
    %v1482 = vpack.c.b16 %v1398, %v1395
    %v1483 = vpack.c.b16 %v1399, %v1396
    %v1484 = vpack.c.b16 %v1403, %v1400
    %v1485 = vpack.c.b16 %v1404, %v1401
    %v1486 = vpack.c.b16 %v1405, %v1402
    %v1487 = vpack.c.b16 %v1409, %v1406
    %v1488 = vpack.c.b16 %v1410, %v1407
    %v1489 = vpack.c.b16 %v1411, %v1408
    %v1490 = vpack.c.b16 %v1415, %v1412
    %v1491 = vpack.c.b16 %v1416, %v1413
    %v1492 = vpack.c.b16 %v1417, %v1414
    %v1493 = vpack.c.b16 %v1421, %v1418
    %v1494 = vpack.c.b16 %v1422, %v1419
    %v1495 = vpack.c.b16 %v1423, %v1420
    %v1496 = vpack.c.b16 %v1427, %v1424
    %v1497 = vpack.c.b16 %v1428, %v1425
    %v1498 = vpack.c.b16 %v1429, %v1426
    %v1499 = vpack.c.b16 %v1433, %v1430
    %v1500 = vpack.c.b16 %v1434, %v1431
    %v1501 = vpack.c.b16 %v1435, %v1432
    %v1502 = vpack.c.b16 %v1439, %v1436
    %v1503 = vpack.c.b16 %v1440, %v1437
    %v1504 = vpack.c.b16 %v1441, %v1438
    %v1505 = vpack.c.b16 %v1445, %v1442
    %v1506 = vpack.c.b16 %v1446, %v1443
    %v1507 = vpack.c.b16 %v1447, %v1444
    %v1508 = vpack.c.b16 %v1451, %v1448
    %v1509 = vpack.c.b16 %v1452, %v1449
    %v1510 = vpack.c.b16 %v1453, %v1450
    %v1511 = vpack.c.b16 %v1457, %v1454
    %v1512 = vpack.c.b16 %v1458, %v1455
    %v1513 = vpack.c.b16 %v1459, %v1456
    %v1514 = vpack.c.b16 %v1463, %v1460
    %v1515 = vpack.c.b16 %v1464, %v1461
    %v1516 = vpack.c.b16 %v1465, %v1462
    %v1517 = vpack.c.b16 %v1469, %v1466
    %v1518 = vpack.c.b16 %v1470, %v1467
    %v1519 = vpack.c.b16 %v1471, %v1468
    %1568 = vmatprep.subr.bf16.mxu0 %v1494
    %1569 = vmatpush1.bf16.msra.mxu0 %v1493
    %1570 = vmatprep.subr.bf16.mxu0 %v1491
    %1571 = vmatpush1.bf16.msra.mxu0 %v1490
    %1572 = vmatprep.subr.bf16.mxu0 %v1488
    %1573 = vmatpush1.bf16.msra.mxu0 %v1487
    %1574 = vmatprep.subr.bf16.mxu0 %v1485
    %1575 = vmatpush1.bf16.msra.mxu0 %v1484
    %1576 = vmatprep.subr.bf16.mxu0 %v1482
    %1577 = vmatpush1.bf16.msra.mxu0 %v1481
    %1578 = vmatprep.subr.bf16.mxu0 %v1479
    %1579 = vmatpush1.bf16.msra.mxu0 %v1478
    %1580 = vmatprep.subr.bf16.mxu0 %v1476
    %1581 = vmatpush1.bf16.msra.mxu0 %v1475
    %1582 = vmatprep.subr.bf16.mxu0 %v1473
    %1583 = vmatpush1.bf16.msra.mxu0 %v1472
    %1584 = vmatprep.subr.bf16.mxu0 %v1518
    %1585 = vmatpush2.bf16.msra.mxu0 %v1517
    %1586 = vmatprep.subr.bf16.mxu0 %v1515
    %1587 = vmatpush2.bf16.msra.mxu0 %v1514
    %1588 = vmatprep.subr.bf16.mxu0 %v1512
    %1589 = vmatpush2.bf16.msra.mxu0 %v1511
    %1590 = vmatprep.subr.bf16.mxu0 %v1509
    %1591 = vmatpush2.bf16.msra.mxu0 %v1508
    %1592 = vmatprep.subr.bf16.mxu0 %v1506
    %1593 = vmatpush2.bf16.msra.mxu0 %v1505
    %1594 = vmatprep.subr.bf16.mxu0 %v1503
    %1595 = vmatpush2.bf16.msra.mxu0 %v1502
    %1596 = vmatprep.subr.bf16.mxu0 %v1500
    %1597 = vmatpush2.bf16.msra.mxu0 %v1499
    %1598 = vmatprep.subr.bf16.mxu0 %v1497
    %1599 = vmatpush2.bf16.msra.mxu0 %v1496
    %1600 = vmatprep.mubr.bf16.mxu0 %v842
    %1601 = vmatmul.mubr.bf16.gmra.mxu0 %v841
    %v1602 = vpop.f32.mrf.mxu0
    %v1603 = vadd.f32 0.0, %v1602
    %v1604 = vpop.f32.mrf.mxu0
    %v1605 = vadd.f32 0.0, %v1604
    %v1606 = vpop.f32.mrf.mxu0
    %v1607 = vpop.f32.mrf.mxu0
    %1608 = vdwg.mxu0
    %1609 = vmatprep.subr.bf16.mxu0 0
    %1610 = vmatpush1.bf16.msra.mxu0 %v1495
    %1611 = vmatprep.subr.bf16.mxu0 0
    %1612 = vmatpush1.bf16.msra.mxu0 %v1492
    %1613 = vmatprep.subr.bf16.mxu0 0
    %1614 = vmatpush1.bf16.msra.mxu0 %v1489
    %1615 = vmatprep.subr.bf16.mxu0 0
    %1616 = vmatpush1.bf16.msra.mxu0 %v1486
    %1617 = vmatprep.subr.bf16.mxu0 0
    %1618 = vmatpush1.bf16.msra.mxu0 %v1483
    %1619 = vmatprep.subr.bf16.mxu0 0
    %1620 = vmatpush1.bf16.msra.mxu0 %v1480
    %1621 = vmatprep.subr.bf16.mxu0 0
    %1622 = vmatpush1.bf16.msra.mxu0 %v1477
    %1623 = vmatprep.subr.bf16.mxu0 0
    %1624 = vmatpush1.bf16.msra.mxu0 %v1474
    %1625 = vmatprep.subr.bf16.mxu0 0
    %1626 = vmatpush2.bf16.msra.mxu0 %v1519
    %1627 = vmatprep.subr.bf16.mxu0 0
    %1628 = vmatpush2.bf16.msra.mxu0 %v1516
    %1629 = vmatprep.subr.bf16.mxu0 0
    %1630 = vmatpush2.bf16.msra.mxu0 %v1513
    %1631 = vmatprep.subr.bf16.mxu0 0
    %1632 = vmatpush2.bf16.msra.mxu0 %v1510
    %1633 = vmatprep.subr.bf16.mxu0 0
    %1634 = vmatpush2.bf16.msra.mxu0 %v1507
    %1635 = vmatprep.subr.bf16.mxu0 0
    %1636 = vmatpush2.bf16.msra.mxu0 %v1504
    %1637 = vmatprep.subr.bf16.mxu0 0
    %1638 = vmatpush2.bf16.msra.mxu0 %v1501
    %1639 = vmatprep.subr.bf16.mxu0 0
    %1640 = vmatpush2.bf16.msra.mxu0 %v1498
    %1641 = vmatprep.mubr.bf16.mxu0 %v842
    %1642 = vmatmul.mubr.bf16.gmra.mxu0 %v841
    %v1643 = vpop.f32.mrf.mxu0
    %v1644 = vadd.f32 0.0, %v1643
    %v1645 = vpop.f32.mrf.mxu0
    %v1646 = vpop.f32.mrf.mxu0
    %v1647 = vpop.f32.mrf.mxu0
    %1648 = vdwg.mxu0
    %1649 = vst [vmem:[#allocation2 + $0x18] sm:$0xff] %v1603
    %1650 = vst [vmem:[#allocation2 + $0x20] sm:$0xff] %v1605
    %1651 = vst.msk [vmem:[#allocation2 + $0x28] sm:$0xff] %vm776, %v1644
    %s1652 = scalar_lea.vmem %s6, 768
    %v1653 = vld [vmem:[%s1652] sm:$0xff]
    %v1654 = vld [vmem:[%s1652 + $0x8] sm:$0xf]
    %v1655 = vld [vmem:[%s1652 + $0xc] sm:$0xff]
    %v1656 = vld [vmem:[%s1652 + $0x14] sm:$0xf]
    %v1657 = vld [vmem:[%s1652 + $0x18] sm:$0xff]
    %v1658 = vld [vmem:[%s1652 + $0x20] sm:$0xf]
    %v1659 = vld [vmem:[%s1652 + $0x24] sm:$0xff]
    %v1660 = vld [vmem:[%s1652 + $0x2c] sm:$0xf]
    %v1661 = vld [vmem:[%s1652 + $0x30] sm:$0xff]
    %v1662 = vld [vmem:[%s1652 + $0x38] sm:$0xf]
    %v1663 = vld [vmem:[%s1652 + $0x3c] sm:$0xff]
    %v1664 = vld [vmem:[%s1652 + $0x44] sm:$0xf]
    %v1665 = vld [vmem:[%s1652 + $0x48] sm:$0xff]
    %v1666 = vld [vmem:[%s1652 + $0x50] sm:$0xf]
    %v1667 = vld [vmem:[%s1652 + $0x54] sm:$0xff]
    %v1668 = vld [vmem:[%s1652 + $0x5c] sm:$0xf]
    %v1669 = vld [vmem:[%s1652 + $0x60] sm:$0xff]
    %v1670 = vld [vmem:[%s1652 + $0x68] sm:$0xf]
    %v1671 = vld [vmem:[%s1652 + $0x6c] sm:$0xff]
    %v1672 = vld [vmem:[%s1652 + $0x74] sm:$0xf]
    %v1673 = vld [vmem:[%s1652 + $0x78] sm:$0xff]
    %v1674 = vld [vmem:[%s1652 + $0x80] sm:$0xf]
    %v1675 = vld [vmem:[%s1652 + $0x84] sm:$0xff]
    %v1676 = vld [vmem:[%s1652 + $0x8c] sm:$0xf]
    %v1677 = vld [vmem:[%s1652 + $0x90] sm:$0xff]
    %v1678 = vld [vmem:[%s1652 + $0x98] sm:$0xf]
    %v1679 = vld [vmem:[%s1652 + $0x9c] sm:$0xff]
    %v1680 = vld [vmem:[%s1652 + $0xa4] sm:$0xf]
    %v1681 = vld [vmem:[%s1652 + $0xa8] sm:$0xff]
    %v1682 = vld [vmem:[%s1652 + $0xb0] sm:$0xf]
    %v1683 = vld [vmem:[%s1652 + $0xb4] sm:$0xff]
    %v1684 = vld [vmem:[%s1652 + $0xbc] sm:$0xf]
    %v1685 = vld [vmem:[%s1652 + $0xc0] sm:$0xff]
    %v1686 = vld [vmem:[%s1652 + $0xc8] sm:$0xf]
    %v1687 = vld [vmem:[%s1652 + $0xcc] sm:$0xff]
    %v1688 = vld [vmem:[%s1652 + $0xd4] sm:$0xf]
    %v1689 = vld [vmem:[%s1652 + $0xd8] sm:$0xff]
    %v1690 = vld [vmem:[%s1652 + $0xe0] sm:$0xf]
    %v1691 = vld [vmem:[%s1652 + $0xe4] sm:$0xff]
    %v1692 = vld [vmem:[%s1652 + $0xec] sm:$0xf]
    %v1693 = vld [vmem:[%s1652 + $0xf0] sm:$0xff]
    %v1694 = vld [vmem:[%s1652 + $0xf8] sm:$0xf]
    %v1695 = vld [vmem:[%s1652 + $0xfc] sm:$0xff]
    %v1696 = vld [vmem:[%s1652 + $0x104] sm:$0xf]
    %v1697 = vld [vmem:[%s1652 + $0x108] sm:$0xff]
    %v1698 = vld [vmem:[%s1652 + $0x110] sm:$0xf]
    %v1699 = vld [vmem:[%s1652 + $0x114] sm:$0xff]
    %v1700 = vld [vmem:[%s1652 + $0x11c] sm:$0xf]
    %v1701 = vld [vmem:[%s1652 + $0x120] sm:$0xff]
    %v1702 = vld [vmem:[%s1652 + $0x128] sm:$0xf]
    %v1703 = vld [vmem:[%s1652 + $0x12c] sm:$0xff]
    %v1704 = vld [vmem:[%s1652 + $0x134] sm:$0xf]
    %v1705 = vld [vmem:[%s1652 + $0x138] sm:$0xff]
    %v1706 = vld [vmem:[%s1652 + $0x140] sm:$0xf]
    %v1707 = vld [vmem:[%s1652 + $0x144] sm:$0xff]
    %v1708 = vld [vmem:[%s1652 + $0x14c] sm:$0xf]
    %v1709 = vld [vmem:[%s1652 + $0x150] sm:$0xff]
    %v1710 = vld [vmem:[%s1652 + $0x158] sm:$0xf]
    %v1711 = vld [vmem:[%s1652 + $0x15c] sm:$0xff]
    %v1712 = vld [vmem:[%s1652 + $0x164] sm:$0xf]
    %v1713 = vld [vmem:[%s1652 + $0x168] sm:$0xff]
    %v1714 = vld [vmem:[%s1652 + $0x170] sm:$0xf]
    %v1715 = vld [vmem:[%s1652 + $0x174] sm:$0xff]
    %v1716 = vld [vmem:[%s1652 + $0x17c] sm:$0xf]
    %v1781 = vunpack.c.l.b16 %v1653
    %v1782 = vunpack.c.h.b16 %v1653
    %v1783 = vunpack.c.l.b16 %v1654
    %v1784 = vunpack.c.l.b16 %v1655
    %v1785 = vunpack.c.h.b16 %v1655
    %v1786 = vunpack.c.l.b16 %v1656
    %v1787 = vunpack.c.l.b16 %v1657
    %v1788 = vunpack.c.h.b16 %v1657
    %v1789 = vunpack.c.l.b16 %v1658
    %v1790 = vunpack.c.l.b16 %v1659
    %v1791 = vunpack.c.h.b16 %v1659
    %v1792 = vunpack.c.l.b16 %v1660
    %v1793 = vunpack.c.l.b16 %v1661
    %v1794 = vunpack.c.h.b16 %v1661
    %v1795 = vunpack.c.l.b16 %v1662
    %v1796 = vunpack.c.l.b16 %v1663
    %v1797 = vunpack.c.h.b16 %v1663
    %v1798 = vunpack.c.l.b16 %v1664
    %v1799 = vunpack.c.l.b16 %v1665
    %v1800 = vunpack.c.h.b16 %v1665
    %v1801 = vunpack.c.l.b16 %v1666
    %v1802 = vunpack.c.l.b16 %v1667
    %v1803 = vunpack.c.h.b16 %v1667
    %v1804 = vunpack.c.l.b16 %v1668
    %v1805 = vunpack.c.l.b16 %v1669
    %v1806 = vunpack.c.h.b16 %v1669
    %v1807 = vunpack.c.l.b16 %v1670
    %v1808 = vunpack.c.l.b16 %v1671
    %v1809 = vunpack.c.h.b16 %v1671
    %v1810 = vunpack.c.l.b16 %v1672
    %v1811 = vunpack.c.l.b16 %v1673
    %v1812 = vunpack.c.h.b16 %v1673
    %v1813 = vunpack.c.l.b16 %v1674
    %v1814 = vunpack.c.l.b16 %v1675
    %v1815 = vunpack.c.h.b16 %v1675
    %v1816 = vunpack.c.l.b16 %v1676
    %v1817 = vunpack.c.l.b16 %v1677
    %v1818 = vunpack.c.h.b16 %v1677
    %v1819 = vunpack.c.l.b16 %v1678
    %v1820 = vunpack.c.l.b16 %v1679
    %v1821 = vunpack.c.h.b16 %v1679
    %v1822 = vunpack.c.l.b16 %v1680
    %v1823 = vunpack.c.l.b16 %v1681
    %v1824 = vunpack.c.h.b16 %v1681
    %v1825 = vunpack.c.l.b16 %v1682
    %v1826 = vunpack.c.l.b16 %v1683
    %v1827 = vunpack.c.h.b16 %v1683
    %v1828 = vunpack.c.l.b16 %v1684
    %v1829 = vunpack.c.l.b16 %v1685
    %v1830 = vunpack.c.h.b16 %v1685
    %v1831 = vunpack.c.l.b16 %v1686
    %v1832 = vunpack.c.l.b16 %v1687
    %v1833 = vunpack.c.h.b16 %v1687
    %v1834 = vunpack.c.l.b16 %v1688
    %v1835 = vunpack.c.l.b16 %v1689
    %v1836 = vunpack.c.h.b16 %v1689
    %v1837 = vunpack.c.l.b16 %v1690
    %v1838 = vunpack.c.l.b16 %v1691
    %v1839 = vunpack.c.h.b16 %v1691
    %v1840 = vunpack.c.l.b16 %v1692
    %v1841 = vunpack.c.l.b16 %v1693
    %v1842 = vunpack.c.h.b16 %v1693
    %v1843 = vunpack.c.l.b16 %v1694
    %v1844 = vunpack.c.l.b16 %v1695
    %v1845 = vunpack.c.h.b16 %v1695
    %v1846 = vunpack.c.l.b16 %v1696
    %v1847 = vunpack.c.l.b16 %v1697
    %v1848 = vunpack.c.h.b16 %v1697
    %v1849 = vunpack.c.l.b16 %v1698
    %v1850 = vunpack.c.l.b16 %v1699
    %v1851 = vunpack.c.h.b16 %v1699
    %v1852 = vunpack.c.l.b16 %v1700
    %v1853 = vunpack.c.l.b16 %v1701
    %v1854 = vunpack.c.h.b16 %v1701
    %v1855 = vunpack.c.l.b16 %v1702
    %v1856 = vunpack.c.l.b16 %v1703
    %v1857 = vunpack.c.h.b16 %v1703
    %v1858 = vunpack.c.l.b16 %v1704
    %v1859 = vunpack.c.l.b16 %v1705
    %v1860 = vunpack.c.h.b16 %v1705
    %v1861 = vunpack.c.l.b16 %v1706
    %v1862 = vunpack.c.l.b16 %v1707
    %v1863 = vunpack.c.h.b16 %v1707
    %v1864 = vunpack.c.l.b16 %v1708
    %v1865 = vunpack.c.l.b16 %v1709
    %v1866 = vunpack.c.h.b16 %v1709
    %v1867 = vunpack.c.l.b16 %v1710
    %v1868 = vunpack.c.l.b16 %v1711
    %v1869 = vunpack.c.h.b16 %v1711
    %v1870 = vunpack.c.l.b16 %v1712
    %v1871 = vunpack.c.l.b16 %v1713
    %v1872 = vunpack.c.h.b16 %v1713
    %v1873 = vunpack.c.l.b16 %v1714
    %v1874 = vunpack.c.l.b16 %v1715
    %v1875 = vunpack.c.h.b16 %v1715
    %v1876 = vunpack.c.l.b16 %v1716
    %v1877 = vpack.c.b16 %v1784, %v1781
    %v1878 = vpack.c.b16 %v1785, %v1782
    %v1879 = vpack.c.b16 %v1786, %v1783
    %v1880 = vpack.c.b16 %v1790, %v1787
    %v1881 = vpack.c.b16 %v1791, %v1788
    %v1882 = vpack.c.b16 %v1792, %v1789
    %v1883 = vpack.c.b16 %v1796, %v1793
    %v1884 = vpack.c.b16 %v1797, %v1794
    %v1885 = vpack.c.b16 %v1798, %v1795
    %v1886 = vpack.c.b16 %v1802, %v1799
    %v1887 = vpack.c.b16 %v1803, %v1800
    %v1888 = vpack.c.b16 %v1804, %v1801
    %v1889 = vpack.c.b16 %v1808, %v1805
    %v1890 = vpack.c.b16 %v1809, %v1806
    %v1891 = vpack.c.b16 %v1810, %v1807
    %v1892 = vpack.c.b16 %v1814, %v1811
    %v1893 = vpack.c.b16 %v1815, %v1812
    %v1894 = vpack.c.b16 %v1816, %v1813
    %v1895 = vpack.c.b16 %v1820, %v1817
    %v1896 = vpack.c.b16 %v1821, %v1818
    %v1897 = vpack.c.b16 %v1822, %v1819
    %v1898 = vpack.c.b16 %v1826, %v1823
    %v1899 = vpack.c.b16 %v1827, %v1824
    %v1900 = vpack.c.b16 %v1828, %v1825
    %v1901 = vpack.c.b16 %v1832, %v1829
    %v1902 = vpack.c.b16 %v1833, %v1830
    %v1903 = vpack.c.b16 %v1834, %v1831
    %v1904 = vpack.c.b16 %v1838, %v1835
    %v1905 = vpack.c.b16 %v1839, %v1836
    %v1906 = vpack.c.b16 %v1840, %v1837
    %v1907 = vpack.c.b16 %v1844, %v1841
    %v1908 = vpack.c.b16 %v1845, %v1842
    %v1909 = vpack.c.b16 %v1846, %v1843
    %v1910 = vpack.c.b16 %v1850, %v1847
    %v1911 = vpack.c.b16 %v1851, %v1848
    %v1912 = vpack.c.b16 %v1852, %v1849
    %v1913 = vpack.c.b16 %v1856, %v1853
    %v1914 = vpack.c.b16 %v1857, %v1854
    %v1915 = vpack.c.b16 %v1858, %v1855
    %v1916 = vpack.c.b16 %v1862, %v1859
    %v1917 = vpack.c.b16 %v1863, %v1860
    %v1918 = vpack.c.b16 %v1864, %v1861
    %v1919 = vpack.c.b16 %v1868, %v1865
    %v1920 = vpack.c.b16 %v1869, %v1866
    %v1921 = vpack.c.b16 %v1870, %v1867
    %v1922 = vpack.c.b16 %v1874, %v1871
    %v1923 = vpack.c.b16 %v1875, %v1872
    %v1924 = vpack.c.b16 %v1876, %v1873
    %1973 = vmatprep.subr.bf16.mxu0 %v1899
    %1974 = vmatpush1.bf16.msra.mxu0 %v1898
    %1975 = vmatprep.subr.bf16.mxu0 %v1896
    %1976 = vmatpush1.bf16.msra.mxu0 %v1895
    %1977 = vmatprep.subr.bf16.mxu0 %v1893
    %1978 = vmatpush1.bf16.msra.mxu0 %v1892
    %1979 = vmatprep.subr.bf16.mxu0 %v1890
    %1980 = vmatpush1.bf16.msra.mxu0 %v1889
    %1981 = vmatprep.subr.bf16.mxu0 %v1887
    %1982 = vmatpush1.bf16.msra.mxu0 %v1886
    %1983 = vmatprep.subr.bf16.mxu0 %v1884
    %1984 = vmatpush1.bf16.msra.mxu0 %v1883
    %1985 = vmatprep.subr.bf16.mxu0 %v1881
    %1986 = vmatpush1.bf16.msra.mxu0 %v1880
    %1987 = vmatprep.subr.bf16.mxu0 %v1878
    %1988 = vmatpush1.bf16.msra.mxu0 %v1877
    %1989 = vmatprep.subr.bf16.mxu0 %v1923
    %1990 = vmatpush2.bf16.msra.mxu0 %v1922
    %1991 = vmatprep.subr.bf16.mxu0 %v1920
    %1992 = vmatpush2.bf16.msra.mxu0 %v1919
    %1993 = vmatprep.subr.bf16.mxu0 %v1917
    %1994 = vmatpush2.bf16.msra.mxu0 %v1916
    %1995 = vmatprep.subr.bf16.mxu0 %v1914
    %1996 = vmatpush2.bf16.msra.mxu0 %v1913
    %1997 = vmatprep.subr.bf16.mxu0 %v1911
    %1998 = vmatpush2.bf16.msra.mxu0 %v1910
    %1999 = vmatprep.subr.bf16.mxu0 %v1908
    %2000 = vmatpush2.bf16.msra.mxu0 %v1907
    %2001 = vmatprep.subr.bf16.mxu0 %v1905
    %2002 = vmatpush2.bf16.msra.mxu0 %v1904
    %2003 = vmatprep.subr.bf16.mxu0 %v1902
    %2004 = vmatpush2.bf16.msra.mxu0 %v1901
    %2005 = vmatprep.mubr.bf16.mxu0 %v842
    %2006 = vmatmul.mubr.bf16.gmra.mxu0 %v841
    %v2007 = vpop.f32.mrf.mxu0
    %v2008 = vadd.f32 0.0, %v2007
    %v2009 = vpop.f32.mrf.mxu0
    %v2010 = vadd.f32 0.0, %v2009
    %v2011 = vpop.f32.mrf.mxu0
    %v2012 = vpop.f32.mrf.mxu0
    %2013 = vdwg.mxu0
    %2014 = vmatprep.subr.bf16.mxu0 0
    %2015 = vmatpush1.bf16.msra.mxu0 %v1900
    %2016 = vmatprep.subr.bf16.mxu0 0
    %2017 = vmatpush1.bf16.msra.mxu0 %v1897
    %2018 = vmatprep.subr.bf16.mxu0 0
    %2019 = vmatpush1.bf16.msra.mxu0 %v1894
    %2020 = vmatprep.subr.bf16.mxu0 0
    %2021 = vmatpush1.bf16.msra.mxu0 %v1891
    %2022 = vmatprep.subr.bf16.mxu0 0
    %2023 = vmatpush1.bf16.msra.mxu0 %v1888
    %2024 = vmatprep.subr.bf16.mxu0 0
    %2025 = vmatpush1.bf16.msra.mxu0 %v1885
    %2026 = vmatprep.subr.bf16.mxu0 0
    %2027 = vmatpush1.bf16.msra.mxu0 %v1882
    %2028 = vmatprep.subr.bf16.mxu0 0
    %2029 = vmatpush1.bf16.msra.mxu0 %v1879
    %2030 = vmatprep.subr.bf16.mxu0 0
    %2031 = vmatpush2.bf16.msra.mxu0 %v1924
    %2032 = vmatprep.subr.bf16.mxu0 0
    %2033 = vmatpush2.bf16.msra.mxu0 %v1921
    %2034 = vmatprep.subr.bf16.mxu0 0
    %2035 = vmatpush2.bf16.msra.mxu0 %v1918
    %2036 = vmatprep.subr.bf16.mxu0 0
    %2037 = vmatpush2.bf16.msra.mxu0 %v1915
    %2038 = vmatprep.subr.bf16.mxu0 0
    %2039 = vmatpush2.bf16.msra.mxu0 %v1912
    %2040 = vmatprep.subr.bf16.mxu0 0
    %2041 = vmatpush2.bf16.msra.mxu0 %v1909
    %2042 = vmatprep.subr.bf16.mxu0 0
    %2043 = vmatpush2.bf16.msra.mxu0 %v1906
    %2044 = vmatprep.subr.bf16.mxu0 0
    %2045 = vmatpush2.bf16.msra.mxu0 %v1903
    %2046 = vmatprep.mubr.bf16.mxu0 %v842
    %2047 = vmatmul.mubr.bf16.gmra.mxu0 %v841
    %v2048 = vpop.f32.mrf.mxu0
    %v2049 = vadd.f32 0.0, %v2048
    %v2050 = vpop.f32.mrf.mxu0
    %v2051 = vpop.f32.mrf.mxu0
    %v2052 = vpop.f32.mrf.mxu0
    %2053 = vdwg.mxu0
    %2054 = vst [vmem:[#allocation2 + $0x30] sm:$0xff] %v2008
    %2055 = vst [vmem:[#allocation2 + $0x38] sm:$0xff] %v2010
    %2056 = vst.msk [vmem:[#allocation2 + $0x40] sm:$0xff] %vm776, %v2049
    %s2057 = scalar_lea.vmem %s6, 1152
    %v2058 = vld [vmem:[%s2057] sm:$0xff]
    %v2059 = vld [vmem:[%s2057 + $0x8] sm:$0xf]
    %v2060 = vld [vmem:[%s2057 + $0xc] sm:$0xff]
    %v2061 = vld [vmem:[%s2057 + $0x14] sm:$0xf]
    %v2062 = vld [vmem:[%s2057 + $0x18] sm:$0xff]
    %v2063 = vld [vmem:[%s2057 + $0x20] sm:$0xf]
    %v2064 = vld [vmem:[%s2057 + $0x24] sm:$0xff]
    %v2065 = vld [vmem:[%s2057 + $0x2c] sm:$0xf]
    %v2066 = vld [vmem:[%s2057 + $0x30] sm:$0xff]
    %v2067 = vld [vmem:[%s2057 + $0x38] sm:$0xf]
    %v2068 = vld [vmem:[%s2057 + $0x3c] sm:$0xff]
    %v2069 = vld [vmem:[%s2057 + $0x44] sm:$0xf]
    %v2070 = vld [vmem:[%s2057 + $0x48] sm:$0xff]
    %v2071 = vld [vmem:[%s2057 + $0x50] sm:$0xf]
    %v2072 = vld [vmem:[%s2057 + $0x54] sm:$0xff]
    %v2073 = vld [vmem:[%s2057 + $0x5c] sm:$0xf]
    %v2074 = vld [vmem:[%s2057 + $0x60] sm:$0xff]
    %v2075 = vld [vmem:[%s2057 + $0x68] sm:$0xf]
    %v2076 = vld [vmem:[%s2057 + $0x6c] sm:$0xff]
    %v2077 = vld [vmem:[%s2057 + $0x74] sm:$0xf]
    %v2078 = vld [vmem:[%s2057 + $0x78] sm:$0xff]
    %v2079 = vld [vmem:[%s2057 + $0x80] sm:$0xf]
    %v2080 = vld [vmem:[%s2057 + $0x84] sm:$0xff]
    %v2081 = vld [vmem:[%s2057 + $0x8c] sm:$0xf]
    %v2082 = vld [vmem:[%s2057 + $0x90] sm:$0xff]
    %v2083 = vld [vmem:[%s2057 + $0x98] sm:$0xf]
    %v2084 = vld [vmem:[%s2057 + $0x9c] sm:$0xff]
    %v2085 = vld [vmem:[%s2057 + $0xa4] sm:$0xf]
    %v2086 = vld [vmem:[%s2057 + $0xa8] sm:$0xff]
    %v2087 = vld [vmem:[%s2057 + $0xb0] sm:$0xf]
    %v2088 = vld [vmem:[%s2057 + $0xb4] sm:$0xff]
    %v2089 = vld [vmem:[%s2057 + $0xbc] sm:$0xf]
    %v2090 = vld [vmem:[%s2057 + $0xc0] sm:$0xff]
    %v2091 = vld [vmem:[%s2057 + $0xc8] sm:$0xf]
    %v2092 = vld [vmem:[%s2057 + $0xcc] sm:$0xff]
    %v2093 = vld [vmem:[%s2057 + $0xd4] sm:$0xf]
    %v2094 = vld [vmem:[%s2057 + $0xd8] sm:$0xff]
    %v2095 = vld [vmem:[%s2057 + $0xe0] sm:$0xf]
    %v2096 = vld [vmem:[%s2057 + $0xe4] sm:$0xff]
    %v2097 = vld [vmem:[%s2057 + $0xec] sm:$0xf]
    %v2098 = vld [vmem:[%s2057 + $0xf0] sm:$0xff]
    %v2099 = vld [vmem:[%s2057 + $0xf8] sm:$0xf]
    %v2100 = vld [vmem:[%s2057 + $0xfc] sm:$0xff]
    %v2101 = vld [vmem:[%s2057 + $0x104] sm:$0xf]
    %v2102 = vld [vmem:[%s2057 + $0x108] sm:$0xff]
    %v2103 = vld [vmem:[%s2057 + $0x110] sm:$0xf]
    %v2104 = vld [vmem:[%s2057 + $0x114] sm:$0xff]
    %v2105 = vld [vmem:[%s2057 + $0x11c] sm:$0xf]
    %v2106 = vld [vmem:[%s2057 + $0x120] sm:$0xff]
    %v2107 = vld [vmem:[%s2057 + $0x128] sm:$0xf]
    %v2108 = vld [vmem:[%s2057 + $0x12c] sm:$0xff]
    %v2109 = vld [vmem:[%s2057 + $0x134] sm:$0xf]
    %v2110 = vld [vmem:[%s2057 + $0x138] sm:$0xff]
    %v2111 = vld [vmem:[%s2057 + $0x140] sm:$0xf]
    %v2112 = vld [vmem:[%s2057 + $0x144] sm:$0xff]
    %v2113 = vld [vmem:[%s2057 + $0x14c] sm:$0xf]
    %v2114 = vld [vmem:[%s2057 + $0x150] sm:$0xff]
    %v2115 = vld [vmem:[%s2057 + $0x158] sm:$0xf]
    %v2116 = vld [vmem:[%s2057 + $0x15c] sm:$0xff]
    %v2117 = vld [vmem:[%s2057 + $0x164] sm:$0xf]
    %v2118 = vld [vmem:[%s2057 + $0x168] sm:$0xff]
    %v2119 = vld [vmem:[%s2057 + $0x170] sm:$0xf]
    %v2120 = vld [vmem:[%s2057 + $0x174] sm:$0xff]
    %v2121 = vld [vmem:[%s2057 + $0x17c] sm:$0xf]
    %v2186 = vunpack.c.l.b16 %v2058
    %v2187 = vunpack.c.h.b16 %v2058
    %v2188 = vunpack.c.l.b16 %v2059
    %v2189 = vunpack.c.l.b16 %v2060
    %v2190 = vunpack.c.h.b16 %v2060
    %v2191 = vunpack.c.l.b16 %v2061
    %v2192 = vunpack.c.l.b16 %v2062
    %v2193 = vunpack.c.h.b16 %v2062
    %v2194 = vunpack.c.l.b16 %v2063
    %v2195 = vunpack.c.l.b16 %v2064
    %v2196 = vunpack.c.h.b16 %v2064
    %v2197 = vunpack.c.l.b16 %v2065
    %v2198 = vunpack.c.l.b16 %v2066
    %v2199 = vunpack.c.h.b16 %v2066
    %v2200 = vunpack.c.l.b16 %v2067
    %v2201 = vunpack.c.l.b16 %v2068
    %v2202 = vunpack.c.h.b16 %v2068
    %v2203 = vunpack.c.l.b16 %v2069
    %v2204 = vunpack.c.l.b16 %v2070
    %v2205 = vunpack.c.h.b16 %v2070
    %v2206 = vunpack.c.l.b16 %v2071
    %v2207 = vunpack.c.l.b16 %v2072
    %v2208 = vunpack.c.h.b16 %v2072
    %v2209 = vunpack.c.l.b16 %v2073
    %v2210 = vunpack.c.l.b16 %v2074
    %v2211 = vunpack.c.h.b16 %v2074
    %v2212 = vunpack.c.l.b16 %v2075
    %v2213 = vunpack.c.l.b16 %v2076
    %v2214 = vunpack.c.h.b16 %v2076
    %v2215 = vunpack.c.l.b16 %v2077
    %v2216 = vunpack.c.l.b16 %v2078
    %v2217 = vunpack.c.h.b16 %v2078
    %v2218 = vunpack.c.l.b16 %v2079
    %v2219 = vunpack.c.l.b16 %v2080
    %v2220 = vunpack.c.h.b16 %v2080
    %v2221 = vunpack.c.l.b16 %v2081
    %v2222 = vunpack.c.l.b16 %v2082
    %v2223 = vunpack.c.h.b16 %v2082
    %v2224 = vunpack.c.l.b16 %v2083
    %v2225 = vunpack.c.l.b16 %v2084
    %v2226 = vunpack.c.h.b16 %v2084
    %v2227 = vunpack.c.l.b16 %v2085
    %v2228 = vunpack.c.l.b16 %v2086
    %v2229 = vunpack.c.h.b16 %v2086
    %v2230 = vunpack.c.l.b16 %v2087
    %v2231 = vunpack.c.l.b16 %v2088
    %v2232 = vunpack.c.h.b16 %v2088
    %v2233 = vunpack.c.l.b16 %v2089
    %v2234 = vunpack.c.l.b16 %v2090
    %v2235 = vunpack.c.h.b16 %v2090
    %v2236 = vunpack.c.l.b16 %v2091
    %v2237 = vunpack.c.l.b16 %v2092
    %v2238 = vunpack.c.h.b16 %v2092
    %v2239 = vunpack.c.l.b16 %v2093
    %v2240 = vunpack.c.l.b16 %v2094
    %v2241 = vunpack.c.h.b16 %v2094
    %v2242 = vunpack.c.l.b16 %v2095
    %v2243 = vunpack.c.l.b16 %v2096
    %v2244 = vunpack.c.h.b16 %v2096
    %v2245 = vunpack.c.l.b16 %v2097
    %v2246 = vunpack.c.l.b16 %v2098
    %v2247 = vunpack.c.h.b16 %v2098
    %v2248 = vunpack.c.l.b16 %v2099
    %v2249 = vunpack.c.l.b16 %v2100
    %v2250 = vunpack.c.h.b16 %v2100
    %v2251 = vunpack.c.l.b16 %v2101
    %v2252 = vunpack.c.l.b16 %v2102
    %v2253 = vunpack.c.h.b16 %v2102
    %v2254 = vunpack.c.l.b16 %v2103
    %v2255 = vunpack.c.l.b16 %v2104
    %v2256 = vunpack.c.h.b16 %v2104
    %v2257 = vunpack.c.l.b16 %v2105
    %v2258 = vunpack.c.l.b16 %v2106
    %v2259 = vunpack.c.h.b16 %v2106
    %v2260 = vunpack.c.l.b16 %v2107
    %v2261 = vunpack.c.l.b16 %v2108
    %v2262 = vunpack.c.h.b16 %v2108
    %v2263 = vunpack.c.l.b16 %v2109
    %v2264 = vunpack.c.l.b16 %v2110
    %v2265 = vunpack.c.h.b16 %v2110
    %v2266 = vunpack.c.l.b16 %v2111
    %v2267 = vunpack.c.l.b16 %v2112
    %v2268 = vunpack.c.h.b16 %v2112
    %v2269 = vunpack.c.l.b16 %v2113
    %v2270 = vunpack.c.l.b16 %v2114
    %v2271 = vunpack.c.h.b16 %v2114
    %v2272 = vunpack.c.l.b16 %v2115
    %v2273 = vunpack.c.l.b16 %v2116
    %v2274 = vunpack.c.h.b16 %v2116
    %v2275 = vunpack.c.l.b16 %v2117
    %v2276 = vunpack.c.l.b16 %v2118
    %v2277 = vunpack.c.h.b16 %v2118
    %v2278 = vunpack.c.l.b16 %v2119
    %v2279 = vunpack.c.l.b16 %v2120
    %v2280 = vunpack.c.h.b16 %v2120
    %v2281 = vunpack.c.l.b16 %v2121
    %v2282 = vpack.c.b16 %v2189, %v2186
    %v2283 = vpack.c.b16 %v2190, %v2187
    %v2284 = vpack.c.b16 %v2191, %v2188
    %v2285 = vpack.c.b16 %v2195, %v2192
    %v2286 = vpack.c.b16 %v2196, %v2193
    %v2287 = vpack.c.b16 %v2197, %v2194
    %v2288 = vpack.c.b16 %v2201, %v2198
    %v2289 = vpack.c.b16 %v2202, %v2199
    %v2290 = vpack.c.b16 %v2203, %v2200
    %v2291 = vpack.c.b16 %v2207, %v2204
    %v2292 = vpack.c.b16 %v2208, %v2205
    %v2293 = vpack.c.b16 %v2209, %v2206
    %v2294 = vpack.c.b16 %v2213, %v2210
    %v2295 = vpack.c.b16 %v2214, %v2211
    %v2296 = vpack.c.b16 %v2215, %v2212
    %v2297 = vpack.c.b16 %v2219, %v2216
    %v2298 = vpack.c.b16 %v2220, %v2217
    %v2299 = vpack.c.b16 %v2221, %v2218
    %v2300 = vpack.c.b16 %v2225, %v2222
    %v2301 = vpack.c.b16 %v2226, %v2223
    %v2302 = vpack.c.b16 %v2227, %v2224
    %v2303 = vpack.c.b16 %v2231, %v2228
    %v2304 = vpack.c.b16 %v2232, %v2229
    %v2305 = vpack.c.b16 %v2233, %v2230
    %v2306 = vpack.c.b16 %v2237, %v2234
    %v2307 = vpack.c.b16 %v2238, %v2235
    %v2308 = vpack.c.b16 %v2239, %v2236
    %v2309 = vpack.c.b16 %v2243, %v2240
    %v2310 = vpack.c.b16 %v2244, %v2241
    %v2311 = vpack.c.b16 %v2245, %v2242
    %v2312 = vpack.c.b16 %v2249, %v2246
    %v2313 = vpack.c.b16 %v2250, %v2247
    %v2314 = vpack.c.b16 %v2251, %v2248
    %v2315 = vpack.c.b16 %v2255, %v2252
    %v2316 = vpack.c.b16 %v2256, %v2253
    %v2317 = vpack.c.b16 %v2257, %v2254
    %v2318 = vpack.c.b16 %v2261, %v2258
    %v2319 = vpack.c.b16 %v2262, %v2259
    %v2320 = vpack.c.b16 %v2263, %v2260
    %v2321 = vpack.c.b16 %v2267, %v2264
    %v2322 = vpack.c.b16 %v2268, %v2265
    %v2323 = vpack.c.b16 %v2269, %v2266
    %v2324 = vpack.c.b16 %v2273, %v2270
    %v2325 = vpack.c.b16 %v2274, %v2271
    %v2326 = vpack.c.b16 %v2275, %v2272
    %v2327 = vpack.c.b16 %v2279, %v2276
    %v2328 = vpack.c.b16 %v2280, %v2277
    %v2329 = vpack.c.b16 %v2281, %v2278
    %2378 = vmatprep.subr.bf16.mxu0 %v2304
    %2379 = vmatpush1.bf16.msra.mxu0 %v2303
    %2380 = vmatprep.subr.bf16.mxu0 %v2301
    %2381 = vmatpush1.bf16.msra.mxu0 %v2300
    %2382 = vmatprep.subr.bf16.mxu0 %v2298
    %2383 = vmatpush1.bf16.msra.mxu0 %v2297
    %2384 = vmatprep.subr.bf16.mxu0 %v2295
    %2385 = vmatpush1.bf16.msra.mxu0 %v2294
    %2386 = vmatprep.subr.bf16.mxu0 %v2292
    %2387 = vmatpush1.bf16.msra.mxu0 %v2291
    %2388 = vmatprep.subr.bf16.mxu0 %v2289
    %2389 = vmatpush1.bf16.msra.mxu0 %v2288
    %2390 = vmatprep.subr.bf16.mxu0 %v2286
    %2391 = vmatpush1.bf16.msra.mxu0 %v2285
    %2392 = vmatprep.subr.bf16.mxu0 %v2283
    %2393 = vmatpush1.bf16.msra.mxu0 %v2282
    %2394 = vmatprep.subr.bf16.mxu0 %v2328
    %2395 = vmatpush2.bf16.msra.mxu0 %v2327
    %2396 = vmatprep.subr.bf16.mxu0 %v2325
    %2397 = vmatpush2.bf16.msra.mxu0 %v2324
    %2398 = vmatprep.subr.bf16.mxu0 %v2322
    %2399 = vmatpush2.bf16.msra.mxu0 %v2321
    %2400 = vmatprep.subr.bf16.mxu0 %v2319
    %2401 = vmatpush2.bf16.msra.mxu0 %v2318
    %2402 = vmatprep.subr.bf16.mxu0 %v2316
    %2403 = vmatpush2.bf16.msra.mxu0 %v2315
    %2404 = vmatprep.subr.bf16.mxu0 %v2313
    %2405 = vmatpush2.bf16.msra.mxu0 %v2312
    %2406 = vmatprep.subr.bf16.mxu0 %v2310
    %2407 = vmatpush2.bf16.msra.mxu0 %v2309
    %2408 = vmatprep.subr.bf16.mxu0 %v2307
    %2409 = vmatpush2.bf16.msra.mxu0 %v2306
    %2410 = vmatprep.mubr.bf16.mxu0 %v842
    %2411 = vmatmul.mubr.bf16.gmra.mxu0 %v841
    %v2412 = vpop.f32.mrf.mxu0
    %v2413 = vadd.f32 0.0, %v2412
    %v2414 = vpop.f32.mrf.mxu0
    %v2415 = vadd.f32 0.0, %v2414
    %v2416 = vpop.f32.mrf.mxu0
    %v2417 = vpop.f32.mrf.mxu0
    %2418 = vdwg.mxu0
    %2419 = vmatprep.subr.bf16.mxu0 0
    %2420 = vmatpush1.bf16.msra.mxu0 %v2305
    %2421 = vmatprep.subr.bf16.mxu0 0
    %2422 = vmatpush1.bf16.msra.mxu0 %v2302
    %2423 = vmatprep.subr.bf16.mxu0 0
    %2424 = vmatpush1.bf16.msra.mxu0 %v2299
    %2425 = vmatprep.subr.bf16.mxu0 0
    %2426 = vmatpush1.bf16.msra.mxu0 %v2296
    %2427 = vmatprep.subr.bf16.mxu0 0
    %2428 = vmatpush1.bf16.msra.mxu0 %v2293
    %2429 = vmatprep.subr.bf16.mxu0 0
    %2430 = vmatpush1.bf16.msra.mxu0 %v2290
    %2431 = vmatprep.subr.bf16.mxu0 0
    %2432 = vmatpush1.bf16.msra.mxu0 %v2287
    %2433 = vmatprep.subr.bf16.mxu0 0
    %2434 = vmatpush1.bf16.msra.mxu0 %v2284
    %2435 = vmatprep.subr.bf16.mxu0 0
    %2436 = vmatpush2.bf16.msra.mxu0 %v2329
    %2437 = vmatprep.subr.bf16.mxu0 0
    %2438 = vmatpush2.bf16.msra.mxu0 %v2326
    %2439 = vmatprep.subr.bf16.mxu0 0
    %2440 = vmatpush2.bf16.msra.mxu0 %v2323
    %2441 = vmatprep.subr.bf16.mxu0 0
    %2442 = vmatpush2.bf16.msra.mxu0 %v2320
    %2443 = vmatprep.subr.bf16.mxu0 0
    %2444 = vmatpush2.bf16.msra.mxu0 %v2317
    %2445 = vmatprep.subr.bf16.mxu0 0
    %2446 = vmatpush2.bf16.msra.mxu0 %v2314
    %2447 = vmatprep.subr.bf16.mxu0 0
    %2448 = vmatpush2.bf16.msra.mxu0 %v2311
    %2449 = vmatprep.subr.bf16.mxu0 0
    %2450 = vmatpush2.bf16.msra.mxu0 %v2308
    %2451 = vmatprep.mubr.bf16.mxu0 %v842
    %2452 = vmatmul.mubr.bf16.gmra.mxu0 %v841
    %v2453 = vpop.f32.mrf.mxu0
    %v2454 = vadd.f32 0.0, %v2453
    %v2455 = vpop.f32.mrf.mxu0
    %v2456 = vpop.f32.mrf.mxu0
    %v2457 = vpop.f32.mrf.mxu0
    %2458 = vdwg.mxu0
    %2459 = vst [vmem:[#allocation2 + $0x48] sm:$0xff] %v2413
    %2460 = vst [vmem:[#allocation2 + $0x50] sm:$0xff] %v2415
    %2461 = vst.msk [vmem:[#allocation2 + $0x58] sm:$0xff] %vm776, %v2454
    %v2462 = vld [vmem:[#allocation2] sm:$0xff]
    %v2463 = vld [vmem:[#allocation2 + $0x8] sm:$0xff]
    %v2464 = vld [vmem:[#allocation2 + $0x10] sm:$0xff]
    %v2465 = vld [vmem:[#allocation2 + $0x18] sm:$0xff]
    %v2466 = vld [vmem:[#allocation2 + $0x20] sm:$0xff]
    %v2467 = vld [vmem:[#allocation2 + $0x28] sm:$0xff]
    %v2468 = vld [vmem:[#allocation2 + $0x30] sm:$0xff]
    %v2469 = vld [vmem:[#allocation2 + $0x38] sm:$0xff]
    %v2470 = vld [vmem:[#allocation2 + $0x40] sm:$0xff]
    %v2471 = vld [vmem:[#allocation2 + $0x48] sm:$0xff]
    %v2472 = vld [vmem:[#allocation2 + $0x50] sm:$0xff]
    %v2473 = vld [vmem:[#allocation2 + $0x58] sm:$0xff]
    %v2474 = vpack.c.bf16 %v2465, %v2462
    %v2475 = vpack.c.bf16 %v2466, %v2463
    %v2476 = vpack.c.bf16 %v2467, %v2464
    %v2477 = vpack.c.bf16 %v2471, %v2468
    %v2478 = vpack.c.bf16 %v2472, %v2469
    %v2479 = vpack.c.bf16 %v2473, %v2470
    %v2480 = vld [vmem:[%s7] sm:$0xf]
    %v2481 = vld [vmem:[%s7 + $0x4] sm:$0xf]
    %v2482 = vld [vmem:[%s7 + $0x8] sm:$0x3]
    %v2486 = vunpack.c.l.b16 %v2480
    %v2487 = vunpack.c.l.b16 %v2481
    %v2488 = vunpack.c.l.b16 %v2482
    %v2489 = vpack.c.b16 %v2487, %v2486
    %v2490 = vpack.c.b16 %v2488, %v2488
    %v2492 = vsel %vm424, %v2489, 0
    %v2495 = vsel %vm424, %v2490, 0
    %2497 = vmatprep.subr.bf16.mxu0 0
    %2498 = vmatpush1.bf16.msra.mxu0 0
    %2499 = vmatprep.subr.bf16.mxu0 0
    %2500 = vmatpush1.bf16.msra.mxu0 0
    %2501 = vmatprep.subr.bf16.mxu0 0
    %2502 = vmatpush1.bf16.msra.mxu0 0
    %2503 = vmatprep.subr.bf16.mxu0 0
    %2504 = vmatpush1.bf16.msra.mxu0 0
    %2505 = vmatprep.subr.bf16.mxu0 0
    %2506 = vmatpush1.bf16.msra.mxu0 0
    %2507 = vmatprep.subr.bf16.mxu0 0
    %2508 = vmatpush1.bf16.msra.mxu0 0
    %2509 = vmatprep.subr.bf16.mxu0 %v2478
    %2510 = vmatpush1.bf16.msra.mxu0 %v2477
    %2511 = vmatprep.subr.bf16.mxu0 %v2475
    %2512 = vmatpush1.bf16.msra.mxu0 %v2474
    %2513 = vmatprep.subr.bf16.mxu0 0
    %2514 = vmatpush2.bf16.msra.mxu0 0
    %2515 = vmatprep.subr.bf16.mxu0 0
    %2516 = vmatpush2.bf16.msra.mxu0 0
    %2517 = vmatprep.subr.bf16.mxu0 0
    %2518 = vmatpush2.bf16.msra.mxu0 0
    %2519 = vmatprep.subr.bf16.mxu0 0
    %2520 = vmatpush2.bf16.msra.mxu0 0
    %2521 = vmatprep.subr.bf16.mxu0 0
    %2522 = vmatpush2.bf16.msra.mxu0 0
    %2523 = vmatprep.subr.bf16.mxu0 0
    %2524 = vmatpush2.bf16.msra.mxu0 0
    %2525 = vmatprep.subr.bf16.mxu0 0
    %2526 = vmatpush2.bf16.msra.mxu0 0
    %2527 = vmatprep.subr.bf16.mxu0 0
    %2528 = vmatpush2.bf16.msra.mxu0 0
    %2529 = vmatprep.mubr.bf16.mxu0 0
    %2530 = vmatmul.mubr.bf16.gmra.mxu0 %v2492
    %v2531 = vpop.f32.mrf.mxu0
    %v2532 = vadd.f32 0.0, %v2531
    %v2533 = vpop.f32.mrf.mxu0
    %v2534 = vadd.f32 0.0, %v2533
    %v2535 = vpop.f32.mrf.mxu0
    %v2536 = vadd.f32 0.0, %v2535
    %v2537 = vpop.f32.mrf.mxu0
    %v2538 = vadd.f32 0.0, %v2537
    %2539 = vmatprep.mubr.bf16.mxu0 0
    %2540 = vmatmul.mubr.bf16.gmra.mxu0 %v2495
    %v2541 = vpop.f32.mrf.mxu0
    %v2542 = vadd.f32 0.0, %v2541
    %v2543 = vpop.f32.mrf.mxu0
    %v2544 = vadd.f32 0.0, %v2543
    %v2545 = vpop.f32.mrf.mxu0
    %v2546 = vpop.f32.mrf.mxu0
    %2547 = vdwg.mxu0
    %2548 = vmatprep.subr.bf16.mxu0 0
    %2549 = vmatpush1.bf16.msra.mxu0 0
    %2550 = vmatprep.subr.bf16.mxu0 0
    %2551 = vmatpush1.bf16.msra.mxu0 0
    %2552 = vmatprep.subr.bf16.mxu0 0
    %2553 = vmatpush1.bf16.msra.mxu0 0
    %2554 = vmatprep.subr.bf16.mxu0 0
    %2555 = vmatpush1.bf16.msra.mxu0 0
    %2556 = vmatprep.subr.bf16.mxu0 0
    %2557 = vmatpush1.bf16.msra.mxu0 0
    %2558 = vmatprep.subr.bf16.mxu0 0
    %2559 = vmatpush1.bf16.msra.mxu0 0
    %2560 = vmatprep.subr.bf16.mxu0 0
    %2561 = vmatpush1.bf16.msra.mxu0 %v2479
    %2562 = vmatprep.subr.bf16.mxu0 0
    %2563 = vmatpush1.bf16.msra.mxu0 %v2476
    %2564 = vmatprep.subr.bf16.mxu0 0
    %2565 = vmatpush2.bf16.msra.mxu0 0
    %2566 = vmatprep.subr.bf16.mxu0 0
    %2567 = vmatpush2.bf16.msra.mxu0 0
    %2568 = vmatprep.subr.bf16.mxu0 0
    %2569 = vmatpush2.bf16.msra.mxu0 0
    %2570 = vmatprep.subr.bf16.mxu0 0
    %2571 = vmatpush2.bf16.msra.mxu0 0
    %2572 = vmatprep.subr.bf16.mxu0 0
    %2573 = vmatpush2.bf16.msra.mxu0 0
    %2574 = vmatprep.subr.bf16.mxu0 0
    %2575 = vmatpush2.bf16.msra.mxu0 0
    %2576 = vmatprep.subr.bf16.mxu0 0
    %2577 = vmatpush2.bf16.msra.mxu0 0
    %2578 = vmatprep.subr.bf16.mxu0 0
    %2579 = vmatpush2.bf16.msra.mxu0 0
    %2580 = vmatprep.mubr.bf16.mxu0 0
    %2581 = vmatmul.mubr.bf16.gmra.mxu0 %v2492
    %v2582 = vpop.f32.mrf.mxu0
    %v2583 = vadd.f32 0.0, %v2582
    %v2584 = vpop.f32.mrf.mxu0
    %v2585 = vpop.f32.mrf.mxu0
    %v2586 = vadd.f32 0.0, %v2585
    %v2587 = vpop.f32.mrf.mxu0
    %2588 = vmatprep.mubr.bf16.mxu0 0
    %2589 = vmatmul.mubr.bf16.gmra.mxu0 %v2495
    %v2590 = vpop.f32.mrf.mxu0
    %v2591 = vadd.f32 0.0, %v2590
    %v2592 = vpop.f32.mrf.mxu0
    %v2593 = vpop.f32.mrf.mxu0
    %v2594 = vpop.f32.mrf.mxu0
    %2595 = vdwg.mxu0
    %v2596 = vadd.f32 %v2532, %v2536
    %vm2597 = vcmask 1043456
    %v2598 = vsel %vm2597, %v2542, 0.0
    %v2599 = vadd.f32 %v2596, %v2598
    %v2600 = vrot.slane %v2599, 4
    %v2601 = vadd.f32 %v2599, %v2600
    %v2602 = vrot.slane %v2601, 2
    %v2603 = vadd.f32 %v2601, %v2602
    %v2604 = vrot.slane %v2603, 1
    %v2605 = vadd.f32 %v2603, %v2604
    %v2606 = vadd.f32 %v2534, %v2538
    %v2607 = vsel %vm2597, %v2544, 0.0
    %v2608 = vadd.f32 %v2606, %v2607
    %v2609 = vrot.slane %v2608, 4
    %v2610 = vadd.f32 %v2608, %v2609
    %v2611 = vrot.slane %v2610, 2
    %v2612 = vadd.f32 %v2610, %v2611
    %v2613 = vrot.slane %v2612, 1
    %v2614 = vadd.f32 %v2612, %v2613
    %v2615 = vsel %vm776, %v2583, 0.0
    %v2616 = vsel %vm776, %v2586, 0.0
    %v2617 = vadd.f32 %v2615, %v2616
    %vm2618 = vcmask 519168
    %v2619 = vsel %vm2618, %v2591, 0.0
    %v2620 = vadd.f32 %v2617, %v2619
    %v2621 = vrot.slane %v2620, 4
    %v2622 = vadd.f32 %v2620, %v2621
    %v2623 = vrot.slane %v2622, 2
    %v2624 = vadd.f32 %v2622, %v2623
    %v2625 = vrot.slane %v2624, 1
    %v2626 = vadd.f32 %v2624, %v2625
    %v2630 = vcombine.low %v2605, %v2614
    %v2632 = vunpack.c.l.s4 1966171168
    %v2633 = vunpack.c.0.s8 %v2632
    %v2634 = vlaneseq
    %v2635 = vshrl.u32 %v2634, 7
    %v2636 = vsub.s32 %v2633, %v2635
    %v2637 = vrot.slane %v2630, %v2636
    %v2639 = vunpack.c.l.s4 1966171168
    %v2640 = vunpack.c.0.s8 %v2639
    %v2641 = vlaneseq
    %v2642 = vshrl.u32 %v2641, 7
    %v2643 = vsub.s32 %v2640, %v2642
    %v2644 = vrot.slane %v2626, %v2643
    %v2645 = vcombine.low %v2637, %v2644
    %v2647 = vunpack.c.l.s4 1966171168
    %v2648 = vunpack.c.0.s8 %v2647
    %v2649 = vlaneseq
    %v2650 = vshrl.u32 %v2649, 7
    %v2651 = vsub.s32 %v2648, %v2650
    %v2652 = vrot.slane %v2645, %v2651
    %vm2654 = vcmp.lt.s32.totalorder %v499, 320
    %vm2655 = vmand %vm500, %vm2654
    %2656 = vst.msk [vmem:[#allocation3] ss:$8 sm:$0x7] %vm2655, %v2652
    %2657 = vst.msk [vmem:[#allocation3] ss:$8 sm:$0x0] %vm2655, %v2652
    %v2658 = vmul.f32 %v2532, %v2532
    %v2659 = vmul.f32 %v2534, %v2534
    %v2660 = vmul.f32 %v2583, %v2583
    %v2661 = vmul.f32 %v2536, %v2536
    %v2662 = vmul.f32 %v2538, %v2538
    %v2663 = vmul.f32 %v2586, %v2586
    %v2664 = vmul.f32 %v2542, %v2542
    %v2665 = vmul.f32 %v2544, %v2544
    %v2666 = vmul.f32 %v2591, %v2591
    %v2667 = vadd.f32 %v2658, %v2661
    %v2668 = vsel %vm2597, %v2664, 0.0
    %v2669 = vadd.f32 %v2667, %v2668
    %v2670 = vrot.slane %v2669, 4
    %v2671 = vadd.f32 %v2669, %v2670
    %v2672 = vrot.slane %v2671, 2
    %v2673 = vadd.f32 %v2671, %v2672
    %v2674 = vrot.slane %v2673, 1
    %v2675 = vadd.f32 %v2673, %v2674
    %v2676 = vadd.f32 %v2659, %v2662
    %v2677 = vsel %vm2597, %v2665, 0.0
    %v2678 = vadd.f32 %v2676, %v2677
    %v2679 = vrot.slane %v2678, 4
    %v2680 = vadd.f32 %v2678, %v2679
    %v2681 = vrot.slane %v2680, 2
    %v2682 = vadd.f32 %v2680, %v2681
    %v2683 = vrot.slane %v2682, 1
    %v2684 = vadd.f32 %v2682, %v2683
    %v2685 = vsel %vm776, %v2660, 0.0
    %v2686 = vsel %vm776, %v2663, 0.0
    %v2687 = vadd.f32 %v2685, %v2686
    %v2688 = vsel %vm2618, %v2666, 0.0
    %v2689 = vadd.f32 %v2687, %v2688
    %v2690 = vrot.slane %v2689, 4
    %v2691 = vadd.f32 %v2689, %v2690
    %v2692 = vrot.slane %v2691, 2
    %v2693 = vadd.f32 %v2691, %v2692
    %v2694 = vrot.slane %v2693, 1
    %v2695 = vadd.f32 %v2693, %v2694
    %v2699 = vcombine.low %v2675, %v2684
    %v2701 = vunpack.c.l.s4 1966171168
    %v2702 = vunpack.c.0.s8 %v2701
    %v2703 = vlaneseq
    %v2704 = vshrl.u32 %v2703, 7
    %v2705 = vsub.s32 %v2702, %v2704
    %v2706 = vrot.slane %v2699, %v2705
    %v2708 = vunpack.c.l.s4 1966171168
    %v2709 = vunpack.c.0.s8 %v2708
    %v2710 = vlaneseq
    %v2711 = vshrl.u32 %v2710, 7
    %v2712 = vsub.s32 %v2709, %v2711
    %v2713 = vrot.slane %v2695, %v2712
    %v2714 = vcombine.low %v2706, %v2713
    %v2716 = vunpack.c.l.s4 1966171168
    %v2717 = vunpack.c.0.s8 %v2716
    %v2718 = vlaneseq
    %v2719 = vshrl.u32 %v2718, 7
    %v2720 = vsub.s32 %v2717, %v2719
    %v2721 = vrot.slane %v2714, %v2720
    %s2723 = scalar_lea.vmem [#allocation3], 1
    %2724 = vst.msk [vmem:[%s2723] ss:$8 sm:$0x7] %vm2655, %v2721
    %2725 = vst.msk [vmem:[%s2723] ss:$8 sm:$0x0] %vm2655, %v2721
    %v2726 = vld [vmem:[#allocation3] sm:$0x3]
    %v2727 = vld [vmem:[#allocation3 + $0x8] sm:$0x3]
    %v2728 = vld [vmem:[#allocation3 + $0x10] sm:$0x3]
    %v2729 = vld [vmem:[%s9] sm:$0xf]
    %v2730 = vld [vmem:[%s9 + $0x4] sm:$0xf]
    %v2731 = vld [vmem:[%s9 + $0x8] sm:$0xf]
    %v2732 = vld [vmem:[%s9 + $0xc] sm:$0xf]
    %v2733 = vld [vmem:[%s9 + $0x10] sm:$0xf]
    %v2734 = vld [vmem:[%s9 + $0x14] sm:$0xf]
    %v2735 = vld [vmem:[%s9 + $0x18] sm:$0xf]
    %v2736 = vld [vmem:[%s9 + $0x1c] sm:$0xf]
    %v2737 = vld [vmem:[%s9 + $0x20] sm:$0xf]
    %v2738 = vld [vmem:[%s9 + $0x24] sm:$0xf]
    %v2739 = vld [vmem:[%s9 + $0x28] sm:$0xf]
    %v2740 = vld [vmem:[%s9 + $0x2c] sm:$0xf]
    %v2741 = vld [vmem:[%s9 + $0x30] sm:$0xf]
    %v2742 = vld [vmem:[%s9 + $0x34] sm:$0xf]
    %v2743 = vld [vmem:[%s9 + $0x38] sm:$0xf]
    %v2744 = vld [vmem:[%s9 + $0x3c] sm:$0xf]
    %v2745 = vld [vmem:[%s9 + $0x40] sm:$0xf]
    %v2746 = vld [vmem:[%s9 + $0x44] sm:$0xf]
    %v2747 = vld [vmem:[%s9 + $0x48] sm:$0xf]
    %v2748 = vld [vmem:[%s9 + $0x4c] sm:$0xf]
    %v2749 = vld [vmem:[%s9 + $0x50] sm:$0xf]
    %v2750 = vld [vmem:[%s9 + $0x54] sm:$0xf]
    %v2751 = vld [vmem:[%s9 + $0x58] sm:$0xf]
    %v2752 = vld [vmem:[%s9 + $0x5c] sm:$0xf]
    %v2753 = vld [vmem:[%s9 + $0x60] sm:$0xf]
    %v2754 = vld [vmem:[%s9 + $0x64] sm:$0xf]
    %v2755 = vld [vmem:[%s9 + $0x68] sm:$0xf]
    %v2756 = vld [vmem:[%s9 + $0x6c] sm:$0xf]
    %v2757 = vld [vmem:[%s9 + $0x70] sm:$0xf]
    %v2758 = vld [vmem:[%s9 + $0x74] sm:$0xf]
    %v2759 = vld [vmem:[%s9 + $0x78] sm:$0xf]
    %v2760 = vld [vmem:[%s9 + $0x7c] sm:$0xf]
    %v2761 = vld [vmem:[%s9 + $0x80] sm:$0xf]
    %v2762 = vld [vmem:[%s9 + $0x84] sm:$0xf]
    %v2763 = vld [vmem:[%s9 + $0x88] sm:$0xf]
    %v2764 = vld [vmem:[%s9 + $0x8c] sm:$0xf]
    %v2765 = vld [vmem:[%s9 + $0x90] sm:$0xf]
    %v2766 = vld [vmem:[%s9 + $0x94] sm:$0xf]
    %v2767 = vld [vmem:[%s9 + $0x98] sm:$0xf]
    %v2768 = vld [vmem:[%s9 + $0x9c] sm:$0xf]
    %v2809 = vunpack.c.l.b16 %v2729
    %v2810 = vunpack.c.l.b16 %v2730
    %v2811 = vunpack.c.l.b16 %v2731
    %v2812 = vunpack.c.l.b16 %v2732
    %v2813 = vunpack.c.l.b16 %v2733
    %v2814 = vunpack.c.l.b16 %v2734
    %v2815 = vunpack.c.l.b16 %v2735
    %v2816 = vunpack.c.l.b16 %v2736
    %v2817 = vunpack.c.l.b16 %v2737
    %v2818 = vunpack.c.l.b16 %v2738
    %v2819 = vunpack.c.l.b16 %v2739
    %v2820 = vunpack.c.l.b16 %v2740
    %v2821 = vunpack.c.l.b16 %v2741
    %v2822 = vunpack.c.l.b16 %v2742
    %v2823 = vunpack.c.l.b16 %v2743
    %v2824 = vunpack.c.l.b16 %v2744
    %v2825 = vunpack.c.l.b16 %v2745
    %v2826 = vunpack.c.l.b16 %v2746
    %v2827 = vunpack.c.l.b16 %v2747
    %v2828 = vunpack.c.l.b16 %v2748
    %v2829 = vunpack.c.l.b16 %v2749
    %v2830 = vunpack.c.l.b16 %v2750
    %v2831 = vunpack.c.l.b16 %v2751
    %v2832 = vunpack.c.l.b16 %v2752
    %v2833 = vunpack.c.l.b16 %v2753
    %v2834 = vunpack.c.l.b16 %v2754
    %v2835 = vunpack.c.l.b16 %v2755
    %v2836 = vunpack.c.l.b16 %v2756
    %v2837 = vunpack.c.l.b16 %v2757
    %v2838 = vunpack.c.l.b16 %v2758
    %v2839 = vunpack.c.l.b16 %v2759
    %v2840 = vunpack.c.l.b16 %v2760
    %v2841 = vunpack.c.l.b16 %v2761
    %v2842 = vunpack.c.l.b16 %v2762
    %v2843 = vunpack.c.l.b16 %v2763
    %v2844 = vunpack.c.l.b16 %v2764
    %v2845 = vunpack.c.l.b16 %v2765
    %v2846 = vunpack.c.l.b16 %v2766
    %v2847 = vunpack.c.l.b16 %v2767
    %v2848 = vunpack.c.l.b16 %v2768
    %v2849 = vpack.c.b16 %v2810, %v2809
    %v2850 = vpack.c.b16 %v2812, %v2811
    %v2851 = vpack.c.b16 %v2814, %v2813
    %v2852 = vpack.c.b16 %v2816, %v2815
    %v2853 = vpack.c.b16 %v2818, %v2817
    %v2854 = vpack.c.b16 %v2820, %v2819
    %v2855 = vpack.c.b16 %v2822, %v2821
    %v2856 = vpack.c.b16 %v2824, %v2823
    %v2857 = vpack.c.b16 %v2826, %v2825
    %v2858 = vpack.c.b16 %v2828, %v2827
    %v2859 = vpack.c.b16 %v2830, %v2829
    %v2860 = vpack.c.b16 %v2832, %v2831
    %v2861 = vpack.c.b16 %v2834, %v2833
    %v2862 = vpack.c.b16 %v2836, %v2835
    %v2863 = vpack.c.b16 %v2838, %v2837
    %v2864 = vpack.c.b16 %v2840, %v2839
    %v2865 = vpack.c.b16 %v2842, %v2841
    %v2866 = vpack.c.b16 %v2844, %v2843
    %v2867 = vpack.c.b16 %v2846, %v2845
    %v2868 = vpack.c.b16 %v2848, %v2847
    %v2890 = vsel %vm776, %v2728, 0
    %2892 = vmatprep.subr.bf16.mxu0 0
    %2893 = vmatpush1.bf16.msra.mxu0 %v2856
    %2894 = vmatprep.subr.bf16.mxu0 0
    %2895 = vmatpush1.bf16.msra.mxu0 %v2855
    %2896 = vmatprep.subr.bf16.mxu0 0
    %2897 = vmatpush1.bf16.msra.mxu0 %v2854
    %2898 = vmatprep.subr.bf16.mxu0 0
    %2899 = vmatpush1.bf16.msra.mxu0 %v2853
    %2900 = vmatprep.subr.bf16.mxu0 0
    %2901 = vmatpush1.bf16.msra.mxu0 %v2852
    %2902 = vmatprep.subr.bf16.mxu0 0
    %2903 = vmatpush1.bf16.msra.mxu0 %v2851
    %2904 = vmatprep.subr.bf16.mxu0 0
    %2905 = vmatpush1.bf16.msra.mxu0 %v2850
    %2906 = vmatprep.subr.bf16.mxu0 0
    %2907 = vmatpush1.bf16.msra.mxu0 %v2849
    %2908 = vmatprep.subr.bf16.mxu0 0
    %2909 = vmatpush2.bf16.msra.mxu0 %v2864
    %2910 = vmatprep.subr.bf16.mxu0 0
    %2911 = vmatpush2.bf16.msra.mxu0 %v2863
    %2912 = vmatprep.subr.bf16.mxu0 0
    %2913 = vmatpush2.bf16.msra.mxu0 %v2862
    %2914 = vmatprep.subr.bf16.mxu0 0
    %2915 = vmatpush2.bf16.msra.mxu0 %v2861
    %2916 = vmatprep.subr.bf16.mxu0 0
    %2917 = vmatpush2.bf16.msra.mxu0 %v2860
    %2918 = vmatprep.subr.bf16.mxu0 0
    %2919 = vmatpush2.bf16.msra.mxu0 %v2859
    %2920 = vmatprep.subr.bf16.mxu0 0
    %2921 = vmatpush2.bf16.msra.mxu0 %v2858
    %2922 = vmatprep.subr.bf16.mxu0 0
    %2923 = vmatpush2.bf16.msra.mxu0 %v2857
    %2924 = vmatprep.mubr.f32.mxu0 %v2727
    %2925 = vmatmul.mubr.f32.gmra.mxu0 %v2726
    %v2926 = vpop.f32.mrf.mxu0
    %v2927 = vadd.f32 0.0, %v2926
    %v2928 = vpop.f32.mrf.mxu0
    %2929 = vdwg.mxu0
    %2930 = vmatprep.subr.bf16.mxu0 0
    %2931 = vmatpush1.bf16.msra.mxu0 0
    %2932 = vmatprep.subr.bf16.mxu0 0
    %2933 = vmatpush1.bf16.msra.mxu0 0
    %2934 = vmatprep.subr.bf16.mxu0 0
    %2935 = vmatpush1.bf16.msra.mxu0 0
    %2936 = vmatprep.subr.bf16.mxu0 0
    %2937 = vmatpush1.bf16.msra.mxu0 0
    %2938 = vmatprep.subr.bf16.mxu0 0
    %2939 = vmatpush1.bf16.msra.mxu0 %v2868
    %2940 = vmatprep.subr.bf16.mxu0 0
    %2941 = vmatpush1.bf16.msra.mxu0 %v2867
    %2942 = vmatprep.subr.bf16.mxu0 0
    %2943 = vmatpush1.bf16.msra.mxu0 %v2866
    %2944 = vmatprep.subr.bf16.mxu0 0
    %2945 = vmatpush1.bf16.msra.mxu0 %v2865
    %2946 = vmatprep.subr.bf16.mxu0 0
    %2947 = vmatpush2.bf16.msra.mxu0 0
    %2948 = vmatprep.subr.bf16.mxu0 0
    %2949 = vmatpush2.bf16.msra.mxu0 0
    %2950 = vmatprep.subr.bf16.mxu0 0
    %2951 = vmatpush2.bf16.msra.mxu0 0
    %2952 = vmatprep.subr.bf16.mxu0 0
    %2953 = vmatpush2.bf16.msra.mxu0 0
    %2954 = vmatprep.subr.bf16.mxu0 0
    %2955 = vmatpush2.bf16.msra.mxu0 0
    %2956 = vmatprep.subr.bf16.mxu0 0
    %2957 = vmatpush2.bf16.msra.mxu0 0
    %2958 = vmatprep.subr.bf16.mxu0 0
    %2959 = vmatpush2.bf16.msra.mxu0 0
    %2960 = vmatprep.subr.bf16.mxu0 0
    %2961 = vmatpush2.bf16.msra.mxu0 0
    %2962 = vmatprep.mubr.f32.mxu0 0.0
    %2963 = vmatmul.mubr.f32.gmra.mxu0 %v2890
    %v2964 = vpop.f32.mrf.mxu0
    %v2965 = vadd.f32 %v2927, %v2964
    %v2966 = vpop.f32.mrf.mxu0
    %2967 = vdwg.mxu0
    %v2968 = vmul.f32 %v2965, 0.005
    %v2969 = vmul.f32 %v2968, %v2968
    %v2971 = vrot.slane %v2969, 7
    %v2973 = vsub.f32 %v2968, %v2971
    %v2974 = vld [vmem:[%s8] sm:$0x1]
    %v2975 = vadd.f32 %v2973, 1e-05
    %v2976 = vrsqrt.pop %v2975
    %v2978 = vrot.slane %v2976, 1
    %v2980 = vmul.f32 %v2974, %v2978
    %v2981 = vld [vmem:[%s8 + $0x1] sm:$0x1]
    %v2982 = vmul.f32 %v2968, %v2980
    %v2983 = vsub.f32 %v2981, %v2982
    %vm2984 = vcmask 253952
    %2985 = vst.msk [vmem:[#allocation3] sm:$0x1] %vm2984, %v2980
    %2986 = vst.msk [vmem:[#allocation3 + $0x1] sm:$0x1] %vm2984, %v2983
    %v2987 = vld [vmem:[#allocation3] sm:$0x3]
    %v2988 = vld [vmem:[%s10] sm:$0xff]
    %v2989 = vld [vmem:[%s10 + $0x8] sm:$0xf]
    %v2990 = vld [vmem:[%s10 + $0xc] sm:$0xff]
    %v2991 = vld [vmem:[%s10 + $0x14] sm:$0xf]
    %v2992 = vld [vmem:[%s10 + $0x18] sm:$0xff]
    %v2993 = vld [vmem:[%s10 + $0x20] sm:$0xf]
    %v2994 = vld [vmem:[%s10 + $0x24] sm:$0xff]
    %v2995 = vld [vmem:[%s10 + $0x2c] sm:$0xf]
    %v3004 = vunpack.c.l.b16 %v2988
    %v3005 = vunpack.c.h.b16 %v2988
    %v3006 = vunpack.c.l.b16 %v2989
    %v3007 = vunpack.c.l.b16 %v2990
    %v3008 = vunpack.c.h.b16 %v2990
    %v3009 = vunpack.c.l.b16 %v2991
    %v3010 = vunpack.c.l.b16 %v2992
    %v3011 = vunpack.c.h.b16 %v2992
    %v3012 = vunpack.c.l.b16 %v2993
    %v3013 = vunpack.c.l.b16 %v2994
    %v3014 = vunpack.c.h.b16 %v2994
    %v3015 = vunpack.c.l.b16 %v2995
    %v3016 = vpack.c.b16 %v3007, %v3004
    %v3017 = vpack.c.b16 %v3008, %v3005
    %v3018 = vpack.c.b16 %v3009, %v3006
    %v3019 = vpack.c.b16 %v3013, %v3010
    %v3020 = vpack.c.b16 %v3014, %v3011
    %v3021 = vpack.c.b16 %v3015, %v3012
    %v3029 = vsel %vm424, %v2987, 0
    %3031 = vmatprep.subr.bf16.mxu0 0
    %3032 = vmatpush1.bf16.msra.mxu0 0
    %3033 = vmatprep.subr.bf16.mxu0 0
    %3034 = vmatpush1.bf16.msra.mxu0 0
    %3035 = vmatprep.subr.bf16.mxu0 0
    %3036 = vmatpush1.bf16.msra.mxu0 0
    %3037 = vmatprep.subr.bf16.mxu0 0
    %3038 = vmatpush1.bf16.msra.mxu0 0
    %3039 = vmatprep.subr.bf16.mxu0 0
    %3040 = vmatpush1.bf16.msra.mxu0 0
    %3041 = vmatprep.subr.bf16.mxu0 0
    %3042 = vmatpush1.bf16.msra.mxu0 0
    %3043 = vmatprep.subr.bf16.mxu0 %v3020
    %3044 = vmatpush1.bf16.msra.mxu0 %v3019
    %3045 = vmatprep.subr.bf16.mxu0 %v3017
    %3046 = vmatpush1.bf16.msra.mxu0 %v3016
    %3047 = vmatprep.subr.bf16.mxu0 0
    %3048 = vmatpush2.bf16.msra.mxu0 0
    %3049 = vmatprep.subr.bf16.mxu0 0
    %3050 = vmatpush2.bf16.msra.mxu0 0
    %3051 = vmatprep.subr.bf16.mxu0 0
    %3052 = vmatpush2.bf16.msra.mxu0 0
    %3053 = vmatprep.subr.bf16.mxu0 0
    %3054 = vmatpush2.bf16.msra.mxu0 0
    %3055 = vmatprep.subr.bf16.mxu0 0
    %3056 = vmatpush2.bf16.msra.mxu0 0
    %3057 = vmatprep.subr.bf16.mxu0 0
    %3058 = vmatpush2.bf16.msra.mxu0 0
    %3059 = vmatprep.subr.bf16.mxu0 0
    %3060 = vmatpush2.bf16.msra.mxu0 0
    %3061 = vmatprep.subr.bf16.mxu0 0
    %3062 = vmatpush2.bf16.msra.mxu0 0
    %3063 = vmatprep.mubr.f32.mxu0 0.0
    %3064 = vmatmul.mubr.f32.gmra.mxu0 %v3029
    %v3065 = vpop.f32.mrf.mxu0
    %v3066 = vadd.f32 0.0, %v3065
    %v3067 = vpop.f32.mrf.mxu0
    %v3068 = vadd.f32 0.0, %v3067
    %3069 = vdwg.mxu0
    %3070 = vmatprep.subr.bf16.mxu0 0
    %3071 = vmatpush1.bf16.msra.mxu0 0
    %3072 = vmatprep.subr.bf16.mxu0 0
    %3073 = vmatpush1.bf16.msra.mxu0 0
    %3074 = vmatprep.subr.bf16.mxu0 0
    %3075 = vmatpush1.bf16.msra.mxu0 0
    %3076 = vmatprep.subr.bf16.mxu0 0
    %3077 = vmatpush1.bf16.msra.mxu0 0
    %3078 = vmatprep.subr.bf16.mxu0 0
    %3079 = vmatpush1.bf16.msra.mxu0 0
    %3080 = vmatprep.subr.bf16.mxu0 0
    %3081 = vmatpush1.bf16.msra.mxu0 0
    %3082 = vmatprep.subr.bf16.mxu0 0
    %3083 = vmatpush1.bf16.msra.mxu0 %v3021
    %3084 = vmatprep.subr.bf16.mxu0 0
    %3085 = vmatpush1.bf16.msra.mxu0 %v3018
    %3086 = vmatprep.subr.bf16.mxu0 0
    %3087 = vmatpush2.bf16.msra.mxu0 0
    %3088 = vmatprep.subr.bf16.mxu0 0
    %3089 = vmatpush2.bf16.msra.mxu0 0
    %3090 = vmatprep.subr.bf16.mxu0 0
    %3091 = vmatpush2.bf16.msra.mxu0 0
    %3092 = vmatprep.subr.bf16.mxu0 0
    %3093 = vmatpush2.bf16.msra.mxu0 0
    %3094 = vmatprep.subr.bf16.mxu0 0
    %3095 = vmatpush2.bf16.msra.mxu0 0
    %3096 = vmatprep.subr.bf16.mxu0 0
    %3097 = vmatpush2.bf16.msra.mxu0 0
    %3098 = vmatprep.subr.bf16.mxu0 0
    %3099 = vmatpush2.bf16.msra.mxu0 0
    %3100 = vmatprep.subr.bf16.mxu0 0
    %3101 = vmatpush2.bf16.msra.mxu0 0
    %3102 = vmatprep.mubr.f32.mxu0 0.0
    %3103 = vmatmul.mubr.f32.gmra.mxu0 %v3029
    %v3104 = vpop.f32.mrf.mxu0
    %v3105 = vadd.f32 0.0, %v3104
    %v3106 = vpop.f32.mrf.mxu0
    %3107 = vdwg.mxu0
    %v3108 = vlaneseq
    %v3109 = vshrl.u32 %v3108, 7
    %v3110 = vsub.s32 0, %v3109
    %v3111 = vrot.slane %v3066, %v3110
    %v3112 = vlaneseq
    %v3113 = vshrl.u32 %v3112, 7
    %v3114 = vsub.s32 0, %v3113
    %v3115 = vrot.slane %v3068, %v3114
    %v3116 = vlaneseq
    %v3117 = vshrl.u32 %v3116, 7
    %v3118 = vsub.s32 0, %v3117
    %v3119 = vrot.slane %v3105, %v3118
    %v3120 = vmul.f32 %v2532, %v3111
    %v3121 = vmul.f32 %v2534, %v3115
    %v3122 = vmul.f32 %v2583, %v3119
    %v3123 = vmul.f32 %v2536, %v3111
    %v3124 = vmul.f32 %v2538, %v3115
    %v3125 = vmul.f32 %v2586, %v3119
    %v3126 = vmul.f32 %v2542, %v3111
    %v3127 = vmul.f32 %v2544, %v3115
    %v3128 = vmul.f32 %v2591, %v3119
    %v3129 = vlaneseq
    %v3130 = vshrl.u32 %v3129, 7
    %v3131 = vsub.s32 1, %v3130
    %v3132 = vrot.slane %v3066, %v3131
    %v3133 = vlaneseq
    %v3134 = vshrl.u32 %v3133, 7
    %v3135 = vsub.s32 1, %v3134
    %v3136 = vrot.slane %v3068, %v3135
    %v3137 = vlaneseq
    %v3138 = vshrl.u32 %v3137, 7
    %v3139 = vsub.s32 1, %v3138
    %v3140 = vrot.slane %v3105, %v3139
    %v3141 = vadd.f32 %v3120, %v3132
    %v3142 = vadd.f32 %v3121, %v3136
    %v3143 = vadd.f32 %v3122, %v3140
    %v3144 = vadd.f32 %v3123, %v3132
    %v3145 = vadd.f32 %v3124, %v3136
    %v3146 = vadd.f32 %v3125, %v3140
    %v3147 = vadd.f32 %v3126, %v3132
    %v3148 = vadd.f32 %v3127, %v3136
    %v3149 = vadd.f32 %v3128, %v3140
    %v3150 = vmax.f32 %v3141, 0.0
    %v3151 = vmax.f32 %v3142, 0.0
    %v3152 = vmax.f32 %v3143, 0.0
    %v3153 = vmax.f32 %v3144, 0.0
    %v3154 = vmax.f32 %v3145, 0.0
    %v3155 = vmax.f32 %v3146, 0.0
    %v3156 = vmax.f32 %v3147, 0.0
    %v3157 = vmax.f32 %v3148, 0.0
    %v3158 = vmax.f32 %v3149, 0.0
    %v3159 = vpack.c.bf16 %v3153, %v3150
    %v3160 = vpack.c.bf16 %v3154, %v3151
    %v3161 = vpack.c.bf16 %v3155, %v3152
    %v3162 = vpack.c.bf16 %v3156, %v3156
    %v3163 = vpack.c.bf16 %v3157, %v3157
    %v3164 = vpack.c.bf16 %v3158, %v3158
    %v3165 = vld [vmem:[%s11] sm:$0xff]
    %v3166 = vld [vmem:[%s11 + $0x8] sm:$0xf]
    %v3167 = vld [vmem:[%s11 + $0xc] sm:$0xff]
    %v3168 = vld [vmem:[%s11 + $0x14] sm:$0xf]
    %v3169 = vld [vmem:[%s11 + $0x18] sm:$0xff]
    %v3170 = vld [vmem:[%s11 + $0x20] sm:$0xf]
    %v3171 = vld [vmem:[%s11 + $0x24] sm:$0xff]
    %v3172 = vld [vmem:[%s11 + $0x2c] sm:$0xf]
    %v3173 = vld [vmem:[%s11 + $0x30] sm:$0xff]
    %v3174 = vld [vmem:[%s11 + $0x38] sm:$0xf]
    %v3175 = vld [vmem:[%s11 + $0x3c] sm:$0xff]
    %v3176 = vld [vmem:[%s11 + $0x44] sm:$0xf]
    %v3177 = vld [vmem:[%s11 + $0x48] sm:$0xff]
    %v3178 = vld [vmem:[%s11 + $0x50] sm:$0xf]
    %v3179 = vld [vmem:[%s11 + $0x54] sm:$0xff]
    %v3180 = vld [vmem:[%s11 + $0x5c] sm:$0xf]
    %v3181 = vld [vmem:[%s11 + $0x60] sm:$0xff]
    %v3182 = vld [vmem:[%s11 + $0x68] sm:$0xf]
    %v3183 = vld [vmem:[%s11 + $0x6c] sm:$0xff]
    %v3184 = vld [vmem:[%s11 + $0x74] sm:$0xf]
    %v3185 = vld [vmem:[%s11 + $0x78] sm:$0xff]
    %v3186 = vld [vmem:[%s11 + $0x80] sm:$0xf]
    %v3187 = vld [vmem:[%s11 + $0x84] sm:$0xff]
    %v3188 = vld [vmem:[%s11 + $0x8c] sm:$0xf]
    %v3189 = vld [vmem:[%s11 + $0x90] sm:$0xff]
    %v3190 = vld [vmem:[%s11 + $0x98] sm:$0xf]
    %v3191 = vld [vmem:[%s11 + $0x9c] sm:$0xff]
    %v3192 = vld [vmem:[%s11 + $0xa4] sm:$0xf]
    %v3193 = vld [vmem:[%s11 + $0xa8] sm:$0xff]
    %v3194 = vld [vmem:[%s11 + $0xb0] sm:$0xf]
    %v3195 = vld [vmem:[%s11 + $0xb4] sm:$0xff]
    %v3196 = vld [vmem:[%s11 + $0xbc] sm:$0xf]
    %v3197 = vld [vmem:[%s11 + $0xc0] sm:$0xff]
    %v3198 = vld [vmem:[%s11 + $0xc8] sm:$0xf]
    %v3199 = vld [vmem:[%s11 + $0xcc] sm:$0xff]
    %v3200 = vld [vmem:[%s11 + $0xd4] sm:$0xf]
    %v3201 = vld [vmem:[%s11 + $0xd8] sm:$0xff]
    %v3202 = vld [vmem:[%s11 + $0xe0] sm:$0xf]
    %v3203 = vld [vmem:[%s11 + $0xe4] sm:$0xff]
    %v3204 = vld [vmem:[%s11 + $0xec] sm:$0xf]
    %v3205 = vld [vmem:[%s11 + $0xf0] sm:$0xff]
    %v3206 = vld [vmem:[%s11 + $0xf8] sm:$0xf]
    %v3207 = vld [vmem:[%s11 + $0xfc] sm:$0xff]
    %v3208 = vld [vmem:[%s11 + $0x104] sm:$0xf]
    %v3209 = vld [vmem:[%s11 + $0x108] sm:$0xff]
    %v3210 = vld [vmem:[%s11 + $0x110] sm:$0xf]
    %v3211 = vld [vmem:[%s11 + $0x114] sm:$0xff]
    %v3212 = vld [vmem:[%s11 + $0x11c] sm:$0xf]
    %v3213 = vld [vmem:[%s11 + $0x120] sm:$0xff]
    %v3214 = vld [vmem:[%s11 + $0x128] sm:$0xf]
    %v3215 = vld [vmem:[%s11 + $0x12c] sm:$0xff]
    %v3216 = vld [vmem:[%s11 + $0x134] sm:$0xf]
    %v3217 = vld [vmem:[%s11 + $0x138] sm:$0xff]
    %v3218 = vld [vmem:[%s11 + $0x140] sm:$0xf]
    %v3219 = vld [vmem:[%s11 + $0x144] sm:$0xff]
    %v3220 = vld [vmem:[%s11 + $0x14c] sm:$0xf]
    %v3221 = vld [vmem:[%s11 + $0x150] sm:$0xff]
    %v3222 = vld [vmem:[%s11 + $0x158] sm:$0xf]
    %v3223 = vld [vmem:[%s11 + $0x15c] sm:$0xff]
    %v3224 = vld [vmem:[%s11 + $0x164] sm:$0xf]
    %v3225 = vld [vmem:[%s11 + $0x168] sm:$0xff]
    %v3226 = vld [vmem:[%s11 + $0x170] sm:$0xf]
    %v3227 = vld [vmem:[%s11 + $0x174] sm:$0xff]
    %v3228 = vld [vmem:[%s11 + $0x17c] sm:$0xf]
    %v3229 = vld [vmem:[%s11 + $0x180] sm:$0xff]
    %v3230 = vld [vmem:[%s11 + $0x188] sm:$0xf]
    %v3231 = vld [vmem:[%s11 + $0x18c] sm:$0xff]
    %v3232 = vld [vmem:[%s11 + $0x194] sm:$0xf]
    %v3233 = vld [vmem:[%s11 + $0x198] sm:$0xff]
    %v3234 = vld [vmem:[%s11 + $0x1a0] sm:$0xf]
    %v3235 = vld [vmem:[%s11 + $0x1a4] sm:$0xff]
    %v3236 = vld [vmem:[%s11 + $0x1ac] sm:$0xf]
    %v3237 = vld [vmem:[%s11 + $0x1b0] sm:$0xff]
    %v3238 = vld [vmem:[%s11 + $0x1b8] sm:$0xf]
    %v3239 = vld [vmem:[%s11 + $0x1bc] sm:$0xff]
    %v3240 = vld [vmem:[%s11 + $0x1c4] sm:$0xf]
    %v3241 = vld [vmem:[%s11 + $0x1c8] sm:$0xff]
    %v3242 = vld [vmem:[%s11 + $0x1d0] sm:$0xf]
    %v3243 = vld [vmem:[%s11 + $0x1d4] sm:$0xff]
    %v3244 = vld [vmem:[%s11 + $0x1dc] sm:$0xf]
    %v3325 = vunpack.c.l.b16 %v3165
    %v3326 = vunpack.c.h.b16 %v3165
    %v3327 = vunpack.c.l.b16 %v3166
    %v3328 = vunpack.c.l.b16 %v3167
    %v3329 = vunpack.c.h.b16 %v3167
    %v3330 = vunpack.c.l.b16 %v3168
    %v3331 = vunpack.c.l.b16 %v3169
    %v3332 = vunpack.c.h.b16 %v3169
    %v3333 = vunpack.c.l.b16 %v3170
    %v3334 = vunpack.c.l.b16 %v3171
    %v3335 = vunpack.c.h.b16 %v3171
    %v3336 = vunpack.c.l.b16 %v3172
    %v3337 = vunpack.c.l.b16 %v3173
    %v3338 = vunpack.c.h.b16 %v3173
    %v3339 = vunpack.c.l.b16 %v3174
    %v3340 = vunpack.c.l.b16 %v3175
    %v3341 = vunpack.c.h.b16 %v3175
    %v3342 = vunpack.c.l.b16 %v3176
    %v3343 = vunpack.c.l.b16 %v3177
    %v3344 = vunpack.c.h.b16 %v3177
    %v3345 = vunpack.c.l.b16 %v3178
    %v3346 = vunpack.c.l.b16 %v3179
    %v3347 = vunpack.c.h.b16 %v3179
    %v3348 = vunpack.c.l.b16 %v3180
    %v3349 = vunpack.c.l.b16 %v3181
    %v3350 = vunpack.c.h.b16 %v3181
    %v3351 = vunpack.c.l.b16 %v3182
    %v3352 = vunpack.c.l.b16 %v3183
    %v3353 = vunpack.c.h.b16 %v3183
    %v3354 = vunpack.c.l.b16 %v3184
    %v3355 = vunpack.c.l.b16 %v3185
    %v3356 = vunpack.c.h.b16 %v3185
    %v3357 = vunpack.c.l.b16 %v3186
    %v3358 = vunpack.c.l.b16 %v3187
    %v3359 = vunpack.c.h.b16 %v3187
    %v3360 = vunpack.c.l.b16 %v3188
    %v3361 = vunpack.c.l.b16 %v3189
    %v3362 = vunpack.c.h.b16 %v3189
    %v3363 = vunpack.c.l.b16 %v3190
    %v3364 = vunpack.c.l.b16 %v3191
    %v3365 = vunpack.c.h.b16 %v3191
    %v3366 = vunpack.c.l.b16 %v3192
    %v3367 = vunpack.c.l.b16 %v3193
    %v3368 = vunpack.c.h.b16 %v3193
    %v3369 = vunpack.c.l.b16 %v3194
    %v3370 = vunpack.c.l.b16 %v3195
    %v3371 = vunpack.c.h.b16 %v3195
    %v3372 = vunpack.c.l.b16 %v3196
    %v3373 = vunpack.c.l.b16 %v3197
    %v3374 = vunpack.c.h.b16 %v3197
    %v3375 = vunpack.c.l.b16 %v3198
    %v3376 = vunpack.c.l.b16 %v3199
    %v3377 = vunpack.c.h.b16 %v3199
    %v3378 = vunpack.c.l.b16 %v3200
    %v3379 = vunpack.c.l.b16 %v3201
    %v3380 = vunpack.c.h.b16 %v3201
    %v3381 = vunpack.c.l.b16 %v3202
    %v3382 = vunpack.c.l.b16 %v3203
    %v3383 = vunpack.c.h.b16 %v3203
    %v3384 = vunpack.c.l.b16 %v3204
    %v3385 = vunpack.c.l.b16 %v3205
    %v3386 = vunpack.c.h.b16 %v3205
    %v3387 = vunpack.c.l.b16 %v3206
    %v3388 = vunpack.c.l.b16 %v3207
    %v3389 = vunpack.c.h.b16 %v3207
    %v3390 = vunpack.c.l.b16 %v3208
    %v3391 = vunpack.c.l.b16 %v3209
    %v3392 = vunpack.c.h.b16 %v3209
    %v3393 = vunpack.c.l.b16 %v3210
    %v3394 = vunpack.c.l.b16 %v3211
    %v3395 = vunpack.c.h.b16 %v3211
    %v3396 = vunpack.c.l.b16 %v3212
    %v3397 = vunpack.c.l.b16 %v3213
    %v3398 = vunpack.c.h.b16 %v3213
    %v3399 = vunpack.c.l.b16 %v3214
    %v3400 = vunpack.c.l.b16 %v3215
    %v3401 = vunpack.c.h.b16 %v3215
    %v3402 = vunpack.c.l.b16 %v3216
    %v3403 = vunpack.c.l.b16 %v3217
    %v3404 = vunpack.c.h.b16 %v3217
    %v3405 = vunpack.c.l.b16 %v3218
    %v3406 = vunpack.c.l.b16 %v3219
    %v3407 = vunpack.c.h.b16 %v3219
    %v3408 = vunpack.c.l.b16 %v3220
    %v3409 = vunpack.c.l.b16 %v3221
    %v3410 = vunpack.c.h.b16 %v3221
    %v3411 = vunpack.c.l.b16 %v3222
    %v3412 = vunpack.c.l.b16 %v3223
    %v3413 = vunpack.c.h.b16 %v3223
    %v3414 = vunpack.c.l.b16 %v3224
    %v3415 = vunpack.c.l.b16 %v3225
    %v3416 = vunpack.c.h.b16 %v3225
    %v3417 = vunpack.c.l.b16 %v3226
    %v3418 = vunpack.c.l.b16 %v3227
    %v3419 = vunpack.c.h.b16 %v3227
    %v3420 = vunpack.c.l.b16 %v3228
    %v3421 = vunpack.c.l.b16 %v3229
    %v3422 = vunpack.c.h.b16 %v3229
    %v3423 = vunpack.c.l.b16 %v3230
    %v3424 = vunpack.c.l.b16 %v3231
    %v3425 = vunpack.c.h.b16 %v3231
    %v3426 = vunpack.c.l.b16 %v3232
    %v3427 = vunpack.c.l.b16 %v3233
    %v3428 = vunpack.c.h.b16 %v3233
    %v3429 = vunpack.c.l.b16 %v3234
    %v3430 = vunpack.c.l.b16 %v3235
    %v3431 = vunpack.c.h.b16 %v3235
    %v3432 = vunpack.c.l.b16 %v3236
    %v3433 = vunpack.c.l.b16 %v3237
    %v3434 = vunpack.c.h.b16 %v3237
    %v3435 = vunpack.c.l.b16 %v3238
    %v3436 = vunpack.c.l.b16 %v3239
    %v3437 = vunpack.c.h.b16 %v3239
    %v3438 = vunpack.c.l.b16 %v3240
    %v3439 = vunpack.c.l.b16 %v3241
    %v3440 = vunpack.c.h.b16 %v3241
    %v3441 = vunpack.c.l.b16 %v3242
    %v3442 = vunpack.c.l.b16 %v3243
    %v3443 = vunpack.c.h.b16 %v3243
    %v3444 = vunpack.c.l.b16 %v3244
    %v3445 = vpack.c.b16 %v3328, %v3325
    %v3446 = vpack.c.b16 %v3329, %v3326
    %v3447 = vpack.c.b16 %v3330, %v3327
    %v3448 = vpack.c.b16 %v3334, %v3331
    %v3449 = vpack.c.b16 %v3335, %v3332
    %v3450 = vpack.c.b16 %v3336, %v3333
    %v3451 = vpack.c.b16 %v3340, %v3337
    %v3452 = vpack.c.b16 %v3341, %v3338
    %v3453 = vpack.c.b16 %v3342, %v3339
    %v3454 = vpack.c.b16 %v3346, %v3343
    %v3455 = vpack.c.b16 %v3347, %v3344
    %v3456 = vpack.c.b16 %v3348, %v3345
    %v3457 = vpack.c.b16 %v3352, %v3349
    %v3458 = vpack.c.b16 %v3353, %v3350
    %v3459 = vpack.c.b16 %v3354, %v3351
    %v3460 = vpack.c.b16 %v3358, %v3355
    %v3461 = vpack.c.b16 %v3359, %v3356
    %v3462 = vpack.c.b16 %v3360, %v3357
    %v3463 = vpack.c.b16 %v3364, %v3361
    %v3464 = vpack.c.b16 %v3365, %v3362
    %v3465 = vpack.c.b16 %v3366, %v3363
    %v3466 = vpack.c.b16 %v3370, %v3367
    %v3467 = vpack.c.b16 %v3371, %v3368
    %v3468 = vpack.c.b16 %v3372, %v3369
    %v3469 = vpack.c.b16 %v3376, %v3373
    %v3470 = vpack.c.b16 %v3377, %v3374
    %v3471 = vpack.c.b16 %v3378, %v3375
    %v3472 = vpack.c.b16 %v3382, %v3379
    %v3473 = vpack.c.b16 %v3383, %v3380
    %v3474 = vpack.c.b16 %v3384, %v3381
    %v3475 = vpack.c.b16 %v3388, %v3385
    %v3476 = vpack.c.b16 %v3389, %v3386
    %v3477 = vpack.c.b16 %v3390, %v3387
    %v3478 = vpack.c.b16 %v3394, %v3391
    %v3479 = vpack.c.b16 %v3395, %v3392
    %v3480 = vpack.c.b16 %v3396, %v3393
    %v3481 = vpack.c.b16 %v3400, %v3397
    %v3482 = vpack.c.b16 %v3401, %v3398
    %v3483 = vpack.c.b16 %v3402, %v3399
    %v3484 = vpack.c.b16 %v3406, %v3403
    %v3485 = vpack.c.b16 %v3407, %v3404
    %v3486 = vpack.c.b16 %v3408, %v3405
    %v3487 = vpack.c.b16 %v3412, %v3409
    %v3488 = vpack.c.b16 %v3413, %v3410
    %v3489 = vpack.c.b16 %v3414, %v3411
    %v3490 = vpack.c.b16 %v3418, %v3415
    %v3491 = vpack.c.b16 %v3419, %v3416
    %v3492 = vpack.c.b16 %v3420, %v3417
    %v3493 = vpack.c.b16 %v3424, %v3421
    %v3494 = vpack.c.b16 %v3425, %v3422
    %v3495 = vpack.c.b16 %v3426, %v3423
    %v3496 = vpack.c.b16 %v3430, %v3427
    %v3497 = vpack.c.b16 %v3431, %v3428
    %v3498 = vpack.c.b16 %v3432, %v3429
    %v3499 = vpack.c.b16 %v3436, %v3433
    %v3500 = vpack.c.b16 %v3437, %v3434
    %v3501 = vpack.c.b16 %v3438, %v3435
    %v3502 = vpack.c.b16 %v3442, %v3439
    %v3503 = vpack.c.b16 %v3443, %v3440
    %v3504 = vpack.c.b16 %v3444, %v3441
    %v3566 = vsel %vm776, %v3161, 0
    %v3569 = vsel %vm776, %v3164, 0
    %3571 = vmatprep.subr.bf16.mxu0 %v3467
    %3572 = vmatpush1.bf16.msra.mxu0 %v3466
    %3573 = vmatprep.subr.bf16.mxu0 %v3464
    %3574 = vmatpush1.bf16.msra.mxu0 %v3463
    %3575 = vmatprep.subr.bf16.mxu0 %v3461
    %3576 = vmatpush1.bf16.msra.mxu0 %v3460
    %3577 = vmatprep.subr.bf16.mxu0 %v3458
    %3578 = vmatpush1.bf16.msra.mxu0 %v3457
    %3579 = vmatprep.subr.bf16.mxu0 %v3455
    %3580 = vmatpush1.bf16.msra.mxu0 %v3454
    %3581 = vmatprep.subr.bf16.mxu0 %v3452
    %3582 = vmatpush1.bf16.msra.mxu0 %v3451
    %3583 = vmatprep.subr.bf16.mxu0 %v3449
    %3584 = vmatpush1.bf16.msra.mxu0 %v3448
    %3585 = vmatprep.subr.bf16.mxu0 %v3446
    %3586 = vmatpush1.bf16.msra.mxu0 %v3445
    %3587 = vmatprep.subr.bf16.mxu0 %v3491
    %3588 = vmatpush2.bf16.msra.mxu0 %v3490
    %3589 = vmatprep.subr.bf16.mxu0 %v3488
    %3590 = vmatpush2.bf16.msra.mxu0 %v3487
    %3591 = vmatprep.subr.bf16.mxu0 %v3485
    %3592 = vmatpush2.bf16.msra.mxu0 %v3484
    %3593 = vmatprep.subr.bf16.mxu0 %v3482
    %3594 = vmatpush2.bf16.msra.mxu0 %v3481
    %3595 = vmatprep.subr.bf16.mxu0 %v3479
    %3596 = vmatpush2.bf16.msra.mxu0 %v3478
    %3597 = vmatprep.subr.bf16.mxu0 %v3476
    %3598 = vmatpush2.bf16.msra.mxu0 %v3475
    %3599 = vmatprep.subr.bf16.mxu0 %v3473
    %3600 = vmatpush2.bf16.msra.mxu0 %v3472
    %3601 = vmatprep.subr.bf16.mxu0 %v3470
    %3602 = vmatpush2.bf16.msra.mxu0 %v3469
    %3603 = vmatprep.mubr.bf16.mxu0 %v3160
    %3604 = vmatmul.mubr.bf16.gmra.mxu0 %v3159
    %v3605 = vpop.f32.mrf.mxu0
    %v3606 = vadd.f32 0.0, %v3605
    %v3607 = vpop.f32.mrf.mxu0
    %v3608 = vadd.f32 0.0, %v3607
    %v3609 = vpop.f32.mrf.mxu0
    %v3610 = vadd.f32 0.0, %v3609
    %v3611 = vpop.f32.mrf.mxu0
    %v3612 = vadd.f32 0.0, %v3611
    %3613 = vmatprep.mubr.bf16.mxu0 %v3163
    %3614 = vmatmul.mubr.bf16.gmra.mxu0 %v3162
    %v3615 = vpop.f32.mrf.mxu0
    %v3616 = vadd.f32 0.0, %v3615
    %v3617 = vpop.f32.mrf.mxu0
    %v3618 = vadd.f32 0.0, %v3617
    %v3619 = vpop.f32.mrf.mxu0
    %v3620 = vpop.f32.mrf.mxu0
    %3621 = vdwg.mxu0
    %3622 = vmatprep.subr.bf16.mxu0 0
    %3623 = vmatpush1.bf16.msra.mxu0 0
    %3624 = vmatprep.subr.bf16.mxu0 0
    %3625 = vmatpush1.bf16.msra.mxu0 0
    %3626 = vmatprep.subr.bf16.mxu0 0
    %3627 = vmatpush1.bf16.msra.mxu0 0
    %3628 = vmatprep.subr.bf16.mxu0 0
    %3629 = vmatpush1.bf16.msra.mxu0 0
    %3630 = vmatprep.subr.bf16.mxu0 %v3503
    %3631 = vmatpush1.bf16.msra.mxu0 %v3502
    %3632 = vmatprep.subr.bf16.mxu0 %v3500
    %3633 = vmatpush1.bf16.msra.mxu0 %v3499
    %3634 = vmatprep.subr.bf16.mxu0 %v3497
    %3635 = vmatpush1.bf16.msra.mxu0 %v3496
    %3636 = vmatprep.subr.bf16.mxu0 %v3494
    %3637 = vmatpush1.bf16.msra.mxu0 %v3493
    %3638 = vmatprep.subr.bf16.mxu0 0
    %3639 = vmatpush2.bf16.msra.mxu0 0
    %3640 = vmatprep.subr.bf16.mxu0 0
    %3641 = vmatpush2.bf16.msra.mxu0 0
    %3642 = vmatprep.subr.bf16.mxu0 0
    %3643 = vmatpush2.bf16.msra.mxu0 0
    %3644 = vmatprep.subr.bf16.mxu0 0
    %3645 = vmatpush2.bf16.msra.mxu0 0
    %3646 = vmatprep.subr.bf16.mxu0 0
    %3647 = vmatpush2.bf16.msra.mxu0 0
    %3648 = vmatprep.subr.bf16.mxu0 0
    %3649 = vmatpush2.bf16.msra.mxu0 0
    %3650 = vmatprep.subr.bf16.mxu0 0
    %3651 = vmatpush2.bf16.msra.mxu0 0
    %3652 = vmatprep.subr.bf16.mxu0 0
    %3653 = vmatpush2.bf16.msra.mxu0 0
    %3654 = vmatprep.mubr.bf16.mxu0 0
    %3655 = vmatmul.mubr.bf16.gmra.mxu0 %v3566
    %v3656 = vpop.f32.mrf.mxu0
    %v3657 = vadd.f32 %v3606, %v3656
    %v3658 = vpop.f32.mrf.mxu0
    %v3659 = vadd.f32 %v3608, %v3658
    %v3660 = vpop.f32.mrf.mxu0
    %v3661 = vadd.f32 %v3610, %v3660
    %v3662 = vpop.f32.mrf.mxu0
    %v3663 = vadd.f32 %v3612, %v3662
    %3664 = vmatprep.mubr.bf16.mxu0 0
    %3665 = vmatmul.mubr.bf16.gmra.mxu0 %v3569
    %v3666 = vpop.f32.mrf.mxu0
    %v3667 = vadd.f32 %v3616, %v3666
    %v3668 = vpop.f32.mrf.mxu0
    %v3669 = vadd.f32 %v3618, %v3668
    %v3670 = vpop.f32.mrf.mxu0
    %v3671 = vpop.f32.mrf.mxu0
    %3672 = vdwg.mxu0
    %3673 = vmatprep.subr.bf16.mxu0 0
    %3674 = vmatpush1.bf16.msra.mxu0 %v3468
    %3675 = vmatprep.subr.bf16.mxu0 0
    %3676 = vmatpush1.bf16.msra.mxu0 %v3465
    %3677 = vmatprep.subr.bf16.mxu0 0
    %3678 = vmatpush1.bf16.msra.mxu0 %v3462
    %3679 = vmatprep.subr.bf16.mxu0 0
    %3680 = vmatpush1.bf16.msra.mxu0 %v3459
    %3681 = vmatprep.subr.bf16.mxu0 0
    %3682 = vmatpush1.bf16.msra.mxu0 %v3456
    %3683 = vmatprep.subr.bf16.mxu0 0
    %3684 = vmatpush1.bf16.msra.mxu0 %v3453
    %3685 = vmatprep.subr.bf16.mxu0 0
    %3686 = vmatpush1.bf16.msra.mxu0 %v3450
    %3687 = vmatprep.subr.bf16.mxu0 0
    %3688 = vmatpush1.bf16.msra.mxu0 %v3447
    %3689 = vmatprep.subr.bf16.mxu0 0
    %3690 = vmatpush2.bf16.msra.mxu0 %v3492
    %3691 = vmatprep.subr.bf16.mxu0 0
    %3692 = vmatpush2.bf16.msra.mxu0 %v3489
    %3693 = vmatprep.subr.bf16.mxu0 0
    %3694 = vmatpush2.bf16.msra.mxu0 %v3486
    %3695 = vmatprep.subr.bf16.mxu0 0
    %3696 = vmatpush2.bf16.msra.mxu0 %v3483
    %3697 = vmatprep.subr.bf16.mxu0 0
    %3698 = vmatpush2.bf16.msra.mxu0 %v3480
    %3699 = vmatprep.subr.bf16.mxu0 0
    %3700 = vmatpush2.bf16.msra.mxu0 %v3477
    %3701 = vmatprep.subr.bf16.mxu0 0
    %3702 = vmatpush2.bf16.msra.mxu0 %v3474
    %3703 = vmatprep.subr.bf16.mxu0 0
    %3704 = vmatpush2.bf16.msra.mxu0 %v3471
    %3705 = vmatprep.mubr.bf16.mxu0 %v3160
    %3706 = vmatmul.mubr.bf16.gmra.mxu0 %v3159
    %v3707 = vpop.f32.mrf.mxu0
    %v3708 = vadd.f32 0.0, %v3707
    %v3709 = vpop.f32.mrf.mxu0
    %v3710 = vpop.f32.mrf.mxu0
    %v3711 = vadd.f32 0.0, %v3710
    %v3712 = vpop.f32.mrf.mxu0
    %3713 = vmatprep.mubr.bf16.mxu0 %v3163
    %3714 = vmatmul.mubr.bf16.gmra.mxu0 %v3162
    %v3715 = vpop.f32.mrf.mxu0
    %v3716 = vadd.f32 0.0, %v3715
    %v3717 = vpop.f32.mrf.mxu0
    %v3718 = vpop.f32.mrf.mxu0
    %v3719 = vpop.f32.mrf.mxu0
    %3720 = vdwg.mxu0
    %3721 = vmatprep.subr.bf16.mxu0 0
    %3722 = vmatpush1.bf16.msra.mxu0 0
    %3723 = vmatprep.subr.bf16.mxu0 0
    %3724 = vmatpush1.bf16.msra.mxu0 0
    %3725 = vmatprep.subr.bf16.mxu0 0
    %3726 = vmatpush1.bf16.msra.mxu0 0
    %3727 = vmatprep.subr.bf16.mxu0 0
    %3728 = vmatpush1.bf16.msra.mxu0 0
    %3729 = vmatprep.subr.bf16.mxu0 0
    %3730 = vmatpush1.bf16.msra.mxu0 %v3504
    %3731 = vmatprep.subr.bf16.mxu0 0
    %3732 = vmatpush1.bf16.msra.mxu0 %v3501
    %3733 = vmatprep.subr.bf16.mxu0 0
    %3734 = vmatpush1.bf16.msra.mxu0 %v3498
    %3735 = vmatprep.subr.bf16.mxu0 0
    %3736 = vmatpush1.bf16.msra.mxu0 %v3495
    %3737 = vmatprep.subr.bf16.mxu0 0
    %3738 = vmatpush2.bf16.msra.mxu0 0
    %3739 = vmatprep.subr.bf16.mxu0 0
    %3740 = vmatpush2.bf16.msra.mxu0 0
    %3741 = vmatprep.subr.bf16.mxu0 0
    %3742 = vmatpush2.bf16.msra.mxu0 0
    %3743 = vmatprep.subr.bf16.mxu0 0
    %3744 = vmatpush2.bf16.msra.mxu0 0
    %3745 = vmatprep.subr.bf16.mxu0 0
    %3746 = vmatpush2.bf16.msra.mxu0 0
    %3747 = vmatprep.subr.bf16.mxu0 0
    %3748 = vmatpush2.bf16.msra.mxu0 0
    %3749 = vmatprep.subr.bf16.mxu0 0
    %3750 = vmatpush2.bf16.msra.mxu0 0
    %3751 = vmatprep.subr.bf16.mxu0 0
    %3752 = vmatpush2.bf16.msra.mxu0 0
    %3753 = vmatprep.mubr.bf16.mxu0 0
    %3754 = vmatmul.mubr.bf16.gmra.mxu0 %v3566
    %v3755 = vpop.f32.mrf.mxu0
    %v3756 = vadd.f32 %v3708, %v3755
    %v3757 = vpop.f32.mrf.mxu0
    %v3758 = vpop.f32.mrf.mxu0
    %v3759 = vadd.f32 %v3711, %v3758
    %v3760 = vpop.f32.mrf.mxu0
    %3761 = vmatprep.mubr.bf16.mxu0 0
    %3762 = vmatmul.mubr.bf16.gmra.mxu0 %v3569
    %v3763 = vpop.f32.mrf.mxu0
    %v3764 = vadd.f32 %v3716, %v3763
    %v3765 = vpop.f32.mrf.mxu0
    %v3766 = vpop.f32.mrf.mxu0
    %v3767 = vpop.f32.mrf.mxu0
    %3768 = vdwg.mxu0
    %3769 = vst [vmem:[#allocation2] sm:$0xff] %v3657
    %3770 = vst [vmem:[#allocation2 + $0x8] sm:$0xff] %v3659
    %vm3771 = vcmask 785408
    %3772 = vst.msk [vmem:[#allocation2 + $0x10] sm:$0xff] %vm3771, %v3756
    %3773 = vst [vmem:[#allocation2 + $0x18] sm:$0xff] %v3661
    %3774 = vst [vmem:[#allocation2 + $0x20] sm:$0xff] %v3663
    %3775 = vst.msk [vmem:[#allocation2 + $0x28] sm:$0xff] %vm3771, %v3759
    %3776 = vst [vmem:[#allocation2 + $0x30] sm:$0xf] %v3667
    %3777 = vst [vmem:[#allocation2 + $0x38] sm:$0xf] %v3669
    %vm3778 = vcmask 781312
    %3779 = vst.msk [vmem:[#allocation2 + $0x40] sm:$0xf] %vm3778, %v3764
    %s3780 = scalar_lea.vmem %s11, 480
    %v3781 = vld [vmem:[%s3780] sm:$0xff]
    %v3782 = vld [vmem:[%s3780 + $0x8] sm:$0xf]
    %v3783 = vld [vmem:[%s3780 + $0xc] sm:$0xff]
    %v3784 = vld [vmem:[%s3780 + $0x14] sm:$0xf]
    %v3785 = vld [vmem:[%s3780 + $0x18] sm:$0xff]
    %v3786 = vld [vmem:[%s3780 + $0x20] sm:$0xf]
    %v3787 = vld [vmem:[%s3780 + $0x24] sm:$0xff]
    %v3788 = vld [vmem:[%s3780 + $0x2c] sm:$0xf]
    %v3789 = vld [vmem:[%s3780 + $0x30] sm:$0xff]
    %v3790 = vld [vmem:[%s3780 + $0x38] sm:$0xf]
    %v3791 = vld [vmem:[%s3780 + $0x3c] sm:$0xff]
    %v3792 = vld [vmem:[%s3780 + $0x44] sm:$0xf]
    %v3793 = vld [vmem:[%s3780 + $0x48] sm:$0xff]
    %v3794 = vld [vmem:[%s3780 + $0x50] sm:$0xf]
    %v3795 = vld [vmem:[%s3780 + $0x54] sm:$0xff]
    %v3796 = vld [vmem:[%s3780 + $0x5c] sm:$0xf]
    %v3797 = vld [vmem:[%s3780 + $0x60] sm:$0xff]
    %v3798 = vld [vmem:[%s3780 + $0x68] sm:$0xf]
    %v3799 = vld [vmem:[%s3780 + $0x6c] sm:$0xff]
    %v3800 = vld [vmem:[%s3780 + $0x74] sm:$0xf]
    %v3801 = vld [vmem:[%s3780 + $0x78] sm:$0xff]
    %v3802 = vld [vmem:[%s3780 + $0x80] sm:$0xf]
    %v3803 = vld [vmem:[%s3780 + $0x84] sm:$0xff]
    %v3804 = vld [vmem:[%s3780 + $0x8c] sm:$0xf]
    %v3805 = vld [vmem:[%s3780 + $0x90] sm:$0xff]
    %v3806 = vld [vmem:[%s3780 + $0x98] sm:$0xf]
    %v3807 = vld [vmem:[%s3780 + $0x9c] sm:$0xff]
    %v3808 = vld [vmem:[%s3780 + $0xa4] sm:$0xf]
    %v3809 = vld [vmem:[%s3780 + $0xa8] sm:$0xff]
    %v3810 = vld [vmem:[%s3780 + $0xb0] sm:$0xf]
    %v3811 = vld [vmem:[%s3780 + $0xb4] sm:$0xff]
    %v3812 = vld [vmem:[%s3780 + $0xbc] sm:$0xf]
    %v3813 = vld [vmem:[%s3780 + $0xc0] sm:$0xff]
    %v3814 = vld [vmem:[%s3780 + $0xc8] sm:$0xf]
    %v3815 = vld [vmem:[%s3780 + $0xcc] sm:$0xff]
    %v3816 = vld [vmem:[%s3780 + $0xd4] sm:$0xf]
    %v3817 = vld [vmem:[%s3780 + $0xd8] sm:$0xff]
    %v3818 = vld [vmem:[%s3780 + $0xe0] sm:$0xf]
    %v3819 = vld [vmem:[%s3780 + $0xe4] sm:$0xff]
    %v3820 = vld [vmem:[%s3780 + $0xec] sm:$0xf]
    %v3821 = vld [vmem:[%s3780 + $0xf0] sm:$0xff]
    %v3822 = vld [vmem:[%s3780 + $0xf8] sm:$0xf]
    %v3823 = vld [vmem:[%s3780 + $0xfc] sm:$0xff]
    %v3824 = vld [vmem:[%s3780 + $0x104] sm:$0xf]
    %v3825 = vld [vmem:[%s3780 + $0x108] sm:$0xff]
    %v3826 = vld [vmem:[%s3780 + $0x110] sm:$0xf]
    %v3827 = vld [vmem:[%s3780 + $0x114] sm:$0xff]
    %v3828 = vld [vmem:[%s3780 + $0x11c] sm:$0xf]
    %v3829 = vld [vmem:[%s3780 + $0x120] sm:$0xff]
    %v3830 = vld [vmem:[%s3780 + $0x128] sm:$0xf]
    %v3831 = vld [vmem:[%s3780 + $0x12c] sm:$0xff]
    %v3832 = vld [vmem:[%s3780 + $0x134] sm:$0xf]
    %v3833 = vld [vmem:[%s3780 + $0x138] sm:$0xff]
    %v3834 = vld [vmem:[%s3780 + $0x140] sm:$0xf]
    %v3835 = vld [vmem:[%s3780 + $0x144] sm:$0xff]
    %v3836 = vld [vmem:[%s3780 + $0x14c] sm:$0xf]
    %v3837 = vld [vmem:[%s3780 + $0x150] sm:$0xff]
    %v3838 = vld [vmem:[%s3780 + $0x158] sm:$0xf]
    %v3839 = vld [vmem:[%s3780 + $0x15c] sm:$0xff]
    %v3840 = vld [vmem:[%s3780 + $0x164] sm:$0xf]
    %v3841 = vld [vmem:[%s3780 + $0x168] sm:$0xff]
    %v3842 = vld [vmem:[%s3780 + $0x170] sm:$0xf]
    %v3843 = vld [vmem:[%s3780 + $0x174] sm:$0xff]
    %v3844 = vld [vmem:[%s3780 + $0x17c] sm:$0xf]
    %v3845 = vld [vmem:[%s3780 + $0x180] sm:$0xff]
    %v3846 = vld [vmem:[%s3780 + $0x188] sm:$0xf]
    %v3847 = vld [vmem:[%s3780 + $0x18c] sm:$0xff]
    %v3848 = vld [vmem:[%s3780 + $0x194] sm:$0xf]
    %v3849 = vld [vmem:[%s3780 + $0x198] sm:$0xff]
    %v3850 = vld [vmem:[%s3780 + $0x1a0] sm:$0xf]
    %v3851 = vld [vmem:[%s3780 + $0x1a4] sm:$0xff]
    %v3852 = vld [vmem:[%s3780 + $0x1ac] sm:$0xf]
    %v3853 = vld [vmem:[%s3780 + $0x1b0] sm:$0xff]
    %v3854 = vld [vmem:[%s3780 + $0x1b8] sm:$0xf]
    %v3855 = vld [vmem:[%s3780 + $0x1bc] sm:$0xff]
    %v3856 = vld [vmem:[%s3780 + $0x1c4] sm:$0xf]
    %v3857 = vld [vmem:[%s3780 + $0x1c8] sm:$0xff]
    %v3858 = vld [vmem:[%s3780 + $0x1d0] sm:$0xf]
    %v3859 = vld [vmem:[%s3780 + $0x1d4] sm:$0xff]
    %v3860 = vld [vmem:[%s3780 + $0x1dc] sm:$0xf]
    %v3941 = vunpack.c.l.b16 %v3781
    %v3942 = vunpack.c.h.b16 %v3781
    %v3943 = vunpack.c.l.b16 %v3782
    %v3944 = vunpack.c.l.b16 %v3783
    %v3945 = vunpack.c.h.b16 %v3783
    %v3946 = vunpack.c.l.b16 %v3784
    %v3947 = vunpack.c.l.b16 %v3785
    %v3948 = vunpack.c.h.b16 %v3785
    %v3949 = vunpack.c.l.b16 %v3786
    %v3950 = vunpack.c.l.b16 %v3787
    %v3951 = vunpack.c.h.b16 %v3787
    %v3952 = vunpack.c.l.b16 %v3788
    %v3953 = vunpack.c.l.b16 %v3789
    %v3954 = vunpack.c.h.b16 %v3789
    %v3955 = vunpack.c.l.b16 %v3790
    %v3956 = vunpack.c.l.b16 %v3791
    %v3957 = vunpack.c.h.b16 %v3791
    %v3958 = vunpack.c.l.b16 %v3792
    %v3959 = vunpack.c.l.b16 %v3793
    %v3960 = vunpack.c.h.b16 %v3793
    %v3961 = vunpack.c.l.b16 %v3794
    %v3962 = vunpack.c.l.b16 %v3795
    %v3963 = vunpack.c.h.b16 %v3795
    %v3964 = vunpack.c.l.b16 %v3796
    %v3965 = vunpack.c.l.b16 %v3797
    %v3966 = vunpack.c.h.b16 %v3797
    %v3967 = vunpack.c.l.b16 %v3798
    %v3968 = vunpack.c.l.b16 %v3799
    %v3969 = vunpack.c.h.b16 %v3799
    %v3970 = vunpack.c.l.b16 %v3800
    %v3971 = vunpack.c.l.b16 %v3801
    %v3972 = vunpack.c.h.b16 %v3801
    %v3973 = vunpack.c.l.b16 %v3802
    %v3974 = vunpack.c.l.b16 %v3803
    %v3975 = vunpack.c.h.b16 %v3803
    %v3976 = vunpack.c.l.b16 %v3804
    %v3977 = vunpack.c.l.b16 %v3805
    %v3978 = vunpack.c.h.b16 %v3805
    %v3979 = vunpack.c.l.b16 %v3806
    %v3980 = vunpack.c.l.b16 %v3807
    %v3981 = vunpack.c.h.b16 %v3807
    %v3982 = vunpack.c.l.b16 %v3808
    %v3983 = vunpack.c.l.b16 %v3809
    %v3984 = vunpack.c.h.b16 %v3809
    %v3985 = vunpack.c.l.b16 %v3810
    %v3986 = vunpack.c.l.b16 %v3811
    %v3987 = vunpack.c.h.b16 %v3811
    %v3988 = vunpack.c.l.b16 %v3812
    %v3989 = vunpack.c.l.b16 %v3813
    %v3990 = vunpack.c.h.b16 %v3813
    %v3991 = vunpack.c.l.b16 %v3814
    %v3992 = vunpack.c.l.b16 %v3815
    %v3993 = vunpack.c.h.b16 %v3815
    %v3994 = vunpack.c.l.b16 %v3816
    %v3995 = vunpack.c.l.b16 %v3817
    %v3996 = vunpack.c.h.b16 %v3817
    %v3997 = vunpack.c.l.b16 %v3818
    %v3998 = vunpack.c.l.b16 %v3819
    %v3999 = vunpack.c.h.b16 %v3819
    %v4000 = vunpack.c.l.b16 %v3820
    %v4001 = vunpack.c.l.b16 %v3821
    %v4002 = vunpack.c.h.b16 %v3821
    %v4003 = vunpack.c.l.b16 %v3822
    %v4004 = vunpack.c.l.b16 %v3823
    %v4005 = vunpack.c.h.b16 %v3823
    %v4006 = vunpack.c.l.b16 %v3824
    %v4007 = vunpack.c.l.b16 %v3825
    %v4008 = vunpack.c.h.b16 %v3825
    %v4009 = vunpack.c.l.b16 %v3826
    %v4010 = vunpack.c.l.b16 %v3827
    %v4011 = vunpack.c.h.b16 %v3827
    %v4012 = vunpack.c.l.b16 %v3828
    %v4013 = vunpack.c.l.b16 %v3829
    %v4014 = vunpack.c.h.b16 %v3829
    %v4015 = vunpack.c.l.b16 %v3830
    %v4016 = vunpack.c.l.b16 %v3831
    %v4017 = vunpack.c.h.b16 %v3831
    %v4018 = vunpack.c.l.b16 %v3832
    %v4019 = vunpack.c.l.b16 %v3833
    %v4020 = vunpack.c.h.b16 %v3833
    %v4021 = vunpack.c.l.b16 %v3834
    %v4022 = vunpack.c.l.b16 %v3835
    %v4023 = vunpack.c.h.b16 %v3835
    %v4024 = vunpack.c.l.b16 %v3836
    %v4025 = vunpack.c.l.b16 %v3837
    %v4026 = vunpack.c.h.b16 %v3837
    %v4027 = vunpack.c.l.b16 %v3838
    %v4028 = vunpack.c.l.b16 %v3839
    %v4029 = vunpack.c.h.b16 %v3839
    %v4030 = vunpack.c.l.b16 %v3840
    %v4031 = vunpack.c.l.b16 %v3841
    %v4032 = vunpack.c.h.b16 %v3841
    %v4033 = vunpack.c.l.b16 %v3842
    %v4034 = vunpack.c.l.b16 %v3843
    %v4035 = vunpack.c.h.b16 %v3843
    %v4036 = vunpack.c.l.b16 %v3844
    %v4037 = vunpack.c.l.b16 %v3845
    %v4038 = vunpack.c.h.b16 %v3845
    %v4039 = vunpack.c.l.b16 %v3846
    %v4040 = vunpack.c.l.b16 %v3847
    %v4041 = vunpack.c.h.b16 %v3847
    %v4042 = vunpack.c.l.b16 %v3848
    %v4043 = vunpack.c.l.b16 %v3849
    %v4044 = vunpack.c.h.b16 %v3849
    %v4045 = vunpack.c.l.b16 %v3850
    %v4046 = vunpack.c.l.b16 %v3851
    %v4047 = vunpack.c.h.b16 %v3851
    %v4048 = vunpack.c.l.b16 %v3852
    %v4049 = vunpack.c.l.b16 %v3853
    %v4050 = vunpack.c.h.b16 %v3853
    %v4051 = vunpack.c.l.b16 %v3854
    %v4052 = vunpack.c.l.b16 %v3855
    %v4053 = vunpack.c.h.b16 %v3855
    %v4054 = vunpack.c.l.b16 %v3856
    %v4055 = vunpack.c.l.b16 %v3857
    %v4056 = vunpack.c.h.b16 %v3857
    %v4057 = vunpack.c.l.b16 %v3858
    %v4058 = vunpack.c.l.b16 %v3859
    %v4059 = vunpack.c.h.b16 %v3859
    %v4060 = vunpack.c.l.b16 %v3860
    %v4061 = vpack.c.b16 %v3944, %v3941
    %v4062 = vpack.c.b16 %v3945, %v3942
    %v4063 = vpack.c.b16 %v3946, %v3943
    %v4064 = vpack.c.b16 %v3950, %v3947
    %v4065 = vpack.c.b16 %v3951, %v3948
    %v4066 = vpack.c.b16 %v3952, %v3949
    %v4067 = vpack.c.b16 %v3956, %v3953
    %v4068 = vpack.c.b16 %v3957, %v3954
    %v4069 = vpack.c.b16 %v3958, %v3955
    %v4070 = vpack.c.b16 %v3962, %v3959
    %v4071 = vpack.c.b16 %v3963, %v3960
    %v4072 = vpack.c.b16 %v3964, %v3961
    %v4073 = vpack.c.b16 %v3968, %v3965
    %v4074 = vpack.c.b16 %v3969, %v3966
    %v4075 = vpack.c.b16 %v3970, %v3967
    %v4076 = vpack.c.b16 %v3974, %v3971
    %v4077 = vpack.c.b16 %v3975, %v3972
    %v4078 = vpack.c.b16 %v3976, %v3973
    %v4079 = vpack.c.b16 %v3980, %v3977
    %v4080 = vpack.c.b16 %v3981, %v3978
    %v4081 = vpack.c.b16 %v3982, %v3979
    %v4082 = vpack.c.b16 %v3986, %v3983
    %v4083 = vpack.c.b16 %v3987, %v3984
    %v4084 = vpack.c.b16 %v3988, %v3985
    %v4085 = vpack.c.b16 %v3992, %v3989
    %v4086 = vpack.c.b16 %v3993, %v3990
    %v4087 = vpack.c.b16 %v3994, %v3991
    %v4088 = vpack.c.b16 %v3998, %v3995
    %v4089 = vpack.c.b16 %v3999, %v3996
    %v4090 = vpack.c.b16 %v4000, %v3997
    %v4091 = vpack.c.b16 %v4004, %v4001
    %v4092 = vpack.c.b16 %v4005, %v4002
    %v4093 = vpack.c.b16 %v4006, %v4003
    %v4094 = vpack.c.b16 %v4010, %v4007
    %v4095 = vpack.c.b16 %v4011, %v4008
    %v4096 = vpack.c.b16 %v4012, %v4009
    %v4097 = vpack.c.b16 %v4016, %v4013
    %v4098 = vpack.c.b16 %v4017, %v4014
    %v4099 = vpack.c.b16 %v4018, %v4015
    %v4100 = vpack.c.b16 %v4022, %v4019
    %v4101 = vpack.c.b16 %v4023, %v4020
    %v4102 = vpack.c.b16 %v4024, %v4021
    %v4103 = vpack.c.b16 %v4028, %v4025
    %v4104 = vpack.c.b16 %v4029, %v4026
    %v4105 = vpack.c.b16 %v4030, %v4027
    %v4106 = vpack.c.b16 %v4034, %v4031
    %v4107 = vpack.c.b16 %v4035, %v4032
    %v4108 = vpack.c.b16 %v4036, %v4033
    %v4109 = vpack.c.b16 %v4040, %v4037
    %v4110 = vpack.c.b16 %v4041, %v4038
    %v4111 = vpack.c.b16 %v4042, %v4039
    %v4112 = vpack.c.b16 %v4046, %v4043
    %v4113 = vpack.c.b16 %v4047, %v4044
    %v4114 = vpack.c.b16 %v4048, %v4045
    %v4115 = vpack.c.b16 %v4052, %v4049
    %v4116 = vpack.c.b16 %v4053, %v4050
    %v4117 = vpack.c.b16 %v4054, %v4051
    %v4118 = vpack.c.b16 %v4058, %v4055
    %v4119 = vpack.c.b16 %v4059, %v4056
    %v4120 = vpack.c.b16 %v4060, %v4057
    %4181 = vmatprep.subr.bf16.mxu0 %v4083
    %4182 = vmatpush1.bf16.msra.mxu0 %v4082
    %4183 = vmatprep.subr.bf16.mxu0 %v4080
    %4184 = vmatpush1.bf16.msra.mxu0 %v4079
    %4185 = vmatprep.subr.bf16.mxu0 %v4077
    %4186 = vmatpush1.bf16.msra.mxu0 %v4076
    %4187 = vmatprep.subr.bf16.mxu0 %v4074
    %4188 = vmatpush1.bf16.msra.mxu0 %v4073
    %4189 = vmatprep.subr.bf16.mxu0 %v4071
    %4190 = vmatpush1.bf16.msra.mxu0 %v4070
    %4191 = vmatprep.subr.bf16.mxu0 %v4068
    %4192 = vmatpush1.bf16.msra.mxu0 %v4067
    %4193 = vmatprep.subr.bf16.mxu0 %v4065
    %4194 = vmatpush1.bf16.msra.mxu0 %v4064
    %4195 = vmatprep.subr.bf16.mxu0 %v4062
    %4196 = vmatpush1.bf16.msra.mxu0 %v4061
    %4197 = vmatprep.subr.bf16.mxu0 %v4107
    %4198 = vmatpush2.bf16.msra.mxu0 %v4106
    %4199 = vmatprep.subr.bf16.mxu0 %v4104
    %4200 = vmatpush2.bf16.msra.mxu0 %v4103
    %4201 = vmatprep.subr.bf16.mxu0 %v4101
    %4202 = vmatpush2.bf16.msra.mxu0 %v4100
    %4203 = vmatprep.subr.bf16.mxu0 %v4098
    %4204 = vmatpush2.bf16.msra.mxu0 %v4097
    %4205 = vmatprep.subr.bf16.mxu0 %v4095
    %4206 = vmatpush2.bf16.msra.mxu0 %v4094
    %4207 = vmatprep.subr.bf16.mxu0 %v4092
    %4208 = vmatpush2.bf16.msra.mxu0 %v4091
    %4209 = vmatprep.subr.bf16.mxu0 %v4089
    %4210 = vmatpush2.bf16.msra.mxu0 %v4088
    %4211 = vmatprep.subr.bf16.mxu0 %v4086
    %4212 = vmatpush2.bf16.msra.mxu0 %v4085
    %4213 = vmatprep.mubr.bf16.mxu0 %v3160
    %4214 = vmatmul.mubr.bf16.gmra.mxu0 %v3159
    %v4215 = vpop.f32.mrf.mxu0
    %v4216 = vadd.f32 0.0, %v4215
    %v4217 = vpop.f32.mrf.mxu0
    %v4218 = vadd.f32 0.0, %v4217
    %v4219 = vpop.f32.mrf.mxu0
    %v4220 = vadd.f32 0.0, %v4219
    %v4221 = vpop.f32.mrf.mxu0
    %v4222 = vadd.f32 0.0, %v4221
    %4223 = vmatprep.mubr.bf16.mxu0 %v3163
    %4224 = vmatmul.mubr.bf16.gmra.mxu0 %v3162
    %v4225 = vpop.f32.mrf.mxu0
    %v4226 = vadd.f32 0.0, %v4225
    %v4227 = vpop.f32.mrf.mxu0
    %v4228 = vadd.f32 0.0, %v4227
    %v4229 = vpop.f32.mrf.mxu0
    %v4230 = vpop.f32.mrf.mxu0
    %4231 = vdwg.mxu0
    %4232 = vmatprep.subr.bf16.mxu0 0
    %4233 = vmatpush1.bf16.msra.mxu0 0
    %4234 = vmatprep.subr.bf16.mxu0 0
    %4235 = vmatpush1.bf16.msra.mxu0 0
    %4236 = vmatprep.subr.bf16.mxu0 0
    %4237 = vmatpush1.bf16.msra.mxu0 0
    %4238 = vmatprep.subr.bf16.mxu0 0
    %4239 = vmatpush1.bf16.msra.mxu0 0
    %4240 = vmatprep.subr.bf16.mxu0 %v4119
    %4241 = vmatpush1.bf16.msra.mxu0 %v4118
    %4242 = vmatprep.subr.bf16.mxu0 %v4116
    %4243 = vmatpush1.bf16.msra.mxu0 %v4115
    %4244 = vmatprep.subr.bf16.mxu0 %v4113
    %4245 = vmatpush1.bf16.msra.mxu0 %v4112
    %4246 = vmatprep.subr.bf16.mxu0 %v4110
    %4247 = vmatpush1.bf16.msra.mxu0 %v4109
    %4248 = vmatprep.subr.bf16.mxu0 0
    %4249 = vmatpush2.bf16.msra.mxu0 0
    %4250 = vmatprep.subr.bf16.mxu0 0
    %4251 = vmatpush2.bf16.msra.mxu0 0
    %4252 = vmatprep.subr.bf16.mxu0 0
    %4253 = vmatpush2.bf16.msra.mxu0 0
    %4254 = vmatprep.subr.bf16.mxu0 0
    %4255 = vmatpush2.bf16.msra.mxu0 0
    %4256 = vmatprep.subr.bf16.mxu0 0
    %4257 = vmatpush2.bf16.msra.mxu0 0
    %4258 = vmatprep.subr.bf16.mxu0 0
    %4259 = vmatpush2.bf16.msra.mxu0 0
    %4260 = vmatprep.subr.bf16.mxu0 0
    %4261 = vmatpush2.bf16.msra.mxu0 0
    %4262 = vmatprep.subr.bf16.mxu0 0
    %4263 = vmatpush2.bf16.msra.mxu0 0
    %4264 = vmatprep.mubr.bf16.mxu0 0
    %4265 = vmatmul.mubr.bf16.gmra.mxu0 %v3566
    %v4266 = vpop.f32.mrf.mxu0
    %v4267 = vadd.f32 %v4216, %v4266
    %v4268 = vpop.f32.mrf.mxu0
    %v4269 = vadd.f32 %v4218, %v4268
    %v4270 = vpop.f32.mrf.mxu0
    %v4271 = vadd.f32 %v4220, %v4270
    %v4272 = vpop.f32.mrf.mxu0
    %v4273 = vadd.f32 %v4222, %v4272
    %4274 = vmatprep.mubr.bf16.mxu0 0
    %4275 = vmatmul.mubr.bf16.gmra.mxu0 %v3569
    %v4276 = vpop.f32.mrf.mxu0
    %v4277 = vadd.f32 %v4226, %v4276
    %v4278 = vpop.f32.mrf.mxu0
    %v4279 = vadd.f32 %v4228, %v4278
    %v4280 = vpop.f32.mrf.mxu0
    %v4281 = vpop.f32.mrf.mxu0
    %4282 = vdwg.mxu0
    %4283 = vmatprep.subr.bf16.mxu0 0
    %4284 = vmatpush1.bf16.msra.mxu0 %v4084
    %4285 = vmatprep.subr.bf16.mxu0 0
    %4286 = vmatpush1.bf16.msra.mxu0 %v4081
    %4287 = vmatprep.subr.bf16.mxu0 0
    %4288 = vmatpush1.bf16.msra.mxu0 %v4078
    %4289 = vmatprep.subr.bf16.mxu0 0
    %4290 = vmatpush1.bf16.msra.mxu0 %v4075
    %4291 = vmatprep.subr.bf16.mxu0 0
    %4292 = vmatpush1.bf16.msra.mxu0 %v4072
    %4293 = vmatprep.subr.bf16.mxu0 0
    %4294 = vmatpush1.bf16.msra.mxu0 %v4069
    %4295 = vmatprep.subr.bf16.mxu0 0
    %4296 = vmatpush1.bf16.msra.mxu0 %v4066
    %4297 = vmatprep.subr.bf16.mxu0 0
    %4298 = vmatpush1.bf16.msra.mxu0 %v4063
    %4299 = vmatprep.subr.bf16.mxu0 0
    %4300 = vmatpush2.bf16.msra.mxu0 %v4108
    %4301 = vmatprep.subr.bf16.mxu0 0
    %4302 = vmatpush2.bf16.msra.mxu0 %v4105
    %4303 = vmatprep.subr.bf16.mxu0 0
    %4304 = vmatpush2.bf16.msra.mxu0 %v4102
    %4305 = vmatprep.subr.bf16.mxu0 0
    %4306 = vmatpush2.bf16.msra.mxu0 %v4099
    %4307 = vmatprep.subr.bf16.mxu0 0
    %4308 = vmatpush2.bf16.msra.mxu0 %v4096
    %4309 = vmatprep.subr.bf16.mxu0 0
    %4310 = vmatpush2.bf16.msra.mxu0 %v4093
    %4311 = vmatprep.subr.bf16.mxu0 0
    %4312 = vmatpush2.bf16.msra.mxu0 %v4090
    %4313 = vmatprep.subr.bf16.mxu0 0
    %4314 = vmatpush2.bf16.msra.mxu0 %v4087
    %4315 = vmatprep.mubr.bf16.mxu0 %v3160
    %4316 = vmatmul.mubr.bf16.gmra.mxu0 %v3159
    %v4317 = vpop.f32.mrf.mxu0
    %v4318 = vadd.f32 0.0, %v4317
    %v4319 = vpop.f32.mrf.mxu0
    %v4320 = vpop.f32.mrf.mxu0
    %v4321 = vadd.f32 0.0, %v4320
    %v4322 = vpop.f32.mrf.mxu0
    %4323 = vmatprep.mubr.bf16.mxu0 %v3163
    %4324 = vmatmul.mubr.bf16.gmra.mxu0 %v3162
    %v4325 = vpop.f32.mrf.mxu0
    %v4326 = vadd.f32 0.0, %v4325
    %v4327 = vpop.f32.mrf.mxu0
    %v4328 = vpop.f32.mrf.mxu0
    %v4329 = vpop.f32.mrf.mxu0
    %4330 = vdwg.mxu0
    %4331 = vmatprep.subr.bf16.mxu0 0
    %4332 = vmatpush1.bf16.msra.mxu0 0
    %4333 = vmatprep.subr.bf16.mxu0 0
    %4334 = vmatpush1.bf16.msra.mxu0 0
    %4335 = vmatprep.subr.bf16.mxu0 0
    %4336 = vmatpush1.bf16.msra.mxu0 0
    %4337 = vmatprep.subr.bf16.mxu0 0
    %4338 = vmatpush1.bf16.msra.mxu0 0
    %4339 = vmatprep.subr.bf16.mxu0 0
    %4340 = vmatpush1.bf16.msra.mxu0 %v4120
    %4341 = vmatprep.subr.bf16.mxu0 0
    %4342 = vmatpush1.bf16.msra.mxu0 %v4117
    %4343 = vmatprep.subr.bf16.mxu0 0
    %4344 = vmatpush1.bf16.msra.mxu0 %v4114
    %4345 = vmatprep.subr.bf16.mxu0 0
    %4346 = vmatpush1.bf16.msra.mxu0 %v4111
    %4347 = vmatprep.subr.bf16.mxu0 0
    %4348 = vmatpush2.bf16.msra.mxu0 0
    %4349 = vmatprep.subr.bf16.mxu0 0
    %4350 = vmatpush2.bf16.msra.mxu0 0
    %4351 = vmatprep.subr.bf16.mxu0 0
    %4352 = vmatpush2.bf16.msra.mxu0 0
    %4353 = vmatprep.subr.bf16.mxu0 0
    %4354 = vmatpush2.bf16.msra.mxu0 0
    %4355 = vmatprep.subr.bf16.mxu0 0
    %4356 = vmatpush2.bf16.msra.mxu0 0
    %4357 = vmatprep.subr.bf16.mxu0 0
    %4358 = vmatpush2.bf16.msra.mxu0 0
    %4359 = vmatprep.subr.bf16.mxu0 0
    %4360 = vmatpush2.bf16.msra.mxu0 0
    %4361 = vmatprep.subr.bf16.mxu0 0
    %4362 = vmatpush2.bf16.msra.mxu0 0
    %4363 = vmatprep.mubr.bf16.mxu0 0
    %4364 = vmatmul.mubr.bf16.gmra.mxu0 %v3566
    %v4365 = vpop.f32.mrf.mxu0
    %v4366 = vadd.f32 %v4318, %v4365
    %v4367 = vpop.f32.mrf.mxu0
    %v4368 = vpop.f32.mrf.mxu0
    %v4369 = vadd.f32 %v4321, %v4368
    %v4370 = vpop.f32.mrf.mxu0
    %4371 = vmatprep.mubr.bf16.mxu0 0
    %4372 = vmatmul.mubr.bf16.gmra.mxu0 %v3569
    %v4373 = vpop.f32.mrf.mxu0
    %v4374 = vadd.f32 %v4326, %v4373
    %v4375 = vpop.f32.mrf.mxu0
    %v4376 = vpop.f32.mrf.mxu0
    %v4377 = vpop.f32.mrf.mxu0
    %4378 = vdwg.mxu0
    %4379 = vst [vmem:[#allocation2 + $0x48] sm:$0xff] %v4267
    %4380 = vst [vmem:[#allocation2 + $0x50] sm:$0xff] %v4269
    %4381 = vst.msk [vmem:[#allocation2 + $0x58] sm:$0xff] %vm3771, %v4366
    %4382 = vst [vmem:[#allocation2 + $0x60] sm:$0xff] %v4271
    %4383 = vst [vmem:[#allocation2 + $0x68] sm:$0xff] %v4273
    %4384 = vst.msk [vmem:[#allocation2 + $0x70] sm:$0xff] %vm3771, %v4369
    %4385 = vst [vmem:[#allocation2 + $0x78] sm:$0xf] %v4277
    %4386 = vst [vmem:[#allocation2 + $0x80] sm:$0xf] %v4279
    %4387 = vst.msk [vmem:[#allocation2 + $0x88] sm:$0xf] %vm3778, %v4374
    %s4388 = scalar_lea.vmem %s11, 960
    %v4389 = vld [vmem:[%s4388] sm:$0xff]
    %v4390 = vld [vmem:[%s4388 + $0x8] sm:$0xf]
    %v4391 = vld [vmem:[%s4388 + $0xc] sm:$0xff]
    %v4392 = vld [vmem:[%s4388 + $0x14] sm:$0xf]
    %v4393 = vld [vmem:[%s4388 + $0x18] sm:$0xff]
    %v4394 = vld [vmem:[%s4388 + $0x20] sm:$0xf]
    %v4395 = vld [vmem:[%s4388 + $0x24] sm:$0xff]
    %v4396 = vld [vmem:[%s4388 + $0x2c] sm:$0xf]
    %v4397 = vld [vmem:[%s4388 + $0x30] sm:$0xff]
    %v4398 = vld [vmem:[%s4388 + $0x38] sm:$0xf]
    %v4399 = vld [vmem:[%s4388 + $0x3c] sm:$0xff]
    %v4400 = vld [vmem:[%s4388 + $0x44] sm:$0xf]
    %v4401 = vld [vmem:[%s4388 + $0x48] sm:$0xff]
    %v4402 = vld [vmem:[%s4388 + $0x50] sm:$0xf]
    %v4403 = vld [vmem:[%s4388 + $0x54] sm:$0xff]
    %v4404 = vld [vmem:[%s4388 + $0x5c] sm:$0xf]
    %v4405 = vld [vmem:[%s4388 + $0x60] sm:$0xff]
    %v4406 = vld [vmem:[%s4388 + $0x68] sm:$0xf]
    %v4407 = vld [vmem:[%s4388 + $0x6c] sm:$0xff]
    %v4408 = vld [vmem:[%s4388 + $0x74] sm:$0xf]
    %v4409 = vld [vmem:[%s4388 + $0x78] sm:$0xff]
    %v4410 = vld [vmem:[%s4388 + $0x80] sm:$0xf]
    %v4411 = vld [vmem:[%s4388 + $0x84] sm:$0xff]
    %v4412 = vld [vmem:[%s4388 + $0x8c] sm:$0xf]
    %v4413 = vld [vmem:[%s4388 + $0x90] sm:$0xff]
    %v4414 = vld [vmem:[%s4388 + $0x98] sm:$0xf]
    %v4415 = vld [vmem:[%s4388 + $0x9c] sm:$0xff]
    %v4416 = vld [vmem:[%s4388 + $0xa4] sm:$0xf]
    %v4417 = vld [vmem:[%s4388 + $0xa8] sm:$0xff]
    %v4418 = vld [vmem:[%s4388 + $0xb0] sm:$0xf]
    %v4419 = vld [vmem:[%s4388 + $0xb4] sm:$0xff]
    %v4420 = vld [vmem:[%s4388 + $0xbc] sm:$0xf]
    %v4421 = vld [vmem:[%s4388 + $0xc0] sm:$0xff]
    %v4422 = vld [vmem:[%s4388 + $0xc8] sm:$0xf]
    %v4423 = vld [vmem:[%s4388 + $0xcc] sm:$0xff]
    %v4424 = vld [vmem:[%s4388 + $0xd4] sm:$0xf]
    %v4425 = vld [vmem:[%s4388 + $0xd8] sm:$0xff]
    %v4426 = vld [vmem:[%s4388 + $0xe0] sm:$0xf]
    %v4427 = vld [vmem:[%s4388 + $0xe4] sm:$0xff]
    %v4428 = vld [vmem:[%s4388 + $0xec] sm:$0xf]
    %v4429 = vld [vmem:[%s4388 + $0xf0] sm:$0xff]
    %v4430 = vld [vmem:[%s4388 + $0xf8] sm:$0xf]
    %v4431 = vld [vmem:[%s4388 + $0xfc] sm:$0xff]
    %v4432 = vld [vmem:[%s4388 + $0x104] sm:$0xf]
    %v4433 = vld [vmem:[%s4388 + $0x108] sm:$0xff]
    %v4434 = vld [vmem:[%s4388 + $0x110] sm:$0xf]
    %v4435 = vld [vmem:[%s4388 + $0x114] sm:$0xff]
    %v4436 = vld [vmem:[%s4388 + $0x11c] sm:$0xf]
    %v4437 = vld [vmem:[%s4388 + $0x120] sm:$0xff]
    %v4438 = vld [vmem:[%s4388 + $0x128] sm:$0xf]
    %v4439 = vld [vmem:[%s4388 + $0x12c] sm:$0xff]
    %v4440 = vld [vmem:[%s4388 + $0x134] sm:$0xf]
    %v4441 = vld [vmem:[%s4388 + $0x138] sm:$0xff]
    %v4442 = vld [vmem:[%s4388 + $0x140] sm:$0xf]
    %v4443 = vld [vmem:[%s4388 + $0x144] sm:$0xff]
    %v4444 = vld [vmem:[%s4388 + $0x14c] sm:$0xf]
    %v4445 = vld [vmem:[%s4388 + $0x150] sm:$0xff]
    %v4446 = vld [vmem:[%s4388 + $0x158] sm:$0xf]
    %v4447 = vld [vmem:[%s4388 + $0x15c] sm:$0xff]
    %v4448 = vld [vmem:[%s4388 + $0x164] sm:$0xf]
    %v4449 = vld [vmem:[%s4388 + $0x168] sm:$0xff]
    %v4450 = vld [vmem:[%s4388 + $0x170] sm:$0xf]
    %v4451 = vld [vmem:[%s4388 + $0x174] sm:$0xff]
    %v4452 = vld [vmem:[%s4388 + $0x17c] sm:$0xf]
    %v4453 = vld [vmem:[%s4388 + $0x180] sm:$0xff]
    %v4454 = vld [vmem:[%s4388 + $0x188] sm:$0xf]
    %v4455 = vld [vmem:[%s4388 + $0x18c] sm:$0xff]
    %v4456 = vld [vmem:[%s4388 + $0x194] sm:$0xf]
    %v4457 = vld [vmem:[%s4388 + $0x198] sm:$0xff]
    %v4458 = vld [vmem:[%s4388 + $0x1a0] sm:$0xf]
    %v4459 = vld [vmem:[%s4388 + $0x1a4] sm:$0xff]
    %v4460 = vld [vmem:[%s4388 + $0x1ac] sm:$0xf]
    %v4461 = vld [vmem:[%s4388 + $0x1b0] sm:$0xff]
    %v4462 = vld [vmem:[%s4388 + $0x1b8] sm:$0xf]
    %v4463 = vld [vmem:[%s4388 + $0x1bc] sm:$0xff]
    %v4464 = vld [vmem:[%s4388 + $0x1c4] sm:$0xf]
    %v4465 = vld [vmem:[%s4388 + $0x1c8] sm:$0xff]
    %v4466 = vld [vmem:[%s4388 + $0x1d0] sm:$0xf]
    %v4467 = vld [vmem:[%s4388 + $0x1d4] sm:$0xff]
    %v4468 = vld [vmem:[%s4388 + $0x1dc] sm:$0xf]
    %v4549 = vunpack.c.l.b16 %v4389
    %v4550 = vunpack.c.h.b16 %v4389
    %v4551 = vunpack.c.l.b16 %v4390
    %v4552 = vunpack.c.l.b16 %v4391
    %v4553 = vunpack.c.h.b16 %v4391
    %v4554 = vunpack.c.l.b16 %v4392
    %v4555 = vunpack.c.l.b16 %v4393
    %v4556 = vunpack.c.h.b16 %v4393
    %v4557 = vunpack.c.l.b16 %v4394
    %v4558 = vunpack.c.l.b16 %v4395
    %v4559 = vunpack.c.h.b16 %v4395
    %v4560 = vunpack.c.l.b16 %v4396
    %v4561 = vunpack.c.l.b16 %v4397
    %v4562 = vunpack.c.h.b16 %v4397
    %v4563 = vunpack.c.l.b16 %v4398
    %v4564 = vunpack.c.l.b16 %v4399
    %v4565 = vunpack.c.h.b16 %v4399
    %v4566 = vunpack.c.l.b16 %v4400
    %v4567 = vunpack.c.l.b16 %v4401
    %v4568 = vunpack.c.h.b16 %v4401
    %v4569 = vunpack.c.l.b16 %v4402
    %v4570 = vunpack.c.l.b16 %v4403
    %v4571 = vunpack.c.h.b16 %v4403
    %v4572 = vunpack.c.l.b16 %v4404
    %v4573 = vunpack.c.l.b16 %v4405
    %v4574 = vunpack.c.h.b16 %v4405
    %v4575 = vunpack.c.l.b16 %v4406
    %v4576 = vunpack.c.l.b16 %v4407
    %v4577 = vunpack.c.h.b16 %v4407
    %v4578 = vunpack.c.l.b16 %v4408
    %v4579 = vunpack.c.l.b16 %v4409
    %v4580 = vunpack.c.h.b16 %v4409
    %v4581 = vunpack.c.l.b16 %v4410
    %v4582 = vunpack.c.l.b16 %v4411
    %v4583 = vunpack.c.h.b16 %v4411
    %v4584 = vunpack.c.l.b16 %v4412
    %v4585 = vunpack.c.l.b16 %v4413
    %v4586 = vunpack.c.h.b16 %v4413
    %v4587 = vunpack.c.l.b16 %v4414
    %v4588 = vunpack.c.l.b16 %v4415
    %v4589 = vunpack.c.h.b16 %v4415
    %v4590 = vunpack.c.l.b16 %v4416
    %v4591 = vunpack.c.l.b16 %v4417
    %v4592 = vunpack.c.h.b16 %v4417
    %v4593 = vunpack.c.l.b16 %v4418
    %v4594 = vunpack.c.l.b16 %v4419
    %v4595 = vunpack.c.h.b16 %v4419
    %v4596 = vunpack.c.l.b16 %v4420
    %v4597 = vunpack.c.l.b16 %v4421
    %v4598 = vunpack.c.h.b16 %v4421
    %v4599 = vunpack.c.l.b16 %v4422
    %v4600 = vunpack.c.l.b16 %v4423
    %v4601 = vunpack.c.h.b16 %v4423
    %v4602 = vunpack.c.l.b16 %v4424
    %v4603 = vunpack.c.l.b16 %v4425
    %v4604 = vunpack.c.h.b16 %v4425
    %v4605 = vunpack.c.l.b16 %v4426
    %v4606 = vunpack.c.l.b16 %v4427
    %v4607 = vunpack.c.h.b16 %v4427
    %v4608 = vunpack.c.l.b16 %v4428
    %v4609 = vunpack.c.l.b16 %v4429
    %v4610 = vunpack.c.h.b16 %v4429
    %v4611 = vunpack.c.l.b16 %v4430
    %v4612 = vunpack.c.l.b16 %v4431
    %v4613 = vunpack.c.h.b16 %v4431
    %v4614 = vunpack.c.l.b16 %v4432
    %v4615 = vunpack.c.l.b16 %v4433
    %v4616 = vunpack.c.h.b16 %v4433
    %v4617 = vunpack.c.l.b16 %v4434
    %v4618 = vunpack.c.l.b16 %v4435
    %v4619 = vunpack.c.h.b16 %v4435
    %v4620 = vunpack.c.l.b16 %v4436
    %v4621 = vunpack.c.l.b16 %v4437
    %v4622 = vunpack.c.h.b16 %v4437
    %v4623 = vunpack.c.l.b16 %v4438
    %v4624 = vunpack.c.l.b16 %v4439
    %v4625 = vunpack.c.h.b16 %v4439
    %v4626 = vunpack.c.l.b16 %v4440
    %v4627 = vunpack.c.l.b16 %v4441
    %v4628 = vunpack.c.h.b16 %v4441
    %v4629 = vunpack.c.l.b16 %v4442
    %v4630 = vunpack.c.l.b16 %v4443
    %v4631 = vunpack.c.h.b16 %v4443
    %v4632 = vunpack.c.l.b16 %v4444
    %v4633 = vunpack.c.l.b16 %v4445
    %v4634 = vunpack.c.h.b16 %v4445
    %v4635 = vunpack.c.l.b16 %v4446
    %v4636 = vunpack.c.l.b16 %v4447
    %v4637 = vunpack.c.h.b16 %v4447
    %v4638 = vunpack.c.l.b16 %v4448
    %v4639 = vunpack.c.l.b16 %v4449
    %v4640 = vunpack.c.h.b16 %v4449
    %v4641 = vunpack.c.l.b16 %v4450
    %v4642 = vunpack.c.l.b16 %v4451
    %v4643 = vunpack.c.h.b16 %v4451
    %v4644 = vunpack.c.l.b16 %v4452
    %v4645 = vunpack.c.l.b16 %v4453
    %v4646 = vunpack.c.h.b16 %v4453
    %v4647 = vunpack.c.l.b16 %v4454
    %v4648 = vunpack.c.l.b16 %v4455
    %v4649 = vunpack.c.h.b16 %v4455
    %v4650 = vunpack.c.l.b16 %v4456
    %v4651 = vunpack.c.l.b16 %v4457
    %v4652 = vunpack.c.h.b16 %v4457
    %v4653 = vunpack.c.l.b16 %v4458
    %v4654 = vunpack.c.l.b16 %v4459
    %v4655 = vunpack.c.h.b16 %v4459
    %v4656 = vunpack.c.l.b16 %v4460
    %v4657 = vunpack.c.l.b16 %v4461
    %v4658 = vunpack.c.h.b16 %v4461
    %v4659 = vunpack.c.l.b16 %v4462
    %v4660 = vunpack.c.l.b16 %v4463
    %v4661 = vunpack.c.h.b16 %v4463
    %v4662 = vunpack.c.l.b16 %v4464
    %v4663 = vunpack.c.l.b16 %v4465
    %v4664 = vunpack.c.h.b16 %v4465
    %v4665 = vunpack.c.l.b16 %v4466
    %v4666 = vunpack.c.l.b16 %v4467
    %v4667 = vunpack.c.h.b16 %v4467
    %v4668 = vunpack.c.l.b16 %v4468
    %v4669 = vpack.c.b16 %v4552, %v4549
    %v4670 = vpack.c.b16 %v4553, %v4550
    %v4671 = vpack.c.b16 %v4554, %v4551
    %v4672 = vpack.c.b16 %v4558, %v4555
    %v4673 = vpack.c.b16 %v4559, %v4556
    %v4674 = vpack.c.b16 %v4560, %v4557
    %v4675 = vpack.c.b16 %v4564, %v4561
    %v4676 = vpack.c.b16 %v4565, %v4562
    %v4677 = vpack.c.b16 %v4566, %v4563
    %v4678 = vpack.c.b16 %v4570, %v4567
    %v4679 = vpack.c.b16 %v4571, %v4568
    %v4680 = vpack.c.b16 %v4572, %v4569
    %v4681 = vpack.c.b16 %v4576, %v4573
    %v4682 = vpack.c.b16 %v4577, %v4574
    %v4683 = vpack.c.b16 %v4578, %v4575
    %v4684 = vpack.c.b16 %v4582, %v4579
    %v4685 = vpack.c.b16 %v4583, %v4580
    %v4686 = vpack.c.b16 %v4584, %v4581
    %v4687 = vpack.c.b16 %v4588, %v4585
    %v4688 = vpack.c.b16 %v4589, %v4586
    %v4689 = vpack.c.b16 %v4590, %v4587
    %v4690 = vpack.c.b16 %v4594, %v4591
    %v4691 = vpack.c.b16 %v4595, %v4592
    %v4692 = vpack.c.b16 %v4596, %v4593
    %v4693 = vpack.c.b16 %v4600, %v4597
    %v4694 = vpack.c.b16 %v4601, %v4598
    %v4695 = vpack.c.b16 %v4602, %v4599
    %v4696 = vpack.c.b16 %v4606, %v4603
    %v4697 = vpack.c.b16 %v4607, %v4604
    %v4698 = vpack.c.b16 %v4608, %v4605
    %v4699 = vpack.c.b16 %v4612, %v4609
    %v4700 = vpack.c.b16 %v4613, %v4610
    %v4701 = vpack.c.b16 %v4614, %v4611
    %v4702 = vpack.c.b16 %v4618, %v4615
    %v4703 = vpack.c.b16 %v4619, %v4616
    %v4704 = vpack.c.b16 %v4620, %v4617
    %v4705 = vpack.c.b16 %v4624, %v4621
    %v4706 = vpack.c.b16 %v4625, %v4622
    %v4707 = vpack.c.b16 %v4626, %v4623
    %v4708 = vpack.c.b16 %v4630, %v4627
    %v4709 = vpack.c.b16 %v4631, %v4628
    %v4710 = vpack.c.b16 %v4632, %v4629
    %v4711 = vpack.c.b16 %v4636, %v4633
    %v4712 = vpack.c.b16 %v4637, %v4634
    %v4713 = vpack.c.b16 %v4638, %v4635
    %v4714 = vpack.c.b16 %v4642, %v4639
    %v4715 = vpack.c.b16 %v4643, %v4640
    %v4716 = vpack.c.b16 %v4644, %v4641
    %v4717 = vpack.c.b16 %v4648, %v4645
    %v4718 = vpack.c.b16 %v4649, %v4646
    %v4719 = vpack.c.b16 %v4650, %v4647
    %v4720 = vpack.c.b16 %v4654, %v4651
    %v4721 = vpack.c.b16 %v4655, %v4652
    %v4722 = vpack.c.b16 %v4656, %v4653
    %v4723 = vpack.c.b16 %v4660, %v4657
    %v4724 = vpack.c.b16 %v4661, %v4658
    %v4725 = vpack.c.b16 %v4662, %v4659
    %v4726 = vpack.c.b16 %v4666, %v4663
    %v4727 = vpack.c.b16 %v4667, %v4664
    %v4728 = vpack.c.b16 %v4668, %v4665
    %4789 = vmatprep.subr.bf16.mxu0 %v4691
    %4790 = vmatpush1.bf16.msra.mxu0 %v4690
    %4791 = vmatprep.subr.bf16.mxu0 %v4688
    %4792 = vmatpush1.bf16.msra.mxu0 %v4687
    %4793 = vmatprep.subr.bf16.mxu0 %v4685
    %4794 = vmatpush1.bf16.msra.mxu0 %v4684
    %4795 = vmatprep.subr.bf16.mxu0 %v4682
    %4796 = vmatpush1.bf16.msra.mxu0 %v4681
    %4797 = vmatprep.subr.bf16.mxu0 %v4679
    %4798 = vmatpush1.bf16.msra.mxu0 %v4678
    %4799 = vmatprep.subr.bf16.mxu0 %v4676
    %4800 = vmatpush1.bf16.msra.mxu0 %v4675
    %4801 = vmatprep.subr.bf16.mxu0 %v4673
    %4802 = vmatpush1.bf16.msra.mxu0 %v4672
    %4803 = vmatprep.subr.bf16.mxu0 %v4670
    %4804 = vmatpush1.bf16.msra.mxu0 %v4669
    %4805 = vmatprep.subr.bf16.mxu0 %v4715
    %4806 = vmatpush2.bf16.msra.mxu0 %v4714
    %4807 = vmatprep.subr.bf16.mxu0 %v4712
    %4808 = vmatpush2.bf16.msra.mxu0 %v4711
    %4809 = vmatprep.subr.bf16.mxu0 %v4709
    %4810 = vmatpush2.bf16.msra.mxu0 %v4708
    %4811 = vmatprep.subr.bf16.mxu0 %v4706
    %4812 = vmatpush2.bf16.msra.mxu0 %v4705
    %4813 = vmatprep.subr.bf16.mxu0 %v4703
    %4814 = vmatpush2.bf16.msra.mxu0 %v4702
    %4815 = vmatprep.subr.bf16.mxu0 %v4700
    %4816 = vmatpush2.bf16.msra.mxu0 %v4699
    %4817 = vmatprep.subr.bf16.mxu0 %v4697
    %4818 = vmatpush2.bf16.msra.mxu0 %v4696
    %4819 = vmatprep.subr.bf16.mxu0 %v4694
    %4820 = vmatpush2.bf16.msra.mxu0 %v4693
    %4821 = vmatprep.mubr.bf16.mxu0 %v3160
    %4822 = vmatmul.mubr.bf16.gmra.mxu0 %v3159
    %v4823 = vpop.f32.mrf.mxu0
    %v4824 = vadd.f32 0.0, %v4823
    %v4825 = vpop.f32.mrf.mxu0
    %v4826 = vadd.f32 0.0, %v4825
    %v4827 = vpop.f32.mrf.mxu0
    %v4828 = vadd.f32 0.0, %v4827
    %v4829 = vpop.f32.mrf.mxu0
    %v4830 = vadd.f32 0.0, %v4829
    %4831 = vmatprep.mubr.bf16.mxu0 %v3163
    %4832 = vmatmul.mubr.bf16.gmra.mxu0 %v3162
    %v4833 = vpop.f32.mrf.mxu0
    %v4834 = vadd.f32 0.0, %v4833
    %v4835 = vpop.f32.mrf.mxu0
    %v4836 = vadd.f32 0.0, %v4835
    %v4837 = vpop.f32.mrf.mxu0
    %v4838 = vpop.f32.mrf.mxu0
    %4839 = vdwg.mxu0
    %4840 = vmatprep.subr.bf16.mxu0 0
    %4841 = vmatpush1.bf16.msra.mxu0 0
    %4842 = vmatprep.subr.bf16.mxu0 0
    %4843 = vmatpush1.bf16.msra.mxu0 0
    %4844 = vmatprep.subr.bf16.mxu0 0
    %4845 = vmatpush1.bf16.msra.mxu0 0
    %4846 = vmatprep.subr.bf16.mxu0 0
    %4847 = vmatpush1.bf16.msra.mxu0 0
    %4848 = vmatprep.subr.bf16.mxu0 %v4727
    %4849 = vmatpush1.bf16.msra.mxu0 %v4726
    %4850 = vmatprep.subr.bf16.mxu0 %v4724
    %4851 = vmatpush1.bf16.msra.mxu0 %v4723
    %4852 = vmatprep.subr.bf16.mxu0 %v4721
    %4853 = vmatpush1.bf16.msra.mxu0 %v4720
    %4854 = vmatprep.subr.bf16.mxu0 %v4718
    %4855 = vmatpush1.bf16.msra.mxu0 %v4717
    %4856 = vmatprep.subr.bf16.mxu0 0
    %4857 = vmatpush2.bf16.msra.mxu0 0
    %4858 = vmatprep.subr.bf16.mxu0 0
    %4859 = vmatpush2.bf16.msra.mxu0 0
    %4860 = vmatprep.subr.bf16.mxu0 0
    %4861 = vmatpush2.bf16.msra.mxu0 0
    %4862 = vmatprep.subr.bf16.mxu0 0
    %4863 = vmatpush2.bf16.msra.mxu0 0
    %4864 = vmatprep.subr.bf16.mxu0 0
    %4865 = vmatpush2.bf16.msra.mxu0 0
    %4866 = vmatprep.subr.bf16.mxu0 0
    %4867 = vmatpush2.bf16.msra.mxu0 0
    %4868 = vmatprep.subr.bf16.mxu0 0
    %4869 = vmatpush2.bf16.msra.mxu0 0
    %4870 = vmatprep.subr.bf16.mxu0 0
    %4871 = vmatpush2.bf16.msra.mxu0 0
    %4872 = vmatprep.mubr.bf16.mxu0 0
    %4873 = vmatmul.mubr.bf16.gmra.mxu0 %v3566
    %v4874 = vpop.f32.mrf.mxu0
    %v4875 = vadd.f32 %v4824, %v4874
    %v4876 = vpop.f32.mrf.mxu0
    %v4877 = vadd.f32 %v4826, %v4876
    %v4878 = vpop.f32.mrf.mxu0
    %v4879 = vadd.f32 %v4828, %v4878
    %v4880 = vpop.f32.mrf.mxu0
    %v4881 = vadd.f32 %v4830, %v4880
    %4882 = vmatprep.mubr.bf16.mxu0 0
    %4883 = vmatmul.mubr.bf16.gmra.mxu0 %v3569
    %v4884 = vpop.f32.mrf.mxu0
    %v4885 = vadd.f32 %v4834, %v4884
    %v4886 = vpop.f32.mrf.mxu0
    %v4887 = vadd.f32 %v4836, %v4886
    %v4888 = vpop.f32.mrf.mxu0
    %v4889 = vpop.f32.mrf.mxu0
    %4890 = vdwg.mxu0
    %4891 = vmatprep.subr.bf16.mxu0 0
    %4892 = vmatpush1.bf16.msra.mxu0 %v4692
    %4893 = vmatprep.subr.bf16.mxu0 0
    %4894 = vmatpush1.bf16.msra.mxu0 %v4689
    %4895 = vmatprep.subr.bf16.mxu0 0
    %4896 = vmatpush1.bf16.msra.mxu0 %v4686
    %4897 = vmatprep.subr.bf16.mxu0 0
    %4898 = vmatpush1.bf16.msra.mxu0 %v4683
    %4899 = vmatprep.subr.bf16.mxu0 0
    %4900 = vmatpush1.bf16.msra.mxu0 %v4680
    %4901 = vmatprep.subr.bf16.mxu0 0
    %4902 = vmatpush1.bf16.msra.mxu0 %v4677
    %4903 = vmatprep.subr.bf16.mxu0 0
    %4904 = vmatpush1.bf16.msra.mxu0 %v4674
    %4905 = vmatprep.subr.bf16.mxu0 0
    %4906 = vmatpush1.bf16.msra.mxu0 %v4671
    %4907 = vmatprep.subr.bf16.mxu0 0
    %4908 = vmatpush2.bf16.msra.mxu0 %v4716
    %4909 = vmatprep.subr.bf16.mxu0 0
    %4910 = vmatpush2.bf16.msra.mxu0 %v4713
    %4911 = vmatprep.subr.bf16.mxu0 0
    %4912 = vmatpush2.bf16.msra.mxu0 %v4710
    %4913 = vmatprep.subr.bf16.mxu0 0
    %4914 = vmatpush2.bf16.msra.mxu0 %v4707
    %4915 = vmatprep.subr.bf16.mxu0 0
    %4916 = vmatpush2.bf16.msra.mxu0 %v4704
    %4917 = vmatprep.subr.bf16.mxu0 0
    %4918 = vmatpush2.bf16.msra.mxu0 %v4701
    %4919 = vmatprep.subr.bf16.mxu0 0
    %4920 = vmatpush2.bf16.msra.mxu0 %v4698
    %4921 = vmatprep.subr.bf16.mxu0 0
    %4922 = vmatpush2.bf16.msra.mxu0 %v4695
    %4923 = vmatprep.mubr.bf16.mxu0 %v3160
    %4924 = vmatmul.mubr.bf16.gmra.mxu0 %v3159
    %v4925 = vpop.f32.mrf.mxu0
    %v4926 = vadd.f32 0.0, %v4925
    %v4927 = vpop.f32.mrf.mxu0
    %v4928 = vpop.f32.mrf.mxu0
    %v4929 = vadd.f32 0.0, %v4928
    %v4930 = vpop.f32.mrf.mxu0
    %4931 = vmatprep.mubr.bf16.mxu0 %v3163
    %4932 = vmatmul.mubr.bf16.gmra.mxu0 %v3162
    %v4933 = vpop.f32.mrf.mxu0
    %v4934 = vadd.f32 0.0, %v4933
    %v4935 = vpop.f32.mrf.mxu0
    %v4936 = vpop.f32.mrf.mxu0
    %v4937 = vpop.f32.mrf.mxu0
    %4938 = vdwg.mxu0
    %4939 = vmatprep.subr.bf16.mxu0 0
    %4940 = vmatpush1.bf16.msra.mxu0 0
    %4941 = vmatprep.subr.bf16.mxu0 0
    %4942 = vmatpush1.bf16.msra.mxu0 0
    %4943 = vmatprep.subr.bf16.mxu0 0
    %4944 = vmatpush1.bf16.msra.mxu0 0
    %4945 = vmatprep.subr.bf16.mxu0 0
    %4946 = vmatpush1.bf16.msra.mxu0 0
    %4947 = vmatprep.subr.bf16.mxu0 0
    %4948 = vmatpush1.bf16.msra.mxu0 %v4728
    %4949 = vmatprep.subr.bf16.mxu0 0
    %4950 = vmatpush1.bf16.msra.mxu0 %v4725
    %4951 = vmatprep.subr.bf16.mxu0 0
    %4952 = vmatpush1.bf16.msra.mxu0 %v4722
    %4953 = vmatprep.subr.bf16.mxu0 0
    %4954 = vmatpush1.bf16.msra.mxu0 %v4719
    %4955 = vmatprep.subr.bf16.mxu0 0
    %4956 = vmatpush2.bf16.msra.mxu0 0
    %4957 = vmatprep.subr.bf16.mxu0 0
    %4958 = vmatpush2.bf16.msra.mxu0 0
    %4959 = vmatprep.subr.bf16.mxu0 0
    %4960 = vmatpush2.bf16.msra.mxu0 0
    %4961 = vmatprep.subr.bf16.mxu0 0
    %4962 = vmatpush2.bf16.msra.mxu0 0
    %4963 = vmatprep.subr.bf16.mxu0 0
    %4964 = vmatpush2.bf16.msra.mxu0 0
    %4965 = vmatprep.subr.bf16.mxu0 0
    %4966 = vmatpush2.bf16.msra.mxu0 0
    %4967 = vmatprep.subr.bf16.mxu0 0
    %4968 = vmatpush2.bf16.msra.mxu0 0
    %4969 = vmatprep.subr.bf16.mxu0 0
    %4970 = vmatpush2.bf16.msra.mxu0 0
    %4971 = vmatprep.mubr.bf16.mxu0 0
    %4972 = vmatmul.mubr.bf16.gmra.mxu0 %v3566
    %v4973 = vpop.f32.mrf.mxu0
    %v4974 = vadd.f32 %v4926, %v4973
    %v4975 = vpop.f32.mrf.mxu0
    %v4976 = vpop.f32.mrf.mxu0
    %v4977 = vadd.f32 %v4929, %v4976
    %v4978 = vpop.f32.mrf.mxu0
    %4979 = vmatprep.mubr.bf16.mxu0 0
    %4980 = vmatmul.mubr.bf16.gmra.mxu0 %v3569
    %v4981 = vpop.f32.mrf.mxu0
    %v4982 = vadd.f32 %v4934, %v4981
    %v4983 = vpop.f32.mrf.mxu0
    %v4984 = vpop.f32.mrf.mxu0
    %v4985 = vpop.f32.mrf.mxu0
    %4986 = vdwg.mxu0
    %4987 = vst [vmem:[#allocation2 + $0x90] sm:$0xff] %v4875
    %4988 = vst [vmem:[#allocation2 + $0x98] sm:$0xff] %v4877
    %4989 = vst.msk [vmem:[#allocation2 + $0xa0] sm:$0xff] %vm3771, %v4974
    %4990 = vst [vmem:[#allocation2 + $0xa8] sm:$0xff] %v4879
    %4991 = vst [vmem:[#allocation2 + $0xb0] sm:$0xff] %v4881
    %4992 = vst.msk [vmem:[#allocation2 + $0xb8] sm:$0xff] %vm3771, %v4977
    %4993 = vst [vmem:[#allocation2 + $0xc0] sm:$0xf] %v4885
    %4994 = vst [vmem:[#allocation2 + $0xc8] sm:$0xf] %v4887
    %4995 = vst.msk [vmem:[#allocation2 + $0xd0] sm:$0xf] %vm3778, %v4982
    %s4996 = scalar_lea.vmem %s11, 1440
    %v4997 = vld [vmem:[%s4996] sm:$0xff]
    %v4998 = vld [vmem:[%s4996 + $0x8] sm:$0xf]
    %v4999 = vld [vmem:[%s4996 + $0xc] sm:$0xff]
    %v5000 = vld [vmem:[%s4996 + $0x14] sm:$0xf]
    %v5001 = vld [vmem:[%s4996 + $0x18] sm:$0xff]
    %v5002 = vld [vmem:[%s4996 + $0x20] sm:$0xf]
    %v5003 = vld [vmem:[%s4996 + $0x24] sm:$0xff]
    %v5004 = vld [vmem:[%s4996 + $0x2c] sm:$0xf]
    %v5005 = vld [vmem:[%s4996 + $0x30] sm:$0xff]
    %v5006 = vld [vmem:[%s4996 + $0x38] sm:$0xf]
    %v5007 = vld [vmem:[%s4996 + $0x3c] sm:$0xff]
    %v5008 = vld [vmem:[%s4996 + $0x44] sm:$0xf]
    %v5009 = vld [vmem:[%s4996 + $0x48] sm:$0xff]
    %v5010 = vld [vmem:[%s4996 + $0x50] sm:$0xf]
    %v5011 = vld [vmem:[%s4996 + $0x54] sm:$0xff]
    %v5012 = vld [vmem:[%s4996 + $0x5c] sm:$0xf]
    %v5013 = vld [vmem:[%s4996 + $0x60] sm:$0xff]
    %v5014 = vld [vmem:[%s4996 + $0x68] sm:$0xf]
    %v5015 = vld [vmem:[%s4996 + $0x6c] sm:$0xff]
    %v5016 = vld [vmem:[%s4996 + $0x74] sm:$0xf]
    %v5017 = vld [vmem:[%s4996 + $0x78] sm:$0xff]
    %v5018 = vld [vmem:[%s4996 + $0x80] sm:$0xf]
    %v5019 = vld [vmem:[%s4996 + $0x84] sm:$0xff]
    %v5020 = vld [vmem:[%s4996 + $0x8c] sm:$0xf]
    %v5021 = vld [vmem:[%s4996 + $0x90] sm:$0xff]
    %v5022 = vld [vmem:[%s4996 + $0x98] sm:$0xf]
    %v5023 = vld [vmem:[%s4996 + $0x9c] sm:$0xff]
    %v5024 = vld [vmem:[%s4996 + $0xa4] sm:$0xf]
    %v5025 = vld [vmem:[%s4996 + $0xa8] sm:$0xff]
    %v5026 = vld [vmem:[%s4996 + $0xb0] sm:$0xf]
    %v5027 = vld [vmem:[%s4996 + $0xb4] sm:$0xff]
    %v5028 = vld [vmem:[%s4996 + $0xbc] sm:$0xf]
    %v5029 = vld [vmem:[%s4996 + $0xc0] sm:$0xff]
    %v5030 = vld [vmem:[%s4996 + $0xc8] sm:$0xf]
    %v5031 = vld [vmem:[%s4996 + $0xcc] sm:$0xff]
    %v5032 = vld [vmem:[%s4996 + $0xd4] sm:$0xf]
    %v5033 = vld [vmem:[%s4996 + $0xd8] sm:$0xff]
    %v5034 = vld [vmem:[%s4996 + $0xe0] sm:$0xf]
    %v5035 = vld [vmem:[%s4996 + $0xe4] sm:$0xff]
    %v5036 = vld [vmem:[%s4996 + $0xec] sm:$0xf]
    %v5037 = vld [vmem:[%s4996 + $0xf0] sm:$0xff]
    %v5038 = vld [vmem:[%s4996 + $0xf8] sm:$0xf]
    %v5039 = vld [vmem:[%s4996 + $0xfc] sm:$0xff]
    %v5040 = vld [vmem:[%s4996 + $0x104] sm:$0xf]
    %v5041 = vld [vmem:[%s4996 + $0x108] sm:$0xff]
    %v5042 = vld [vmem:[%s4996 + $0x110] sm:$0xf]
    %v5043 = vld [vmem:[%s4996 + $0x114] sm:$0xff]
    %v5044 = vld [vmem:[%s4996 + $0x11c] sm:$0xf]
    %v5045 = vld [vmem:[%s4996 + $0x120] sm:$0xff]
    %v5046 = vld [vmem:[%s4996 + $0x128] sm:$0xf]
    %v5047 = vld [vmem:[%s4996 + $0x12c] sm:$0xff]
    %v5048 = vld [vmem:[%s4996 + $0x134] sm:$0xf]
    %v5049 = vld [vmem:[%s4996 + $0x138] sm:$0xff]
    %v5050 = vld [vmem:[%s4996 + $0x140] sm:$0xf]
    %v5051 = vld [vmem:[%s4996 + $0x144] sm:$0xff]
    %v5052 = vld [vmem:[%s4996 + $0x14c] sm:$0xf]
    %v5053 = vld [vmem:[%s4996 + $0x150] sm:$0xff]
    %v5054 = vld [vmem:[%s4996 + $0x158] sm:$0xf]
    %v5055 = vld [vmem:[%s4996 + $0x15c] sm:$0xff]
    %v5056 = vld [vmem:[%s4996 + $0x164] sm:$0xf]
    %v5057 = vld [vmem:[%s4996 + $0x168] sm:$0xff]
    %v5058 = vld [vmem:[%s4996 + $0x170] sm:$0xf]
    %v5059 = vld [vmem:[%s4996 + $0x174] sm:$0xff]
    %v5060 = vld [vmem:[%s4996 + $0x17c] sm:$0xf]
    %v5061 = vld [vmem:[%s4996 + $0x180] sm:$0xff]
    %v5062 = vld [vmem:[%s4996 + $0x188] sm:$0xf]
    %v5063 = vld [vmem:[%s4996 + $0x18c] sm:$0xff]
    %v5064 = vld [vmem:[%s4996 + $0x194] sm:$0xf]
    %v5065 = vld [vmem:[%s4996 + $0x198] sm:$0xff]
    %v5066 = vld [vmem:[%s4996 + $0x1a0] sm:$0xf]
    %v5067 = vld [vmem:[%s4996 + $0x1a4] sm:$0xff]
    %v5068 = vld [vmem:[%s4996 + $0x1ac] sm:$0xf]
    %v5069 = vld [vmem:[%s4996 + $0x1b0] sm:$0xff]
    %v5070 = vld [vmem:[%s4996 + $0x1b8] sm:$0xf]
    %v5071 = vld [vmem:[%s4996 + $0x1bc] sm:$0xff]
    %v5072 = vld [vmem:[%s4996 + $0x1c4] sm:$0xf]
    %v5073 = vld [vmem:[%s4996 + $0x1c8] sm:$0xff]
    %v5074 = vld [vmem:[%s4996 + $0x1d0] sm:$0xf]
    %v5075 = vld [vmem:[%s4996 + $0x1d4] sm:$0xff]
    %v5076 = vld [vmem:[%s4996 + $0x1dc] sm:$0xf]
    %v5157 = vunpack.c.l.b16 %v4997
    %v5158 = vunpack.c.h.b16 %v4997
    %v5159 = vunpack.c.l.b16 %v4998
    %v5160 = vunpack.c.l.b16 %v4999
    %v5161 = vunpack.c.h.b16 %v4999
    %v5162 = vunpack.c.l.b16 %v5000
    %v5163 = vunpack.c.l.b16 %v5001
    %v5164 = vunpack.c.h.b16 %v5001
    %v5165 = vunpack.c.l.b16 %v5002
    %v5166 = vunpack.c.l.b16 %v5003
    %v5167 = vunpack.c.h.b16 %v5003
    %v5168 = vunpack.c.l.b16 %v5004
    %v5169 = vunpack.c.l.b16 %v5005
    %v5170 = vunpack.c.h.b16 %v5005
    %v5171 = vunpack.c.l.b16 %v5006
    %v5172 = vunpack.c.l.b16 %v5007
    %v5173 = vunpack.c.h.b16 %v5007
    %v5174 = vunpack.c.l.b16 %v5008
    %v5175 = vunpack.c.l.b16 %v5009
    %v5176 = vunpack.c.h.b16 %v5009
    %v5177 = vunpack.c.l.b16 %v5010
    %v5178 = vunpack.c.l.b16 %v5011
    %v5179 = vunpack.c.h.b16 %v5011
    %v5180 = vunpack.c.l.b16 %v5012
    %v5181 = vunpack.c.l.b16 %v5013
    %v5182 = vunpack.c.h.b16 %v5013
    %v5183 = vunpack.c.l.b16 %v5014
    %v5184 = vunpack.c.l.b16 %v5015
    %v5185 = vunpack.c.h.b16 %v5015
    %v5186 = vunpack.c.l.b16 %v5016
    %v5187 = vunpack.c.l.b16 %v5017
    %v5188 = vunpack.c.h.b16 %v5017
    %v5189 = vunpack.c.l.b16 %v5018
    %v5190 = vunpack.c.l.b16 %v5019
    %v5191 = vunpack.c.h.b16 %v5019
    %v5192 = vunpack.c.l.b16 %v5020
    %v5193 = vunpack.c.l.b16 %v5021
    %v5194 = vunpack.c.h.b16 %v5021
    %v5195 = vunpack.c.l.b16 %v5022
    %v5196 = vunpack.c.l.b16 %v5023
    %v5197 = vunpack.c.h.b16 %v5023
    %v5198 = vunpack.c.l.b16 %v5024
    %v5199 = vunpack.c.l.b16 %v5025
    %v5200 = vunpack.c.h.b16 %v5025
    %v5201 = vunpack.c.l.b16 %v5026
    %v5202 = vunpack.c.l.b16 %v5027
    %v5203 = vunpack.c.h.b16 %v5027
    %v5204 = vunpack.c.l.b16 %v5028
    %v5205 = vunpack.c.l.b16 %v5029
    %v5206 = vunpack.c.h.b16 %v5029
    %v5207 = vunpack.c.l.b16 %v5030
    %v5208 = vunpack.c.l.b16 %v5031
    %v5209 = vunpack.c.h.b16 %v5031
    %v5210 = vunpack.c.l.b16 %v5032
    %v5211 = vunpack.c.l.b16 %v5033
    %v5212 = vunpack.c.h.b16 %v5033
    %v5213 = vunpack.c.l.b16 %v5034
    %v5214 = vunpack.c.l.b16 %v5035
    %v5215 = vunpack.c.h.b16 %v5035
    %v5216 = vunpack.c.l.b16 %v5036
    %v5217 = vunpack.c.l.b16 %v5037
    %v5218 = vunpack.c.h.b16 %v5037
    %v5219 = vunpack.c.l.b16 %v5038
    %v5220 = vunpack.c.l.b16 %v5039
    %v5221 = vunpack.c.h.b16 %v5039
    %v5222 = vunpack.c.l.b16 %v5040
    %v5223 = vunpack.c.l.b16 %v5041
    %v5224 = vunpack.c.h.b16 %v5041
    %v5225 = vunpack.c.l.b16 %v5042
    %v5226 = vunpack.c.l.b16 %v5043
    %v5227 = vunpack.c.h.b16 %v5043
    %v5228 = vunpack.c.l.b16 %v5044
    %v5229 = vunpack.c.l.b16 %v5045
    %v5230 = vunpack.c.h.b16 %v5045
    %v5231 = vunpack.c.l.b16 %v5046
    %v5232 = vunpack.c.l.b16 %v5047
    %v5233 = vunpack.c.h.b16 %v5047
    %v5234 = vunpack.c.l.b16 %v5048
    %v5235 = vunpack.c.l.b16 %v5049
    %v5236 = vunpack.c.h.b16 %v5049
    %v5237 = vunpack.c.l.b16 %v5050
    %v5238 = vunpack.c.l.b16 %v5051
    %v5239 = vunpack.c.h.b16 %v5051
    %v5240 = vunpack.c.l.b16 %v5052
    %v5241 = vunpack.c.l.b16 %v5053
    %v5242 = vunpack.c.h.b16 %v5053
    %v5243 = vunpack.c.l.b16 %v5054
    %v5244 = vunpack.c.l.b16 %v5055
    %v5245 = vunpack.c.h.b16 %v5055
    %v5246 = vunpack.c.l.b16 %v5056
    %v5247 = vunpack.c.l.b16 %v5057
    %v5248 = vunpack.c.h.b16 %v5057
    %v5249 = vunpack.c.l.b16 %v5058
    %v5250 = vunpack.c.l.b16 %v5059
    %v5251 = vunpack.c.h.b16 %v5059
    %v5252 = vunpack.c.l.b16 %v5060
    %v5253 = vunpack.c.l.b16 %v5061
    %v5254 = vunpack.c.h.b16 %v5061
    %v5255 = vunpack.c.l.b16 %v5062
    %v5256 = vunpack.c.l.b16 %v5063
    %v5257 = vunpack.c.h.b16 %v5063
    %v5258 = vunpack.c.l.b16 %v5064
    %v5259 = vunpack.c.l.b16 %v5065
    %v5260 = vunpack.c.h.b16 %v5065
    %v5261 = vunpack.c.l.b16 %v5066
    %v5262 = vunpack.c.l.b16 %v5067
    %v5263 = vunpack.c.h.b16 %v5067
    %v5264 = vunpack.c.l.b16 %v5068
    %v5265 = vunpack.c.l.b16 %v5069
    %v5266 = vunpack.c.h.b16 %v5069
    %v5267 = vunpack.c.l.b16 %v5070
    %v5268 = vunpack.c.l.b16 %v5071
    %v5269 = vunpack.c.h.b16 %v5071
    %v5270 = vunpack.c.l.b16 %v5072
    %v5271 = vunpack.c.l.b16 %v5073
    %v5272 = vunpack.c.h.b16 %v5073
    %v5273 = vunpack.c.l.b16 %v5074
    %v5274 = vunpack.c.l.b16 %v5075
    %v5275 = vunpack.c.h.b16 %v5075
    %v5276 = vunpack.c.l.b16 %v5076
    %v5277 = vpack.c.b16 %v5160, %v5157
    %v5278 = vpack.c.b16 %v5161, %v5158
    %v5279 = vpack.c.b16 %v5162, %v5159
    %v5280 = vpack.c.b16 %v5166, %v5163
    %v5281 = vpack.c.b16 %v5167, %v5164
    %v5282 = vpack.c.b16 %v5168, %v5165
    %v5283 = vpack.c.b16 %v5172, %v5169
    %v5284 = vpack.c.b16 %v5173, %v5170
    %v5285 = vpack.c.b16 %v5174, %v5171
    %v5286 = vpack.c.b16 %v5178, %v5175
    %v5287 = vpack.c.b16 %v5179, %v5176
    %v5288 = vpack.c.b16 %v5180, %v5177
    %v5289 = vpack.c.b16 %v5184, %v5181
    %v5290 = vpack.c.b16 %v5185, %v5182
    %v5291 = vpack.c.b16 %v5186, %v5183
    %v5292 = vpack.c.b16 %v5190, %v5187
    %v5293 = vpack.c.b16 %v5191, %v5188
    %v5294 = vpack.c.b16 %v5192, %v5189
    %v5295 = vpack.c.b16 %v5196, %v5193
    %v5296 = vpack.c.b16 %v5197, %v5194
    %v5297 = vpack.c.b16 %v5198, %v5195
    %v5298 = vpack.c.b16 %v5202, %v5199
    %v5299 = vpack.c.b16 %v5203, %v5200
    %v5300 = vpack.c.b16 %v5204, %v5201
    %v5301 = vpack.c.b16 %v5208, %v5205
    %v5302 = vpack.c.b16 %v5209, %v5206
    %v5303 = vpack.c.b16 %v5210, %v5207
    %v5304 = vpack.c.b16 %v5214, %v5211
    %v5305 = vpack.c.b16 %v5215, %v5212
    %v5306 = vpack.c.b16 %v5216, %v5213
    %v5307 = vpack.c.b16 %v5220, %v5217
    %v5308 = vpack.c.b16 %v5221, %v5218
    %v5309 = vpack.c.b16 %v5222, %v5219
    %v5310 = vpack.c.b16 %v5226, %v5223
    %v5311 = vpack.c.b16 %v5227, %v5224
    %v5312 = vpack.c.b16 %v5228, %v5225
    %v5313 = vpack.c.b16 %v5232, %v5229
    %v5314 = vpack.c.b16 %v5233, %v5230
    %v5315 = vpack.c.b16 %v5234, %v5231
    %v5316 = vpack.c.b16 %v5238, %v5235
    %v5317 = vpack.c.b16 %v5239, %v5236
    %v5318 = vpack.c.b16 %v5240, %v5237
    %v5319 = vpack.c.b16 %v5244, %v5241
    %v5320 = vpack.c.b16 %v5245, %v5242
    %v5321 = vpack.c.b16 %v5246, %v5243
    %v5322 = vpack.c.b16 %v5250, %v5247
    %v5323 = vpack.c.b16 %v5251, %v5248
    %v5324 = vpack.c.b16 %v5252, %v5249
    %v5325 = vpack.c.b16 %v5256, %v5253
    %v5326 = vpack.c.b16 %v5257, %v5254
    %v5327 = vpack.c.b16 %v5258, %v5255
    %v5328 = vpack.c.b16 %v5262, %v5259
    %v5329 = vpack.c.b16 %v5263, %v5260
    %v5330 = vpack.c.b16 %v5264, %v5261
    %v5331 = vpack.c.b16 %v5268, %v5265
    %v5332 = vpack.c.b16 %v5269, %v5266
    %v5333 = vpack.c.b16 %v5270, %v5267
    %v5334 = vpack.c.b16 %v5274, %v5271
    %v5335 = vpack.c.b16 %v5275, %v5272
    %v5336 = vpack.c.b16 %v5276, %v5273
    %5397 = vmatprep.subr.bf16.mxu0 %v5299
    %5398 = vmatpush1.bf16.msra.mxu0 %v5298
    %5399 = vmatprep.subr.bf16.mxu0 %v5296
    %5400 = vmatpush1.bf16.msra.mxu0 %v5295
    %5401 = vmatprep.subr.bf16.mxu0 %v5293
    %5402 = vmatpush1.bf16.msra.mxu0 %v5292
    %5403 = vmatprep.subr.bf16.mxu0 %v5290
    %5404 = vmatpush1.bf16.msra.mxu0 %v5289
    %5405 = vmatprep.subr.bf16.mxu0 %v5287
    %5406 = vmatpush1.bf16.msra.mxu0 %v5286
    %5407 = vmatprep.subr.bf16.mxu0 %v5284
    %5408 = vmatpush1.bf16.msra.mxu0 %v5283
    %5409 = vmatprep.subr.bf16.mxu0 %v5281
    %5410 = vmatpush1.bf16.msra.mxu0 %v5280
    %5411 = vmatprep.subr.bf16.mxu0 %v5278
    %5412 = vmatpush1.bf16.msra.mxu0 %v5277
    %5413 = vmatprep.subr.bf16.mxu0 %v5323
    %5414 = vmatpush2.bf16.msra.mxu0 %v5322
    %5415 = vmatprep.subr.bf16.mxu0 %v5320
    %5416 = vmatpush2.bf16.msra.mxu0 %v5319
    %5417 = vmatprep.subr.bf16.mxu0 %v5317
    %5418 = vmatpush2.bf16.msra.mxu0 %v5316
    %5419 = vmatprep.subr.bf16.mxu0 %v5314
    %5420 = vmatpush2.bf16.msra.mxu0 %v5313
    %5421 = vmatprep.subr.bf16.mxu0 %v5311
    %5422 = vmatpush2.bf16.msra.mxu0 %v5310
    %5423 = vmatprep.subr.bf16.mxu0 %v5308
    %5424 = vmatpush2.bf16.msra.mxu0 %v5307
    %5425 = vmatprep.subr.bf16.mxu0 %v5305
    %5426 = vmatpush2.bf16.msra.mxu0 %v5304
    %5427 = vmatprep.subr.bf16.mxu0 %v5302
    %5428 = vmatpush2.bf16.msra.mxu0 %v5301
    %5429 = vmatprep.mubr.bf16.mxu0 %v3160
    %5430 = vmatmul.mubr.bf16.gmra.mxu0 %v3159
    %v5431 = vpop.f32.mrf.mxu0
    %v5432 = vadd.f32 0.0, %v5431
    %v5433 = vpop.f32.mrf.mxu0
    %v5434 = vadd.f32 0.0, %v5433
    %v5435 = vpop.f32.mrf.mxu0
    %v5436 = vadd.f32 0.0, %v5435
    %v5437 = vpop.f32.mrf.mxu0
    %v5438 = vadd.f32 0.0, %v5437
    %5439 = vmatprep.mubr.bf16.mxu0 %v3163
    %5440 = vmatmul.mubr.bf16.gmra.mxu0 %v3162
    %v5441 = vpop.f32.mrf.mxu0
    %v5442 = vadd.f32 0.0, %v5441
    %v5443 = vpop.f32.mrf.mxu0
    %v5444 = vadd.f32 0.0, %v5443
    %v5445 = vpop.f32.mrf.mxu0
    %v5446 = vpop.f32.mrf.mxu0
    %5447 = vdwg.mxu0
    %5448 = vmatprep.subr.bf16.mxu0 0
    %5449 = vmatpush1.bf16.msra.mxu0 0
    %5450 = vmatprep.subr.bf16.mxu0 0
    %5451 = vmatpush1.bf16.msra.mxu0 0
    %5452 = vmatprep.subr.bf16.mxu0 0
    %5453 = vmatpush1.bf16.msra.mxu0 0
    %5454 = vmatprep.subr.bf16.mxu0 0
    %5455 = vmatpush1.bf16.msra.mxu0 0
    %5456 = vmatprep.subr.bf16.mxu0 %v5335
    %5457 = vmatpush1.bf16.msra.mxu0 %v5334
    %5458 = vmatprep.subr.bf16.mxu0 %v5332
    %5459 = vmatpush1.bf16.msra.mxu0 %v5331
    %5460 = vmatprep.subr.bf16.mxu0 %v5329
    %5461 = vmatpush1.bf16.msra.mxu0 %v5328
    %5462 = vmatprep.subr.bf16.mxu0 %v5326
    %5463 = vmatpush1.bf16.msra.mxu0 %v5325
    %5464 = vmatprep.subr.bf16.mxu0 0
    %5465 = vmatpush2.bf16.msra.mxu0 0
    %5466 = vmatprep.subr.bf16.mxu0 0
    %5467 = vmatpush2.bf16.msra.mxu0 0
    %5468 = vmatprep.subr.bf16.mxu0 0
    %5469 = vmatpush2.bf16.msra.mxu0 0
    %5470 = vmatprep.subr.bf16.mxu0 0
    %5471 = vmatpush2.bf16.msra.mxu0 0
    %5472 = vmatprep.subr.bf16.mxu0 0
    %5473 = vmatpush2.bf16.msra.mxu0 0
    %5474 = vmatprep.subr.bf16.mxu0 0
    %5475 = vmatpush2.bf16.msra.mxu0 0
    %5476 = vmatprep.subr.bf16.mxu0 0
    %5477 = vmatpush2.bf16.msra.mxu0 0
    %5478 = vmatprep.subr.bf16.mxu0 0
    %5479 = vmatpush2.bf16.msra.mxu0 0
    %5480 = vmatprep.mubr.bf16.mxu0 0
    %5481 = vmatmul.mubr.bf16.gmra.mxu0 %v3566
    %v5482 = vpop.f32.mrf.mxu0
    %v5483 = vadd.f32 %v5432, %v5482
    %v5484 = vpop.f32.mrf.mxu0
    %v5485 = vadd.f32 %v5434, %v5484
    %v5486 = vpop.f32.mrf.mxu0
    %v5487 = vadd.f32 %v5436, %v5486
    %v5488 = vpop.f32.mrf.mxu0
    %v5489 = vadd.f32 %v5438, %v5488
    %5490 = vmatprep.mubr.bf16.mxu0 0
    %5491 = vmatmul.mubr.bf16.gmra.mxu0 %v3569
    %v5492 = vpop.f32.mrf.mxu0
    %v5493 = vadd.f32 %v5442, %v5492
    %v5494 = vpop.f32.mrf.mxu0
    %v5495 = vadd.f32 %v5444, %v5494
    %v5496 = vpop.f32.mrf.mxu0
    %v5497 = vpop.f32.mrf.mxu0
    %5498 = vdwg.mxu0
    %5499 = vmatprep.subr.bf16.mxu0 0
    %5500 = vmatpush1.bf16.msra.mxu0 %v5300
    %5501 = vmatprep.subr.bf16.mxu0 0
    %5502 = vmatpush1.bf16.msra.mxu0 %v5297
    %5503 = vmatprep.subr.bf16.mxu0 0
    %5504 = vmatpush1.bf16.msra.mxu0 %v5294
    %5505 = vmatprep.subr.bf16.mxu0 0
    %5506 = vmatpush1.bf16.msra.mxu0 %v5291
    %5507 = vmatprep.subr.bf16.mxu0 0
    %5508 = vmatpush1.bf16.msra.mxu0 %v5288
    %5509 = vmatprep.subr.bf16.mxu0 0
    %5510 = vmatpush1.bf16.msra.mxu0 %v5285
    %5511 = vmatprep.subr.bf16.mxu0 0
    %5512 = vmatpush1.bf16.msra.mxu0 %v5282
    %5513 = vmatprep.subr.bf16.mxu0 0
    %5514 = vmatpush1.bf16.msra.mxu0 %v5279
    %5515 = vmatprep.subr.bf16.mxu0 0
    %5516 = vmatpush2.bf16.msra.mxu0 %v5324
    %5517 = vmatprep.subr.bf16.mxu0 0
    %5518 = vmatpush2.bf16.msra.mxu0 %v5321
    %5519 = vmatprep.subr.bf16.mxu0 0
    %5520 = vmatpush2.bf16.msra.mxu0 %v5318
    %5521 = vmatprep.subr.bf16.mxu0 0
    %5522 = vmatpush2.bf16.msra.mxu0 %v5315
    %5523 = vmatprep.subr.bf16.mxu0 0
    %5524 = vmatpush2.bf16.msra.mxu0 %v5312
    %5525 = vmatprep.subr.bf16.mxu0 0
    %5526 = vmatpush2.bf16.msra.mxu0 %v5309
    %5527 = vmatprep.subr.bf16.mxu0 0
    %5528 = vmatpush2.bf16.msra.mxu0 %v5306
    %5529 = vmatprep.subr.bf16.mxu0 0
    %5530 = vmatpush2.bf16.msra.mxu0 %v5303
    %5531 = vmatprep.mubr.bf16.mxu0 %v3160
    %5532 = vmatmul.mubr.bf16.gmra.mxu0 %v3159
    %v5533 = vpop.f32.mrf.mxu0
    %v5534 = vadd.f32 0.0, %v5533
    %v5535 = vpop.f32.mrf.mxu0
    %v5536 = vpop.f32.mrf.mxu0
    %v5537 = vadd.f32 0.0, %v5536
    %v5538 = vpop.f32.mrf.mxu0
    %5539 = vmatprep.mubr.bf16.mxu0 %v3163
    %5540 = vmatmul.mubr.bf16.gmra.mxu0 %v3162
    %v5541 = vpop.f32.mrf.mxu0
    %v5542 = vadd.f32 0.0, %v5541
    %v5543 = vpop.f32.mrf.mxu0
    %v5544 = vpop.f32.mrf.mxu0
    %v5545 = vpop.f32.mrf.mxu0
    %5546 = vdwg.mxu0
    %5547 = vmatprep.subr.bf16.mxu0 0
    %5548 = vmatpush1.bf16.msra.mxu0 0
    %5549 = vmatprep.subr.bf16.mxu0 0
    %5550 = vmatpush1.bf16.msra.mxu0 0
    %5551 = vmatprep.subr.bf16.mxu0 0
    %5552 = vmatpush1.bf16.msra.mxu0 0
    %5553 = vmatprep.subr.bf16.mxu0 0
    %5554 = vmatpush1.bf16.msra.mxu0 0
    %5555 = vmatprep.subr.bf16.mxu0 0
    %5556 = vmatpush1.bf16.msra.mxu0 %v5336
    %5557 = vmatprep.subr.bf16.mxu0 0
    %5558 = vmatpush1.bf16.msra.mxu0 %v5333
    %5559 = vmatprep.subr.bf16.mxu0 0
    %5560 = vmatpush1.bf16.msra.mxu0 %v5330
    %5561 = vmatprep.subr.bf16.mxu0 0
    %5562 = vmatpush1.bf16.msra.mxu0 %v5327
    %5563 = vmatprep.subr.bf16.mxu0 0
    %5564 = vmatpush2.bf16.msra.mxu0 0
    %5565 = vmatprep.subr.bf16.mxu0 0
    %5566 = vmatpush2.bf16.msra.mxu0 0
    %5567 = vmatprep.subr.bf16.mxu0 0
    %5568 = vmatpush2.bf16.msra.mxu0 0
    %5569 = vmatprep.subr.bf16.mxu0 0
    %5570 = vmatpush2.bf16.msra.mxu0 0
    %5571 = vmatprep.subr.bf16.mxu0 0
    %5572 = vmatpush2.bf16.msra.mxu0 0
    %5573 = vmatprep.subr.bf16.mxu0 0
    %5574 = vmatpush2.bf16.msra.mxu0 0
    %5575 = vmatprep.subr.bf16.mxu0 0
    %5576 = vmatpush2.bf16.msra.mxu0 0
    %5577 = vmatprep.subr.bf16.mxu0 0
    %5578 = vmatpush2.bf16.msra.mxu0 0
    %5579 = vmatprep.mubr.bf16.mxu0 0
    %5580 = vmatmul.mubr.bf16.gmra.mxu0 %v3566
    %v5581 = vpop.f32.mrf.mxu0
    %v5582 = vadd.f32 %v5534, %v5581
    %v5583 = vpop.f32.mrf.mxu0
    %v5584 = vpop.f32.mrf.mxu0
    %v5585 = vadd.f32 %v5537, %v5584
    %v5586 = vpop.f32.mrf.mxu0
    %5587 = vmatprep.mubr.bf16.mxu0 0
    %5588 = vmatmul.mubr.bf16.gmra.mxu0 %v3569
    %v5589 = vpop.f32.mrf.mxu0
    %v5590 = vadd.f32 %v5542, %v5589
    %v5591 = vpop.f32.mrf.mxu0
    %v5592 = vpop.f32.mrf.mxu0
    %v5593 = vpop.f32.mrf.mxu0
    %5594 = vdwg.mxu0
    %5595 = vst [vmem:[#allocation2 + $0xd8] sm:$0xff] %v5483
    %5596 = vst [vmem:[#allocation2 + $0xe0] sm:$0xff] %v5485
    %5597 = vst.msk [vmem:[#allocation2 + $0xe8] sm:$0xff] %vm3771, %v5582
    %5598 = vst [vmem:[#allocation2 + $0xf0] sm:$0xff] %v5487
    %5599 = vst [vmem:[#allocation2 + $0xf8] sm:$0xff] %v5489
    %5600 = vst.msk [vmem:[#allocation2 + $0x100] sm:$0xff] %vm3771, %v5585
    %5601 = vst [vmem:[#allocation2 + $0x108] sm:$0xf] %v5493
    %5602 = vst [vmem:[#allocation2 + $0x110] sm:$0xf] %v5495
    %5603 = vst.msk [vmem:[#allocation2 + $0x118] sm:$0xf] %vm3778, %v5590
    %v5604 = vld [vmem:[#allocation2] sm:$0xff]
    %v5605 = vld [vmem:[#allocation2 + $0x8] sm:$0xff]
    %v5606 = vld [vmem:[#allocation2 + $0x10] sm:$0xff]
    %v5607 = vld [vmem:[#allocation2 + $0x18] sm:$0xff]
    %v5608 = vld [vmem:[#allocation2 + $0x20] sm:$0xff]
    %v5609 = vld [vmem:[#allocation2 + $0x28] sm:$0xff]
    %v5610 = vld [vmem:[#allocation2 + $0x30] sm:$0xff]
    %v5611 = vld [vmem:[#allocation2 + $0x38] sm:$0xff]
    %v5612 = vld [vmem:[#allocation2 + $0x40] sm:$0xff]
    %v5613 = vld [vmem:[#allocation2 + $0x48] sm:$0xff]
    %v5614 = vld [vmem:[#allocation2 + $0x50] sm:$0xff]
    %v5615 = vld [vmem:[#allocation2 + $0x58] sm:$0xff]
    %v5616 = vld [vmem:[#allocation2 + $0x60] sm:$0xff]
    %v5617 = vld [vmem:[#allocation2 + $0x68] sm:$0xff]
    %v5618 = vld [vmem:[#allocation2 + $0x70] sm:$0xff]
    %v5619 = vld [vmem:[#allocation2 + $0x78] sm:$0xff]
    %v5620 = vld [vmem:[#allocation2 + $0x80] sm:$0xff]
    %v5621 = vld [vmem:[#allocation2 + $0x88] sm:$0xff]
    %v5622 = vld [vmem:[#allocation2 + $0x90] sm:$0xff]
    %v5623 = vld [vmem:[#allocation2 + $0x98] sm:$0xff]
    %v5624 = vld [vmem:[#allocation2 + $0xa0] sm:$0xff]
    %v5625 = vld [vmem:[#allocation2 + $0xa8] sm:$0xff]
    %v5626 = vld [vmem:[#allocation2 + $0xb0] sm:$0xff]
    %v5627 = vld [vmem:[#allocation2 + $0xb8] sm:$0xff]
    %v5628 = vld [vmem:[#allocation2 + $0xc0] sm:$0xff]
    %v5629 = vld [vmem:[#allocation2 + $0xc8] sm:$0xff]
    %v5630 = vld [vmem:[#allocation2 + $0xd0] sm:$0xff]
    %v5631 = vld [vmem:[#allocation2 + $0xd8] sm:$0xff]
    %v5632 = vld [vmem:[#allocation2 + $0xe0] sm:$0xff]
    %v5633 = vld [vmem:[#allocation2 + $0xe8] sm:$0xff]
    %v5634 = vld [vmem:[#allocation2 + $0xf0] sm:$0xff]
    %v5635 = vld [vmem:[#allocation2 + $0xf8] sm:$0xff]
    %v5636 = vld [vmem:[#allocation2 + $0x100] sm:$0xff]
    %v5637 = vld [vmem:[#allocation2 + $0x108] sm:$0xff]
    %v5638 = vld [vmem:[#allocation2 + $0x110] sm:$0xff]
    %v5639 = vld [vmem:[#allocation2 + $0x118] sm:$0xff]
    %v5640 = vpack.c.bf16 %v5607, %v5604
    %v5641 = vpack.c.bf16 %v5608, %v5605
    %v5642 = vpack.c.bf16 %v5609, %v5606
    %v5643 = vpack.c.bf16 %v5613, %v5610
    %v5644 = vpack.c.bf16 %v5614, %v5611
    %v5645 = vpack.c.bf16 %v5615, %v5612
    %v5646 = vpack.c.bf16 %v5619, %v5616
    %v5647 = vpack.c.bf16 %v5620, %v5617
    %v5648 = vpack.c.bf16 %v5621, %v5618
    %v5649 = vpack.c.bf16 %v5625, %v5622
    %v5650 = vpack.c.bf16 %v5626, %v5623
    %v5651 = vpack.c.bf16 %v5627, %v5624
    %v5652 = vpack.c.bf16 %v5631, %v5628
    %v5653 = vpack.c.bf16 %v5632, %v5629
    %v5654 = vpack.c.bf16 %v5633, %v5630
    %v5655 = vpack.c.bf16 %v5637, %v5634
    %v5656 = vpack.c.bf16 %v5638, %v5635
    %v5657 = vpack.c.bf16 %v5639, %v5636
    %v5658 = vld [vmem:[%s12] sm:$0xf]
    %v5659 = vld [vmem:[%s12 + $0x4] sm:$0xf]
    %v5660 = vld [vmem:[%s12 + $0x8] sm:$0xf]
    %v5661 = vld [vmem:[%s12 + $0xc] sm:$0xf]
    %v5662 = vld [vmem:[%s12 + $0x10] sm:$0xf]
    %v5663 = vld [vmem:[%s12 + $0x14] sm:$0x3]
    %v5670 = vunpack.c.l.b16 %v5658
    %v5671 = vunpack.c.l.b16 %v5659
    %v5672 = vunpack.c.l.b16 %v5660
    %v5673 = vunpack.c.l.b16 %v5661
    %v5674 = vunpack.c.l.b16 %v5662
    %v5675 = vunpack.c.l.b16 %v5663
    %v5676 = vpack.c.b16 %v5671, %v5670
    %v5677 = vpack.c.b16 %v5673, %v5672
    %v5678 = vpack.c.b16 %v5675, %v5674
    %v5680 = vsel %vm3771, %v5676, 0
    %v5683 = vsel %vm3771, %v5677, 0
    %v5686 = vsel %vm3771, %v5678, 0
    %5688 = vmatprep.subr.bf16.mxu0 0
    %5689 = vmatpush1.bf16.msra.mxu0 0
    %5690 = vmatprep.subr.bf16.mxu0 0
    %5691 = vmatpush1.bf16.msra.mxu0 0
    %5692 = vmatprep.subr.bf16.mxu0 %v5656
    %5693 = vmatpush1.bf16.msra.mxu0 %v5655
    %5694 = vmatprep.subr.bf16.mxu0 %v5653
    %5695 = vmatpush1.bf16.msra.mxu0 %v5652
    %5696 = vmatprep.subr.bf16.mxu0 %v5650
    %5697 = vmatpush1.bf16.msra.mxu0 %v5649
    %5698 = vmatprep.subr.bf16.mxu0 %v5647
    %5699 = vmatpush1.bf16.msra.mxu0 %v5646
    %5700 = vmatprep.subr.bf16.mxu0 %v5644
    %5701 = vmatpush1.bf16.msra.mxu0 %v5643
    %5702 = vmatprep.subr.bf16.mxu0 %v5641
    %5703 = vmatpush1.bf16.msra.mxu0 %v5640
    %5704 = vmatprep.subr.bf16.mxu0 0
    %5705 = vmatpush2.bf16.msra.mxu0 0
    %5706 = vmatprep.subr.bf16.mxu0 0
    %5707 = vmatpush2.bf16.msra.mxu0 0
    %5708 = vmatprep.subr.bf16.mxu0 0
    %5709 = vmatpush2.bf16.msra.mxu0 0
    %5710 = vmatprep.subr.bf16.mxu0 0
    %5711 = vmatpush2.bf16.msra.mxu0 0
    %5712 = vmatprep.subr.bf16.mxu0 0
    %5713 = vmatpush2.bf16.msra.mxu0 0
    %5714 = vmatprep.subr.bf16.mxu0 0
    %5715 = vmatpush2.bf16.msra.mxu0 0
    %5716 = vmatprep.subr.bf16.mxu0 0
    %5717 = vmatpush2.bf16.msra.mxu0 0
    %5718 = vmatprep.subr.bf16.mxu0 0
    %5719 = vmatpush2.bf16.msra.mxu0 0
    %5720 = vmatprep.mubr.bf16.mxu0 0
    %5721 = vmatmul.mubr.bf16.gmra.mxu0 %v5680
    %v5722 = vpop.f32.mrf.mxu0
    %v5723 = vadd.f32 0.0, %v5722
    %v5724 = vpop.f32.mrf.mxu0
    %v5725 = vadd.f32 0.0, %v5724
    %v5726 = vpop.f32.mrf.mxu0
    %v5727 = vadd.f32 0.0, %v5726
    %v5728 = vpop.f32.mrf.mxu0
    %v5729 = vadd.f32 0.0, %v5728
    %5730 = vmatprep.mubr.bf16.mxu0 0
    %5731 = vmatmul.mubr.bf16.gmra.mxu0 %v5683
    %v5732 = vpop.f32.mrf.mxu0
    %v5733 = vadd.f32 0.0, %v5732
    %v5734 = vpop.f32.mrf.mxu0
    %v5735 = vadd.f32 0.0, %v5734
    %v5736 = vpop.f32.mrf.mxu0
    %v5737 = vadd.f32 0.0, %v5736
    %v5738 = vpop.f32.mrf.mxu0
    %v5739 = vadd.f32 0.0, %v5738
    %5740 = vmatprep.mubr.bf16.mxu0 0
    %5741 = vmatmul.mubr.bf16.gmra.mxu0 %v5686
    %v5742 = vpop.f32.mrf.mxu0
    %v5743 = vadd.f32 0.0, %v5742
    %v5744 = vpop.f32.mrf.mxu0
    %v5745 = vadd.f32 0.0, %v5744
    %v5746 = vpop.f32.mrf.mxu0
    %v5747 = vadd.f32 0.0, %v5746
    %v5748 = vpop.f32.mrf.mxu0
    %v5749 = vadd.f32 0.0, %v5748
    %5750 = vdwg.mxu0
    %5751 = vmatprep.subr.bf16.mxu0 0
    %5752 = vmatpush1.bf16.msra.mxu0 0
    %5753 = vmatprep.subr.bf16.mxu0 0
    %5754 = vmatpush1.bf16.msra.mxu0 0
    %5755 = vmatprep.subr.bf16.mxu0 0
    %5756 = vmatpush1.bf16.msra.mxu0 %v5657
    %5757 = vmatprep.subr.bf16.mxu0 0
    %5758 = vmatpush1.bf16.msra.mxu0 %v5654
    %5759 = vmatprep.subr.bf16.mxu0 0
    %5760 = vmatpush1.bf16.msra.mxu0 %v5651
    %5761 = vmatprep.subr.bf16.mxu0 0
    %5762 = vmatpush1.bf16.msra.mxu0 %v5648
    %5763 = vmatprep.subr.bf16.mxu0 0
    %5764 = vmatpush1.bf16.msra.mxu0 %v5645
    %5765 = vmatprep.subr.bf16.mxu0 0
    %5766 = vmatpush1.bf16.msra.mxu0 %v5642
    %5767 = vmatprep.subr.bf16.mxu0 0
    %5768 = vmatpush2.bf16.msra.mxu0 0
    %5769 = vmatprep.subr.bf16.mxu0 0
    %5770 = vmatpush2.bf16.msra.mxu0 0
    %5771 = vmatprep.subr.bf16.mxu0 0
    %5772 = vmatpush2.bf16.msra.mxu0 0
    %5773 = vmatprep.subr.bf16.mxu0 0
    %5774 = vmatpush2.bf16.msra.mxu0 0
    %5775 = vmatprep.subr.bf16.mxu0 0
    %5776 = vmatpush2.bf16.msra.mxu0 0
    %5777 = vmatprep.subr.bf16.mxu0 0
    %5778 = vmatpush2.bf16.msra.mxu0 0
    %5779 = vmatprep.subr.bf16.mxu0 0
    %5780 = vmatpush2.bf16.msra.mxu0 0
    %5781 = vmatprep.subr.bf16.mxu0 0
    %5782 = vmatpush2.bf16.msra.mxu0 0
    %5783 = vmatprep.mubr.bf16.mxu0 0
    %5784 = vmatmul.mubr.bf16.gmra.mxu0 %v5680
    %v5785 = vpop.f32.mrf.mxu0
    %v5786 = vadd.f32 0.0, %v5785
    %v5787 = vpop.f32.mrf.mxu0
    %v5788 = vpop.f32.mrf.mxu0
    %v5789 = vadd.f32 0.0, %v5788
    %v5790 = vpop.f32.mrf.mxu0
    %5791 = vmatprep.mubr.bf16.mxu0 0
    %5792 = vmatmul.mubr.bf16.gmra.mxu0 %v5683
    %v5793 = vpop.f32.mrf.mxu0
    %v5794 = vadd.f32 0.0, %v5793
    %v5795 = vpop.f32.mrf.mxu0
    %v5796 = vpop.f32.mrf.mxu0
    %v5797 = vadd.f32 0.0, %v5796
    %v5798 = vpop.f32.mrf.mxu0
    %5799 = vmatprep.mubr.bf16.mxu0 0
    %5800 = vmatmul.mubr.bf16.gmra.mxu0 %v5686
    %v5801 = vpop.f32.mrf.mxu0
    %v5802 = vadd.f32 0.0, %v5801
    %v5803 = vpop.f32.mrf.mxu0
    %v5804 = vpop.f32.mrf.mxu0
    %v5805 = vadd.f32 0.0, %v5804
    %v5806 = vpop.f32.mrf.mxu0
    %5807 = vdwg.mxu0
    %v5808 = vadd.f32 %v5723, %v5727
    %v5809 = vadd.f32 %v5808, %v5733
    %v5810 = vadd.f32 %v5809, %v5737
    %v5811 = vadd.f32 %v5810, %v5743
    %v5812 = vsel %vm2597, %v5747, 0.0
    %v5813 = vadd.f32 %v5811, %v5812
    %v5814 = vrot.slane %v5813, 4
    %v5815 = vadd.f32 %v5813, %v5814
    %v5816 = vrot.slane %v5815, 2
    %v5817 = vadd.f32 %v5815, %v5816
    %v5818 = vrot.slane %v5817, 1
    %v5819 = vadd.f32 %v5817, %v5818
    %v5820 = vadd.f32 %v5725, %v5729
    %v5821 = vadd.f32 %v5820, %v5735
    %v5822 = vadd.f32 %v5821, %v5739
    %v5823 = vadd.f32 %v5822, %v5745
    %v5824 = vsel %vm2597, %v5749, 0.0
    %v5825 = vadd.f32 %v5823, %v5824
    %v5826 = vrot.slane %v5825, 4
    %v5827 = vadd.f32 %v5825, %v5826
    %v5828 = vrot.slane %v5827, 2
    %v5829 = vadd.f32 %v5827, %v5828
    %v5830 = vrot.slane %v5829, 1
    %v5831 = vadd.f32 %v5829, %v5830
    %v5832 = vsel %vm3771, %v5786, 0.0
    %v5833 = vsel %vm3771, %v5789, 0.0
    %v5834 = vadd.f32 %v5832, %v5833
    %v5835 = vsel %vm3771, %v5794, 0.0
    %v5836 = vadd.f32 %v5834, %v5835
    %v5837 = vsel %vm3771, %v5797, 0.0
    %v5838 = vadd.f32 %v5836, %v5837
    %v5839 = vsel %vm3771, %v5802, 0.0
    %v5840 = vadd.f32 %v5838, %v5839
    %v5841 = vsel %vm3778, %v5805, 0.0
    %v5842 = vadd.f32 %v5840, %v5841
    %v5843 = vrot.slane %v5842, 4
    %v5844 = vadd.f32 %v5842, %v5843
    %v5845 = vrot.slane %v5844, 2
    %v5846 = vadd.f32 %v5844, %v5845
    %v5847 = vrot.slane %v5846, 1
    %v5848 = vadd.f32 %v5846, %v5847
    %v5852 = vcombine.low %v5819, %v5831
    %v5854 = vunpack.c.l.s4 1966171168
    %v5855 = vunpack.c.0.s8 %v5854
    %v5856 = vlaneseq
    %v5857 = vshrl.u32 %v5856, 7
    %v5858 = vsub.s32 %v5855, %v5857
    %v5859 = vrot.slane %v5852, %v5858
    %v5861 = vunpack.c.l.s4 1966171168
    %v5862 = vunpack.c.0.s8 %v5861
    %v5863 = vlaneseq
    %v5864 = vshrl.u32 %v5863, 7
    %v5865 = vsub.s32 %v5862, %v5864
    %v5866 = vrot.slane %v5848, %v5865
    %v5867 = vcombine.low %v5859, %v5866
    %v5869 = vunpack.c.l.s4 1966171168
    %v5870 = vunpack.c.0.s8 %v5869
    %v5871 = vlaneseq
    %v5872 = vshrl.u32 %v5871, 7
    %v5873 = vsub.s32 %v5870, %v5872
    %v5874 = vrot.slane %v5867, %v5873
    %vm5876 = vcmp.lt.s32.totalorder %v499, 352
    %vm5877 = vmand %vm500, %vm5876
    %5878 = vst.msk [vmem:[#allocation3] ss:$8 sm:$0x7] %vm5877, %v5874
    %5879 = vst.msk [vmem:[#allocation3] ss:$8 sm:$0x0] %vm5877, %v5874
    %v5880 = vmul.f32 %v5723, %v5723
    %v5881 = vmul.f32 %v5725, %v5725
    %v5882 = vmul.f32 %v5786, %v5786
    %v5883 = vmul.f32 %v5727, %v5727
    %v5884 = vmul.f32 %v5729, %v5729
    %v5885 = vmul.f32 %v5789, %v5789
    %v5886 = vmul.f32 %v5733, %v5733
    %v5887 = vmul.f32 %v5735, %v5735
    %v5888 = vmul.f32 %v5794, %v5794
    %v5889 = vmul.f32 %v5737, %v5737
    %v5890 = vmul.f32 %v5739, %v5739
    %v5891 = vmul.f32 %v5797, %v5797
    %v5892 = vmul.f32 %v5743, %v5743
    %v5893 = vmul.f32 %v5745, %v5745
    %v5894 = vmul.f32 %v5802, %v5802
    %v5895 = vmul.f32 %v5747, %v5747
    %v5896 = vmul.f32 %v5749, %v5749
    %v5897 = vmul.f32 %v5805, %v5805
    %v5898 = vadd.f32 %v5880, %v5883
    %v5899 = vadd.f32 %v5898, %v5886
    %v5900 = vadd.f32 %v5899, %v5889
    %v5901 = vadd.f32 %v5900, %v5892
    %v5902 = vsel %vm2597, %v5895, 0.0
    %v5903 = vadd.f32 %v5901, %v5902
    %v5904 = vrot.slane %v5903, 4
    %v5905 = vadd.f32 %v5903, %v5904
    %v5906 = vrot.slane %v5905, 2
    %v5907 = vadd.f32 %v5905, %v5906
    %v5908 = vrot.slane %v5907, 1
    %v5909 = vadd.f32 %v5907, %v5908
    %v5910 = vadd.f32 %v5881, %v5884
    %v5911 = vadd.f32 %v5910, %v5887
    %v5912 = vadd.f32 %v5911, %v5890
    %v5913 = vadd.f32 %v5912, %v5893
    %v5914 = vsel %vm2597, %v5896, 0.0
    %v5915 = vadd.f32 %v5913, %v5914
    %v5916 = vrot.slane %v5915, 4
    %v5917 = vadd.f32 %v5915, %v5916
    %v5918 = vrot.slane %v5917, 2
    %v5919 = vadd.f32 %v5917, %v5918
    %v5920 = vrot.slane %v5919, 1
    %v5921 = vadd.f32 %v5919, %v5920
    %v5922 = vsel %vm3771, %v5882, 0.0
    %v5923 = vsel %vm3771, %v5885, 0.0
    %v5924 = vadd.f32 %v5922, %v5923
    %v5925 = vsel %vm3771, %v5888, 0.0
    %v5926 = vadd.f32 %v5924, %v5925
    %v5927 = vsel %vm3771, %v5891, 0.0
    %v5928 = vadd.f32 %v5926, %v5927
    %v5929 = vsel %vm3771, %v5894, 0.0
    %v5930 = vadd.f32 %v5928, %v5929
    %v5931 = vsel %vm3778, %v5897, 0.0
    %v5932 = vadd.f32 %v5930, %v5931
    %v5933 = vrot.slane %v5932, 4
    %v5934 = vadd.f32 %v5932, %v5933
    %v5935 = vrot.slane %v5934, 2
    %v5936 = vadd.f32 %v5934, %v5935
    %v5937 = vrot.slane %v5936, 1
    %v5938 = vadd.f32 %v5936, %v5937
    %v5942 = vcombine.low %v5909, %v5921
    %v5944 = vunpack.c.l.s4 1966171168
    %v5945 = vunpack.c.0.s8 %v5944
    %v5946 = vlaneseq
    %v5947 = vshrl.u32 %v5946, 7
    %v5948 = vsub.s32 %v5945, %v5947
    %v5949 = vrot.slane %v5942, %v5948
    %v5951 = vunpack.c.l.s4 1966171168
    %v5952 = vunpack.c.0.s8 %v5951
    %v5953 = vlaneseq
    %v5954 = vshrl.u32 %v5953, 7
    %v5955 = vsub.s32 %v5952, %v5954
    %v5956 = vrot.slane %v5938, %v5955
    %v5957 = vcombine.low %v5949, %v5956
    %v5959 = vunpack.c.l.s4 1966171168
    %v5960 = vunpack.c.0.s8 %v5959
    %v5961 = vlaneseq
    %v5962 = vshrl.u32 %v5961, 7
    %v5963 = vsub.s32 %v5960, %v5962
    %v5964 = vrot.slane %v5957, %v5963
    %5966 = vst.msk [vmem:[%s2723] ss:$8 sm:$0x7] %vm5877, %v5964
    %5967 = vst.msk [vmem:[%s2723] ss:$8 sm:$0x0] %vm5877, %v5964
    %v5968 = vld [vmem:[#allocation3] sm:$0x3]
    %v5969 = vld [vmem:[#allocation3 + $0x8] sm:$0x3]
    %v5970 = vld [vmem:[#allocation3 + $0x10] sm:$0x3]
    %v5971 = vld [vmem:[%s14] sm:$0xf]
    %v5972 = vld [vmem:[%s14 + $0x4] sm:$0xf]
    %v5973 = vld [vmem:[%s14 + $0x8] sm:$0xf]
    %v5974 = vld [vmem:[%s14 + $0xc] sm:$0xf]
    %v5975 = vld [vmem:[%s14 + $0x10] sm:$0xf]
    %v5976 = vld [vmem:[%s14 + $0x14] sm:$0xf]
    %v5977 = vld [vmem:[%s14 + $0x18] sm:$0xf]
    %v5978 = vld [vmem:[%s14 + $0x1c] sm:$0xf]
    %v5979 = vld [vmem:[%s14 + $0x20] sm:$0xf]
    %v5980 = vld [vmem:[%s14 + $0x24] sm:$0xf]
    %v5981 = vld [vmem:[%s14 + $0x28] sm:$0xf]
    %v5982 = vld [vmem:[%s14 + $0x2c] sm:$0xf]
    %v5983 = vld [vmem:[%s14 + $0x30] sm:$0xf]
    %v5984 = vld [vmem:[%s14 + $0x34] sm:$0xf]
    %v5985 = vld [vmem:[%s14 + $0x38] sm:$0xf]
    %v5986 = vld [vmem:[%s14 + $0x3c] sm:$0xf]
    %v5987 = vld [vmem:[%s14 + $0x40] sm:$0xf]
    %v5988 = vld [vmem:[%s14 + $0x44] sm:$0xf]
    %v5989 = vld [vmem:[%s14 + $0x48] sm:$0xf]
    %v5990 = vld [vmem:[%s14 + $0x4c] sm:$0xf]
    %v5991 = vld [vmem:[%s14 + $0x50] sm:$0xf]
    %v5992 = vld [vmem:[%s14 + $0x54] sm:$0xf]
    %v5993 = vld [vmem:[%s14 + $0x58] sm:$0xf]
    %v5994 = vld [vmem:[%s14 + $0x5c] sm:$0xf]
    %v5995 = vld [vmem:[%s14 + $0x60] sm:$0xf]
    %v5996 = vld [vmem:[%s14 + $0x64] sm:$0xf]
    %v5997 = vld [vmem:[%s14 + $0x68] sm:$0xf]
    %v5998 = vld [vmem:[%s14 + $0x6c] sm:$0xf]
    %v5999 = vld [vmem:[%s14 + $0x70] sm:$0xf]
    %v6000 = vld [vmem:[%s14 + $0x74] sm:$0xf]
    %v6001 = vld [vmem:[%s14 + $0x78] sm:$0xf]
    %v6002 = vld [vmem:[%s14 + $0x7c] sm:$0xf]
    %v6003 = vld [vmem:[%s14 + $0x80] sm:$0xf]
    %v6004 = vld [vmem:[%s14 + $0x84] sm:$0xf]
    %v6005 = vld [vmem:[%s14 + $0x88] sm:$0xf]
    %v6006 = vld [vmem:[%s14 + $0x8c] sm:$0xf]
    %v6007 = vld [vmem:[%s14 + $0x90] sm:$0xf]
    %v6008 = vld [vmem:[%s14 + $0x94] sm:$0xf]
    %v6009 = vld [vmem:[%s14 + $0x98] sm:$0xf]
    %v6010 = vld [vmem:[%s14 + $0x9c] sm:$0xf]
    %v6011 = vld [vmem:[%s14 + $0xa0] sm:$0xf]
    %v6012 = vld [vmem:[%s14 + $0xa4] sm:$0xf]
    %v6013 = vld [vmem:[%s14 + $0xa8] sm:$0xf]
    %v6014 = vld [vmem:[%s14 + $0xac] sm:$0xf]
    %v6059 = vunpack.c.l.b16 %v5971
    %v6060 = vunpack.c.l.b16 %v5972
    %v6061 = vunpack.c.l.b16 %v5973
    %v6062 = vunpack.c.l.b16 %v5974
    %v6063 = vunpack.c.l.b16 %v5975
    %v6064 = vunpack.c.l.b16 %v5976
    %v6065 = vunpack.c.l.b16 %v5977
    %v6066 = vunpack.c.l.b16 %v5978
    %v6067 = vunpack.c.l.b16 %v5979
    %v6068 = vunpack.c.l.b16 %v5980
    %v6069 = vunpack.c.l.b16 %v5981
    %v6070 = vunpack.c.l.b16 %v5982
    %v6071 = vunpack.c.l.b16 %v5983
    %v6072 = vunpack.c.l.b16 %v5984
    %v6073 = vunpack.c.l.b16 %v5985
    %v6074 = vunpack.c.l.b16 %v5986
    %v6075 = vunpack.c.l.b16 %v5987
    %v6076 = vunpack.c.l.b16 %v5988
    %v6077 = vunpack.c.l.b16 %v5989
    %v6078 = vunpack.c.l.b16 %v5990
    %v6079 = vunpack.c.l.b16 %v5991
    %v6080 = vunpack.c.l.b16 %v5992
    %v6081 = vunpack.c.l.b16 %v5993
    %v6082 = vunpack.c.l.b16 %v5994
    %v6083 = vunpack.c.l.b16 %v5995
    %v6084 = vunpack.c.l.b16 %v5996
    %v6085 = vunpack.c.l.b16 %v5997
    %v6086 = vunpack.c.l.b16 %v5998
    %v6087 = vunpack.c.l.b16 %v5999
    %v6088 = vunpack.c.l.b16 %v6000
    %v6089 = vunpack.c.l.b16 %v6001
    %v6090 = vunpack.c.l.b16 %v6002
    %v6091 = vunpack.c.l.b16 %v6003
    %v6092 = vunpack.c.l.b16 %v6004
    %v6093 = vunpack.c.l.b16 %v6005
    %v6094 = vunpack.c.l.b16 %v6006
    %v6095 = vunpack.c.l.b16 %v6007
    %v6096 = vunpack.c.l.b16 %v6008
    %v6097 = vunpack.c.l.b16 %v6009
    %v6098 = vunpack.c.l.b16 %v6010
    %v6099 = vunpack.c.l.b16 %v6011
    %v6100 = vunpack.c.l.b16 %v6012
    %v6101 = vunpack.c.l.b16 %v6013
    %v6102 = vunpack.c.l.b16 %v6014
    %v6103 = vpack.c.b16 %v6060, %v6059
    %v6104 = vpack.c.b16 %v6062, %v6061
    %v6105 = vpack.c.b16 %v6064, %v6063
    %v6106 = vpack.c.b16 %v6066, %v6065
    %v6107 = vpack.c.b16 %v6068, %v6067
    %v6108 = vpack.c.b16 %v6070, %v6069
    %v6109 = vpack.c.b16 %v6072, %v6071
    %v6110 = vpack.c.b16 %v6074, %v6073
    %v6111 = vpack.c.b16 %v6076, %v6075
    %v6112 = vpack.c.b16 %v6078, %v6077
    %v6113 = vpack.c.b16 %v6080, %v6079
    %v6114 = vpack.c.b16 %v6082, %v6081
    %v6115 = vpack.c.b16 %v6084, %v6083
    %v6116 = vpack.c.b16 %v6086, %v6085
    %v6117 = vpack.c.b16 %v6088, %v6087
    %v6118 = vpack.c.b16 %v6090, %v6089
    %v6119 = vpack.c.b16 %v6092, %v6091
    %v6120 = vpack.c.b16 %v6094, %v6093
    %v6121 = vpack.c.b16 %v6096, %v6095
    %v6122 = vpack.c.b16 %v6098, %v6097
    %v6123 = vpack.c.b16 %v6100, %v6099
    %v6124 = vpack.c.b16 %v6102, %v6101
    %v6148 = vsel %vm3771, %v5970, 0
    %6150 = vmatprep.subr.bf16.mxu0 0
    %6151 = vmatpush1.bf16.msra.mxu0 %v6110
    %6152 = vmatprep.subr.bf16.mxu0 0
    %6153 = vmatpush1.bf16.msra.mxu0 %v6109
    %6154 = vmatprep.subr.bf16.mxu0 0
    %6155 = vmatpush1.bf16.msra.mxu0 %v6108
    %6156 = vmatprep.subr.bf16.mxu0 0
    %6157 = vmatpush1.bf16.msra.mxu0 %v6107
    %6158 = vmatprep.subr.bf16.mxu0 0
    %6159 = vmatpush1.bf16.msra.mxu0 %v6106
    %6160 = vmatprep.subr.bf16.mxu0 0
    %6161 = vmatpush1.bf16.msra.mxu0 %v6105
    %6162 = vmatprep.subr.bf16.mxu0 0
    %6163 = vmatpush1.bf16.msra.mxu0 %v6104
    %6164 = vmatprep.subr.bf16.mxu0 0
    %6165 = vmatpush1.bf16.msra.mxu0 %v6103
    %6166 = vmatprep.subr.bf16.mxu0 0
    %6167 = vmatpush2.bf16.msra.mxu0 %v6118
    %6168 = vmatprep.subr.bf16.mxu0 0
    %6169 = vmatpush2.bf16.msra.mxu0 %v6117
    %6170 = vmatprep.subr.bf16.mxu0 0
    %6171 = vmatpush2.bf16.msra.mxu0 %v6116
    %6172 = vmatprep.subr.bf16.mxu0 0
    %6173 = vmatpush2.bf16.msra.mxu0 %v6115
    %6174 = vmatprep.subr.bf16.mxu0 0
    %6175 = vmatpush2.bf16.msra.mxu0 %v6114
    %6176 = vmatprep.subr.bf16.mxu0 0
    %6177 = vmatpush2.bf16.msra.mxu0 %v6113
    %6178 = vmatprep.subr.bf16.mxu0 0
    %6179 = vmatpush2.bf16.msra.mxu0 %v6112
    %6180 = vmatprep.subr.bf16.mxu0 0
    %6181 = vmatpush2.bf16.msra.mxu0 %v6111
    %6182 = vmatprep.mubr.f32.mxu0 %v5969
    %6183 = vmatmul.mubr.f32.gmra.mxu0 %v5968
    %v6184 = vpop.f32.mrf.mxu0
    %v6185 = vadd.f32 0.0, %v6184
    %v6186 = vpop.f32.mrf.mxu0
    %6187 = vdwg.mxu0
    %6188 = vmatprep.subr.bf16.mxu0 0
    %6189 = vmatpush1.bf16.msra.mxu0 0
    %6190 = vmatprep.subr.bf16.mxu0 0
    %6191 = vmatpush1.bf16.msra.mxu0 0
    %6192 = vmatprep.subr.bf16.mxu0 0
    %6193 = vmatpush1.bf16.msra.mxu0 %v6124
    %6194 = vmatprep.subr.bf16.mxu0 0
    %6195 = vmatpush1.bf16.msra.mxu0 %v6123
    %6196 = vmatprep.subr.bf16.mxu0 0
    %6197 = vmatpush1.bf16.msra.mxu0 %v6122
    %6198 = vmatprep.subr.bf16.mxu0 0
    %6199 = vmatpush1.bf16.msra.mxu0 %v6121
    %6200 = vmatprep.subr.bf16.mxu0 0
    %6201 = vmatpush1.bf16.msra.mxu0 %v6120
    %6202 = vmatprep.subr.bf16.mxu0 0
    %6203 = vmatpush1.bf16.msra.mxu0 %v6119
    %6204 = vmatprep.subr.bf16.mxu0 0
    %6205 = vmatpush2.bf16.msra.mxu0 0
    %6206 = vmatprep.subr.bf16.mxu0 0
    %6207 = vmatpush2.bf16.msra.mxu0 0
    %6208 = vmatprep.subr.bf16.mxu0 0
    %6209 = vmatpush2.bf16.msra.mxu0 0
    %6210 = vmatprep.subr.bf16.mxu0 0
    %6211 = vmatpush2.bf16.msra.mxu0 0
    %6212 = vmatprep.subr.bf16.mxu0 0
    %6213 = vmatpush2.bf16.msra.mxu0 0
    %6214 = vmatprep.subr.bf16.mxu0 0
    %6215 = vmatpush2.bf16.msra.mxu0 0
    %6216 = vmatprep.subr.bf16.mxu0 0
    %6217 = vmatpush2.bf16.msra.mxu0 0
    %6218 = vmatprep.subr.bf16.mxu0 0
    %6219 = vmatpush2.bf16.msra.mxu0 0
    %6220 = vmatprep.mubr.f32.mxu0 0.0
    %6221 = vmatmul.mubr.f32.gmra.mxu0 %v6148
    %v6222 = vpop.f32.mrf.mxu0
    %v6223 = vadd.f32 %v6185, %v6222
    %v6224 = vpop.f32.mrf.mxu0
    %6225 = vdwg.mxu0
    %v6226 = vmul.f32 %v6223, 0.0010330578
    %v6227 = vmul.f32 %v6226, %v6226
    %v6229 = vrot.slane %v6227, 7
    %v6231 = vsub.f32 %v6226, %v6229
    %v6232 = vld [vmem:[%s13] sm:$0x1]
    %v6233 = vadd.f32 %v6231, 1e-05
    %v6234 = vrsqrt.pop %v6233
    %v6236 = vrot.slane %v6234, 1
    %v6238 = vmul.f32 %v6232, %v6236
    %v6239 = vld [vmem:[%s13 + $0x1] sm:$0x1]
    %v6240 = vmul.f32 %v6226, %v6238
    %v6241 = vsub.f32 %v6239, %v6240
    %vm6242 = vcmask 122880
    %6243 = vst.msk [vmem:[#allocation3] sm:$0x1] %vm6242, %v6238
    %6244 = vst.msk [vmem:[#allocation3 + $0x1] sm:$0x1] %vm6242, %v6241
    %v6245 = vld [vmem:[#allocation3] sm:$0x3]
    %v6246 = vld [vmem:[%s15] sm:$0xff]
    %v6247 = vld [vmem:[%s15 + $0x8] sm:$0xf]
    %v6248 = vld [vmem:[%s15 + $0xc] sm:$0xff]
    %v6249 = vld [vmem:[%s15 + $0x14] sm:$0xf]
    %v6254 = vunpack.c.l.b16 %v6246
    %v6255 = vunpack.c.h.b16 %v6246
    %v6256 = vunpack.c.l.b16 %v6247
    %v6257 = vunpack.c.l.b16 %v6248
    %v6258 = vunpack.c.h.b16 %v6248
    %v6259 = vunpack.c.l.b16 %v6249
    %v6260 = vpack.c.b16 %v6257, %v6254
    %v6261 = vpack.c.b16 %v6258, %v6255
    %v6262 = vpack.c.b16 %v6259, %v6256
    %vm6266 = vcmask 130048
    %v6268 = vsel %vm6266, %v6245, 0
    %6270 = vmatprep.subr.bf16.mxu0 0
    %6271 = vmatpush1.bf16.msra.mxu0 0
    %6272 = vmatprep.subr.bf16.mxu0 0
    %6273 = vmatpush1.bf16.msra.mxu0 0
    %6274 = vmatprep.subr.bf16.mxu0 0
    %6275 = vmatpush1.bf16.msra.mxu0 0
    %6276 = vmatprep.subr.bf16.mxu0 0
    %6277 = vmatpush1.bf16.msra.mxu0 0
    %6278 = vmatprep.subr.bf16.mxu0 0
    %6279 = vmatpush1.bf16.msra.mxu0 0
    %6280 = vmatprep.subr.bf16.mxu0 0
    %6281 = vmatpush1.bf16.msra.mxu0 0
    %6282 = vmatprep.subr.bf16.mxu0 0
    %6283 = vmatpush1.bf16.msra.mxu0 0
    %6284 = vmatprep.subr.bf16.mxu0 %v6261
    %6285 = vmatpush1.bf16.msra.mxu0 %v6260
    %6286 = vmatprep.subr.bf16.mxu0 0
    %6287 = vmatpush2.bf16.msra.mxu0 0
    %6288 = vmatprep.subr.bf16.mxu0 0
    %6289 = vmatpush2.bf16.msra.mxu0 0
    %6290 = vmatprep.subr.bf16.mxu0 0
    %6291 = vmatpush2.bf16.msra.mxu0 0
    %6292 = vmatprep.subr.bf16.mxu0 0
    %6293 = vmatpush2.bf16.msra.mxu0 0
    %6294 = vmatprep.subr.bf16.mxu0 0
    %6295 = vmatpush2.bf16.msra.mxu0 0
    %6296 = vmatprep.subr.bf16.mxu0 0
    %6297 = vmatpush2.bf16.msra.mxu0 0
    %6298 = vmatprep.subr.bf16.mxu0 0
    %6299 = vmatpush2.bf16.msra.mxu0 0
    %6300 = vmatprep.subr.bf16.mxu0 0
    %6301 = vmatpush2.bf16.msra.mxu0 0
    %6302 = vmatprep.mubr.f32.mxu0 0.0
    %6303 = vmatmul.mubr.f32.gmra.mxu0 %v6268
    %v6304 = vpop.f32.mrf.mxu0
    %v6305 = vadd.f32 0.0, %v6304
    %v6306 = vpop.f32.mrf.mxu0
    %v6307 = vadd.f32 0.0, %v6306
    %6308 = vdwg.mxu0
    %6309 = vmatprep.subr.bf16.mxu0 0
    %6310 = vmatpush1.bf16.msra.mxu0 0
    %6311 = vmatprep.subr.bf16.mxu0 0
    %6312 = vmatpush1.bf16.msra.mxu0 0
    %6313 = vmatprep.subr.bf16.mxu0 0
    %6314 = vmatpush1.bf16.msra.mxu0 0
    %6315 = vmatprep.subr.bf16.mxu0 0
    %6316 = vmatpush1.bf16.msra.mxu0 0
    %6317 = vmatprep.subr.bf16.mxu0 0
    %6318 = vmatpush1.bf16.msra.mxu0 0
    %6319 = vmatprep.subr.bf16.mxu0 0
    %6320 = vmatpush1.bf16.msra.mxu0 0
    %6321 = vmatprep.subr.bf16.mxu0 0
    %6322 = vmatpush1.bf16.msra.mxu0 0
    %6323 = vmatprep.subr.bf16.mxu0 0
    %6324 = vmatpush1.bf16.msra.mxu0 %v6262
    %6325 = vmatprep.subr.bf16.mxu0 0
    %6326 = vmatpush2.bf16.msra.mxu0 0
    %6327 = vmatprep.subr.bf16.mxu0 0
    %6328 = vmatpush2.bf16.msra.mxu0 0
    %6329 = vmatprep.subr.bf16.mxu0 0
    %6330 = vmatpush2.bf16.msra.mxu0 0
    %6331 = vmatprep.subr.bf16.mxu0 0
    %6332 = vmatpush2.bf16.msra.mxu0 0
    %6333 = vmatprep.subr.bf16.mxu0 0
    %6334 = vmatpush2.bf16.msra.mxu0 0
    %6335 = vmatprep.subr.bf16.mxu0 0
    %6336 = vmatpush2.bf16.msra.mxu0 0
    %6337 = vmatprep.subr.bf16.mxu0 0
    %6338 = vmatpush2.bf16.msra.mxu0 0
    %6339 = vmatprep.subr.bf16.mxu0 0
    %6340 = vmatpush2.bf16.msra.mxu0 0
    %6341 = vmatprep.mubr.f32.mxu0 0.0
    %6342 = vmatmul.mubr.f32.gmra.mxu0 %v6268
    %v6343 = vpop.f32.mrf.mxu0
    %v6344 = vadd.f32 0.0, %v6343
    %v6345 = vpop.f32.mrf.mxu0
    %6346 = vdwg.mxu0
    %v6347 = vlaneseq
    %v6348 = vshrl.u32 %v6347, 7
    %v6349 = vsub.s32 0, %v6348
    %v6350 = vrot.slane %v6305, %v6349
    %v6351 = vlaneseq
    %v6352 = vshrl.u32 %v6351, 7
    %v6353 = vsub.s32 0, %v6352
    %v6354 = vrot.slane %v6307, %v6353
    %v6355 = vlaneseq
    %v6356 = vshrl.u32 %v6355, 7
    %v6357 = vsub.s32 0, %v6356
    %v6358 = vrot.slane %v6344, %v6357
    %v6359 = vmul.f32 %v5723, %v6350
    %v6360 = vmul.f32 %v5725, %v6354
    %v6361 = vmul.f32 %v5786, %v6358
    %v6362 = vmul.f32 %v5727, %v6350
    %v6363 = vmul.f32 %v5729, %v6354
    %v6364 = vmul.f32 %v5789, %v6358
    %v6365 = vmul.f32 %v5733, %v6350
    %v6366 = vmul.f32 %v5735, %v6354
    %v6367 = vmul.f32 %v5794, %v6358
    %v6368 = vmul.f32 %v5737, %v6350
    %v6369 = vmul.f32 %v5739, %v6354
    %v6370 = vmul.f32 %v5797, %v6358
    %v6371 = vmul.f32 %v5743, %v6350
    %v6372 = vmul.f32 %v5745, %v6354
    %v6373 = vmul.f32 %v5802, %v6358
    %v6374 = vmul.f32 %v5747, %v6350
    %v6375 = vmul.f32 %v5749, %v6354
    %v6376 = vmul.f32 %v5805, %v6358
    %v6377 = vlaneseq
    %v6378 = vshrl.u32 %v6377, 7
    %v6379 = vsub.s32 1, %v6378
    %v6380 = vrot.slane %v6305, %v6379
    %v6381 = vlaneseq
    %v6382 = vshrl.u32 %v6381, 7
    %v6383 = vsub.s32 1, %v6382
    %v6384 = vrot.slane %v6307, %v6383
    %v6385 = vlaneseq
    %v6386 = vshrl.u32 %v6385, 7
    %v6387 = vsub.s32 1, %v6386
    %v6388 = vrot.slane %v6344, %v6387
    %v6389 = vadd.f32 %v6359, %v6380
    %v6390 = vadd.f32 %v6360, %v6384
    %v6391 = vadd.f32 %v6361, %v6388
    %v6392 = vadd.f32 %v6362, %v6380
    %v6393 = vadd.f32 %v6363, %v6384
    %v6394 = vadd.f32 %v6364, %v6388
    %v6395 = vadd.f32 %v6365, %v6380
    %v6396 = vadd.f32 %v6366, %v6384
    %v6397 = vadd.f32 %v6367, %v6388
    %v6398 = vadd.f32 %v6368, %v6380
    %v6399 = vadd.f32 %v6369, %v6384
    %v6400 = vadd.f32 %v6370, %v6388
    %v6401 = vadd.f32 %v6371, %v6380
    %v6402 = vadd.f32 %v6372, %v6384
    %v6403 = vadd.f32 %v6373, %v6388
    %v6404 = vadd.f32 %v6374, %v6380
    %v6405 = vadd.f32 %v6375, %v6384
    %v6406 = vadd.f32 %v6376, %v6388
    %v6407 = vmax.f32 %v6389, 0.0
    %v6408 = vmax.f32 %v6390, 0.0
    %v6409 = vmax.f32 %v6391, 0.0
    %v6410 = vmax.f32 %v6392, 0.0
    %v6411 = vmax.f32 %v6393, 0.0
    %v6412 = vmax.f32 %v6394, 0.0
    %v6413 = vmax.f32 %v6395, 0.0
    %v6414 = vmax.f32 %v6396, 0.0
    %v6415 = vmax.f32 %v6397, 0.0
    %v6416 = vmax.f32 %v6398, 0.0
    %v6417 = vmax.f32 %v6399, 0.0
    %v6418 = vmax.f32 %v6400, 0.0
    %v6419 = vmax.f32 %v6401, 0.0
    %v6420 = vmax.f32 %v6402, 0.0
    %v6421 = vmax.f32 %v6403, 0.0
    %v6422 = vmax.f32 %v6404, 0.0
    %v6423 = vmax.f32 %v6405, 0.0
    %v6424 = vmax.f32 %v6406, 0.0
    %v6425 = vpack.c.bf16 %v6410, %v6407
    %v6426 = vpack.c.bf16 %v6411, %v6408
    %v6427 = vpack.c.bf16 %v6412, %v6409
    %v6428 = vpack.c.bf16 %v6416, %v6413
    %v6429 = vpack.c.bf16 %v6417, %v6414
    %v6430 = vpack.c.bf16 %v6418, %v6415
    %v6431 = vpack.c.bf16 %v6422, %v6419
    %v6432 = vpack.c.bf16 %v6423, %v6420
    %v6433 = vpack.c.bf16 %v6424, %v6421
    %v6434 = vld [vmem:[%s16] sm:$0xff]
    %v6435 = vld [vmem:[%s16 + $0x8] sm:$0xff]
    %v6436 = vld [vmem:[%s16 + $0x10] sm:$0xff]
    %v6437 = vld [vmem:[%s16 + $0x18] sm:$0xff]
    %v6438 = vld [vmem:[%s16 + $0x20] sm:$0xff]
    %v6439 = vld [vmem:[%s16 + $0x28] sm:$0xff]
    %v6440 = vld [vmem:[%s16 + $0x30] sm:$0xff]
    %v6441 = vld [vmem:[%s16 + $0x38] sm:$0xff]
    %v6442 = vld [vmem:[%s16 + $0x40] sm:$0xff]
    %v6443 = vld [vmem:[%s16 + $0x48] sm:$0xff]
    %v6444 = vld [vmem:[%s16 + $0x50] sm:$0xff]
    %v6445 = vld [vmem:[%s16 + $0x58] sm:$0xff]
    %v6446 = vld [vmem:[%s16 + $0x60] sm:$0xff]
    %v6447 = vld [vmem:[%s16 + $0x68] sm:$0xff]
    %v6448 = vld [vmem:[%s16 + $0x70] sm:$0xff]
    %v6449 = vld [vmem:[%s16 + $0x78] sm:$0xff]
    %v6450 = vld [vmem:[%s16 + $0x80] sm:$0xff]
    %v6451 = vld [vmem:[%s16 + $0x88] sm:$0xff]
    %v6452 = vld [vmem:[%s16 + $0x90] sm:$0xff]
    %v6453 = vld [vmem:[%s16 + $0x98] sm:$0xff]
    %v6454 = vld [vmem:[%s16 + $0xa0] sm:$0xff]
    %v6455 = vld [vmem:[%s16 + $0xa8] sm:$0xff]
    %v6456 = vld [vmem:[%s16 + $0xb0] sm:$0xff]
    %v6457 = vld [vmem:[%s16 + $0xb8] sm:$0xff]
    %v6458 = vld [vmem:[%s16 + $0xc0] sm:$0xff]
    %v6459 = vld [vmem:[%s16 + $0xc8] sm:$0xff]
    %v6460 = vld [vmem:[%s16 + $0xd0] sm:$0xff]
    %v6461 = vld [vmem:[%s16 + $0xd8] sm:$0xff]
    %v6462 = vld [vmem:[%s16 + $0xe0] sm:$0xff]
    %v6463 = vld [vmem:[%s16 + $0xe8] sm:$0xff]
    %v6464 = vld [vmem:[%s16 + $0xf0] sm:$0xff]
    %v6465 = vld [vmem:[%s16 + $0xf8] sm:$0xff]
    %v6466 = vld [vmem:[%s16 + $0x100] sm:$0xff]
    %v6467 = vld [vmem:[%s16 + $0x108] sm:$0xff]
    %v6468 = vld [vmem:[%s16 + $0x110] sm:$0xff]
    %v6469 = vld [vmem:[%s16 + $0x118] sm:$0xff]
    %v6470 = vld [vmem:[%s16 + $0x120] sm:$0xff]
    %v6471 = vld [vmem:[%s16 + $0x128] sm:$0xff]
    %v6472 = vld [vmem:[%s16 + $0x130] sm:$0xff]
    %v6473 = vld [vmem:[%s16 + $0x138] sm:$0xff]
    %v6474 = vld [vmem:[%s16 + $0x140] sm:$0xff]
    %v6475 = vld [vmem:[%s16 + $0x148] sm:$0xff]
    %v6476 = vld [vmem:[%s16 + $0x150] sm:$0xff]
    %v6477 = vld [vmem:[%s16 + $0x158] sm:$0xff]
    %v6522 = vunpack.c.l.b16 %v6434
    %v6523 = vunpack.c.h.b16 %v6434
    %v6524 = vunpack.c.l.b16 %v6435
    %v6525 = vunpack.c.h.b16 %v6435
    %v6526 = vunpack.c.l.b16 %v6436
    %v6527 = vunpack.c.h.b16 %v6436
    %v6528 = vunpack.c.l.b16 %v6437
    %v6529 = vunpack.c.h.b16 %v6437
    %v6530 = vunpack.c.l.b16 %v6438
    %v6531 = vunpack.c.h.b16 %v6438
    %v6532 = vunpack.c.l.b16 %v6439
    %v6533 = vunpack.c.h.b16 %v6439
    %v6534 = vunpack.c.l.b16 %v6440
    %v6535 = vunpack.c.h.b16 %v6440
    %v6536 = vunpack.c.l.b16 %v6441
    %v6537 = vunpack.c.h.b16 %v6441
    %v6538 = vunpack.c.l.b16 %v6442
    %v6539 = vunpack.c.h.b16 %v6442
    %v6540 = vunpack.c.l.b16 %v6443
    %v6541 = vunpack.c.h.b16 %v6443
    %v6542 = vunpack.c.l.b16 %v6444
    %v6543 = vunpack.c.h.b16 %v6444
    %v6544 = vunpack.c.l.b16 %v6445
    %v6545 = vunpack.c.h.b16 %v6445
    %v6546 = vunpack.c.l.b16 %v6446
    %v6547 = vunpack.c.h.b16 %v6446
    %v6548 = vunpack.c.l.b16 %v6447
    %v6549 = vunpack.c.h.b16 %v6447
    %v6550 = vunpack.c.l.b16 %v6448
    %v6551 = vunpack.c.h.b16 %v6448
    %v6552 = vunpack.c.l.b16 %v6449
    %v6553 = vunpack.c.h.b16 %v6449
    %v6554 = vunpack.c.l.b16 %v6450
    %v6555 = vunpack.c.h.b16 %v6450
    %v6556 = vunpack.c.l.b16 %v6451
    %v6557 = vunpack.c.h.b16 %v6451
    %v6558 = vunpack.c.l.b16 %v6452
    %v6559 = vunpack.c.h.b16 %v6452
    %v6560 = vunpack.c.l.b16 %v6453
    %v6561 = vunpack.c.h.b16 %v6453
    %v6562 = vunpack.c.l.b16 %v6454
    %v6563 = vunpack.c.h.b16 %v6454
    %v6564 = vunpack.c.l.b16 %v6455
    %v6565 = vunpack.c.h.b16 %v6455
    %v6566 = vunpack.c.l.b16 %v6456
    %v6567 = vunpack.c.h.b16 %v6456
    %v6568 = vunpack.c.l.b16 %v6457
    %v6569 = vunpack.c.h.b16 %v6457
    %v6570 = vunpack.c.l.b16 %v6458
    %v6571 = vunpack.c.h.b16 %v6458
    %v6572 = vunpack.c.l.b16 %v6459
    %v6573 = vunpack.c.h.b16 %v6459
    %v6574 = vunpack.c.l.b16 %v6460
    %v6575 = vunpack.c.h.b16 %v6460
    %v6576 = vunpack.c.l.b16 %v6461
    %v6577 = vunpack.c.h.b16 %v6461
    %v6578 = vunpack.c.l.b16 %v6462
    %v6579 = vunpack.c.h.b16 %v6462
    %v6580 = vunpack.c.l.b16 %v6463
    %v6581 = vunpack.c.h.b16 %v6463
    %v6582 = vunpack.c.l.b16 %v6464
    %v6583 = vunpack.c.h.b16 %v6464
    %v6584 = vunpack.c.l.b16 %v6465
    %v6585 = vunpack.c.h.b16 %v6465
    %v6586 = vunpack.c.l.b16 %v6466
    %v6587 = vunpack.c.h.b16 %v6466
    %v6588 = vunpack.c.l.b16 %v6467
    %v6589 = vunpack.c.h.b16 %v6467
    %v6590 = vunpack.c.l.b16 %v6468
    %v6591 = vunpack.c.h.b16 %v6468
    %v6592 = vunpack.c.l.b16 %v6469
    %v6593 = vunpack.c.h.b16 %v6469
    %v6594 = vunpack.c.l.b16 %v6470
    %v6595 = vunpack.c.h.b16 %v6470
    %v6596 = vunpack.c.l.b16 %v6471
    %v6597 = vunpack.c.h.b16 %v6471
    %v6598 = vunpack.c.l.b16 %v6472
    %v6599 = vunpack.c.h.b16 %v6472
    %v6600 = vunpack.c.l.b16 %v6473
    %v6601 = vunpack.c.h.b16 %v6473
    %v6602 = vunpack.c.l.b16 %v6474
    %v6603 = vunpack.c.h.b16 %v6474
    %v6604 = vunpack.c.l.b16 %v6475
    %v6605 = vunpack.c.h.b16 %v6475
    %v6606 = vunpack.c.l.b16 %v6476
    %v6607 = vunpack.c.h.b16 %v6476
    %v6608 = vunpack.c.l.b16 %v6477
    %v6609 = vunpack.c.h.b16 %v6477
    %v6610 = vpack.c.b16 %v6524, %v6522
    %v6611 = vpack.c.b16 %v6525, %v6523
    %v6612 = vpack.c.b16 %v6528, %v6526
    %v6613 = vpack.c.b16 %v6529, %v6527
    %v6614 = vpack.c.b16 %v6532, %v6530
    %v6615 = vpack.c.b16 %v6533, %v6531
    %v6616 = vpack.c.b16 %v6536, %v6534
    %v6617 = vpack.c.b16 %v6537, %v6535
    %v6618 = vpack.c.b16 %v6540, %v6538
    %v6619 = vpack.c.b16 %v6541, %v6539
    %v6620 = vpack.c.b16 %v6544, %v6542
    %v6621 = vpack.c.b16 %v6545, %v6543
    %v6622 = vpack.c.b16 %v6548, %v6546
    %v6623 = vpack.c.b16 %v6549, %v6547
    %v6624 = vpack.c.b16 %v6552, %v6550
    %v6625 = vpack.c.b16 %v6553, %v6551
    %v6626 = vpack.c.b16 %v6556, %v6554
    %v6627 = vpack.c.b16 %v6557, %v6555
    %v6628 = vpack.c.b16 %v6560, %v6558
    %v6629 = vpack.c.b16 %v6561, %v6559
    %v6630 = vpack.c.b16 %v6564, %v6562
    %v6631 = vpack.c.b16 %v6565, %v6563
    %v6632 = vpack.c.b16 %v6568, %v6566
    %v6633 = vpack.c.b16 %v6569, %v6567
    %v6634 = vpack.c.b16 %v6572, %v6570
    %v6635 = vpack.c.b16 %v6573, %v6571
    %v6636 = vpack.c.b16 %v6576, %v6574
    %v6637 = vpack.c.b16 %v6577, %v6575
    %v6638 = vpack.c.b16 %v6580, %v6578
    %v6639 = vpack.c.b16 %v6581, %v6579
    %v6640 = vpack.c.b16 %v6584, %v6582
    %v6641 = vpack.c.b16 %v6585, %v6583
    %v6642 = vpack.c.b16 %v6588, %v6586
    %v6643 = vpack.c.b16 %v6589, %v6587
    %v6644 = vpack.c.b16 %v6592, %v6590
    %v6645 = vpack.c.b16 %v6593, %v6591
    %v6646 = vpack.c.b16 %v6596, %v6594
    %v6647 = vpack.c.b16 %v6597, %v6595
    %v6648 = vpack.c.b16 %v6600, %v6598
    %v6649 = vpack.c.b16 %v6601, %v6599
    %v6650 = vpack.c.b16 %v6604, %v6602
    %v6651 = vpack.c.b16 %v6605, %v6603
    %v6652 = vpack.c.b16 %v6608, %v6606
    %v6653 = vpack.c.b16 %v6609, %v6607
    %v6699 = vsel %vm3771, %v6427, 0
    %v6702 = vsel %vm3771, %v6430, 0
    %v6705 = vsel %vm3771, %v6433, 0
    %6707 = vmatprep.subr.bf16.mxu0 %v6625
    %6708 = vmatpush1.bf16.msra.mxu0 %v6624
    %6709 = vmatprep.subr.bf16.mxu0 %v6623
    %6710 = vmatpush1.bf16.msra.mxu0 %v6622
    %6711 = vmatprep.subr.bf16.mxu0 %v6621
    %6712 = vmatpush1.bf16.msra.mxu0 %v6620
    %6713 = vmatprep.subr.bf16.mxu0 %v6619
    %6714 = vmatpush1.bf16.msra.mxu0 %v6618
    %6715 = vmatprep.subr.bf16.mxu0 %v6617
    %6716 = vmatpush1.bf16.msra.mxu0 %v6616
    %6717 = vmatprep.subr.bf16.mxu0 %v6615
    %6718 = vmatpush1.bf16.msra.mxu0 %v6614
    %6719 = vmatprep.subr.bf16.mxu0 %v6613
    %6720 = vmatpush1.bf16.msra.mxu0 %v6612
    %6721 = vmatprep.subr.bf16.mxu0 %v6611
    %6722 = vmatpush1.bf16.msra.mxu0 %v6610
    %6723 = vmatprep.subr.bf16.mxu0 %v6641
    %6724 = vmatpush2.bf16.msra.mxu0 %v6640
    %6725 = vmatprep.subr.bf16.mxu0 %v6639
    %6726 = vmatpush2.bf16.msra.mxu0 %v6638
    %6727 = vmatprep.subr.bf16.mxu0 %v6637
    %6728 = vmatpush2.bf16.msra.mxu0 %v6636
    %6729 = vmatprep.subr.bf16.mxu0 %v6635
    %6730 = vmatpush2.bf16.msra.mxu0 %v6634
    %6731 = vmatprep.subr.bf16.mxu0 %v6633
    %6732 = vmatpush2.bf16.msra.mxu0 %v6632
    %6733 = vmatprep.subr.bf16.mxu0 %v6631
    %6734 = vmatpush2.bf16.msra.mxu0 %v6630
    %6735 = vmatprep.subr.bf16.mxu0 %v6629
    %6736 = vmatpush2.bf16.msra.mxu0 %v6628
    %6737 = vmatprep.subr.bf16.mxu0 %v6627
    %6738 = vmatpush2.bf16.msra.mxu0 %v6626
    %6739 = vmatprep.mubr.bf16.mxu0 %v6426
    %6740 = vmatmul.mubr.bf16.gmra.mxu0 %v6425
    %v6741 = vpop.f32.mrf.mxu0
    %v6742 = vadd.f32 0.0, %v6741
    %v6743 = vpop.f32.mrf.mxu0
    %v6744 = vadd.f32 0.0, %v6743
    %v6745 = vpop.f32.mrf.mxu0
    %v6746 = vadd.f32 0.0, %v6745
    %v6747 = vpop.f32.mrf.mxu0
    %v6748 = vadd.f32 0.0, %v6747
    %6749 = vmatprep.mubr.bf16.mxu0 %v6429
    %6750 = vmatmul.mubr.bf16.gmra.mxu0 %v6428
    %v6751 = vpop.f32.mrf.mxu0
    %v6752 = vadd.f32 0.0, %v6751
    %v6753 = vpop.f32.mrf.mxu0
    %v6754 = vadd.f32 0.0, %v6753
    %v6755 = vpop.f32.mrf.mxu0
    %v6756 = vadd.f32 0.0, %v6755
    %v6757 = vpop.f32.mrf.mxu0
    %v6758 = vadd.f32 0.0, %v6757
    %6759 = vmatprep.mubr.bf16.mxu0 %v6432
    %6760 = vmatmul.mubr.bf16.gmra.mxu0 %v6431
    %v6761 = vpop.f32.mrf.mxu0
    %v6762 = vadd.f32 0.0, %v6761
    %v6763 = vpop.f32.mrf.mxu0
    %v6764 = vadd.f32 0.0, %v6763
    %v6765 = vpop.f32.mrf.mxu0
    %v6766 = vadd.f32 0.0, %v6765
    %v6767 = vpop.f32.mrf.mxu0
    %v6768 = vadd.f32 0.0, %v6767
    %6769 = vdwg.mxu0
    %6770 = vmatprep.subr.bf16.mxu0 0
    %6771 = vmatpush1.bf16.msra.mxu0 0
    %6772 = vmatprep.subr.bf16.mxu0 0
    %6773 = vmatpush1.bf16.msra.mxu0 0
    %6774 = vmatprep.subr.bf16.mxu0 %v6653
    %6775 = vmatpush1.bf16.msra.mxu0 %v6652
    %6776 = vmatprep.subr.bf16.mxu0 %v6651
    %6777 = vmatpush1.bf16.msra.mxu0 %v6650
    %6778 = vmatprep.subr.bf16.mxu0 %v6649
    %6779 = vmatpush1.bf16.msra.mxu0 %v6648
    %6780 = vmatprep.subr.bf16.mxu0 %v6647
    %6781 = vmatpush1.bf16.msra.mxu0 %v6646
    %6782 = vmatprep.subr.bf16.mxu0 %v6645
    %6783 = vmatpush1.bf16.msra.mxu0 %v6644
    %6784 = vmatprep.subr.bf16.mxu0 %v6643
    %6785 = vmatpush1.bf16.msra.mxu0 %v6642
    %6786 = vmatprep.subr.bf16.mxu0 0
    %6787 = vmatpush2.bf16.msra.mxu0 0
    %6788 = vmatprep.subr.bf16.mxu0 0
    %6789 = vmatpush2.bf16.msra.mxu0 0
    %6790 = vmatprep.subr.bf16.mxu0 0
    %6791 = vmatpush2.bf16.msra.mxu0 0
    %6792 = vmatprep.subr.bf16.mxu0 0
    %6793 = vmatpush2.bf16.msra.mxu0 0
    %6794 = vmatprep.subr.bf16.mxu0 0
    %6795 = vmatpush2.bf16.msra.mxu0 0
    %6796 = vmatprep.subr.bf16.mxu0 0
    %6797 = vmatpush2.bf16.msra.mxu0 0
    %6798 = vmatprep.subr.bf16.mxu0 0
    %6799 = vmatpush2.bf16.msra.mxu0 0
    %6800 = vmatprep.subr.bf16.mxu0 0
    %6801 = vmatpush2.bf16.msra.mxu0 0
    %6802 = vmatprep.mubr.bf16.mxu0 0
    %6803 = vmatmul.mubr.bf16.gmra.mxu0 %v6699
    %v6804 = vpop.f32.mrf.mxu0
    %v6805 = vadd.f32 %v6742, %v6804
    %v6806 = vpop.f32.mrf.mxu0
    %v6807 = vadd.f32 %v6744, %v6806
    %v6808 = vpop.f32.mrf.mxu0
    %v6809 = vadd.f32 %v6746, %v6808
    %v6810 = vpop.f32.mrf.mxu0
    %v6811 = vadd.f32 %v6748, %v6810
    %6812 = vmatprep.mubr.bf16.mxu0 0
    %6813 = vmatmul.mubr.bf16.gmra.mxu0 %v6702
    %v6814 = vpop.f32.mrf.mxu0
    %v6815 = vadd.f32 %v6752, %v6814
    %v6816 = vpop.f32.mrf.mxu0
    %v6817 = vadd.f32 %v6754, %v6816
    %v6818 = vpop.f32.mrf.mxu0
    %v6819 = vadd.f32 %v6756, %v6818
    %v6820 = vpop.f32.mrf.mxu0
    %v6821 = vadd.f32 %v6758, %v6820
    %6822 = vmatprep.mubr.bf16.mxu0 0
    %6823 = vmatmul.mubr.bf16.gmra.mxu0 %v6705
    %v6824 = vpop.f32.mrf.mxu0
    %v6825 = vadd.f32 %v6762, %v6824
    %v6826 = vpop.f32.mrf.mxu0
    %v6827 = vadd.f32 %v6764, %v6826
    %v6828 = vpop.f32.mrf.mxu0
    %v6829 = vadd.f32 %v6766, %v6828
    %v6830 = vpop.f32.mrf.mxu0
    %v6831 = vadd.f32 %v6768, %v6830
    %6832 = vdwg.mxu0
    %6833 = vst [vmem:[#allocation2] sm:$0xff] %v6805
    %vm6834 = vcmask 588800
    %6835 = vst.msk [vmem:[#allocation2 + $0x8] sm:$0xff] %vm6834, %v6807
    %6836 = vst [vmem:[#allocation2 + $0x18] sm:$0xff] %v6809
    %6837 = vst.msk [vmem:[#allocation2 + $0x20] sm:$0xff] %vm6834, %v6811
    %6838 = vst [vmem:[#allocation2 + $0x30] sm:$0xff] %v6815
    %6839 = vst.msk [vmem:[#allocation2 + $0x38] sm:$0xff] %vm6834, %v6817
    %6840 = vst [vmem:[#allocation2 + $0x48] sm:$0xff] %v6819
    %6841 = vst.msk [vmem:[#allocation2 + $0x50] sm:$0xff] %vm6834, %v6821
    %6842 = vst [vmem:[#allocation2 + $0x60] sm:$0xff] %v6825
    %6843 = vst.msk [vmem:[#allocation2 + $0x68] sm:$0xff] %vm6834, %v6827
    %6844 = vst [vmem:[#allocation2 + $0x78] sm:$0xf] %v6829
    %vm6845 = vcmask 584704
    %6846 = vst.msk [vmem:[#allocation2 + $0x80] sm:$0xf] %vm6845, %v6831
    %s6847 = scalar_lea.vmem %s16, 352
    %v6848 = vld [vmem:[%s6847] sm:$0xff]
    %v6849 = vld [vmem:[%s6847 + $0x8] sm:$0xff]
    %v6850 = vld [vmem:[%s6847 + $0x10] sm:$0xff]
    %v6851 = vld [vmem:[%s6847 + $0x18] sm:$0xff]
    %v6852 = vld [vmem:[%s6847 + $0x20] sm:$0xff]
    %v6853 = vld [vmem:[%s6847 + $0x28] sm:$0xff]
    %v6854 = vld [vmem:[%s6847 + $0x30] sm:$0xff]
    %v6855 = vld [vmem:[%s6847 + $0x38] sm:$0xff]
    %v6856 = vld [vmem:[%s6847 + $0x40] sm:$0xff]
    %v6857 = vld [vmem:[%s6847 + $0x48] sm:$0xff]
    %v6858 = vld [vmem:[%s6847 + $0x50] sm:$0xff]
    %v6859 = vld [vmem:[%s6847 + $0x58] sm:$0xff]
    %v6860 = vld [vmem:[%s6847 + $0x60] sm:$0xff]
    %v6861 = vld [vmem:[%s6847 + $0x68] sm:$0xff]
    %v6862 = vld [vmem:[%s6847 + $0x70] sm:$0xff]
    %v6863 = vld [vmem:[%s6847 + $0x78] sm:$0xff]
    %v6864 = vld [vmem:[%s6847 + $0x80] sm:$0xff]
    %v6865 = vld [vmem:[%s6847 + $0x88] sm:$0xff]
    %v6866 = vld [vmem:[%s6847 + $0x90] sm:$0xff]
    %v6867 = vld [vmem:[%s6847 + $0x98] sm:$0xff]
    %v6868 = vld [vmem:[%s6847 + $0xa0] sm:$0xff]
    %v6869 = vld [vmem:[%s6847 + $0xa8] sm:$0xff]
    %v6870 = vld [vmem:[%s6847 + $0xb0] sm:$0xff]
    %v6871 = vld [vmem:[%s6847 + $0xb8] sm:$0xff]
    %v6872 = vld [vmem:[%s6847 + $0xc0] sm:$0xff]
    %v6873 = vld [vmem:[%s6847 + $0xc8] sm:$0xff]
    %v6874 = vld [vmem:[%s6847 + $0xd0] sm:$0xff]
    %v6875 = vld [vmem:[%s6847 + $0xd8] sm:$0xff]
    %v6876 = vld [vmem:[%s6847 + $0xe0] sm:$0xff]
    %v6877 = vld [vmem:[%s6847 + $0xe8] sm:$0xff]
    %v6878 = vld [vmem:[%s6847 + $0xf0] sm:$0xff]
    %v6879 = vld [vmem:[%s6847 + $0xf8] sm:$0xff]
    %v6880 = vld [vmem:[%s6847 + $0x100] sm:$0xff]
    %v6881 = vld [vmem:[%s6847 + $0x108] sm:$0xff]
    %v6882 = vld [vmem:[%s6847 + $0x110] sm:$0xff]
    %v6883 = vld [vmem:[%s6847 + $0x118] sm:$0xff]
    %v6884 = vld [vmem:[%s6847 + $0x120] sm:$0xff]
    %v6885 = vld [vmem:[%s6847 + $0x128] sm:$0xff]
    %v6886 = vld [vmem:[%s6847 + $0x130] sm:$0xff]
    %v6887 = vld [vmem:[%s6847 + $0x138] sm:$0xff]
    %v6888 = vld [vmem:[%s6847 + $0x140] sm:$0xff]
    %v6889 = vld [vmem:[%s6847 + $0x148] sm:$0xff]
    %v6890 = vld [vmem:[%s6847 + $0x150] sm:$0xff]
    %v6891 = vld [vmem:[%s6847 + $0x158] sm:$0xff]
    %v6936 = vunpack.c.l.b16 %v6848
    %v6937 = vunpack.c.h.b16 %v6848
    %v6938 = vunpack.c.l.b16 %v6849
    %v6939 = vunpack.c.h.b16 %v6849
    %v6940 = vunpack.c.l.b16 %v6850
    %v6941 = vunpack.c.h.b16 %v6850
    %v6942 = vunpack.c.l.b16 %v6851
    %v6943 = vunpack.c.h.b16 %v6851
    %v6944 = vunpack.c.l.b16 %v6852
    %v6945 = vunpack.c.h.b16 %v6852
    %v6946 = vunpack.c.l.b16 %v6853
    %v6947 = vunpack.c.h.b16 %v6853
    %v6948 = vunpack.c.l.b16 %v6854
    %v6949 = vunpack.c.h.b16 %v6854
    %v6950 = vunpack.c.l.b16 %v6855
    %v6951 = vunpack.c.h.b16 %v6855
    %v6952 = vunpack.c.l.b16 %v6856
    %v6953 = vunpack.c.h.b16 %v6856
    %v6954 = vunpack.c.l.b16 %v6857
    %v6955 = vunpack.c.h.b16 %v6857
    %v6956 = vunpack.c.l.b16 %v6858
    %v6957 = vunpack.c.h.b16 %v6858
    %v6958 = vunpack.c.l.b16 %v6859
    %v6959 = vunpack.c.h.b16 %v6859
    %v6960 = vunpack.c.l.b16 %v6860
    %v6961 = vunpack.c.h.b16 %v6860
    %v6962 = vunpack.c.l.b16 %v6861
    %v6963 = vunpack.c.h.b16 %v6861
    %v6964 = vunpack.c.l.b16 %v6862
    %v6965 = vunpack.c.h.b16 %v6862
    %v6966 = vunpack.c.l.b16 %v6863
    %v6967 = vunpack.c.h.b16 %v6863
    %v6968 = vunpack.c.l.b16 %v6864
    %v6969 = vunpack.c.h.b16 %v6864
    %v6970 = vunpack.c.l.b16 %v6865
    %v6971 = vunpack.c.h.b16 %v6865
    %v6972 = vunpack.c.l.b16 %v6866
    %v6973 = vunpack.c.h.b16 %v6866
    %v6974 = vunpack.c.l.b16 %v6867
    %v6975 = vunpack.c.h.b16 %v6867
    %v6976 = vunpack.c.l.b16 %v6868
    %v6977 = vunpack.c.h.b16 %v6868
    %v6978 = vunpack.c.l.b16 %v6869
    %v6979 = vunpack.c.h.b16 %v6869
    %v6980 = vunpack.c.l.b16 %v6870
    %v6981 = vunpack.c.h.b16 %v6870
    %v6982 = vunpack.c.l.b16 %v6871
    %v6983 = vunpack.c.h.b16 %v6871
    %v6984 = vunpack.c.l.b16 %v6872
    %v6985 = vunpack.c.h.b16 %v6872
    %v6986 = vunpack.c.l.b16 %v6873
    %v6987 = vunpack.c.h.b16 %v6873
    %v6988 = vunpack.c.l.b16 %v6874
    %v6989 = vunpack.c.h.b16 %v6874
    %v6990 = vunpack.c.l.b16 %v6875
    %v6991 = vunpack.c.h.b16 %v6875
    %v6992 = vunpack.c.l.b16 %v6876
    %v6993 = vunpack.c.h.b16 %v6876
    %v6994 = vunpack.c.l.b16 %v6877
    %v6995 = vunpack.c.h.b16 %v6877
    %v6996 = vunpack.c.l.b16 %v6878
    %v6997 = vunpack.c.h.b16 %v6878
    %v6998 = vunpack.c.l.b16 %v6879
    %v6999 = vunpack.c.h.b16 %v6879
    %v7000 = vunpack.c.l.b16 %v6880
    %v7001 = vunpack.c.h.b16 %v6880
    %v7002 = vunpack.c.l.b16 %v6881
    %v7003 = vunpack.c.h.b16 %v6881
    %v7004 = vunpack.c.l.b16 %v6882
    %v7005 = vunpack.c.h.b16 %v6882
    %v7006 = vunpack.c.l.b16 %v6883
    %v7007 = vunpack.c.h.b16 %v6883
    %v7008 = vunpack.c.l.b16 %v6884
    %v7009 = vunpack.c.h.b16 %v6884
    %v7010 = vunpack.c.l.b16 %v6885
    %v7011 = vunpack.c.h.b16 %v6885
    %v7012 = vunpack.c.l.b16 %v6886
    %v7013 = vunpack.c.h.b16 %v6886
    %v7014 = vunpack.c.l.b16 %v6887
    %v7015 = vunpack.c.h.b16 %v6887
    %v7016 = vunpack.c.l.b16 %v6888
    %v7017 = vunpack.c.h.b16 %v6888
    %v7018 = vunpack.c.l.b16 %v6889
    %v7019 = vunpack.c.h.b16 %v6889
    %v7020 = vunpack.c.l.b16 %v6890
    %v7021 = vunpack.c.h.b16 %v6890
    %v7022 = vunpack.c.l.b16 %v6891
    %v7023 = vunpack.c.h.b16 %v6891
    %v7024 = vpack.c.b16 %v6938, %v6936
    %v7025 = vpack.c.b16 %v6939, %v6937
    %v7026 = vpack.c.b16 %v6942, %v6940
    %v7027 = vpack.c.b16 %v6943, %v6941
    %v7028 = vpack.c.b16 %v6946, %v6944
    %v7029 = vpack.c.b16 %v6947, %v6945
    %v7030 = vpack.c.b16 %v6950, %v6948
    %v7031 = vpack.c.b16 %v6951, %v6949
    %v7032 = vpack.c.b16 %v6954, %v6952
    %v7033 = vpack.c.b16 %v6955, %v6953
    %v7034 = vpack.c.b16 %v6958, %v6956
    %v7035 = vpack.c.b16 %v6959, %v6957
    %v7036 = vpack.c.b16 %v6962, %v6960
    %v7037 = vpack.c.b16 %v6963, %v6961
    %v7038 = vpack.c.b16 %v6966, %v6964
    %v7039 = vpack.c.b16 %v6967, %v6965
    %v7040 = vpack.c.b16 %v6970, %v6968
    %v7041 = vpack.c.b16 %v6971, %v6969
    %v7042 = vpack.c.b16 %v6974, %v6972
    %v7043 = vpack.c.b16 %v6975, %v6973
    %v7044 = vpack.c.b16 %v6978, %v6976
    %v7045 = vpack.c.b16 %v6979, %v6977
    %v7046 = vpack.c.b16 %v6982, %v6980
    %v7047 = vpack.c.b16 %v6983, %v6981
    %v7048 = vpack.c.b16 %v6986, %v6984
    %v7049 = vpack.c.b16 %v6987, %v6985
    %v7050 = vpack.c.b16 %v6990, %v6988
    %v7051 = vpack.c.b16 %v6991, %v6989
    %v7052 = vpack.c.b16 %v6994, %v6992
    %v7053 = vpack.c.b16 %v6995, %v6993
    %v7054 = vpack.c.b16 %v6998, %v6996
    %v7055 = vpack.c.b16 %v6999, %v6997
    %v7056 = vpack.c.b16 %v7002, %v7000
    %v7057 = vpack.c.b16 %v7003, %v7001
    %v7058 = vpack.c.b16 %v7006, %v7004
    %v7059 = vpack.c.b16 %v7007, %v7005
    %v7060 = vpack.c.b16 %v7010, %v7008
    %v7061 = vpack.c.b16 %v7011, %v7009
    %v7062 = vpack.c.b16 %v7014, %v7012
    %v7063 = vpack.c.b16 %v7015, %v7013
    %v7064 = vpack.c.b16 %v7018, %v7016
    %v7065 = vpack.c.b16 %v7019, %v7017
    %v7066 = vpack.c.b16 %v7022, %v7020
    %v7067 = vpack.c.b16 %v7023, %v7021
    %7112 = vmatprep.subr.bf16.mxu0 %v7039
    %7113 = vmatpush1.bf16.msra.mxu0 %v7038
    %7114 = vmatprep.subr.bf16.mxu0 %v7037
    %7115 = vmatpush1.bf16.msra.mxu0 %v7036
    %7116 = vmatprep.subr.bf16.mxu0 %v7035
    %7117 = vmatpush1.bf16.msra.mxu0 %v7034
    %7118 = vmatprep.subr.bf16.mxu0 %v7033
    %7119 = vmatpush1.bf16.msra.mxu0 %v7032
    %7120 = vmatprep.subr.bf16.mxu0 %v7031
    %7121 = vmatpush1.bf16.msra.mxu0 %v7030
    %7122 = vmatprep.subr.bf16.mxu0 %v7029
    %7123 = vmatpush1.bf16.msra.mxu0 %v7028
    %7124 = vmatprep.subr.bf16.mxu0 %v7027
    %7125 = vmatpush1.bf16.msra.mxu0 %v7026
    %7126 = vmatprep.subr.bf16.mxu0 %v7025
    %7127 = vmatpush1.bf16.msra.mxu0 %v7024
    %7128 = vmatprep.subr.bf16.mxu0 %v7055
    %7129 = vmatpush2.bf16.msra.mxu0 %v7054
    %7130 = vmatprep.subr.bf16.mxu0 %v7053
    %7131 = vmatpush2.bf16.msra.mxu0 %v7052
    %7132 = vmatprep.subr.bf16.mxu0 %v7051
    %7133 = vmatpush2.bf16.msra.mxu0 %v7050
    %7134 = vmatprep.subr.bf16.mxu0 %v7049
    %7135 = vmatpush2.bf16.msra.mxu0 %v7048
    %7136 = vmatprep.subr.bf16.mxu0 %v7047
    %7137 = vmatpush2.bf16.msra.mxu0 %v7046
    %7138 = vmatprep.subr.bf16.mxu0 %v7045
    %7139 = vmatpush2.bf16.msra.mxu0 %v7044
    %7140 = vmatprep.subr.bf16.mxu0 %v7043
    %7141 = vmatpush2.bf16.msra.mxu0 %v7042
    %7142 = vmatprep.subr.bf16.mxu0 %v7041
    %7143 = vmatpush2.bf16.msra.mxu0 %v7040
    %7144 = vmatprep.mubr.bf16.mxu0 %v6426
    %7145 = vmatmul.mubr.bf16.gmra.mxu0 %v6425
    %v7146 = vpop.f32.mrf.mxu0
    %v7147 = vadd.f32 0.0, %v7146
    %v7148 = vpop.f32.mrf.mxu0
    %v7149 = vadd.f32 0.0, %v7148
    %v7150 = vpop.f32.mrf.mxu0
    %v7151 = vadd.f32 0.0, %v7150
    %v7152 = vpop.f32.mrf.mxu0
    %v7153 = vadd.f32 0.0, %v7152
    %7154 = vmatprep.mubr.bf16.mxu0 %v6429
    %7155 = vmatmul.mubr.bf16.gmra.mxu0 %v6428
    %v7156 = vpop.f32.mrf.mxu0
    %v7157 = vadd.f32 0.0, %v7156
    %v7158 = vpop.f32.mrf.mxu0
    %v7159 = vadd.f32 0.0, %v7158
    %v7160 = vpop.f32.mrf.mxu0
    %v7161 = vadd.f32 0.0, %v7160
    %v7162 = vpop.f32.mrf.mxu0
    %v7163 = vadd.f32 0.0, %v7162
    %7164 = vmatprep.mubr.bf16.mxu0 %v6432
    %7165 = vmatmul.mubr.bf16.gmra.mxu0 %v6431
    %v7166 = vpop.f32.mrf.mxu0
    %v7167 = vadd.f32 0.0, %v7166
    %v7168 = vpop.f32.mrf.mxu0
    %v7169 = vadd.f32 0.0, %v7168
    %v7170 = vpop.f32.mrf.mxu0
    %v7171 = vadd.f32 0.0, %v7170
    %v7172 = vpop.f32.mrf.mxu0
    %v7173 = vadd.f32 0.0, %v7172
    %7174 = vdwg.mxu0
    %7175 = vmatprep.subr.bf16.mxu0 0
    %7176 = vmatpush1.bf16.msra.mxu0 0
    %7177 = vmatprep.subr.bf16.mxu0 0
    %7178 = vmatpush1.bf16.msra.mxu0 0
    %7179 = vmatprep.subr.bf16.mxu0 %v7067
    %7180 = vmatpush1.bf16.msra.mxu0 %v7066
    %7181 = vmatprep.subr.bf16.mxu0 %v7065
    %7182 = vmatpush1.bf16.msra.mxu0 %v7064
    %7183 = vmatprep.subr.bf16.mxu0 %v7063
    %7184 = vmatpush1.bf16.msra.mxu0 %v7062
    %7185 = vmatprep.subr.bf16.mxu0 %v7061
    %7186 = vmatpush1.bf16.msra.mxu0 %v7060
    %7187 = vmatprep.subr.bf16.mxu0 %v7059
    %7188 = vmatpush1.bf16.msra.mxu0 %v7058
    %7189 = vmatprep.subr.bf16.mxu0 %v7057
    %7190 = vmatpush1.bf16.msra.mxu0 %v7056
    %7191 = vmatprep.subr.bf16.mxu0 0
    %7192 = vmatpush2.bf16.msra.mxu0 0
    %7193 = vmatprep.subr.bf16.mxu0 0
    %7194 = vmatpush2.bf16.msra.mxu0 0
    %7195 = vmatprep.subr.bf16.mxu0 0
    %7196 = vmatpush2.bf16.msra.mxu0 0
    %7197 = vmatprep.subr.bf16.mxu0 0
    %7198 = vmatpush2.bf16.msra.mxu0 0
    %7199 = vmatprep.subr.bf16.mxu0 0
    %7200 = vmatpush2.bf16.msra.mxu0 0
    %7201 = vmatprep.subr.bf16.mxu0 0
    %7202 = vmatpush2.bf16.msra.mxu0 0
    %7203 = vmatprep.subr.bf16.mxu0 0
    %7204 = vmatpush2.bf16.msra.mxu0 0
    %7205 = vmatprep.subr.bf16.mxu0 0
    %7206 = vmatpush2.bf16.msra.mxu0 0
    %7207 = vmatprep.mubr.bf16.mxu0 0
    %7208 = vmatmul.mubr.bf16.gmra.mxu0 %v6699
    %v7209 = vpop.f32.mrf.mxu0
    %v7210 = vadd.f32 %v7147, %v7209
    %v7211 = vpop.f32.mrf.mxu0
    %v7212 = vadd.f32 %v7149, %v7211
    %v7213 = vpop.f32.mrf.mxu0
    %v7214 = vadd.f32 %v7151, %v7213
    %v7215 = vpop.f32.mrf.mxu0
    %v7216 = vadd.f32 %v7153, %v7215
    %7217 = vmatprep.mubr.bf16.mxu0 0
    %7218 = vmatmul.mubr.bf16.gmra.mxu0 %v6702
    %v7219 = vpop.f32.mrf.mxu0
    %v7220 = vadd.f32 %v7157, %v7219
    %v7221 = vpop.f32.mrf.mxu0
    %v7222 = vadd.f32 %v7159, %v7221
    %v7223 = vpop.f32.mrf.mxu0
    %v7224 = vadd.f32 %v7161, %v7223
    %v7225 = vpop.f32.mrf.mxu0
    %v7226 = vadd.f32 %v7163, %v7225
    %7227 = vmatprep.mubr.bf16.mxu0 0
    %7228 = vmatmul.mubr.bf16.gmra.mxu0 %v6705
    %v7229 = vpop.f32.mrf.mxu0
    %v7230 = vadd.f32 %v7167, %v7229
    %v7231 = vpop.f32.mrf.mxu0
    %v7232 = vadd.f32 %v7169, %v7231
    %v7233 = vpop.f32.mrf.mxu0
    %v7234 = vadd.f32 %v7171, %v7233
    %v7235 = vpop.f32.mrf.mxu0
    %v7236 = vadd.f32 %v7173, %v7235
    %7237 = vdwg.mxu0
    %7238 = vst [vmem:[#allocation2 + $0x90] sm:$0xff] %v7210
    %7239 = vst.msk [vmem:[#allocation2 + $0x98] sm:$0xff] %vm6834, %v7212
    %7240 = vst [vmem:[#allocation2 + $0xa8] sm:$0xff] %v7214
    %7241 = vst.msk [vmem:[#allocation2 + $0xb0] sm:$0xff] %vm6834, %v7216
    %7242 = vst [vmem:[#allocation2 + $0xc0] sm:$0xff] %v7220
    %7243 = vst.msk [vmem:[#allocation2 + $0xc8] sm:$0xff] %vm6834, %v7222
    %7244 = vst [vmem:[#allocation2 + $0xd8] sm:$0xff] %v7224
    %7245 = vst.msk [vmem:[#allocation2 + $0xe0] sm:$0xff] %vm6834, %v7226
    %7246 = vst [vmem:[#allocation2 + $0xf0] sm:$0xff] %v7230
    %7247 = vst.msk [vmem:[#allocation2 + $0xf8] sm:$0xff] %vm6834, %v7232
    %7248 = vst [vmem:[#allocation2 + $0x108] sm:$0xf] %v7234
    %7249 = vst.msk [vmem:[#allocation2 + $0x110] sm:$0xf] %vm6845, %v7236
    %s7250 = scalar_lea.vmem %s16, 704
    %v7251 = vld [vmem:[%s7250] sm:$0xff]
    %v7252 = vld [vmem:[%s7250 + $0x8] sm:$0xff]
    %v7253 = vld [vmem:[%s7250 + $0x10] sm:$0xff]
    %v7254 = vld [vmem:[%s7250 + $0x18] sm:$0xff]
    %v7255 = vld [vmem:[%s7250 + $0x20] sm:$0xff]
    %v7256 = vld [vmem:[%s7250 + $0x28] sm:$0xff]
    %v7257 = vld [vmem:[%s7250 + $0x30] sm:$0xff]
    %v7258 = vld [vmem:[%s7250 + $0x38] sm:$0xff]
    %v7259 = vld [vmem:[%s7250 + $0x40] sm:$0xff]
    %v7260 = vld [vmem:[%s7250 + $0x48] sm:$0xff]
    %v7261 = vld [vmem:[%s7250 + $0x50] sm:$0xff]
    %v7262 = vld [vmem:[%s7250 + $0x58] sm:$0xff]
    %v7263 = vld [vmem:[%s7250 + $0x60] sm:$0xff]
    %v7264 = vld [vmem:[%s7250 + $0x68] sm:$0xff]
    %v7265 = vld [vmem:[%s7250 + $0x70] sm:$0xff]
    %v7266 = vld [vmem:[%s7250 + $0x78] sm:$0xff]
    %v7267 = vld [vmem:[%s7250 + $0x80] sm:$0xff]
    %v7268 = vld [vmem:[%s7250 + $0x88] sm:$0xff]
    %v7269 = vld [vmem:[%s7250 + $0x90] sm:$0xff]
    %v7270 = vld [vmem:[%s7250 + $0x98] sm:$0xff]
    %v7271 = vld [vmem:[%s7250 + $0xa0] sm:$0xff]
    %v7272 = vld [vmem:[%s7250 + $0xa8] sm:$0xff]
    %v7273 = vld [vmem:[%s7250 + $0xb0] sm:$0xff]
    %v7274 = vld [vmem:[%s7250 + $0xb8] sm:$0xff]
    %v7275 = vld [vmem:[%s7250 + $0xc0] sm:$0xff]
    %v7276 = vld [vmem:[%s7250 + $0xc8] sm:$0xff]
    %v7277 = vld [vmem:[%s7250 + $0xd0] sm:$0xff]
    %v7278 = vld [vmem:[%s7250 + $0xd8] sm:$0xff]
    %v7279 = vld [vmem:[%s7250 + $0xe0] sm:$0xff]
    %v7280 = vld [vmem:[%s7250 + $0xe8] sm:$0xff]
    %v7281 = vld [vmem:[%s7250 + $0xf0] sm:$0xff]
    %v7282 = vld [vmem:[%s7250 + $0xf8] sm:$0xff]
    %v7283 = vld [vmem:[%s7250 + $0x100] sm:$0xff]
    %v7284 = vld [vmem:[%s7250 + $0x108] sm:$0xff]
    %v7285 = vld [vmem:[%s7250 + $0x110] sm:$0xff]
    %v7286 = vld [vmem:[%s7250 + $0x118] sm:$0xff]
    %v7287 = vld [vmem:[%s7250 + $0x120] sm:$0xff]
    %v7288 = vld [vmem:[%s7250 + $0x128] sm:$0xff]
    %v7289 = vld [vmem:[%s7250 + $0x130] sm:$0xff]
    %v7290 = vld [vmem:[%s7250 + $0x138] sm:$0xff]
    %v7291 = vld [vmem:[%s7250 + $0x140] sm:$0xff]
    %v7292 = vld [vmem:[%s7250 + $0x148] sm:$0xff]
    %v7293 = vld [vmem:[%s7250 + $0x150] sm:$0xff]
    %v7294 = vld [vmem:[%s7250 + $0x158] sm:$0xff]
    %v7339 = vunpack.c.l.b16 %v7251
    %v7340 = vunpack.c.h.b16 %v7251
    %v7341 = vunpack.c.l.b16 %v7252
    %v7342 = vunpack.c.h.b16 %v7252
    %v7343 = vunpack.c.l.b16 %v7253
    %v7344 = vunpack.c.h.b16 %v7253
    %v7345 = vunpack.c.l.b16 %v7254
    %v7346 = vunpack.c.h.b16 %v7254
    %v7347 = vunpack.c.l.b16 %v7255
    %v7348 = vunpack.c.h.b16 %v7255
    %v7349 = vunpack.c.l.b16 %v7256
    %v7350 = vunpack.c.h.b16 %v7256
    %v7351 = vunpack.c.l.b16 %v7257
    %v7352 = vunpack.c.h.b16 %v7257
    %v7353 = vunpack.c.l.b16 %v7258
    %v7354 = vunpack.c.h.b16 %v7258
    %v7355 = vunpack.c.l.b16 %v7259
    %v7356 = vunpack.c.h.b16 %v7259
    %v7357 = vunpack.c.l.b16 %v7260
    %v7358 = vunpack.c.h.b16 %v7260
    %v7359 = vunpack.c.l.b16 %v7261
    %v7360 = vunpack.c.h.b16 %v7261
    %v7361 = vunpack.c.l.b16 %v7262
    %v7362 = vunpack.c.h.b16 %v7262
    %v7363 = vunpack.c.l.b16 %v7263
    %v7364 = vunpack.c.h.b16 %v7263
    %v7365 = vunpack.c.l.b16 %v7264
    %v7366 = vunpack.c.h.b16 %v7264
    %v7367 = vunpack.c.l.b16 %v7265
    %v7368 = vunpack.c.h.b16 %v7265
    %v7369 = vunpack.c.l.b16 %v7266
    %v7370 = vunpack.c.h.b16 %v7266
    %v7371 = vunpack.c.l.b16 %v7267
    %v7372 = vunpack.c.h.b16 %v7267
    %v7373 = vunpack.c.l.b16 %v7268
    %v7374 = vunpack.c.h.b16 %v7268
    %v7375 = vunpack.c.l.b16 %v7269
    %v7376 = vunpack.c.h.b16 %v7269
    %v7377 = vunpack.c.l.b16 %v7270
    %v7378 = vunpack.c.h.b16 %v7270
    %v7379 = vunpack.c.l.b16 %v7271
    %v7380 = vunpack.c.h.b16 %v7271
    %v7381 = vunpack.c.l.b16 %v7272
    %v7382 = vunpack.c.h.b16 %v7272
    %v7383 = vunpack.c.l.b16 %v7273
    %v7384 = vunpack.c.h.b16 %v7273
    %v7385 = vunpack.c.l.b16 %v7274
    %v7386 = vunpack.c.h.b16 %v7274
    %v7387 = vunpack.c.l.b16 %v7275
    %v7388 = vunpack.c.h.b16 %v7275
    %v7389 = vunpack.c.l.b16 %v7276
    %v7390 = vunpack.c.h.b16 %v7276
    %v7391 = vunpack.c.l.b16 %v7277
    %v7392 = vunpack.c.h.b16 %v7277
    %v7393 = vunpack.c.l.b16 %v7278
    %v7394 = vunpack.c.h.b16 %v7278
    %v7395 = vunpack.c.l.b16 %v7279
    %v7396 = vunpack.c.h.b16 %v7279
    %v7397 = vunpack.c.l.b16 %v7280
    %v7398 = vunpack.c.h.b16 %v7280
    %v7399 = vunpack.c.l.b16 %v7281
    %v7400 = vunpack.c.h.b16 %v7281
    %v7401 = vunpack.c.l.b16 %v7282
    %v7402 = vunpack.c.h.b16 %v7282
    %v7403 = vunpack.c.l.b16 %v7283
    %v7404 = vunpack.c.h.b16 %v7283
    %v7405 = vunpack.c.l.b16 %v7284
    %v7406 = vunpack.c.h.b16 %v7284
    %v7407 = vunpack.c.l.b16 %v7285
    %v7408 = vunpack.c.h.b16 %v7285
    %v7409 = vunpack.c.l.b16 %v7286
    %v7410 = vunpack.c.h.b16 %v7286
    %v7411 = vunpack.c.l.b16 %v7287
    %v7412 = vunpack.c.h.b16 %v7287
    %v7413 = vunpack.c.l.b16 %v7288
    %v7414 = vunpack.c.h.b16 %v7288
    %v7415 = vunpack.c.l.b16 %v7289
    %v7416 = vunpack.c.h.b16 %v7289
    %v7417 = vunpack.c.l.b16 %v7290
    %v7418 = vunpack.c.h.b16 %v7290
    %v7419 = vunpack.c.l.b16 %v7291
    %v7420 = vunpack.c.h.b16 %v7291
    %v7421 = vunpack.c.l.b16 %v7292
    %v7422 = vunpack.c.h.b16 %v7292
    %v7423 = vunpack.c.l.b16 %v7293
    %v7424 = vunpack.c.h.b16 %v7293
    %v7425 = vunpack.c.l.b16 %v7294
    %v7426 = vunpack.c.h.b16 %v7294
    %v7427 = vpack.c.b16 %v7341, %v7339
    %v7428 = vpack.c.b16 %v7342, %v7340
    %v7429 = vpack.c.b16 %v7345, %v7343
    %v7430 = vpack.c.b16 %v7346, %v7344
    %v7431 = vpack.c.b16 %v7349, %v7347
    %v7432 = vpack.c.b16 %v7350, %v7348
    %v7433 = vpack.c.b16 %v7353, %v7351
    %v7434 = vpack.c.b16 %v7354, %v7352
    %v7435 = vpack.c.b16 %v7357, %v7355
    %v7436 = vpack.c.b16 %v7358, %v7356
    %v7437 = vpack.c.b16 %v7361, %v7359
    %v7438 = vpack.c.b16 %v7362, %v7360
    %v7439 = vpack.c.b16 %v7365, %v7363
    %v7440 = vpack.c.b16 %v7366, %v7364
    %v7441 = vpack.c.b16 %v7369, %v7367
    %v7442 = vpack.c.b16 %v7370, %v7368
    %v7443 = vpack.c.b16 %v7373, %v7371
    %v7444 = vpack.c.b16 %v7374, %v7372
    %v7445 = vpack.c.b16 %v7377, %v7375
    %v7446 = vpack.c.b16 %v7378, %v7376
    %v7447 = vpack.c.b16 %v7381, %v7379
    %v7448 = vpack.c.b16 %v7382, %v7380
    %v7449 = vpack.c.b16 %v7385, %v7383
    %v7450 = vpack.c.b16 %v7386, %v7384
    %v7451 = vpack.c.b16 %v7389, %v7387
    %v7452 = vpack.c.b16 %v7390, %v7388
    %v7453 = vpack.c.b16 %v7393, %v7391
    %v7454 = vpack.c.b16 %v7394, %v7392
    %v7455 = vpack.c.b16 %v7397, %v7395
    %v7456 = vpack.c.b16 %v7398, %v7396
    %v7457 = vpack.c.b16 %v7401, %v7399
    %v7458 = vpack.c.b16 %v7402, %v7400
    %v7459 = vpack.c.b16 %v7405, %v7403
    %v7460 = vpack.c.b16 %v7406, %v7404
    %v7461 = vpack.c.b16 %v7409, %v7407
    %v7462 = vpack.c.b16 %v7410, %v7408
    %v7463 = vpack.c.b16 %v7413, %v7411
    %v7464 = vpack.c.b16 %v7414, %v7412
    %v7465 = vpack.c.b16 %v7417, %v7415
    %v7466 = vpack.c.b16 %v7418, %v7416
    %v7467 = vpack.c.b16 %v7421, %v7419
    %v7468 = vpack.c.b16 %v7422, %v7420
    %v7469 = vpack.c.b16 %v7425, %v7423
    %v7470 = vpack.c.b16 %v7426, %v7424
    %7515 = vmatprep.subr.bf16.mxu0 %v7442
    %7516 = vmatpush1.bf16.msra.mxu0 %v7441
    %7517 = vmatprep.subr.bf16.mxu0 %v7440
    %7518 = vmatpush1.bf16.msra.mxu0 %v7439
    %7519 = vmatprep.subr.bf16.mxu0 %v7438
    %7520 = vmatpush1.bf16.msra.mxu0 %v7437
    %7521 = vmatprep.subr.bf16.mxu0 %v7436
    %7522 = vmatpush1.bf16.msra.mxu0 %v7435
    %7523 = vmatprep.subr.bf16.mxu0 %v7434
    %7524 = vmatpush1.bf16.msra.mxu0 %v7433
    %7525 = vmatprep.subr.bf16.mxu0 %v7432
    %7526 = vmatpush1.bf16.msra.mxu0 %v7431
    %7527 = vmatprep.subr.bf16.mxu0 %v7430
    %7528 = vmatpush1.bf16.msra.mxu0 %v7429
    %7529 = vmatprep.subr.bf16.mxu0 %v7428
    %7530 = vmatpush1.bf16.msra.mxu0 %v7427
    %7531 = vmatprep.subr.bf16.mxu0 %v7458
    %7532 = vmatpush2.bf16.msra.mxu0 %v7457
    %7533 = vmatprep.subr.bf16.mxu0 %v7456
    %7534 = vmatpush2.bf16.msra.mxu0 %v7455
    %7535 = vmatprep.subr.bf16.mxu0 %v7454
    %7536 = vmatpush2.bf16.msra.mxu0 %v7453
    %7537 = vmatprep.subr.bf16.mxu0 %v7452
    %7538 = vmatpush2.bf16.msra.mxu0 %v7451
    %7539 = vmatprep.subr.bf16.mxu0 %v7450
    %7540 = vmatpush2.bf16.msra.mxu0 %v7449
    %7541 = vmatprep.subr.bf16.mxu0 %v7448
    %7542 = vmatpush2.bf16.msra.mxu0 %v7447
    %7543 = vmatprep.subr.bf16.mxu0 %v7446
    %7544 = vmatpush2.bf16.msra.mxu0 %v7445
    %7545 = vmatprep.subr.bf16.mxu0 %v7444
    %7546 = vmatpush2.bf16.msra.mxu0 %v7443
    %7547 = vmatprep.mubr.bf16.mxu0 %v6426
    %7548 = vmatmul.mubr.bf16.gmra.mxu0 %v6425
    %v7549 = vpop.f32.mrf.mxu0
    %v7550 = vadd.f32 0.0, %v7549
    %v7551 = vpop.f32.mrf.mxu0
    %v7552 = vadd.f32 0.0, %v7551
    %v7553 = vpop.f32.mrf.mxu0
    %v7554 = vadd.f32 0.0, %v7553
    %v7555 = vpop.f32.mrf.mxu0
    %v7556 = vadd.f32 0.0, %v7555
    %7557 = vmatprep.mubr.bf16.mxu0 %v6429
    %7558 = vmatmul.mubr.bf16.gmra.mxu0 %v6428
    %v7559 = vpop.f32.mrf.mxu0
    %v7560 = vadd.f32 0.0, %v7559
    %v7561 = vpop.f32.mrf.mxu0
    %v7562 = vadd.f32 0.0, %v7561
    %v7563 = vpop.f32.mrf.mxu0
    %v7564 = vadd.f32 0.0, %v7563
    %v7565 = vpop.f32.mrf.mxu0
    %v7566 = vadd.f32 0.0, %v7565
    %7567 = vmatprep.mubr.bf16.mxu0 %v6432
    %7568 = vmatmul.mubr.bf16.gmra.mxu0 %v6431
    %v7569 = vpop.f32.mrf.mxu0
    %v7570 = vadd.f32 0.0, %v7569
    %v7571 = vpop.f32.mrf.mxu0
    %v7572 = vadd.f32 0.0, %v7571
    %v7573 = vpop.f32.mrf.mxu0
    %v7574 = vadd.f32 0.0, %v7573
    %v7575 = vpop.f32.mrf.mxu0
    %v7576 = vadd.f32 0.0, %v7575
    %7577 = vdwg.mxu0
    %7578 = vmatprep.subr.bf16.mxu0 0
    %7579 = vmatpush1.bf16.msra.mxu0 0
    %7580 = vmatprep.subr.bf16.mxu0 0
    %7581 = vmatpush1.bf16.msra.mxu0 0
    %7582 = vmatprep.subr.bf16.mxu0 %v7470
    %7583 = vmatpush1.bf16.msra.mxu0 %v7469
    %7584 = vmatprep.subr.bf16.mxu0 %v7468
    %7585 = vmatpush1.bf16.msra.mxu0 %v7467
    %7586 = vmatprep.subr.bf16.mxu0 %v7466
    %7587 = vmatpush1.bf16.msra.mxu0 %v7465
    %7588 = vmatprep.subr.bf16.mxu0 %v7464
    %7589 = vmatpush1.bf16.msra.mxu0 %v7463
    %7590 = vmatprep.subr.bf16.mxu0 %v7462
    %7591 = vmatpush1.bf16.msra.mxu0 %v7461
    %7592 = vmatprep.subr.bf16.mxu0 %v7460
    %7593 = vmatpush1.bf16.msra.mxu0 %v7459
    %7594 = vmatprep.subr.bf16.mxu0 0
    %7595 = vmatpush2.bf16.msra.mxu0 0
    %7596 = vmatprep.subr.bf16.mxu0 0
    %7597 = vmatpush2.bf16.msra.mxu0 0
    %7598 = vmatprep.subr.bf16.mxu0 0
    %7599 = vmatpush2.bf16.msra.mxu0 0
    %7600 = vmatprep.subr.bf16.mxu0 0
    %7601 = vmatpush2.bf16.msra.mxu0 0
    %7602 = vmatprep.subr.bf16.mxu0 0
    %7603 = vmatpush2.bf16.msra.mxu0 0
    %7604 = vmatprep.subr.bf16.mxu0 0
    %7605 = vmatpush2.bf16.msra.mxu0 0
    %7606 = vmatprep.subr.bf16.mxu0 0
    %7607 = vmatpush2.bf16.msra.mxu0 0
    %7608 = vmatprep.subr.bf16.mxu0 0
    %7609 = vmatpush2.bf16.msra.mxu0 0
    %7610 = vmatprep.mubr.bf16.mxu0 0
    %7611 = vmatmul.mubr.bf16.gmra.mxu0 %v6699
    %v7612 = vpop.f32.mrf.mxu0
    %v7613 = vadd.f32 %v7550, %v7612
    %v7614 = vpop.f32.mrf.mxu0
    %v7615 = vadd.f32 %v7552, %v7614
    %v7616 = vpop.f32.mrf.mxu0
    %v7617 = vadd.f32 %v7554, %v7616
    %v7618 = vpop.f32.mrf.mxu0
    %v7619 = vadd.f32 %v7556, %v7618
    %7620 = vmatprep.mubr.bf16.mxu0 0
    %7621 = vmatmul.mubr.bf16.gmra.mxu0 %v6702
    %v7622 = vpop.f32.mrf.mxu0
    %v7623 = vadd.f32 %v7560, %v7622
    %v7624 = vpop.f32.mrf.mxu0
    %v7625 = vadd.f32 %v7562, %v7624
    %v7626 = vpop.f32.mrf.mxu0
    %v7627 = vadd.f32 %v7564, %v7626
    %v7628 = vpop.f32.mrf.mxu0
    %v7629 = vadd.f32 %v7566, %v7628
    %7630 = vmatprep.mubr.bf16.mxu0 0
    %7631 = vmatmul.mubr.bf16.gmra.mxu0 %v6705
    %v7632 = vpop.f32.mrf.mxu0
    %v7633 = vadd.f32 %v7570, %v7632
    %v7634 = vpop.f32.mrf.mxu0
    %v7635 = vadd.f32 %v7572, %v7634
    %v7636 = vpop.f32.mrf.mxu0
    %v7637 = vadd.f32 %v7574, %v7636
    %v7638 = vpop.f32.mrf.mxu0
    %v7639 = vadd.f32 %v7576, %v7638
    %7640 = vdwg.mxu0
    %7641 = vst [vmem:[#allocation2 + $0x120] sm:$0xff] %v7613
    %7642 = vst.msk [vmem:[#allocation2 + $0x128] sm:$0xff] %vm6834, %v7615
    %7643 = vst [vmem:[#allocation2 + $0x138] sm:$0xff] %v7617
    %7644 = vst.msk [vmem:[#allocation2 + $0x140] sm:$0xff] %vm6834, %v7619
    %7645 = vst [vmem:[#allocation2 + $0x150] sm:$0xff] %v7623
    %7646 = vst.msk [vmem:[#allocation2 + $0x158] sm:$0xff] %vm6834, %v7625
    %7647 = vst [vmem:[#allocation2 + $0x168] sm:$0xff] %v7627
    %7648 = vst.msk [vmem:[#allocation2 + $0x170] sm:$0xff] %vm6834, %v7629
    %7649 = vst [vmem:[#allocation2 + $0x180] sm:$0xff] %v7633
    %7650 = vst.msk [vmem:[#allocation2 + $0x188] sm:$0xff] %vm6834, %v7635
    %7651 = vst [vmem:[#allocation2 + $0x198] sm:$0xf] %v7637
    %7652 = vst.msk [vmem:[#allocation2 + $0x1a0] sm:$0xf] %vm6845, %v7639
    %s7653 = scalar_lea.vmem %s16, 1056
    %v7654 = vld [vmem:[%s7653] sm:$0xff]
    %v7655 = vld [vmem:[%s7653 + $0x8] sm:$0xff]
    %v7656 = vld [vmem:[%s7653 + $0x10] sm:$0xff]
    %v7657 = vld [vmem:[%s7653 + $0x18] sm:$0xff]
    %v7658 = vld [vmem:[%s7653 + $0x20] sm:$0xff]
    %v7659 = vld [vmem:[%s7653 + $0x28] sm:$0xff]
    %v7660 = vld [vmem:[%s7653 + $0x30] sm:$0xff]
    %v7661 = vld [vmem:[%s7653 + $0x38] sm:$0xff]
    %v7662 = vld [vmem:[%s7653 + $0x40] sm:$0xff]
    %v7663 = vld [vmem:[%s7653 + $0x48] sm:$0xff]
    %v7664 = vld [vmem:[%s7653 + $0x50] sm:$0xff]
    %v7665 = vld [vmem:[%s7653 + $0x58] sm:$0xff]
    %v7666 = vld [vmem:[%s7653 + $0x60] sm:$0xff]
    %v7667 = vld [vmem:[%s7653 + $0x68] sm:$0xff]
    %v7668 = vld [vmem:[%s7653 + $0x70] sm:$0xff]
    %v7669 = vld [vmem:[%s7653 + $0x78] sm:$0xff]
    %v7670 = vld [vmem:[%s7653 + $0x80] sm:$0xff]
    %v7671 = vld [vmem:[%s7653 + $0x88] sm:$0xff]
    %v7672 = vld [vmem:[%s7653 + $0x90] sm:$0xff]
    %v7673 = vld [vmem:[%s7653 + $0x98] sm:$0xff]
    %v7674 = vld [vmem:[%s7653 + $0xa0] sm:$0xff]
    %v7675 = vld [vmem:[%s7653 + $0xa8] sm:$0xff]
    %v7676 = vld [vmem:[%s7653 + $0xb0] sm:$0xff]
    %v7677 = vld [vmem:[%s7653 + $0xb8] sm:$0xff]
    %v7678 = vld [vmem:[%s7653 + $0xc0] sm:$0xff]
    %v7679 = vld [vmem:[%s7653 + $0xc8] sm:$0xff]
    %v7680 = vld [vmem:[%s7653 + $0xd0] sm:$0xff]
    %v7681 = vld [vmem:[%s7653 + $0xd8] sm:$0xff]
    %v7682 = vld [vmem:[%s7653 + $0xe0] sm:$0xff]
    %v7683 = vld [vmem:[%s7653 + $0xe8] sm:$0xff]
    %v7684 = vld [vmem:[%s7653 + $0xf0] sm:$0xff]
    %v7685 = vld [vmem:[%s7653 + $0xf8] sm:$0xff]
    %v7686 = vld [vmem:[%s7653 + $0x100] sm:$0xff]
    %v7687 = vld [vmem:[%s7653 + $0x108] sm:$0xff]
    %v7688 = vld [vmem:[%s7653 + $0x110] sm:$0xff]
    %v7689 = vld [vmem:[%s7653 + $0x118] sm:$0xff]
    %v7690 = vld [vmem:[%s7653 + $0x120] sm:$0xff]
    %v7691 = vld [vmem:[%s7653 + $0x128] sm:$0xff]
    %v7692 = vld [vmem:[%s7653 + $0x130] sm:$0xff]
    %v7693 = vld [vmem:[%s7653 + $0x138] sm:$0xff]
    %v7694 = vld [vmem:[%s7653 + $0x140] sm:$0xff]
    %v7695 = vld [vmem:[%s7653 + $0x148] sm:$0xff]
    %v7696 = vld [vmem:[%s7653 + $0x150] sm:$0xff]
    %v7697 = vld [vmem:[%s7653 + $0x158] sm:$0xff]
    %v7742 = vunpack.c.l.b16 %v7654
    %v7743 = vunpack.c.h.b16 %v7654
    %v7744 = vunpack.c.l.b16 %v7655
    %v7745 = vunpack.c.h.b16 %v7655
    %v7746 = vunpack.c.l.b16 %v7656
    %v7747 = vunpack.c.h.b16 %v7656
    %v7748 = vunpack.c.l.b16 %v7657
    %v7749 = vunpack.c.h.b16 %v7657
    %v7750 = vunpack.c.l.b16 %v7658
    %v7751 = vunpack.c.h.b16 %v7658
    %v7752 = vunpack.c.l.b16 %v7659
    %v7753 = vunpack.c.h.b16 %v7659
    %v7754 = vunpack.c.l.b16 %v7660
    %v7755 = vunpack.c.h.b16 %v7660
    %v7756 = vunpack.c.l.b16 %v7661
    %v7757 = vunpack.c.h.b16 %v7661
    %v7758 = vunpack.c.l.b16 %v7662
    %v7759 = vunpack.c.h.b16 %v7662
    %v7760 = vunpack.c.l.b16 %v7663
    %v7761 = vunpack.c.h.b16 %v7663
    %v7762 = vunpack.c.l.b16 %v7664
    %v7763 = vunpack.c.h.b16 %v7664
    %v7764 = vunpack.c.l.b16 %v7665
    %v7765 = vunpack.c.h.b16 %v7665
    %v7766 = vunpack.c.l.b16 %v7666
    %v7767 = vunpack.c.h.b16 %v7666
    %v7768 = vunpack.c.l.b16 %v7667
    %v7769 = vunpack.c.h.b16 %v7667
    %v7770 = vunpack.c.l.b16 %v7668
    %v7771 = vunpack.c.h.b16 %v7668
    %v7772 = vunpack.c.l.b16 %v7669
    %v7773 = vunpack.c.h.b16 %v7669
    %v7774 = vunpack.c.l.b16 %v7670
    %v7775 = vunpack.c.h.b16 %v7670
    %v7776 = vunpack.c.l.b16 %v7671
    %v7777 = vunpack.c.h.b16 %v7671
    %v7778 = vunpack.c.l.b16 %v7672
    %v7779 = vunpack.c.h.b16 %v7672
    %v7780 = vunpack.c.l.b16 %v7673
    %v7781 = vunpack.c.h.b16 %v7673
    %v7782 = vunpack.c.l.b16 %v7674
    %v7783 = vunpack.c.h.b16 %v7674
    %v7784 = vunpack.c.l.b16 %v7675
    %v7785 = vunpack.c.h.b16 %v7675
    %v7786 = vunpack.c.l.b16 %v7676
    %v7787 = vunpack.c.h.b16 %v7676
    %v7788 = vunpack.c.l.b16 %v7677
    %v7789 = vunpack.c.h.b16 %v7677
    %v7790 = vunpack.c.l.b16 %v7678
    %v7791 = vunpack.c.h.b16 %v7678
    %v7792 = vunpack.c.l.b16 %v7679
    %v7793 = vunpack.c.h.b16 %v7679
    %v7794 = vunpack.c.l.b16 %v7680
    %v7795 = vunpack.c.h.b16 %v7680
    %v7796 = vunpack.c.l.b16 %v7681
    %v7797 = vunpack.c.h.b16 %v7681
    %v7798 = vunpack.c.l.b16 %v7682
    %v7799 = vunpack.c.h.b16 %v7682
    %v7800 = vunpack.c.l.b16 %v7683
    %v7801 = vunpack.c.h.b16 %v7683
    %v7802 = vunpack.c.l.b16 %v7684
    %v7803 = vunpack.c.h.b16 %v7684
    %v7804 = vunpack.c.l.b16 %v7685
    %v7805 = vunpack.c.h.b16 %v7685
    %v7806 = vunpack.c.l.b16 %v7686
    %v7807 = vunpack.c.h.b16 %v7686
    %v7808 = vunpack.c.l.b16 %v7687
    %v7809 = vunpack.c.h.b16 %v7687
    %v7810 = vunpack.c.l.b16 %v7688
    %v7811 = vunpack.c.h.b16 %v7688
    %v7812 = vunpack.c.l.b16 %v7689
    %v7813 = vunpack.c.h.b16 %v7689
    %v7814 = vunpack.c.l.b16 %v7690
    %v7815 = vunpack.c.h.b16 %v7690
    %v7816 = vunpack.c.l.b16 %v7691
    %v7817 = vunpack.c.h.b16 %v7691
    %v7818 = vunpack.c.l.b16 %v7692
    %v7819 = vunpack.c.h.b16 %v7692
    %v7820 = vunpack.c.l.b16 %v7693
    %v7821 = vunpack.c.h.b16 %v7693
    %v7822 = vunpack.c.l.b16 %v7694
    %v7823 = vunpack.c.h.b16 %v7694
    %v7824 = vunpack.c.l.b16 %v7695
    %v7825 = vunpack.c.h.b16 %v7695
    %v7826 = vunpack.c.l.b16 %v7696
    %v7827 = vunpack.c.h.b16 %v7696
    %v7828 = vunpack.c.l.b16 %v7697
    %v7829 = vunpack.c.h.b16 %v7697
    %v7830 = vpack.c.b16 %v7744, %v7742
    %v7831 = vpack.c.b16 %v7745, %v7743
    %v7832 = vpack.c.b16 %v7748, %v7746
    %v7833 = vpack.c.b16 %v7749, %v7747
    %v7834 = vpack.c.b16 %v7752, %v7750
    %v7835 = vpack.c.b16 %v7753, %v7751
    %v7836 = vpack.c.b16 %v7756, %v7754
    %v7837 = vpack.c.b16 %v7757, %v7755
    %v7838 = vpack.c.b16 %v7760, %v7758
    %v7839 = vpack.c.b16 %v7761, %v7759
    %v7840 = vpack.c.b16 %v7764, %v7762
    %v7841 = vpack.c.b16 %v7765, %v7763
    %v7842 = vpack.c.b16 %v7768, %v7766
    %v7843 = vpack.c.b16 %v7769, %v7767
    %v7844 = vpack.c.b16 %v7772, %v7770
    %v7845 = vpack.c.b16 %v7773, %v7771
    %v7846 = vpack.c.b16 %v7776, %v7774
    %v7847 = vpack.c.b16 %v7777, %v7775
    %v7848 = vpack.c.b16 %v7780, %v7778
    %v7849 = vpack.c.b16 %v7781, %v7779
    %v7850 = vpack.c.b16 %v7784, %v7782
    %v7851 = vpack.c.b16 %v7785, %v7783
    %v7852 = vpack.c.b16 %v7788, %v7786
    %v7853 = vpack.c.b16 %v7789, %v7787
    %v7854 = vpack.c.b16 %v7792, %v7790
    %v7855 = vpack.c.b16 %v7793, %v7791
    %v7856 = vpack.c.b16 %v7796, %v7794
    %v7857 = vpack.c.b16 %v7797, %v7795
    %v7858 = vpack.c.b16 %v7800, %v7798
    %v7859 = vpack.c.b16 %v7801, %v7799
    %v7860 = vpack.c.b16 %v7804, %v7802
    %v7861 = vpack.c.b16 %v7805, %v7803
    %v7862 = vpack.c.b16 %v7808, %v7806
    %v7863 = vpack.c.b16 %v7809, %v7807
    %v7864 = vpack.c.b16 %v7812, %v7810
    %v7865 = vpack.c.b16 %v7813, %v7811
    %v7866 = vpack.c.b16 %v7816, %v7814
    %v7867 = vpack.c.b16 %v7817, %v7815
    %v7868 = vpack.c.b16 %v7820, %v7818
    %v7869 = vpack.c.b16 %v7821, %v7819
    %v7870 = vpack.c.b16 %v7824, %v7822
    %v7871 = vpack.c.b16 %v7825, %v7823
    %v7872 = vpack.c.b16 %v7828, %v7826
    %v7873 = vpack.c.b16 %v7829, %v7827
    %7918 = vmatprep.subr.bf16.mxu0 %v7845
    %7919 = vmatpush1.bf16.msra.mxu0 %v7844
    %7920 = vmatprep.subr.bf16.mxu0 %v7843
    %7921 = vmatpush1.bf16.msra.mxu0 %v7842
    %7922 = vmatprep.subr.bf16.mxu0 %v7841
    %7923 = vmatpush1.bf16.msra.mxu0 %v7840
    %7924 = vmatprep.subr.bf16.mxu0 %v7839
    %7925 = vmatpush1.bf16.msra.mxu0 %v7838
    %7926 = vmatprep.subr.bf16.mxu0 %v7837
    %7927 = vmatpush1.bf16.msra.mxu0 %v7836
    %7928 = vmatprep.subr.bf16.mxu0 %v7835
    %7929 = vmatpush1.bf16.msra.mxu0 %v7834
    %7930 = vmatprep.subr.bf16.mxu0 %v7833
    %7931 = vmatpush1.bf16.msra.mxu0 %v7832
    %7932 = vmatprep.subr.bf16.mxu0 %v7831
    %7933 = vmatpush1.bf16.msra.mxu0 %v7830
    %7934 = vmatprep.subr.bf16.mxu0 %v7861
    %7935 = vmatpush2.bf16.msra.mxu0 %v7860
    %7936 = vmatprep.subr.bf16.mxu0 %v7859
    %7937 = vmatpush2.bf16.msra.mxu0 %v7858
    %7938 = vmatprep.subr.bf16.mxu0 %v7857
    %7939 = vmatpush2.bf16.msra.mxu0 %v7856
    %7940 = vmatprep.subr.bf16.mxu0 %v7855
    %7941 = vmatpush2.bf16.msra.mxu0 %v7854
    %7942 = vmatprep.subr.bf16.mxu0 %v7853
    %7943 = vmatpush2.bf16.msra.mxu0 %v7852
    %7944 = vmatprep.subr.bf16.mxu0 %v7851
    %7945 = vmatpush2.bf16.msra.mxu0 %v7850
    %7946 = vmatprep.subr.bf16.mxu0 %v7849
    %7947 = vmatpush2.bf16.msra.mxu0 %v7848
    %7948 = vmatprep.subr.bf16.mxu0 %v7847
    %7949 = vmatpush2.bf16.msra.mxu0 %v7846
    %7950 = vmatprep.mubr.bf16.mxu0 %v6426
    %7951 = vmatmul.mubr.bf16.gmra.mxu0 %v6425
    %v7952 = vpop.f32.mrf.mxu0
    %v7953 = vadd.f32 0.0, %v7952
    %v7954 = vpop.f32.mrf.mxu0
    %v7955 = vadd.f32 0.0, %v7954
    %v7956 = vpop.f32.mrf.mxu0
    %v7957 = vadd.f32 0.0, %v7956
    %v7958 = vpop.f32.mrf.mxu0
    %v7959 = vadd.f32 0.0, %v7958
    %7960 = vmatprep.mubr.bf16.mxu0 %v6429
    %7961 = vmatmul.mubr.bf16.gmra.mxu0 %v6428
    %v7962 = vpop.f32.mrf.mxu0
    %v7963 = vadd.f32 0.0, %v7962
    %v7964 = vpop.f32.mrf.mxu0
    %v7965 = vadd.f32 0.0, %v7964
    %v7966 = vpop.f32.mrf.mxu0
    %v7967 = vadd.f32 0.0, %v7966
    %v7968 = vpop.f32.mrf.mxu0
    %v7969 = vadd.f32 0.0, %v7968
    %7970 = vmatprep.mubr.bf16.mxu0 %v6432
    %7971 = vmatmul.mubr.bf16.gmra.mxu0 %v6431
    %v7972 = vpop.f32.mrf.mxu0
    %v7973 = vadd.f32 0.0, %v7972
    %v7974 = vpop.f32.mrf.mxu0
    %v7975 = vadd.f32 0.0, %v7974
    %v7976 = vpop.f32.mrf.mxu0
    %v7977 = vadd.f32 0.0, %v7976
    %v7978 = vpop.f32.mrf.mxu0
    %v7979 = vadd.f32 0.0, %v7978
    %7980 = vdwg.mxu0
    %7981 = vmatprep.subr.bf16.mxu0 0
    %7982 = vmatpush1.bf16.msra.mxu0 0
    %7983 = vmatprep.subr.bf16.mxu0 0
    %7984 = vmatpush1.bf16.msra.mxu0 0
    %7985 = vmatprep.subr.bf16.mxu0 %v7873
    %7986 = vmatpush1.bf16.msra.mxu0 %v7872
    %7987 = vmatprep.subr.bf16.mxu0 %v7871
    %7988 = vmatpush1.bf16.msra.mxu0 %v7870
    %7989 = vmatprep.subr.bf16.mxu0 %v7869
    %7990 = vmatpush1.bf16.msra.mxu0 %v7868
    %7991 = vmatprep.subr.bf16.mxu0 %v7867
    %7992 = vmatpush1.bf16.msra.mxu0 %v7866
    %7993 = vmatprep.subr.bf16.mxu0 %v7865
    %7994 = vmatpush1.bf16.msra.mxu0 %v7864
    %7995 = vmatprep.subr.bf16.mxu0 %v7863
    %7996 = vmatpush1.bf16.msra.mxu0 %v7862
    %7997 = vmatprep.subr.bf16.mxu0 0
    %7998 = vmatpush2.bf16.msra.mxu0 0
    %7999 = vmatprep.subr.bf16.mxu0 0
    %8000 = vmatpush2.bf16.msra.mxu0 0
    %8001 = vmatprep.subr.bf16.mxu0 0
    %8002 = vmatpush2.bf16.msra.mxu0 0
    %8003 = vmatprep.subr.bf16.mxu0 0
    %8004 = vmatpush2.bf16.msra.mxu0 0
    %8005 = vmatprep.subr.bf16.mxu0 0
    %8006 = vmatpush2.bf16.msra.mxu0 0
    %8007 = vmatprep.subr.bf16.mxu0 0
    %8008 = vmatpush2.bf16.msra.mxu0 0
    %8009 = vmatprep.subr.bf16.mxu0 0
    %8010 = vmatpush2.bf16.msra.mxu0 0
    %8011 = vmatprep.subr.bf16.mxu0 0
    %8012 = vmatpush2.bf16.msra.mxu0 0
    %8013 = vmatprep.mubr.bf16.mxu0 0
    %8014 = vmatmul.mubr.bf16.gmra.mxu0 %v6699
    %v8015 = vpop.f32.mrf.mxu0
    %v8016 = vadd.f32 %v7953, %v8015
    %v8017 = vpop.f32.mrf.mxu0
    %v8018 = vadd.f32 %v7955, %v8017
    %v8019 = vpop.f32.mrf.mxu0
    %v8020 = vadd.f32 %v7957, %v8019
    %v8021 = vpop.f32.mrf.mxu0
    %v8022 = vadd.f32 %v7959, %v8021
    %8023 = vmatprep.mubr.bf16.mxu0 0
    %8024 = vmatmul.mubr.bf16.gmra.mxu0 %v6702
    %v8025 = vpop.f32.mrf.mxu0
    %v8026 = vadd.f32 %v7963, %v8025
    %v8027 = vpop.f32.mrf.mxu0
    %v8028 = vadd.f32 %v7965, %v8027
    %v8029 = vpop.f32.mrf.mxu0
    %v8030 = vadd.f32 %v7967, %v8029
    %v8031 = vpop.f32.mrf.mxu0
    %v8032 = vadd.f32 %v7969, %v8031
    %8033 = vmatprep.mubr.bf16.mxu0 0
    %8034 = vmatmul.mubr.bf16.gmra.mxu0 %v6705
    %v8035 = vpop.f32.mrf.mxu0
    %v8036 = vadd.f32 %v7973, %v8035
    %v8037 = vpop.f32.mrf.mxu0
    %v8038 = vadd.f32 %v7975, %v8037
    %v8039 = vpop.f32.mrf.mxu0
    %v8040 = vadd.f32 %v7977, %v8039
    %v8041 = vpop.f32.mrf.mxu0
    %v8042 = vadd.f32 %v7979, %v8041
    %8043 = vdwg.mxu0
    %8044 = vst [vmem:[#allocation2 + $0x1b0] sm:$0xff] %v8016
    %8045 = vst.msk [vmem:[#allocation2 + $0x1b8] sm:$0xff] %vm6834, %v8018
    %8046 = vst [vmem:[#allocation2 + $0x1c8] sm:$0xff] %v8020
    %8047 = vst.msk [vmem:[#allocation2 + $0x1d0] sm:$0xff] %vm6834, %v8022
    %8048 = vst [vmem:[#allocation2 + $0x1e0] sm:$0xff] %v8026
    %8049 = vst.msk [vmem:[#allocation2 + $0x1e8] sm:$0xff] %vm6834, %v8028
    %8050 = vst [vmem:[#allocation2 + $0x1f8] sm:$0xff] %v8030
    %8051 = vst.msk [vmem:[#allocation2 + $0x200] sm:$0xff] %vm6834, %v8032
    %8052 = vst [vmem:[#allocation2 + $0x210] sm:$0xff] %v8036
    %8053 = vst.msk [vmem:[#allocation2 + $0x218] sm:$0xff] %vm6834, %v8038
    %8054 = vst [vmem:[#allocation2 + $0x228] sm:$0xf] %v8040
    %8055 = vst.msk [vmem:[#allocation2 + $0x230] sm:$0xf] %vm6845, %v8042
    %v8056 = vld [vmem:[#allocation2] sm:$0xff]
    %v8057 = vld [vmem:[#allocation2 + $0x8] sm:$0xff]
    %v8058 = vld [vmem:[#allocation2 + $0x18] sm:$0xff]
    %v8059 = vld [vmem:[#allocation2 + $0x20] sm:$0xff]
    %v8060 = vld [vmem:[#allocation2 + $0x30] sm:$0xff]
    %v8061 = vld [vmem:[#allocation2 + $0x38] sm:$0xff]
    %v8062 = vld [vmem:[#allocation2 + $0x48] sm:$0xff]
    %v8063 = vld [vmem:[#allocation2 + $0x50] sm:$0xff]
    %v8064 = vld [vmem:[#allocation2 + $0x60] sm:$0xff]
    %v8065 = vld [vmem:[#allocation2 + $0x68] sm:$0xff]
    %v8066 = vld [vmem:[#allocation2 + $0x78] sm:$0xff]
    %v8067 = vld [vmem:[#allocation2 + $0x80] sm:$0xff]
    %v8068 = vld [vmem:[#allocation2 + $0x90] sm:$0xff]
    %v8069 = vld [vmem:[#allocation2 + $0x98] sm:$0xff]
    %v8070 = vld [vmem:[#allocation2 + $0xa8] sm:$0xff]
    %v8071 = vld [vmem:[#allocation2 + $0xb0] sm:$0xff]
    %v8072 = vld [vmem:[#allocation2 + $0xc0] sm:$0xff]
    %v8073 = vld [vmem:[#allocation2 + $0xc8] sm:$0xff]
    %v8074 = vld [vmem:[#allocation2 + $0xd8] sm:$0xff]
    %v8075 = vld [vmem:[#allocation2 + $0xe0] sm:$0xff]
    %v8076 = vld [vmem:[#allocation2 + $0xf0] sm:$0xff]
    %v8077 = vld [vmem:[#allocation2 + $0xf8] sm:$0xff]
    %v8078 = vld [vmem:[#allocation2 + $0x108] sm:$0xff]
    %v8079 = vld [vmem:[#allocation2 + $0x110] sm:$0xff]
    %v8080 = vld [vmem:[#allocation2 + $0x120] sm:$0xff]
    %v8081 = vld [vmem:[#allocation2 + $0x128] sm:$0xff]
    %v8082 = vld [vmem:[#allocation2 + $0x138] sm:$0xff]
    %v8083 = vld [vmem:[#allocation2 + $0x140] sm:$0xff]
    %v8084 = vld [vmem:[#allocation2 + $0x150] sm:$0xff]
    %v8085 = vld [vmem:[#allocation2 + $0x158] sm:$0xff]
    %v8086 = vld [vmem:[#allocation2 + $0x168] sm:$0xff]
    %v8087 = vld [vmem:[#allocation2 + $0x170] sm:$0xff]
    %v8088 = vld [vmem:[#allocation2 + $0x180] sm:$0xff]
    %v8089 = vld [vmem:[#allocation2 + $0x188] sm:$0xff]
    %v8090 = vld [vmem:[#allocation2 + $0x198] sm:$0xff]
    %v8091 = vld [vmem:[#allocation2 + $0x1a0] sm:$0xff]
    %v8092 = vld [vmem:[#allocation2 + $0x1b0] sm:$0xff]
    %v8093 = vld [vmem:[#allocation2 + $0x1b8] sm:$0xff]
    %v8094 = vld [vmem:[#allocation2 + $0x1c8] sm:$0xff]
    %v8095 = vld [vmem:[#allocation2 + $0x1d0] sm:$0xff]
    %v8096 = vld [vmem:[#allocation2 + $0x1e0] sm:$0xff]
    %v8097 = vld [vmem:[#allocation2 + $0x1e8] sm:$0xff]
    %v8098 = vld [vmem:[#allocation2 + $0x1f8] sm:$0xff]
    %v8099 = vld [vmem:[#allocation2 + $0x200] sm:$0xff]
    %v8100 = vld [vmem:[#allocation2 + $0x210] sm:$0xff]
    %v8101 = vld [vmem:[#allocation2 + $0x218] sm:$0xff]
    %v8102 = vld [vmem:[#allocation2 + $0x228] sm:$0xff]
    %v8103 = vld [vmem:[#allocation2 + $0x230] sm:$0xff]
    %v8104 = vpack.c.bf16 %v8058, %v8056
    %v8105 = vpack.c.bf16 %v8059, %v8057
    %v8106 = vpack.c.bf16 %v8062, %v8060
    %v8107 = vpack.c.bf16 %v8063, %v8061
    %v8108 = vpack.c.bf16 %v8066, %v8064
    %v8109 = vpack.c.bf16 %v8067, %v8065
    %v8110 = vpack.c.bf16 %v8070, %v8068
    %v8111 = vpack.c.bf16 %v8071, %v8069
    %v8112 = vpack.c.bf16 %v8074, %v8072
    %v8113 = vpack.c.bf16 %v8075, %v8073
    %v8114 = vpack.c.bf16 %v8078, %v8076
    %v8115 = vpack.c.bf16 %v8079, %v8077
    %v8116 = vpack.c.bf16 %v8082, %v8080
    %v8117 = vpack.c.bf16 %v8083, %v8081
    %v8118 = vpack.c.bf16 %v8086, %v8084
    %v8119 = vpack.c.bf16 %v8087, %v8085
    %v8120 = vpack.c.bf16 %v8090, %v8088
    %v8121 = vpack.c.bf16 %v8091, %v8089
    %v8122 = vpack.c.bf16 %v8094, %v8092
    %v8123 = vpack.c.bf16 %v8095, %v8093
    %v8124 = vpack.c.bf16 %v8098, %v8096
    %v8125 = vpack.c.bf16 %v8099, %v8097
    %v8126 = vpack.c.bf16 %v8102, %v8100
    %v8127 = vpack.c.bf16 %v8103, %v8101
    %v8128 = vld [vmem:[%s17] sm:$0xff]
    %v8129 = vld [vmem:[%s17 + $0x8] sm:$0xff]
    %v8130 = vld [vmem:[%s17 + $0x10] sm:$0xff]
    %v8131 = vld [vmem:[%s17 + $0x18] sm:$0xff]
    %v8132 = vld [vmem:[%s17 + $0x20] sm:$0xff]
    %v8133 = vld [vmem:[%s17 + $0x28] sm:$0xff]
    %v8134 = vld [vmem:[%s17 + $0x30] sm:$0x11]
    %v8142 = vunpack.c.l.b16 %v8128
    %v8143 = vunpack.c.h.b16 %v8128
    %v8144 = vunpack.c.l.b16 %v8129
    %v8145 = vunpack.c.h.b16 %v8129
    %v8146 = vunpack.c.l.b16 %v8130
    %v8147 = vunpack.c.h.b16 %v8130
    %v8148 = vunpack.c.l.b16 %v8131
    %v8149 = vunpack.c.h.b16 %v8131
    %v8150 = vunpack.c.l.b16 %v8132
    %v8151 = vunpack.c.h.b16 %v8132
    %v8152 = vunpack.c.l.b16 %v8133
    %v8153 = vunpack.c.h.b16 %v8133
    %v8154 = vunpack.c.l.b16 %v8134
    %v8155 = vunpack.c.h.b16 %v8134
    %v8156 = vpack.c.b16 %v8144, %v8142
    %v8157 = vpack.c.b16 %v8145, %v8143
    %v8158 = vpack.c.b16 %v8148, %v8146
    %v8159 = vpack.c.b16 %v8149, %v8147
    %v8160 = vpack.c.b16 %v8152, %v8150
    %v8161 = vpack.c.b16 %v8153, %v8151
    %v8162 = vpack.c.b16 %v8154, %v8154
    %v8163 = vpack.c.b16 %v8155, %v8155
    %v8169 = vsel %vm776, %v8157, 0
    %v8172 = vsel %vm776, %v8159, 0
    %v8175 = vsel %vm776, %v8161, 0
    %v8178 = vsel %vm776, %v8163, 0
    %8180 = vmatprep.subr.bf16.mxu0 %v8119
    %8181 = vmatpush1.bf16.msra.mxu0 %v8118
    %8182 = vmatprep.subr.bf16.mxu0 %v8117
    %8183 = vmatpush1.bf16.msra.mxu0 %v8116
    %8184 = vmatprep.subr.bf16.mxu0 %v8115
    %8185 = vmatpush1.bf16.msra.mxu0 %v8114
    %8186 = vmatprep.subr.bf16.mxu0 %v8113
    %8187 = vmatpush1.bf16.msra.mxu0 %v8112
    %8188 = vmatprep.subr.bf16.mxu0 %v8111
    %8189 = vmatpush1.bf16.msra.mxu0 %v8110
    %8190 = vmatprep.subr.bf16.mxu0 %v8109
    %8191 = vmatpush1.bf16.msra.mxu0 %v8108
    %8192 = vmatprep.subr.bf16.mxu0 %v8107
    %8193 = vmatpush1.bf16.msra.mxu0 %v8106
    %8194 = vmatprep.subr.bf16.mxu0 %v8105
    %8195 = vmatpush1.bf16.msra.mxu0 %v8104
    %8196 = vmatprep.subr.bf16.mxu0 0
    %8197 = vmatpush2.bf16.msra.mxu0 0
    %8198 = vmatprep.subr.bf16.mxu0 0
    %8199 = vmatpush2.bf16.msra.mxu0 0
    %8200 = vmatprep.subr.bf16.mxu0 0
    %8201 = vmatpush2.bf16.msra.mxu0 0
    %8202 = vmatprep.subr.bf16.mxu0 0
    %8203 = vmatpush2.bf16.msra.mxu0 0
    %8204 = vmatprep.subr.bf16.mxu0 %v8127
    %8205 = vmatpush2.bf16.msra.mxu0 %v8126
    %8206 = vmatprep.subr.bf16.mxu0 %v8125
    %8207 = vmatpush2.bf16.msra.mxu0 %v8124
    %8208 = vmatprep.subr.bf16.mxu0 %v8123
    %8209 = vmatpush2.bf16.msra.mxu0 %v8122
    %8210 = vmatprep.subr.bf16.mxu0 %v8121
    %8211 = vmatpush2.bf16.msra.mxu0 %v8120
    %8212 = vmatprep.mubr.bf16.mxu0 %v8169
    %8213 = vmatmul.mubr.bf16.gmra.mxu0 %v8156
    %v8214 = vpop.f32.mrf.mxu0
    %v8215 = vadd.f32 0.0, %v8214
    %v8216 = vpop.f32.mrf.mxu0
    %v8217 = vadd.f32 0.0, %v8216
    %v8218 = vpop.f32.mrf.mxu0
    %v8219 = vadd.f32 0.0, %v8218
    %v8220 = vpop.f32.mrf.mxu0
    %v8221 = vadd.f32 0.0, %v8220
    %8222 = vmatprep.mubr.bf16.mxu0 %v8172
    %8223 = vmatmul.mubr.bf16.gmra.mxu0 %v8158
    %v8224 = vpop.f32.mrf.mxu0
    %v8225 = vadd.f32 0.0, %v8224
    %v8226 = vpop.f32.mrf.mxu0
    %v8227 = vadd.f32 0.0, %v8226
    %v8228 = vpop.f32.mrf.mxu0
    %v8229 = vadd.f32 0.0, %v8228
    %v8230 = vpop.f32.mrf.mxu0
    %v8231 = vadd.f32 0.0, %v8230
    %8232 = vmatprep.mubr.bf16.mxu0 %v8175
    %8233 = vmatmul.mubr.bf16.gmra.mxu0 %v8160
    %v8234 = vpop.f32.mrf.mxu0
    %v8235 = vadd.f32 0.0, %v8234
    %v8236 = vpop.f32.mrf.mxu0
    %v8237 = vadd.f32 0.0, %v8236
    %v8238 = vpop.f32.mrf.mxu0
    %v8239 = vadd.f32 0.0, %v8238
    %v8240 = vpop.f32.mrf.mxu0
    %v8241 = vadd.f32 0.0, %v8240
    %8242 = vmatprep.mubr.bf16.mxu0 %v8178
    %8243 = vmatmul.mubr.bf16.gmra.mxu0 %v8162
    %v8244 = vpop.f32.mrf.mxu0
    %v8245 = vadd.f32 0.0, %v8244
    %v8246 = vpop.f32.mrf.mxu0
    %v8247 = vadd.f32 0.0, %v8246
    %v8248 = vpop.f32.mrf.mxu0
    %v8249 = vpop.f32.mrf.mxu0
    %8250 = vdwg.mxu0
    %v8251 = vadd.f32 %v8215, %v8219
    %v8252 = vadd.f32 %v8251, %v8225
    %v8253 = vadd.f32 %v8252, %v8229
    %v8254 = vadd.f32 %v8253, %v8235
    %v8255 = vadd.f32 %v8254, %v8239
    %vm8256 = vcmask 1041408
    %v8257 = vsel %vm8256, %v8245, 0.0
    %v8258 = vadd.f32 %v8255, %v8257
    %v8259 = vrot.slane %v8258, 4
    %v8260 = vadd.f32 %v8258, %v8259
    %v8261 = vrot.slane %v8260, 2
    %v8262 = vadd.f32 %v8260, %v8261
    %v8263 = vrot.slane %v8262, 1
    %v8264 = vadd.f32 %v8262, %v8263
    %v8265 = vsel %vm6834, %v8217, 0.0
    %v8266 = vsel %vm6834, %v8221, 0.0
    %v8267 = vadd.f32 %v8265, %v8266
    %v8268 = vsel %vm6834, %v8227, 0.0
    %v8269 = vadd.f32 %v8267, %v8268
    %v8270 = vsel %vm6834, %v8231, 0.0
    %v8271 = vadd.f32 %v8269, %v8270
    %v8272 = vsel %vm6834, %v8237, 0.0
    %v8273 = vadd.f32 %v8271, %v8272
    %v8274 = vsel %vm6834, %v8241, 0.0
    %v8275 = vadd.f32 %v8273, %v8274
    %vm8276 = vcmask 582656
    %v8277 = vsel %vm8276, %v8247, 0.0
    %v8278 = vadd.f32 %v8275, %v8277
    %v8279 = vrot.slane %v8278, 4
    %v8280 = vadd.f32 %v8278, %v8279
    %v8281 = vrot.slane %v8280, 2
    %v8282 = vadd.f32 %v8280, %v8281
    %v8283 = vrot.slane %v8282, 1
    %v8284 = vadd.f32 %v8282, %v8283
    %v8287 = vcombine.low %v8264, %v8284
    %v8289 = vunpack.c.l.s4 1966171168
    %v8290 = vunpack.c.0.s8 %v8289
    %v8291 = vlaneseq
    %v8292 = vshrl.u32 %v8291, 7
    %v8293 = vsub.s32 %v8290, %v8292
    %v8294 = vrot.slane %v8287, %v8293
    %v8296 = vunpack.c.l.s4 1966171168
    %v8297 = vunpack.c.0.s8 %v8296
    %v8298 = vlaneseq
    %v8299 = vshrl.u32 %v8298, 7
    %v8300 = vsub.s32 %v8297, %v8299
    %v8301 = vrot.slane %v8294, %v8300
    %vm8303 = vcmp.lt.s32.totalorder %v499, 200
    %vm8304 = vmand %vm500, %vm8303
    %8305 = vst.msk [vmem:[#allocation3] ss:$8 sm:$0x3] %vm8304, %v8301
    %8306 = vst.msk [vmem:[#allocation3] ss:$8 sm:$0x0] %vm8304, %v8301
    %v8307 = vmul.f32 %v8215, %v8215
    %v8308 = vmul.f32 %v8217, %v8217
    %v8309 = vmul.f32 %v8219, %v8219
    %v8310 = vmul.f32 %v8221, %v8221
    %v8311 = vmul.f32 %v8225, %v8225
    %v8312 = vmul.f32 %v8227, %v8227
    %v8313 = vmul.f32 %v8229, %v8229
    %v8314 = vmul.f32 %v8231, %v8231
    %v8315 = vmul.f32 %v8235, %v8235
    %v8316 = vmul.f32 %v8237, %v8237
    %v8317 = vmul.f32 %v8239, %v8239
    %v8318 = vmul.f32 %v8241, %v8241
    %v8319 = vmul.f32 %v8245, %v8245
    %v8320 = vmul.f32 %v8247, %v8247
    %v8321 = vadd.f32 %v8307, %v8309
    %v8322 = vadd.f32 %v8321, %v8311
    %v8323 = vadd.f32 %v8322, %v8313
    %v8324 = vadd.f32 %v8323, %v8315
    %v8325 = vadd.f32 %v8324, %v8317
    %v8326 = vsel %vm8256, %v8319, 0.0
    %v8327 = vadd.f32 %v8325, %v8326
    %v8328 = vrot.slane %v8327, 4
    %v8329 = vadd.f32 %v8327, %v8328
    %v8330 = vrot.slane %v8329, 2
    %v8331 = vadd.f32 %v8329, %v8330
    %v8332 = vrot.slane %v8331, 1
    %v8333 = vadd.f32 %v8331, %v8332
    %v8334 = vsel %vm6834, %v8308, 0.0
    %v8335 = vsel %vm6834, %v8310, 0.0
    %v8336 = vadd.f32 %v8334, %v8335
    %v8337 = vsel %vm6834, %v8312, 0.0
    %v8338 = vadd.f32 %v8336, %v8337
    %v8339 = vsel %vm6834, %v8314, 0.0
    %v8340 = vadd.f32 %v8338, %v8339
    %v8341 = vsel %vm6834, %v8316, 0.0
    %v8342 = vadd.f32 %v8340, %v8341
    %v8343 = vsel %vm6834, %v8318, 0.0
    %v8344 = vadd.f32 %v8342, %v8343
    %v8345 = vsel %vm8276, %v8320, 0.0
    %v8346 = vadd.f32 %v8344, %v8345
    %v8347 = vrot.slane %v8346, 4
    %v8348 = vadd.f32 %v8346, %v8347
    %v8349 = vrot.slane %v8348, 2
    %v8350 = vadd.f32 %v8348, %v8349
    %v8351 = vrot.slane %v8350, 1
    %v8352 = vadd.f32 %v8350, %v8351
    %v8355 = vcombine.low %v8333, %v8352
    %v8357 = vunpack.c.l.s4 1966171168
    %v8358 = vunpack.c.0.s8 %v8357
    %v8359 = vlaneseq
    %v8360 = vshrl.u32 %v8359, 7
    %v8361 = vsub.s32 %v8358, %v8360
    %v8362 = vrot.slane %v8355, %v8361
    %v8364 = vunpack.c.l.s4 1966171168
    %v8365 = vunpack.c.0.s8 %v8364
    %v8366 = vlaneseq
    %v8367 = vshrl.u32 %v8366, 7
    %v8368 = vsub.s32 %v8365, %v8367
    %v8369 = vrot.slane %v8362, %v8368
    %8371 = vst.msk [vmem:[%s537] ss:$8 sm:$0x3] %vm8304, %v8369
    %8372 = vst.msk [vmem:[%s537] ss:$8 sm:$0x0] %vm8304, %v8369
    %v8373 = vld [vmem:[#allocation3] sm:$0x3]
    %v8374 = vld [vmem:[#allocation3 + $0x8] sm:$0x3]
    %v8375 = vld [vmem:[%s19] sm:$0xf]
    %v8376 = vld [vmem:[%s19 + $0x4] sm:$0xf]
    %v8377 = vld [vmem:[%s19 + $0x8] sm:$0xf]
    %v8378 = vld [vmem:[%s19 + $0xc] sm:$0xf]
    %v8379 = vld [vmem:[%s19 + $0x10] sm:$0xf]
    %v8380 = vld [vmem:[%s19 + $0x14] sm:$0xf]
    %v8381 = vld [vmem:[%s19 + $0x18] sm:$0xf]
    %v8382 = vld [vmem:[%s19 + $0x1c] sm:$0xf]
    %v8383 = vld [vmem:[%s19 + $0x20] sm:$0xf]
    %v8384 = vld [vmem:[%s19 + $0x24] sm:$0xf]
    %v8385 = vld [vmem:[%s19 + $0x28] sm:$0xf]
    %v8386 = vld [vmem:[%s19 + $0x2c] sm:$0xf]
    %v8387 = vld [vmem:[%s19 + $0x30] sm:$0xf]
    %v8388 = vld [vmem:[%s19 + $0x34] sm:$0xf]
    %v8389 = vld [vmem:[%s19 + $0x38] sm:$0xf]
    %v8390 = vld [vmem:[%s19 + $0x3c] sm:$0xf]
    %v8391 = vld [vmem:[%s19 + $0x40] sm:$0xf]
    %v8392 = vld [vmem:[%s19 + $0x44] sm:$0xf]
    %v8393 = vld [vmem:[%s19 + $0x48] sm:$0xf]
    %v8394 = vld [vmem:[%s19 + $0x4c] sm:$0xf]
    %v8395 = vld [vmem:[%s19 + $0x50] sm:$0xf]
    %v8396 = vld [vmem:[%s19 + $0x54] sm:$0xf]
    %v8397 = vld [vmem:[%s19 + $0x58] sm:$0xf]
    %v8398 = vld [vmem:[%s19 + $0x5c] sm:$0xf]
    %v8399 = vld [vmem:[%s19 + $0x60] sm:$0xf]
    %v8425 = vunpack.c.l.b16 %v8375
    %v8426 = vunpack.c.l.b16 %v8376
    %v8427 = vunpack.c.l.b16 %v8377
    %v8428 = vunpack.c.l.b16 %v8378
    %v8429 = vunpack.c.l.b16 %v8379
    %v8430 = vunpack.c.l.b16 %v8380
    %v8431 = vunpack.c.l.b16 %v8381
    %v8432 = vunpack.c.l.b16 %v8382
    %v8433 = vunpack.c.l.b16 %v8383
    %v8434 = vunpack.c.l.b16 %v8384
    %v8435 = vunpack.c.l.b16 %v8385
    %v8436 = vunpack.c.l.b16 %v8386
    %v8437 = vunpack.c.l.b16 %v8387
    %v8438 = vunpack.c.l.b16 %v8388
    %v8439 = vunpack.c.l.b16 %v8389
    %v8440 = vunpack.c.l.b16 %v8390
    %v8441 = vunpack.c.l.b16 %v8391
    %v8442 = vunpack.c.l.b16 %v8392
    %v8443 = vunpack.c.l.b16 %v8393
    %v8444 = vunpack.c.l.b16 %v8394
    %v8445 = vunpack.c.l.b16 %v8395
    %v8446 = vunpack.c.l.b16 %v8396
    %v8447 = vunpack.c.l.b16 %v8397
    %v8448 = vunpack.c.l.b16 %v8398
    %v8449 = vunpack.c.l.b16 %v8399
    %v8450 = vpack.c.b16 %v8426, %v8425
    %v8451 = vpack.c.b16 %v8428, %v8427
    %v8452 = vpack.c.b16 %v8430, %v8429
    %v8453 = vpack.c.b16 %v8432, %v8431
    %v8454 = vpack.c.b16 %v8434, %v8433
    %v8455 = vpack.c.b16 %v8436, %v8435
    %v8456 = vpack.c.b16 %v8438, %v8437
    %v8457 = vpack.c.b16 %v8440, %v8439
    %v8458 = vpack.c.b16 %v8442, %v8441
    %v8459 = vpack.c.b16 %v8444, %v8443
    %v8460 = vpack.c.b16 %v8446, %v8445
    %v8461 = vpack.c.b16 %v8448, %v8447
    %v8462 = vpack.c.b16 %v8449, %v8449
    %v8476 = vsel %vm6834, %v8374, 0
    %v8479 = vsel %vm2597, %v8462, 0
    %8481 = vmatprep.subr.bf16.mxu0 0
    %8482 = vmatpush1.bf16.msra.mxu0 %v8457
    %8483 = vmatprep.subr.bf16.mxu0 0
    %8484 = vmatpush1.bf16.msra.mxu0 %v8456
    %8485 = vmatprep.subr.bf16.mxu0 0
    %8486 = vmatpush1.bf16.msra.mxu0 %v8455
    %8487 = vmatprep.subr.bf16.mxu0 0
    %8488 = vmatpush1.bf16.msra.mxu0 %v8454
    %8489 = vmatprep.subr.bf16.mxu0 0
    %8490 = vmatpush1.bf16.msra.mxu0 %v8453
    %8491 = vmatprep.subr.bf16.mxu0 0
    %8492 = vmatpush1.bf16.msra.mxu0 %v8452
    %8493 = vmatprep.subr.bf16.mxu0 0
    %8494 = vmatpush1.bf16.msra.mxu0 %v8451
    %8495 = vmatprep.subr.bf16.mxu0 0
    %8496 = vmatpush1.bf16.msra.mxu0 %v8450
    %8497 = vmatprep.subr.bf16.mxu0 0
    %8498 = vmatpush2.bf16.msra.mxu0 0
    %8499 = vmatprep.subr.bf16.mxu0 0
    %8500 = vmatpush2.bf16.msra.mxu0 0
    %8501 = vmatprep.subr.bf16.mxu0 0
    %8502 = vmatpush2.bf16.msra.mxu0 0
    %8503 = vmatprep.subr.bf16.mxu0 0
    %8504 = vmatpush2.bf16.msra.mxu0 %v8479
    %8505 = vmatprep.subr.bf16.mxu0 0
    %8506 = vmatpush2.bf16.msra.mxu0 %v8461
    %8507 = vmatprep.subr.bf16.mxu0 0
    %8508 = vmatpush2.bf16.msra.mxu0 %v8460
    %8509 = vmatprep.subr.bf16.mxu0 0
    %8510 = vmatpush2.bf16.msra.mxu0 %v8459
    %8511 = vmatprep.subr.bf16.mxu0 0
    %8512 = vmatpush2.bf16.msra.mxu0 %v8458
    %8513 = vmatprep.mubr.f32.mxu0 %v8476
    %8514 = vmatmul.mubr.f32.gmra.mxu0 %v8373
    %v8515 = vpop.f32.mrf.mxu0
    %v8516 = vadd.f32 0.0, %v8515
    %v8517 = vpop.f32.mrf.mxu0
    %8518 = vdwg.mxu0
    %v8519 = vmul.f32 %v8516, 0.0008
    %v8520 = vmul.f32 %v8519, %v8519
    %v8522 = vrot.slane %v8520, 7
    %v8524 = vsub.f32 %v8519, %v8522
    %v8525 = vld [vmem:[%s18] sm:$0x1]
    %v8526 = vadd.f32 %v8524, 1e-05
    %v8527 = vrsqrt.pop %v8526
    %v8529 = vrot.slane %v8527, 1
    %v8531 = vmul.f32 %v8525, %v8529
    %v8532 = vld [vmem:[%s18 + $0x1] sm:$0x1]
    %v8533 = vmul.f32 %v8519, %v8531
    %v8534 = vsub.f32 %v8532, %v8533
    %vm8535 = vcmask 57344
    %8536 = vst.msk [vmem:[#allocation3] sm:$0x1] %vm8535, %v8531
    %8537 = vst.msk [vmem:[#allocation3 + $0x1] sm:$0x1] %vm8535, %v8534
    %v8538 = vld [vmem:[#allocation3] sm:$0x3]
    %v8539 = vld [vmem:[%s20] sm:$0xff]
    %v8541 = vunpack.c.l.b16 %v8539
    %v8542 = vunpack.c.h.b16 %v8539
    %v8543 = vpack.c.b16 %v8541, %v8541
    %v8544 = vpack.c.b16 %v8542, %v8542
    %vm8545 = vcmask 64512
    %v8547 = vsel %vm8545, %v8538, 0
    %v8550 = vsel %vm2597, %v8543, 0
    %v8553 = vsel %vm2597, %v8544, 0
    %8555 = vmatprep.subr.bf16.mxu0 0
    %8556 = vmatpush1.bf16.msra.mxu0 0
    %8557 = vmatprep.subr.bf16.mxu0 0
    %8558 = vmatpush1.bf16.msra.mxu0 0
    %8559 = vmatprep.subr.bf16.mxu0 0
    %8560 = vmatpush1.bf16.msra.mxu0 0
    %8561 = vmatprep.subr.bf16.mxu0 0
    %8562 = vmatpush1.bf16.msra.mxu0 0
    %8563 = vmatprep.subr.bf16.mxu0 0
    %8564 = vmatpush1.bf16.msra.mxu0 0
    %8565 = vmatprep.subr.bf16.mxu0 0
    %8566 = vmatpush1.bf16.msra.mxu0 0
    %8567 = vmatprep.subr.bf16.mxu0 0
    %8568 = vmatpush1.bf16.msra.mxu0 0
    %8569 = vmatprep.subr.bf16.mxu0 %v8553
    %8570 = vmatpush1.bf16.msra.mxu0 %v8550
    %8571 = vmatprep.subr.bf16.mxu0 0
    %8572 = vmatpush2.bf16.msra.mxu0 0
    %8573 = vmatprep.subr.bf16.mxu0 0
    %8574 = vmatpush2.bf16.msra.mxu0 0
    %8575 = vmatprep.subr.bf16.mxu0 0
    %8576 = vmatpush2.bf16.msra.mxu0 0
    %8577 = vmatprep.subr.bf16.mxu0 0
    %8578 = vmatpush2.bf16.msra.mxu0 0
    %8579 = vmatprep.subr.bf16.mxu0 0
    %8580 = vmatpush2.bf16.msra.mxu0 0
    %8581 = vmatprep.subr.bf16.mxu0 0
    %8582 = vmatpush2.bf16.msra.mxu0 0
    %8583 = vmatprep.subr.bf16.mxu0 0
    %8584 = vmatpush2.bf16.msra.mxu0 0
    %8585 = vmatprep.subr.bf16.mxu0 0
    %8586 = vmatpush2.bf16.msra.mxu0 0
    %8587 = vmatprep.mubr.f32.mxu0 0.0
    %8588 = vmatmul.mubr.f32.gmra.mxu0 %v8547
    %v8589 = vpop.f32.mrf.mxu0
    %v8590 = vadd.f32 0.0, %v8589
    %v8591 = vpop.f32.mrf.mxu0
    %v8592 = vadd.f32 0.0, %v8591
    %8593 = vdwg.mxu0
    %v8594 = vlaneseq
    %v8595 = vshrl.u32 %v8594, 7
    %v8596 = vsub.s32 0, %v8595
    %v8597 = vrot.slane %v8590, %v8596
    %v8598 = vlaneseq
    %v8599 = vshrl.u32 %v8598, 7
    %v8600 = vsub.s32 0, %v8599
    %v8601 = vrot.slane %v8592, %v8600
    %v8602 = vmul.f32 %v8215, %v8597
    %v8603 = vmul.f32 %v8217, %v8601
    %v8604 = vmul.f32 %v8219, %v8597
    %v8605 = vmul.f32 %v8221, %v8601
    %v8606 = vmul.f32 %v8225, %v8597
    %v8607 = vmul.f32 %v8227, %v8601
    %v8608 = vmul.f32 %v8229, %v8597
    %v8609 = vmul.f32 %v8231, %v8601
    %v8610 = vmul.f32 %v8235, %v8597
    %v8611 = vmul.f32 %v8237, %v8601
    %v8612 = vmul.f32 %v8239, %v8597
    %v8613 = vmul.f32 %v8241, %v8601
    %v8614 = vmul.f32 %v8245, %v8597
    %v8615 = vmul.f32 %v8247, %v8601
    %v8616 = vlaneseq
    %v8617 = vshrl.u32 %v8616, 7
    %v8618 = vsub.s32 1, %v8617
    %v8619 = vrot.slane %v8590, %v8618
    %v8620 = vlaneseq
    %v8621 = vshrl.u32 %v8620, 7
    %v8622 = vsub.s32 1, %v8621
    %v8623 = vrot.slane %v8592, %v8622
    %v8624 = vadd.f32 %v8602, %v8619
    %v8625 = vadd.f32 %v8603, %v8623
    %v8626 = vadd.f32 %v8604, %v8619
    %v8627 = vadd.f32 %v8605, %v8623
    %v8628 = vadd.f32 %v8606, %v8619
    %v8629 = vadd.f32 %v8607, %v8623
    %v8630 = vadd.f32 %v8608, %v8619
    %v8631 = vadd.f32 %v8609, %v8623
    %v8632 = vadd.f32 %v8610, %v8619
    %v8633 = vadd.f32 %v8611, %v8623
    %v8634 = vadd.f32 %v8612, %v8619
    %v8635 = vadd.f32 %v8613, %v8623
    %v8636 = vadd.f32 %v8614, %v8619
    %v8637 = vadd.f32 %v8615, %v8623
    %v8638 = vmax.f32 %v8624, 0.0
    %v8639 = vmax.f32 %v8625, 0.0
    %v8640 = vmax.f32 %v8626, 0.0
    %v8641 = vmax.f32 %v8627, 0.0
    %v8642 = vmax.f32 %v8628, 0.0
    %v8643 = vmax.f32 %v8629, 0.0
    %v8644 = vmax.f32 %v8630, 0.0
    %v8645 = vmax.f32 %v8631, 0.0
    %v8646 = vmax.f32 %v8632, 0.0
    %v8647 = vmax.f32 %v8633, 0.0
    %v8648 = vmax.f32 %v8634, 0.0
    %v8649 = vmax.f32 %v8635, 0.0
    %v8650 = vmax.f32 %v8636, 0.0
    %v8651 = vmax.f32 %v8637, 0.0
    %v8652 = vpack.c.bf16 %v8640, %v8638
    %v8653 = vpack.c.bf16 %v8641, %v8639
    %v8654 = vpack.c.bf16 %v8644, %v8642
    %v8655 = vpack.c.bf16 %v8645, %v8643
    %v8656 = vpack.c.bf16 %v8648, %v8646
    %v8657 = vpack.c.bf16 %v8649, %v8647
    %v8658 = vpack.c.bf16 %v8650, %v8650
    %v8659 = vpack.c.bf16 %v8651, %v8651
    %v8660 = vld [vmem:[%s21] sm:$0xf]
    %v8661 = vld [vmem:[%s21 + $0x4] sm:$0xf]
    %v8662 = vld [vmem:[%s21 + $0x8] sm:$0xf]
    %v8663 = vld [vmem:[%s21 + $0xc] sm:$0xf]
    %v8664 = vld [vmem:[%s21 + $0x10] sm:$0xf]
    %v8665 = vld [vmem:[%s21 + $0x14] sm:$0xf]
    %v8666 = vld [vmem:[%s21 + $0x18] sm:$0xf]
    %v8667 = vld [vmem:[%s21 + $0x1c] sm:$0xf]
    %v8668 = vld [vmem:[%s21 + $0x20] sm:$0xf]
    %v8669 = vld [vmem:[%s21 + $0x24] sm:$0xf]
    %v8670 = vld [vmem:[%s21 + $0x28] sm:$0xf]
    %v8671 = vld [vmem:[%s21 + $0x2c] sm:$0xf]
    %v8672 = vld [vmem:[%s21 + $0x30] sm:$0xf]
    %v8673 = vld [vmem:[%s21 + $0x34] sm:$0xf]
    %v8674 = vld [vmem:[%s21 + $0x38] sm:$0xf]
    %v8675 = vld [vmem:[%s21 + $0x3c] sm:$0xf]
    %v8676 = vld [vmem:[%s21 + $0x40] sm:$0xf]
    %v8677 = vld [vmem:[%s21 + $0x44] sm:$0xf]
    %v8678 = vld [vmem:[%s21 + $0x48] sm:$0xf]
    %v8679 = vld [vmem:[%s21 + $0x4c] sm:$0xf]
    %v8680 = vld [vmem:[%s21 + $0x50] sm:$0xf]
    %v8681 = vld [vmem:[%s21 + $0x54] sm:$0xf]
    %v8682 = vld [vmem:[%s21 + $0x58] sm:$0xf]
    %v8683 = vld [vmem:[%s21 + $0x5c] sm:$0xf]
    %v8684 = vld [vmem:[%s21 + $0x60] sm:$0xf]
    %v8710 = vunpack.c.l.b16 %v8660
    %v8711 = vunpack.c.l.b16 %v8661
    %v8712 = vunpack.c.l.b16 %v8662
    %v8713 = vunpack.c.l.b16 %v8663
    %v8714 = vunpack.c.l.b16 %v8664
    %v8715 = vunpack.c.l.b16 %v8665
    %v8716 = vunpack.c.l.b16 %v8666
    %v8717 = vunpack.c.l.b16 %v8667
    %v8718 = vunpack.c.l.b16 %v8668
    %v8719 = vunpack.c.l.b16 %v8669
    %v8720 = vunpack.c.l.b16 %v8670
    %v8721 = vunpack.c.l.b16 %v8671
    %v8722 = vunpack.c.l.b16 %v8672
    %v8723 = vunpack.c.l.b16 %v8673
    %v8724 = vunpack.c.l.b16 %v8674
    %v8725 = vunpack.c.l.b16 %v8675
    %v8726 = vunpack.c.l.b16 %v8676
    %v8727 = vunpack.c.l.b16 %v8677
    %v8728 = vunpack.c.l.b16 %v8678
    %v8729 = vunpack.c.l.b16 %v8679
    %v8730 = vunpack.c.l.b16 %v8680
    %v8731 = vunpack.c.l.b16 %v8681
    %v8732 = vunpack.c.l.b16 %v8682
    %v8733 = vunpack.c.l.b16 %v8683
    %v8734 = vunpack.c.l.b16 %v8684
    %v8735 = vpack.c.b16 %v8711, %v8710
    %v8736 = vpack.c.b16 %v8713, %v8712
    %v8737 = vpack.c.b16 %v8715, %v8714
    %v8738 = vpack.c.b16 %v8717, %v8716
    %v8739 = vpack.c.b16 %v8719, %v8718
    %v8740 = vpack.c.b16 %v8721, %v8720
    %v8741 = vpack.c.b16 %v8723, %v8722
    %v8742 = vpack.c.b16 %v8725, %v8724
    %v8743 = vpack.c.b16 %v8727, %v8726
    %v8744 = vpack.c.b16 %v8729, %v8728
    %v8745 = vpack.c.b16 %v8731, %v8730
    %v8746 = vpack.c.b16 %v8733, %v8732
    %v8747 = vpack.c.b16 %v8734, %v8734
    %v8761 = vsel %vm6834, %v8653, 0
    %v8764 = vsel %vm6834, %v8655, 0
    %v8767 = vsel %vm6834, %v8657, 0
    %v8770 = vsel %vm6834, %v8659, 0
    %v8773 = vsel %vm2597, %v8747, 0
    %8775 = vmatprep.subr.bf16.mxu0 0
    %8776 = vmatpush1.bf16.msra.mxu0 %v8742
    %8777 = vmatprep.subr.bf16.mxu0 0
    %8778 = vmatpush1.bf16.msra.mxu0 %v8741
    %8779 = vmatprep.subr.bf16.mxu0 0
    %8780 = vmatpush1.bf16.msra.mxu0 %v8740
    %8781 = vmatprep.subr.bf16.mxu0 0
    %8782 = vmatpush1.bf16.msra.mxu0 %v8739
    %8783 = vmatprep.subr.bf16.mxu0 0
    %8784 = vmatpush1.bf16.msra.mxu0 %v8738
    %8785 = vmatprep.subr.bf16.mxu0 0
    %8786 = vmatpush1.bf16.msra.mxu0 %v8737
    %8787 = vmatprep.subr.bf16.mxu0 0
    %8788 = vmatpush1.bf16.msra.mxu0 %v8736
    %8789 = vmatprep.subr.bf16.mxu0 0
    %8790 = vmatpush1.bf16.msra.mxu0 %v8735
    %8791 = vmatprep.subr.bf16.mxu0 0
    %8792 = vmatpush2.bf16.msra.mxu0 0
    %8793 = vmatprep.subr.bf16.mxu0 0
    %8794 = vmatpush2.bf16.msra.mxu0 0
    %8795 = vmatprep.subr.bf16.mxu0 0
    %8796 = vmatpush2.bf16.msra.mxu0 0
    %8797 = vmatprep.subr.bf16.mxu0 0
    %8798 = vmatpush2.bf16.msra.mxu0 %v8773
    %8799 = vmatprep.subr.bf16.mxu0 0
    %8800 = vmatpush2.bf16.msra.mxu0 %v8746
    %8801 = vmatprep.subr.bf16.mxu0 0
    %8802 = vmatpush2.bf16.msra.mxu0 %v8745
    %8803 = vmatprep.subr.bf16.mxu0 0
    %8804 = vmatpush2.bf16.msra.mxu0 %v8744
    %8805 = vmatprep.subr.bf16.mxu0 0
    %8806 = vmatpush2.bf16.msra.mxu0 %v8743
    %8807 = vmatprep.mubr.bf16.mxu0 %v8761
    %8808 = vmatmul.mubr.bf16.gmra.mxu0 %v8652
    %v8809 = vpop.f32.mrf.mxu0
    %v8810 = vadd.f32 0.0, %v8809
    %v8811 = vpop.f32.mrf.mxu0
    %v8812 = vpop.f32.mrf.mxu0
    %v8813 = vadd.f32 0.0, %v8812
    %v8814 = vpop.f32.mrf.mxu0
    %8815 = vmatprep.mubr.bf16.mxu0 %v8764
    %8816 = vmatmul.mubr.bf16.gmra.mxu0 %v8654
    %v8817 = vpop.f32.mrf.mxu0
    %v8818 = vadd.f32 0.0, %v8817
    %v8819 = vpop.f32.mrf.mxu0
    %v8820 = vpop.f32.mrf.mxu0
    %v8821 = vadd.f32 0.0, %v8820
    %v8822 = vpop.f32.mrf.mxu0
    %8823 = vmatprep.mubr.bf16.mxu0 %v8767
    %8824 = vmatmul.mubr.bf16.gmra.mxu0 %v8656
    %v8825 = vpop.f32.mrf.mxu0
    %v8826 = vadd.f32 0.0, %v8825
    %v8827 = vpop.f32.mrf.mxu0
    %v8828 = vpop.f32.mrf.mxu0
    %v8829 = vadd.f32 0.0, %v8828
    %v8830 = vpop.f32.mrf.mxu0
    %8831 = vmatprep.mubr.bf16.mxu0 %v8770
    %8832 = vmatmul.mubr.bf16.gmra.mxu0 %v8658
    %v8833 = vpop.f32.mrf.mxu0
    %v8834 = vadd.f32 0.0, %v8833
    %v8835 = vpop.f32.mrf.mxu0
    %v8836 = vpop.f32.mrf.mxu0
    %v8837 = vpop.f32.mrf.mxu0
    %8838 = vdwg.mxu0
    %8839 = vst [vmem:[#allocation2] sm:$0xff] %v8810
    %8840 = vst [vmem:[#allocation2 + $0x18] sm:$0xff] %v8813
    %8841 = vst [vmem:[#allocation2 + $0x30] sm:$0xff] %v8818
    %8842 = vst [vmem:[#allocation2 + $0x48] sm:$0xff] %v8821
    %8843 = vst [vmem:[#allocation2 + $0x60] sm:$0xff] %v8826
    %8844 = vst [vmem:[#allocation2 + $0x78] sm:$0xff] %v8829
    %8845 = vst [vmem:[#allocation2 + $0x90] sm:$0x3] %v8834
    %s8846 = scalar_lea.vmem %s21, 100
    %v8847 = vld [vmem:[%s8846] sm:$0xf]
    %v8848 = vld [vmem:[%s8846 + $0x4] sm:$0xf]
    %v8849 = vld [vmem:[%s8846 + $0x8] sm:$0xf]
    %v8850 = vld [vmem:[%s8846 + $0xc] sm:$0xf]
    %v8851 = vld [vmem:[%s8846 + $0x10] sm:$0xf]
    %v8852 = vld [vmem:[%s8846 + $0x14] sm:$0xf]
    %v8853 = vld [vmem:[%s8846 + $0x18] sm:$0xf]
    %v8854 = vld [vmem:[%s8846 + $0x1c] sm:$0xf]
    %v8855 = vld [vmem:[%s8846 + $0x20] sm:$0xf]
    %v8856 = vld [vmem:[%s8846 + $0x24] sm:$0xf]
    %v8857 = vld [vmem:[%s8846 + $0x28] sm:$0xf]
    %v8858 = vld [vmem:[%s8846 + $0x2c] sm:$0xf]
    %v8859 = vld [vmem:[%s8846 + $0x30] sm:$0xf]
    %v8860 = vld [vmem:[%s8846 + $0x34] sm:$0xf]
    %v8861 = vld [vmem:[%s8846 + $0x38] sm:$0xf]
    %v8862 = vld [vmem:[%s8846 + $0x3c] sm:$0xf]
    %v8863 = vld [vmem:[%s8846 + $0x40] sm:$0xf]
    %v8864 = vld [vmem:[%s8846 + $0x44] sm:$0xf]
    %v8865 = vld [vmem:[%s8846 + $0x48] sm:$0xf]
    %v8866 = vld [vmem:[%s8846 + $0x4c] sm:$0xf]
    %v8867 = vld [vmem:[%s8846 + $0x50] sm:$0xf]
    %v8868 = vld [vmem:[%s8846 + $0x54] sm:$0xf]
    %v8869 = vld [vmem:[%s8846 + $0x58] sm:$0xf]
    %v8870 = vld [vmem:[%s8846 + $0x5c] sm:$0xf]
    %v8871 = vld [vmem:[%s8846 + $0x60] sm:$0xf]
    %v8897 = vunpack.c.l.b16 %v8847
    %v8898 = vunpack.c.l.b16 %v8848
    %v8899 = vunpack.c.l.b16 %v8849
    %v8900 = vunpack.c.l.b16 %v8850
    %v8901 = vunpack.c.l.b16 %v8851
    %v8902 = vunpack.c.l.b16 %v8852
    %v8903 = vunpack.c.l.b16 %v8853
    %v8904 = vunpack.c.l.b16 %v8854
    %v8905 = vunpack.c.l.b16 %v8855
    %v8906 = vunpack.c.l.b16 %v8856
    %v8907 = vunpack.c.l.b16 %v8857
    %v8908 = vunpack.c.l.b16 %v8858
    %v8909 = vunpack.c.l.b16 %v8859
    %v8910 = vunpack.c.l.b16 %v8860
    %v8911 = vunpack.c.l.b16 %v8861
    %v8912 = vunpack.c.l.b16 %v8862
    %v8913 = vunpack.c.l.b16 %v8863
    %v8914 = vunpack.c.l.b16 %v8864
    %v8915 = vunpack.c.l.b16 %v8865
    %v8916 = vunpack.c.l.b16 %v8866
    %v8917 = vunpack.c.l.b16 %v8867
    %v8918 = vunpack.c.l.b16 %v8868
    %v8919 = vunpack.c.l.b16 %v8869
    %v8920 = vunpack.c.l.b16 %v8870
    %v8921 = vunpack.c.l.b16 %v8871
    %v8922 = vpack.c.b16 %v8898, %v8897
    %v8923 = vpack.c.b16 %v8900, %v8899
    %v8924 = vpack.c.b16 %v8902, %v8901
    %v8925 = vpack.c.b16 %v8904, %v8903
    %v8926 = vpack.c.b16 %v8906, %v8905
    %v8927 = vpack.c.b16 %v8908, %v8907
    %v8928 = vpack.c.b16 %v8910, %v8909
    %v8929 = vpack.c.b16 %v8912, %v8911
    %v8930 = vpack.c.b16 %v8914, %v8913
    %v8931 = vpack.c.b16 %v8916, %v8915
    %v8932 = vpack.c.b16 %v8918, %v8917
    %v8933 = vpack.c.b16 %v8920, %v8919
    %v8934 = vpack.c.b16 %v8921, %v8921
    %v8948 = vsel %vm2597, %v8934, 0
    %8950 = vmatprep.subr.bf16.mxu0 0
    %8951 = vmatpush1.bf16.msra.mxu0 %v8929
    %8952 = vmatprep.subr.bf16.mxu0 0
    %8953 = vmatpush1.bf16.msra.mxu0 %v8928
    %8954 = vmatprep.subr.bf16.mxu0 0
    %8955 = vmatpush1.bf16.msra.mxu0 %v8927
    %8956 = vmatprep.subr.bf16.mxu0 0
    %8957 = vmatpush1.bf16.msra.mxu0 %v8926
    %8958 = vmatprep.subr.bf16.mxu0 0
    %8959 = vmatpush1.bf16.msra.mxu0 %v8925
    %8960 = vmatprep.subr.bf16.mxu0 0
    %8961 = vmatpush1.bf16.msra.mxu0 %v8924
    %8962 = vmatprep.subr.bf16.mxu0 0
    %8963 = vmatpush1.bf16.msra.mxu0 %v8923
    %8964 = vmatprep.subr.bf16.mxu0 0
    %8965 = vmatpush1.bf16.msra.mxu0 %v8922
    %8966 = vmatprep.subr.bf16.mxu0 0
    %8967 = vmatpush2.bf16.msra.mxu0 0
    %8968 = vmatprep.subr.bf16.mxu0 0
    %8969 = vmatpush2.bf16.msra.mxu0 0
    %8970 = vmatprep.subr.bf16.mxu0 0
    %8971 = vmatpush2.bf16.msra.mxu0 0
    %8972 = vmatprep.subr.bf16.mxu0 0
    %8973 = vmatpush2.bf16.msra.mxu0 %v8948
    %8974 = vmatprep.subr.bf16.mxu0 0
    %8975 = vmatpush2.bf16.msra.mxu0 %v8933
    %8976 = vmatprep.subr.bf16.mxu0 0
    %8977 = vmatpush2.bf16.msra.mxu0 %v8932
    %8978 = vmatprep.subr.bf16.mxu0 0
    %8979 = vmatpush2.bf16.msra.mxu0 %v8931
    %8980 = vmatprep.subr.bf16.mxu0 0
    %8981 = vmatpush2.bf16.msra.mxu0 %v8930
    %8982 = vmatprep.mubr.bf16.mxu0 %v8761
    %8983 = vmatmul.mubr.bf16.gmra.mxu0 %v8652
    %v8984 = vpop.f32.mrf.mxu0
    %v8985 = vadd.f32 0.0, %v8984
    %v8986 = vpop.f32.mrf.mxu0
    %v8987 = vpop.f32.mrf.mxu0
    %v8988 = vadd.f32 0.0, %v8987
    %v8989 = vpop.f32.mrf.mxu0
    %8990 = vmatprep.mubr.bf16.mxu0 %v8764
    %8991 = vmatmul.mubr.bf16.gmra.mxu0 %v8654
    %v8992 = vpop.f32.mrf.mxu0
    %v8993 = vadd.f32 0.0, %v8992
    %v8994 = vpop.f32.mrf.mxu0
    %v8995 = vpop.f32.mrf.mxu0
    %v8996 = vadd.f32 0.0, %v8995
    %v8997 = vpop.f32.mrf.mxu0
    %8998 = vmatprep.mubr.bf16.mxu0 %v8767
    %8999 = vmatmul.mubr.bf16.gmra.mxu0 %v8656
    %v9000 = vpop.f32.mrf.mxu0
    %v9001 = vadd.f32 0.0, %v9000
    %v9002 = vpop.f32.mrf.mxu0
    %v9003 = vpop.f32.mrf.mxu0
    %v9004 = vadd.f32 0.0, %v9003
    %v9005 = vpop.f32.mrf.mxu0
    %9006 = vmatprep.mubr.bf16.mxu0 %v8770
    %9007 = vmatmul.mubr.bf16.gmra.mxu0 %v8658
    %v9008 = vpop.f32.mrf.mxu0
    %v9009 = vadd.f32 0.0, %v9008
    %v9010 = vpop.f32.mrf.mxu0
    %v9011 = vpop.f32.mrf.mxu0
    %v9012 = vpop.f32.mrf.mxu0
    %9013 = vdwg.mxu0
    %9014 = vst [vmem:[#allocation2 + $0xa8] sm:$0xff] %v8985
    %9015 = vst [vmem:[#allocation2 + $0xc0] sm:$0xff] %v8988
    %9016 = vst [vmem:[#allocation2 + $0xd8] sm:$0xff] %v8993
    %9017 = vst [vmem:[#allocation2 + $0xf0] sm:$0xff] %v8996
    %9018 = vst [vmem:[#allocation2 + $0x108] sm:$0xff] %v9001
    %9019 = vst [vmem:[#allocation2 + $0x120] sm:$0xff] %v9004
    %9020 = vst [vmem:[#allocation2 + $0x138] sm:$0x3] %v9009
    %s9021 = scalar_lea.vmem %s21, 200
    %v9022 = vld [vmem:[%s9021] sm:$0xf]
    %v9023 = vld [vmem:[%s9021 + $0x4] sm:$0xf]
    %v9024 = vld [vmem:[%s9021 + $0x8] sm:$0xf]
    %v9025 = vld [vmem:[%s9021 + $0xc] sm:$0xf]
    %v9026 = vld [vmem:[%s9021 + $0x10] sm:$0xf]
    %v9027 = vld [vmem:[%s9021 + $0x14] sm:$0xf]
    %v9028 = vld [vmem:[%s9021 + $0x18] sm:$0xf]
    %v9029 = vld [vmem:[%s9021 + $0x1c] sm:$0xf]
    %v9030 = vld [vmem:[%s9021 + $0x20] sm:$0xf]
    %v9031 = vld [vmem:[%s9021 + $0x24] sm:$0xf]
    %v9032 = vld [vmem:[%s9021 + $0x28] sm:$0xf]
    %v9033 = vld [vmem:[%s9021 + $0x2c] sm:$0xf]
    %v9034 = vld [vmem:[%s9021 + $0x30] sm:$0xf]
    %v9035 = vld [vmem:[%s9021 + $0x34] sm:$0xf]
    %v9036 = vld [vmem:[%s9021 + $0x38] sm:$0xf]
    %v9037 = vld [vmem:[%s9021 + $0x3c] sm:$0xf]
    %v9038 = vld [vmem:[%s9021 + $0x40] sm:$0xf]
    %v9039 = vld [vmem:[%s9021 + $0x44] sm:$0xf]
    %v9040 = vld [vmem:[%s9021 + $0x48] sm:$0xf]
    %v9041 = vld [vmem:[%s9021 + $0x4c] sm:$0xf]
    %v9042 = vld [vmem:[%s9021 + $0x50] sm:$0xf]
    %v9043 = vld [vmem:[%s9021 + $0x54] sm:$0xf]
    %v9044 = vld [vmem:[%s9021 + $0x58] sm:$0xf]
    %v9045 = vld [vmem:[%s9021 + $0x5c] sm:$0xf]
    %v9046 = vld [vmem:[%s9021 + $0x60] sm:$0xf]
    %v9072 = vunpack.c.l.b16 %v9022
    %v9073 = vunpack.c.l.b16 %v9023
    %v9074 = vunpack.c.l.b16 %v9024
    %v9075 = vunpack.c.l.b16 %v9025
    %v9076 = vunpack.c.l.b16 %v9026
    %v9077 = vunpack.c.l.b16 %v9027
    %v9078 = vunpack.c.l.b16 %v9028
    %v9079 = vunpack.c.l.b16 %v9029
    %v9080 = vunpack.c.l.b16 %v9030
    %v9081 = vunpack.c.l.b16 %v9031
    %v9082 = vunpack.c.l.b16 %v9032
    %v9083 = vunpack.c.l.b16 %v9033
    %v9084 = vunpack.c.l.b16 %v9034
    %v9085 = vunpack.c.l.b16 %v9035
    %v9086 = vunpack.c.l.b16 %v9036
    %v9087 = vunpack.c.l.b16 %v9037
    %v9088 = vunpack.c.l.b16 %v9038
    %v9089 = vunpack.c.l.b16 %v9039
    %v9090 = vunpack.c.l.b16 %v9040
    %v9091 = vunpack.c.l.b16 %v9041
    %v9092 = vunpack.c.l.b16 %v9042
    %v9093 = vunpack.c.l.b16 %v9043
    %v9094 = vunpack.c.l.b16 %v9044
    %v9095 = vunpack.c.l.b16 %v9045
    %v9096 = vunpack.c.l.b16 %v9046
    %v9097 = vpack.c.b16 %v9073, %v9072
    %v9098 = vpack.c.b16 %v9075, %v9074
    %v9099 = vpack.c.b16 %v9077, %v9076
    %v9100 = vpack.c.b16 %v9079, %v9078
    %v9101 = vpack.c.b16 %v9081, %v9080
    %v9102 = vpack.c.b16 %v9083, %v9082
    %v9103 = vpack.c.b16 %v9085, %v9084
    %v9104 = vpack.c.b16 %v9087, %v9086
    %v9105 = vpack.c.b16 %v9089, %v9088
    %v9106 = vpack.c.b16 %v9091, %v9090
    %v9107 = vpack.c.b16 %v9093, %v9092
    %v9108 = vpack.c.b16 %v9095, %v9094
    %v9109 = vpack.c.b16 %v9096, %v9096
    %v9123 = vsel %vm2597, %v9109, 0
    %9125 = vmatprep.subr.bf16.mxu0 0
    %9126 = vmatpush1.bf16.msra.mxu0 %v9104
    %9127 = vmatprep.subr.bf16.mxu0 0
    %9128 = vmatpush1.bf16.msra.mxu0 %v9103
    %9129 = vmatprep.subr.bf16.mxu0 0
    %9130 = vmatpush1.bf16.msra.mxu0 %v9102
    %9131 = vmatprep.subr.bf16.mxu0 0
    %9132 = vmatpush1.bf16.msra.mxu0 %v9101
    %9133 = vmatprep.subr.bf16.mxu0 0
    %9134 = vmatpush1.bf16.msra.mxu0 %v9100
    %9135 = vmatprep.subr.bf16.mxu0 0
    %9136 = vmatpush1.bf16.msra.mxu0 %v9099
    %9137 = vmatprep.subr.bf16.mxu0 0
    %9138 = vmatpush1.bf16.msra.mxu0 %v9098
    %9139 = vmatprep.subr.bf16.mxu0 0
    %9140 = vmatpush1.bf16.msra.mxu0 %v9097
    %9141 = vmatprep.subr.bf16.mxu0 0
    %9142 = vmatpush2.bf16.msra.mxu0 0
    %9143 = vmatprep.subr.bf16.mxu0 0
    %9144 = vmatpush2.bf16.msra.mxu0 0
    %9145 = vmatprep.subr.bf16.mxu0 0
    %9146 = vmatpush2.bf16.msra.mxu0 0
    %9147 = vmatprep.subr.bf16.mxu0 0
    %9148 = vmatpush2.bf16.msra.mxu0 %v9123
    %9149 = vmatprep.subr.bf16.mxu0 0
    %9150 = vmatpush2.bf16.msra.mxu0 %v9108
    %9151 = vmatprep.subr.bf16.mxu0 0
    %9152 = vmatpush2.bf16.msra.mxu0 %v9107
    %9153 = vmatprep.subr.bf16.mxu0 0
    %9154 = vmatpush2.bf16.msra.mxu0 %v9106
    %9155 = vmatprep.subr.bf16.mxu0 0
    %9156 = vmatpush2.bf16.msra.mxu0 %v9105
    %9157 = vmatprep.mubr.bf16.mxu0 %v8761
    %9158 = vmatmul.mubr.bf16.gmra.mxu0 %v8652
    %v9159 = vpop.f32.mrf.mxu0
    %v9160 = vadd.f32 0.0, %v9159
    %v9161 = vpop.f32.mrf.mxu0
    %v9162 = vpop.f32.mrf.mxu0
    %v9163 = vadd.f32 0.0, %v9162
    %v9164 = vpop.f32.mrf.mxu0
    %9165 = vmatprep.mubr.bf16.mxu0 %v8764
    %9166 = vmatmul.mubr.bf16.gmra.mxu0 %v8654
    %v9167 = vpop.f32.mrf.mxu0
    %v9168 = vadd.f32 0.0, %v9167
    %v9169 = vpop.f32.mrf.mxu0
    %v9170 = vpop.f32.mrf.mxu0
    %v9171 = vadd.f32 0.0, %v9170
    %v9172 = vpop.f32.mrf.mxu0
    %9173 = vmatprep.mubr.bf16.mxu0 %v8767
    %9174 = vmatmul.mubr.bf16.gmra.mxu0 %v8656
    %v9175 = vpop.f32.mrf.mxu0
    %v9176 = vadd.f32 0.0, %v9175
    %v9177 = vpop.f32.mrf.mxu0
    %v9178 = vpop.f32.mrf.mxu0
    %v9179 = vadd.f32 0.0, %v9178
    %v9180 = vpop.f32.mrf.mxu0
    %9181 = vmatprep.mubr.bf16.mxu0 %v8770
    %9182 = vmatmul.mubr.bf16.gmra.mxu0 %v8658
    %v9183 = vpop.f32.mrf.mxu0
    %v9184 = vadd.f32 0.0, %v9183
    %v9185 = vpop.f32.mrf.mxu0
    %v9186 = vpop.f32.mrf.mxu0
    %v9187 = vpop.f32.mrf.mxu0
    %9188 = vdwg.mxu0
    %9189 = vst [vmem:[#allocation2 + $0x150] sm:$0xff] %v9160
    %9190 = vst [vmem:[#allocation2 + $0x168] sm:$0xff] %v9163
    %9191 = vst [vmem:[#allocation2 + $0x180] sm:$0xff] %v9168
    %9192 = vst [vmem:[#allocation2 + $0x198] sm:$0xff] %v9171
    %9193 = vst [vmem:[#allocation2 + $0x1b0] sm:$0xff] %v9176
    %9194 = vst [vmem:[#allocation2 + $0x1c8] sm:$0xff] %v9179
    %9195 = vst [vmem:[#allocation2 + $0x1e0] sm:$0x3] %v9184
    %s9196 = scalar_lea.vmem %s21, 300
    %v9197 = vld [vmem:[%s9196] sm:$0xf]
    %v9198 = vld [vmem:[%s9196 + $0x4] sm:$0xf]
    %v9199 = vld [vmem:[%s9196 + $0x8] sm:$0xf]
    %v9200 = vld [vmem:[%s9196 + $0xc] sm:$0xf]
    %v9201 = vld [vmem:[%s9196 + $0x10] sm:$0xf]
    %v9202 = vld [vmem:[%s9196 + $0x14] sm:$0xf]
    %v9203 = vld [vmem:[%s9196 + $0x18] sm:$0xf]
    %v9204 = vld [vmem:[%s9196 + $0x1c] sm:$0xf]
    %v9205 = vld [vmem:[%s9196 + $0x20] sm:$0xf]
    %v9206 = vld [vmem:[%s9196 + $0x24] sm:$0xf]
    %v9207 = vld [vmem:[%s9196 + $0x28] sm:$0xf]
    %v9208 = vld [vmem:[%s9196 + $0x2c] sm:$0xf]
    %v9209 = vld [vmem:[%s9196 + $0x30] sm:$0xf]
    %v9210 = vld [vmem:[%s9196 + $0x34] sm:$0xf]
    %v9211 = vld [vmem:[%s9196 + $0x38] sm:$0xf]
    %v9212 = vld [vmem:[%s9196 + $0x3c] sm:$0xf]
    %v9213 = vld [vmem:[%s9196 + $0x40] sm:$0xf]
    %v9214 = vld [vmem:[%s9196 + $0x44] sm:$0xf]
    %v9215 = vld [vmem:[%s9196 + $0x48] sm:$0xf]
    %v9216 = vld [vmem:[%s9196 + $0x4c] sm:$0xf]
    %v9217 = vld [vmem:[%s9196 + $0x50] sm:$0xf]
    %v9218 = vld [vmem:[%s9196 + $0x54] sm:$0xf]
    %v9219 = vld [vmem:[%s9196 + $0x58] sm:$0xf]
    %v9220 = vld [vmem:[%s9196 + $0x5c] sm:$0xf]
    %v9221 = vld [vmem:[%s9196 + $0x60] sm:$0xf]
    %v9247 = vunpack.c.l.b16 %v9197
    %v9248 = vunpack.c.l.b16 %v9198
    %v9249 = vunpack.c.l.b16 %v9199
    %v9250 = vunpack.c.l.b16 %v9200
    %v9251 = vunpack.c.l.b16 %v9201
    %v9252 = vunpack.c.l.b16 %v9202
    %v9253 = vunpack.c.l.b16 %v9203
    %v9254 = vunpack.c.l.b16 %v9204
    %v9255 = vunpack.c.l.b16 %v9205
    %v9256 = vunpack.c.l.b16 %v9206
    %v9257 = vunpack.c.l.b16 %v9207
    %v9258 = vunpack.c.l.b16 %v9208
    %v9259 = vunpack.c.l.b16 %v9209
    %v9260 = vunpack.c.l.b16 %v9210
    %v9261 = vunpack.c.l.b16 %v9211
    %v9262 = vunpack.c.l.b16 %v9212
    %v9263 = vunpack.c.l.b16 %v9213
    %v9264 = vunpack.c.l.b16 %v9214
    %v9265 = vunpack.c.l.b16 %v9215
    %v9266 = vunpack.c.l.b16 %v9216
    %v9267 = vunpack.c.l.b16 %v9217
    %v9268 = vunpack.c.l.b16 %v9218
    %v9269 = vunpack.c.l.b16 %v9219
    %v9270 = vunpack.c.l.b16 %v9220
    %v9271 = vunpack.c.l.b16 %v9221
    %v9272 = vpack.c.b16 %v9248, %v9247
    %v9273 = vpack.c.b16 %v9250, %v9249
    %v9274 = vpack.c.b16 %v9252, %v9251
    %v9275 = vpack.c.b16 %v9254, %v9253
    %v9276 = vpack.c.b16 %v9256, %v9255
    %v9277 = vpack.c.b16 %v9258, %v9257
    %v9278 = vpack.c.b16 %v9260, %v9259
    %v9279 = vpack.c.b16 %v9262, %v9261
    %v9280 = vpack.c.b16 %v9264, %v9263
    %v9281 = vpack.c.b16 %v9266, %v9265
    %v9282 = vpack.c.b16 %v9268, %v9267
    %v9283 = vpack.c.b16 %v9270, %v9269
    %v9284 = vpack.c.b16 %v9271, %v9271
    %v9298 = vsel %vm2597, %v9284, 0
    %9300 = vmatprep.subr.bf16.mxu0 0
    %9301 = vmatpush1.bf16.msra.mxu0 %v9279
    %9302 = vmatprep.subr.bf16.mxu0 0
    %9303 = vmatpush1.bf16.msra.mxu0 %v9278
    %9304 = vmatprep.subr.bf16.mxu0 0
    %9305 = vmatpush1.bf16.msra.mxu0 %v9277
    %9306 = vmatprep.subr.bf16.mxu0 0
    %9307 = vmatpush1.bf16.msra.mxu0 %v9276
    %9308 = vmatprep.subr.bf16.mxu0 0
    %9309 = vmatpush1.bf16.msra.mxu0 %v9275
    %9310 = vmatprep.subr.bf16.mxu0 0
    %9311 = vmatpush1.bf16.msra.mxu0 %v9274
    %9312 = vmatprep.subr.bf16.mxu0 0
    %9313 = vmatpush1.bf16.msra.mxu0 %v9273
    %9314 = vmatprep.subr.bf16.mxu0 0
    %9315 = vmatpush1.bf16.msra.mxu0 %v9272
    %9316 = vmatprep.subr.bf16.mxu0 0
    %9317 = vmatpush2.bf16.msra.mxu0 0
    %9318 = vmatprep.subr.bf16.mxu0 0
    %9319 = vmatpush2.bf16.msra.mxu0 0
    %9320 = vmatprep.subr.bf16.mxu0 0
    %9321 = vmatpush2.bf16.msra.mxu0 0
    %9322 = vmatprep.subr.bf16.mxu0 0
    %9323 = vmatpush2.bf16.msra.mxu0 %v9298
    %9324 = vmatprep.subr.bf16.mxu0 0
    %9325 = vmatpush2.bf16.msra.mxu0 %v9283
    %9326 = vmatprep.subr.bf16.mxu0 0
    %9327 = vmatpush2.bf16.msra.mxu0 %v9282
    %9328 = vmatprep.subr.bf16.mxu0 0
    %9329 = vmatpush2.bf16.msra.mxu0 %v9281
    %9330 = vmatprep.subr.bf16.mxu0 0
    %9331 = vmatpush2.bf16.msra.mxu0 %v9280
    %9332 = vmatprep.mubr.bf16.mxu0 %v8761
    %9333 = vmatmul.mubr.bf16.gmra.mxu0 %v8652
    %v9334 = vpop.f32.mrf.mxu0
    %v9335 = vadd.f32 0.0, %v9334
    %v9336 = vpop.f32.mrf.mxu0
    %v9337 = vpop.f32.mrf.mxu0
    %v9338 = vadd.f32 0.0, %v9337
    %v9339 = vpop.f32.mrf.mxu0
    %9340 = vmatprep.mubr.bf16.mxu0 %v8764
    %9341 = vmatmul.mubr.bf16.gmra.mxu0 %v8654
    %v9342 = vpop.f32.mrf.mxu0
    %v9343 = vadd.f32 0.0, %v9342
    %v9344 = vpop.f32.mrf.mxu0
    %v9345 = vpop.f32.mrf.mxu0
    %v9346 = vadd.f32 0.0, %v9345
    %v9347 = vpop.f32.mrf.mxu0
    %9348 = vmatprep.mubr.bf16.mxu0 %v8767
    %9349 = vmatmul.mubr.bf16.gmra.mxu0 %v8656
    %v9350 = vpop.f32.mrf.mxu0
    %v9351 = vadd.f32 0.0, %v9350
    %v9352 = vpop.f32.mrf.mxu0
    %v9353 = vpop.f32.mrf.mxu0
    %v9354 = vadd.f32 0.0, %v9353
    %v9355 = vpop.f32.mrf.mxu0
    %9356 = vmatprep.mubr.bf16.mxu0 %v8770
    %9357 = vmatmul.mubr.bf16.gmra.mxu0 %v8658
    %v9358 = vpop.f32.mrf.mxu0
    %v9359 = vadd.f32 0.0, %v9358
    %v9360 = vpop.f32.mrf.mxu0
    %v9361 = vpop.f32.mrf.mxu0
    %v9362 = vpop.f32.mrf.mxu0
    %9363 = vdwg.mxu0
    %9364 = vst [vmem:[#allocation2 + $0x1f8] sm:$0xff] %v9335
    %9365 = vst [vmem:[#allocation2 + $0x210] sm:$0xff] %v9338
    %9366 = vst [vmem:[#allocation2 + $0x228] sm:$0xff] %v9343
    %9367 = vst [vmem:[#allocation2 + $0x240] sm:$0xff] %v9346
    %9368 = vst [vmem:[#allocation2 + $0x258] sm:$0xff] %v9351
    %9369 = vst [vmem:[#allocation2 + $0x270] sm:$0xff] %v9354
    %9370 = vst [vmem:[#allocation2 + $0x288] sm:$0x3] %v9359
    %v9371 = vld [vmem:[#allocation2] sm:$0xff]
    %v9372 = vld [vmem:[#allocation2 + $0x18] sm:$0xff]
    %v9373 = vld [vmem:[#allocation2 + $0x30] sm:$0xff]
    %v9374 = vld [vmem:[#allocation2 + $0x48] sm:$0xff]
    %v9375 = vld [vmem:[#allocation2 + $0x60] sm:$0xff]
    %v9376 = vld [vmem:[#allocation2 + $0x78] sm:$0xff]
    %v9377 = vld [vmem:[#allocation2 + $0x90] sm:$0xff]
    %v9378 = vld [vmem:[#allocation2 + $0xa8] sm:$0xff]
    %v9379 = vld [vmem:[#allocation2 + $0xc0] sm:$0xff]
    %v9380 = vld [vmem:[#allocation2 + $0xd8] sm:$0xff]
    %v9381 = vld [vmem:[#allocation2 + $0xf0] sm:$0xff]
    %v9382 = vld [vmem:[#allocation2 + $0x108] sm:$0xff]
    %v9383 = vld [vmem:[#allocation2 + $0x120] sm:$0xff]
    %v9384 = vld [vmem:[#allocation2 + $0x138] sm:$0xff]
    %v9385 = vld [vmem:[#allocation2 + $0x150] sm:$0xff]
    %v9386 = vld [vmem:[#allocation2 + $0x168] sm:$0xff]
    %v9387 = vld [vmem:[#allocation2 + $0x180] sm:$0xff]
    %v9388 = vld [vmem:[#allocation2 + $0x198] sm:$0xff]
    %v9389 = vld [vmem:[#allocation2 + $0x1b0] sm:$0xff]
    %v9390 = vld [vmem:[#allocation2 + $0x1c8] sm:$0xff]
    %v9391 = vld [vmem:[#allocation2 + $0x1e0] sm:$0xff]
    %v9392 = vld [vmem:[#allocation2 + $0x1f8] sm:$0xff]
    %v9393 = vld [vmem:[#allocation2 + $0x210] sm:$0xff]
    %v9394 = vld [vmem:[#allocation2 + $0x228] sm:$0xff]
    %v9395 = vld [vmem:[#allocation2 + $0x240] sm:$0xff]
    %v9396 = vld [vmem:[#allocation2 + $0x258] sm:$0xff]
    %v9397 = vld [vmem:[#allocation2 + $0x270] sm:$0xff]
    %v9398 = vld [vmem:[#allocation2 + $0x288] sm:$0xff]
    %v9399 = vpack.c.bf16 %v9372, %v9371
    %v9400 = vpack.c.bf16 %v9374, %v9373
    %v9401 = vpack.c.bf16 %v9376, %v9375
    %v9402 = vpack.c.bf16 %v9378, %v9377
    %v9403 = vpack.c.bf16 %v9380, %v9379
    %v9404 = vpack.c.bf16 %v9382, %v9381
    %v9405 = vpack.c.bf16 %v9384, %v9383
    %v9406 = vpack.c.bf16 %v9386, %v9385
    %v9407 = vpack.c.bf16 %v9388, %v9387
    %v9408 = vpack.c.bf16 %v9390, %v9389
    %v9409 = vpack.c.bf16 %v9392, %v9391
    %v9410 = vpack.c.bf16 %v9394, %v9393
    %v9411 = vpack.c.bf16 %v9396, %v9395
    %v9412 = vpack.c.bf16 %v9398, %v9397
    %v9413 = vld [vmem:[%s22] sm:$0xff]
    %v9414 = vld [vmem:[%s22 + $0x8] sm:$0xff]
    %v9415 = vld [vmem:[%s22 + $0x10] sm:$0xff]
    %v9416 = vld [vmem:[%s22 + $0x18] sm:$0xff]
    %v9417 = vld [vmem:[%s22 + $0x20] sm:$0xff]
    %v9418 = vld [vmem:[%s22 + $0x28] sm:$0xff]
    %v9419 = vld [vmem:[%s22 + $0x30] sm:$0xff]
    %v9420 = vld [vmem:[%s22 + $0x38] sm:$0xff]
    %v9421 = vld [vmem:[%s22 + $0x40] sm:$0xff]
    %v9422 = vld [vmem:[%s22 + $0x48] sm:$0xff]
    %v9423 = vld [vmem:[%s22 + $0x50] sm:$0xff]
    %v9424 = vld [vmem:[%s22 + $0x58] sm:$0xff]
    %v9425 = vld [vmem:[%s22 + $0x60] sm:$0xff]
    %v9426 = vld [vmem:[#allocation4] sm:$0x1]
    %v9428 = vlaneseq
    %v9429 = vshrl.u32 %v9428, 7
    %v9430 = vsub.s32 0, %v9429
    %v9431 = vrot.slane %v9426, %v9430
    %9432 = vset.pattern.permute.xlu0 0
    %9433 = vperm.xlu0 %9432, %v9431
    %v9434 = vpop.permute.xlu0 %9433
    %v9449 = vunpack.c.l.b16 %v9413
    %v9450 = vunpack.c.h.b16 %v9413
    %v9451 = vunpack.c.l.b16 %v9414
    %v9452 = vunpack.c.h.b16 %v9414
    %v9453 = vunpack.c.l.b16 %v9415
    %v9454 = vunpack.c.h.b16 %v9415
    %v9455 = vunpack.c.l.b16 %v9416
    %v9456 = vunpack.c.h.b16 %v9416
    %v9457 = vunpack.c.l.b16 %v9417
    %v9458 = vunpack.c.h.b16 %v9417
    %v9459 = vunpack.c.l.b16 %v9418
    %v9460 = vunpack.c.h.b16 %v9418
    %v9461 = vunpack.c.l.b16 %v9419
    %v9462 = vunpack.c.h.b16 %v9419
    %v9463 = vunpack.c.l.b16 %v9420
    %v9464 = vunpack.c.h.b16 %v9420
    %v9465 = vunpack.c.l.b16 %v9421
    %v9466 = vunpack.c.h.b16 %v9421
    %v9467 = vunpack.c.l.b16 %v9422
    %v9468 = vunpack.c.h.b16 %v9422
    %v9469 = vunpack.c.l.b16 %v9423
    %v9470 = vunpack.c.h.b16 %v9423
    %v9471 = vunpack.c.l.b16 %v9424
    %v9472 = vunpack.c.h.b16 %v9424
    %v9473 = vunpack.c.l.b16 %v9425
    %v9474 = vunpack.c.h.b16 %v9425
    %v9475 = vpack.c.b16 %v9451, %v9449
    %v9476 = vpack.c.b16 %v9452, %v9450
    %v9477 = vpack.c.b16 %v9455, %v9453
    %v9478 = vpack.c.b16 %v9456, %v9454
    %v9479 = vpack.c.b16 %v9459, %v9457
    %v9480 = vpack.c.b16 %v9460, %v9458
    %v9481 = vpack.c.b16 %v9463, %v9461
    %v9482 = vpack.c.b16 %v9464, %v9462
    %v9483 = vpack.c.b16 %v9467, %v9465
    %v9484 = vpack.c.b16 %v9468, %v9466
    %v9485 = vpack.c.b16 %v9471, %v9469
    %v9486 = vpack.c.b16 %v9472, %v9470
    %v9487 = vpack.c.b16 %v9473, %v9473
    %v9488 = vpack.c.b16 %v9474, %v9474
    %v9497 = vsel %vm3771, %v9476, 0
    %v9500 = vsel %vm3771, %v9478, 0
    %v9503 = vsel %vm3771, %v9480, 0
    %v9506 = vsel %vm3771, %v9482, 0
    %v9509 = vsel %vm3771, %v9484, 0
    %v9512 = vsel %vm3771, %v9486, 0
    %v9515 = vsel %vm3771, %v9488, 0
    %9517 = vmatprep.subr.bf16.mxu0 0
    %9518 = vmatpush1.bf16.msra.mxu0 %v9406
    %9519 = vmatprep.subr.bf16.mxu0 0
    %9520 = vmatpush1.bf16.msra.mxu0 %v9405
    %9521 = vmatprep.subr.bf16.mxu0 0
    %9522 = vmatpush1.bf16.msra.mxu0 %v9404
    %9523 = vmatprep.subr.bf16.mxu0 0
    %9524 = vmatpush1.bf16.msra.mxu0 %v9403
    %9525 = vmatprep.subr.bf16.mxu0 0
    %9526 = vmatpush1.bf16.msra.mxu0 %v9402
    %9527 = vmatprep.subr.bf16.mxu0 0
    %9528 = vmatpush1.bf16.msra.mxu0 %v9401
    %9529 = vmatprep.subr.bf16.mxu0 0
    %9530 = vmatpush1.bf16.msra.mxu0 %v9400
    %9531 = vmatprep.subr.bf16.mxu0 0
    %9532 = vmatpush1.bf16.msra.mxu0 %v9399
    %9533 = vmatprep.subr.bf16.mxu0 0
    %9534 = vmatpush2.bf16.msra.mxu0 0
    %9535 = vmatprep.subr.bf16.mxu0 0
    %9536 = vmatpush2.bf16.msra.mxu0 0
    %9537 = vmatprep.subr.bf16.mxu0 0
    %9538 = vmatpush2.bf16.msra.mxu0 %v9412
    %9539 = vmatprep.subr.bf16.mxu0 0
    %9540 = vmatpush2.bf16.msra.mxu0 %v9411
    %9541 = vmatprep.subr.bf16.mxu0 0
    %9542 = vmatpush2.bf16.msra.mxu0 %v9410
    %9543 = vmatprep.subr.bf16.mxu0 0
    %9544 = vmatpush2.bf16.msra.mxu0 %v9409
    %9545 = vmatprep.subr.bf16.mxu0 0
    %9546 = vmatpush2.bf16.msra.mxu0 %v9408
    %9547 = vmatprep.subr.bf16.mxu0 0
    %9548 = vmatpush2.bf16.msra.mxu0 %v9407
    %9549 = vmatprep.mubr.bf16.mxu0 %v9497
    %9550 = vmatmul.mubr.bf16.gmra.mxu0 %v9475
    %v9551 = vpop.f32.mrf.mxu0
    %v9552 = vadd.f32 %v9434, %v9551
    %v9553 = vpop.f32.mrf.mxu0
    %v9554 = vpop.f32.mrf.mxu0
    %v9555 = vadd.f32 %v9434, %v9554
    %v9556 = vpop.f32.mrf.mxu0
    %9557 = vmatprep.mubr.bf16.mxu0 %v9500
    %9558 = vmatmul.mubr.bf16.gmra.mxu0 %v9477
    %v9559 = vpop.f32.mrf.mxu0
    %v9560 = vadd.f32 %v9434, %v9559
    %v9561 = vpop.f32.mrf.mxu0
    %v9562 = vpop.f32.mrf.mxu0
    %v9563 = vadd.f32 %v9434, %v9562
    %v9564 = vpop.f32.mrf.mxu0
    %9565 = vmatprep.mubr.bf16.mxu0 %v9503
    %9566 = vmatmul.mubr.bf16.gmra.mxu0 %v9479
    %v9567 = vpop.f32.mrf.mxu0
    %v9568 = vadd.f32 %v9434, %v9567
    %v9569 = vpop.f32.mrf.mxu0
    %v9570 = vpop.f32.mrf.mxu0
    %v9571 = vadd.f32 %v9434, %v9570
    %v9572 = vpop.f32.mrf.mxu0
    %9573 = vmatprep.mubr.bf16.mxu0 %v9506
    %9574 = vmatmul.mubr.bf16.gmra.mxu0 %v9481
    %v9575 = vpop.f32.mrf.mxu0
    %v9576 = vadd.f32 %v9434, %v9575
    %v9577 = vpop.f32.mrf.mxu0
    %v9578 = vpop.f32.mrf.mxu0
    %v9579 = vadd.f32 %v9434, %v9578
    %v9580 = vpop.f32.mrf.mxu0
    %9581 = vmatprep.mubr.bf16.mxu0 %v9509
    %9582 = vmatmul.mubr.bf16.gmra.mxu0 %v9483
    %v9583 = vpop.f32.mrf.mxu0
    %v9584 = vadd.f32 %v9434, %v9583
    %v9585 = vpop.f32.mrf.mxu0
    %v9586 = vpop.f32.mrf.mxu0
    %v9587 = vadd.f32 %v9434, %v9586
    %v9588 = vpop.f32.mrf.mxu0
    %9589 = vmatprep.mubr.bf16.mxu0 %v9512
    %9590 = vmatmul.mubr.bf16.gmra.mxu0 %v9485
    %v9591 = vpop.f32.mrf.mxu0
    %v9592 = vadd.f32 %v9434, %v9591
    %v9593 = vpop.f32.mrf.mxu0
    %v9594 = vpop.f32.mrf.mxu0
    %v9595 = vadd.f32 %v9434, %v9594
    %v9596 = vpop.f32.mrf.mxu0
    %9597 = vmatprep.mubr.bf16.mxu0 %v9515
    %9598 = vmatmul.mubr.bf16.gmra.mxu0 %v9487
    %v9599 = vpop.f32.mrf.mxu0
    %v9600 = vadd.f32 %v9434, %v9599
    %v9601 = vpop.f32.mrf.mxu0
    %v9602 = vpop.f32.mrf.mxu0
    %v9603 = vpop.f32.mrf.mxu0
    %9604 = vdwg.mxu0
    %v9605 = vtanh.pop %v9552
    %v9606 = vtanh.pop %v9555
    %v9607 = vtanh.pop %v9560
    %v9608 = vtanh.pop %v9563
    %v9609 = vtanh.pop %v9568
    %v9610 = vtanh.pop %v9571
    %v9611 = vtanh.pop %v9576
    %v9612 = vtanh.pop %v9579
    %v9613 = vtanh.pop %v9584
    %v9614 = vtanh.pop %v9587
    %v9615 = vtanh.pop %v9592
    %v9616 = vtanh.pop %v9595
    %v9617 = vtanh.pop %v9600
    %9618 = vst [vmem:[#allocation5] sm:$0xff] %v9605
    %9619 = vst [vmem:[#allocation5 + $0x8] sm:$0xff] %v9606
    %9620 = vst [vmem:[#allocation5 + $0x10] sm:$0xff] %v9607
    %9621 = vst [vmem:[#allocation5 + $0x18] sm:$0xff] %v9608
    %9622 = vst [vmem:[#allocation5 + $0x20] sm:$0xff] %v9609
    %9623 = vst [vmem:[#allocation5 + $0x28] sm:$0xff] %v9610
    %9624 = vst [vmem:[#allocation5 + $0x30] sm:$0xff] %v9611
    %9625 = vst [vmem:[#allocation5 + $0x38] sm:$0xff] %v9612
    %9626 = vst [vmem:[#allocation5 + $0x40] sm:$0xff] %v9613
    %9627 = vst [vmem:[#allocation5 + $0x48] sm:$0xff] %v9614
    %9628 = vst [vmem:[#allocation5 + $0x50] sm:$0xff] %v9615
    %9629 = vst [vmem:[#allocation5 + $0x58] sm:$0xff] %v9616
    %9630 = vst [vmem:[#allocation5 + $0x60] sm:$0xff] %v9617
    // Predicated region
    $region98: #{follower_generator_forward.1} parent=1 // pred_check
      _
    $region99: #{follower_generator_forward.1} parent=1 // pred_check_branch
      %9632 = sbr.rel (0) target = $region101
    $region100: #{follower_generator_forward.1} parent=1 // pred_region
      %s9634 = ssub.s32 1664, 1664
      %9635 = vsyncadd [#allocation6], %s9634
      %s9636 = sshll.u32 [#allocation5], 4
      %s9637 = int_to_ptr.vmem [resolvable:$true] %s9636
      %9642 = dma.vmem_to_hbm [thread:$0]  %s9637, 1664, %s24, [#allocation6], 128, 128, 8
    $region101: #{follower_generator_forward.1} parent=1 // pred_fallthru
      _
    // Predicated region
    $region102: #{follower_generator_forward.1} parent=1 // pred_check
      _
    $region103: #{follower_generator_forward.1} parent=1 // pred_check_branch
      %9644 = sbr.rel (0) target = $region105
    $region104: #{follower_generator_forward.1} parent=1 // pred_region
      %9645 = dma.done [#allocation6], 1664
    $region105: #{follower_generator_forward.1} parent=1 // pred_fallthru
      _
    %9646 = vsyncpa [#allocation6], 1

</llo_original>
